<compile_context>
chip_gen: v6e
topology: v6e:2x2x1
jax: 0.10.0
libtpu: 0.0.40
codegen_flags: <defaults>
</compile_context>

<pallas_src>
import math

import jax
import jax.numpy as jnp
from jax import lax
from jax.experimental import pallas as pl
from jax.experimental.pallas import tpu as pltpu

MIN_NORM = 1e-15
EPS_F32 = 4e-3          # PoincareBall proj eps for float32
ARTANH_CLIP = 1e-7      # f32-safe artanh clamp (1 - 1e-15 rounds to 1.0 in f32)


def _round_up(x, m):
    return ((x + m - 1) // m) * m


# -----------------------------------------------------------------------------
# Pure-jnp PoincareBall helpers (wrapper-side constants + reference check).
# -----------------------------------------------------------------------------
def _artanh(x):
    x = jnp.clip(x, -1.0 + ARTANH_CLIP, 1.0 - ARTANH_CLIP)
    return 0.5 * (jnp.log1p(x) - jnp.log1p(-x))


def _norm_last(x):
    return jnp.maximum(jnp.sqrt(jnp.sum(x * x, axis=-1, keepdims=True)), MIN_NORM)


def _proj(x, c):
    norm = _norm_last(x)
    maxnorm = (1.0 - EPS_F32) / math.sqrt(c)
    return jnp.where(norm > maxnorm, x / norm * maxnorm, x)


def _expmap0(u, c):
    sqrt_c = math.sqrt(c)
    u_norm = _norm_last(u)
    return jnp.tanh(sqrt_c * u_norm) * u / (sqrt_c * u_norm)


def _logmap0(p, c):
    sqrt_c = math.sqrt(c)
    p_norm = _norm_last(p)
    return (1.0 / sqrt_c) * _artanh(sqrt_c * p_norm) * p / p_norm


def _mobius_add(x, y, c):
    x2 = jnp.sum(x * x, axis=-1, keepdims=True)
    y2 = jnp.sum(y * y, axis=-1, keepdims=True)
    xy = jnp.sum(x * y, axis=-1, keepdims=True)
    num = (1.0 + 2.0 * c * xy + c * y2) * x + (1.0 - c * x2) * y
    denom = 1.0 + 2.0 * c * xy + (c * c) * x2 * y2
    return num / jnp.maximum(denom, MIN_NORM)


def _ref_forward(x, adj, w, b, c_in, c_out):
    """Pure-JAX f32 reference mirroring the PyTorch module."""
    sqrt_c = math.sqrt(c_in)
    x_norm = _norm_last(x)
    mx = x @ w.T
    mx_norm = _norm_last(mx)
    res_c = jnp.tanh(mx_norm / x_norm * _artanh(sqrt_c * x_norm)) * mx / (mx_norm * sqrt_c)
    cond = jnp.all(mx == 0.0, axis=-1, keepdims=True)
    res = jnp.where(cond, jnp.zeros_like(res_c), res_c)
    res = _proj(res, c_in)
    hyp_bias = _proj(_expmap0(b.reshape(1, -1), c_in), c_in)
    res = _proj(_mobius_add(res, hyp_bias, c_in), c_in)
    xt = _logmap0(res, c_in)
    support = adj @ xt
    h = _proj(_expmap0(support, c_in), c_in)
    xt2 = jax.nn.relu(_logmap0(h, c_in))
    return _proj(_expmap0(xt2, c_out), c_out)


# -----------------------------------------------------------------------------
# Pass 1: HypLinear (mobius_matvec + bias mobius_add + proj) -> logmap0.
# One node-row tile per grid step; bf16 weight and f32 hyperbolic bias resident.
# -----------------------------------------------------------------------------
def make_linear_tangent_kernel(c_in):
    c = float(c_in)
    sqrt_c = math.sqrt(c)
    max_t = 1.0 - EPS_F32          # proj clip expressed on the tanh magnitude
    maxnorm = max_t / sqrt_c
    inv_maxnorm = 1.0 / maxnorm
    eps2 = MIN_NORM * MIN_NORM

    def kernel(x_ref, wT_ref, hb_ref, hbsq_ref, xt_ref):
        x = x_ref[...]                              # f32 (tm, f_in_p)
        wT = wT_ref[...]                            # bf16 (f_in_p, f_out_p)
        hb = hb_ref[...]                            # f32 (1, f_out_p), hyperbolic bias
        hb_sq = hbsq_ref[0, 0]                      # precomputed ||hb||^2 (SMEM scalar)

        # ---- mobius_matvec(W, x, c) --------------------------------------
        x_sq = jnp.sum(x * x, axis=-1, keepdims=True)
        inv_x_norm = lax.rsqrt(x_sq + eps2)         # ~1/max(||x||, MIN_NORM)
        x_norm = x_sq * inv_x_norm

        mx = jnp.dot(x.astype(jnp.bfloat16), wT,    # bf16 MXU matmul, f32 accum
                     preferred_element_type=jnp.float32)
        mx_sq = jnp.sum(mx * mx, axis=-1, keepdims=True)
        inv_mx_norm = lax.rsqrt(mx_sq + eps2)
        mx_norm = mx_sq * inv_mx_norm

        t = jnp.tanh(mx_norm * inv_x_norm * _artanh(sqrt_c * x_norm))
        t = jnp.minimum(t, max_t)           # fused proj(., c): ||res|| = t/sqrt_c
        zero_rows = mx_sq <= eps2
        res = jnp.where(zero_rows, 0.0, (t / sqrt_c) * inv_mx_norm * mx)
        res_sq = jnp.where(zero_rows, 0.0, (t / sqrt_c) ** 2)   # analytic ||res||^2

        # ---- mobius_add(res, hyp_bias, c) + proj ---------------------------
        xy = jnp.sum(res * hb, axis=-1, keepdims=True)
        num = (1.0 + 2.0 * c * xy + c * hb_sq) * res + (1.0 - c * res_sq) * hb
        denom = 1.0 + 2.0 * c * xy + (c * c) * res_sq * hb_sq
        add = num * pl.reciprocal(jnp.maximum(denom, MIN_NORM), approx=True)

        add_sq = jnp.sum(add * add, axis=-1, keepdims=True)
        inv_add_norm = lax.rsqrt(add_sq + eps2)
        add_norm = add_sq * inv_add_norm
        h = add * jnp.minimum(1.0, maxnorm * inv_add_norm)
        h_norm = jnp.minimum(add_norm, maxnorm)                 # ||h|| after proj
        inv_h_norm = jnp.maximum(inv_add_norm, inv_maxnorm)     # 1/||h||

        # ---- logmap0(h, c) --------------------------------------------------
        xt = (_artanh(sqrt_c * h_norm) / sqrt_c) * inv_h_norm * h
        xt_ref[...] = xt.astype(xt_ref.dtype)

    return kernel


# -----------------------------------------------------------------------------
# Pass 2: HypAgg (adj @ tangent, K-reduction grid accumulating straight into
# the resident f32 output block) with the HypAgg->HypAct boundary collapsed to
# a tangent-norm clamp, then ReLU -> expmap0/proj at curvature c_out.
# -----------------------------------------------------------------------------
def make_agg_act_kernel(c_in, c_out, tile_k, xt_resident):
    c_i, c_o = float(c_in), float(c_out)
    sqrt_co = math.sqrt(c_o)
    max_t = 1.0 - EPS_F32
    # logmap0(proj(expmap0(u, c_in), c_in), c_in)  ==  clamp ||u|| at t_max
    t_max = math.atanh(max_t) / math.sqrt(c_i)
    eps2 = MIN_NORM * MIN_NORM

    def kernel(adj_ref, xt_ref, out_ref):
        k = pl.program_id(1)

        @pl.when(k == 0)
        def _():
            out_ref[...] = jnp.zeros_like(out_ref)

        if xt_resident:
            # Whole tangent matrix is VMEM-resident (constant block index);
            # slice the current K chunk in-place.
            start = pl.multiple_of(k * tile_k, tile_k)
            xt_blk = xt_ref[pl.ds(start, tile_k), :]
        else:
            xt_blk = xt_ref[...]

        out_ref[...] += jnp.dot(adj_ref[...], xt_blk,
                                preferred_element_type=jnp.float32)

        @pl.when(k == pl.num_programs(1) - 1)
        def _():
            u = out_ref[...]                                    # support_t, f32
            u_sq = jnp.sum(u * u, axis=-1, keepdims=True)
            inv_u = lax.rsqrt(u_sq + eps2)
            clamp = jnp.minimum(1.0, t_max * inv_u)
            xt = jnp.maximum(u * clamp, 0.0)                    # ReLU in tangent space

            xt_sq = jnp.sum(xt * xt, axis=-1, keepdims=True)
            inv_xt = lax.rsqrt(xt_sq + eps2)
            xt_norm = xt_sq * inv_xt
            t = jnp.minimum(jnp.tanh(sqrt_co * xt_norm), max_t)   # fused proj(expmap0)
            out_ref[...] = ((t / sqrt_co) * inv_xt * xt).astype(out_ref.dtype)

    return kernel


def _vmem_limit(need_bytes):
    # 2x headroom over the double-buffered tile working set, capped at 56 MiB so
    # v7x (64 MiB physical / TC) keeps Mosaic scratch headroom; v5e/v6e (128 MiB)
    # are never the binding constraint at these tile sizes.
    return int(min(max(2 * need_bytes, 16 << 20), 56 << 20))


def hyperbolic_graph_conv(x, adj, w, b, c_in=1.0, c_out=1.0, *,
                          tile_rows=512, tile_k=512, xt_resident_bytes=8 << 20):
    n, f_in = x.shape
    f_out = w.shape[0]

    # Lane-dense padding: features to multiples of 128, nodes to the tiles.
    f_in_p = _round_up(max(f_in, 128), 128)
    f_out_p = _round_up(max(f_out, 128), 128)
    n128 = _round_up(n, 128)

    assert tile_rows % 128 == 0 and tile_k % 128 == 0
    if n128 <= max(tile_rows, tile_k):
        tm = tk = n128                     # single tile per axis at small N
    else:
        tm, tk = tile_rows, tile_k
    assert max(tm, tk) % min(tm, tk) == 0
    n_p = _round_up(n, max(tm, tk))

    x_p = jnp.zeros((n_p, f_in_p), jnp.float32).at[:n, :f_in].set(
        x.astype(jnp.float32))
    # bf16 weight (pre-transposed) for the MXU; norm path stays f32 in-kernel.
    wT_bf16 = jnp.zeros((f_in_p, f_out_p), jnp.bfloat16).at[:f_in, :f_out].set(
        jnp.asarray(w, jnp.float32).T.astype(jnp.bfloat16))
    b_p = jnp.zeros((1, f_out_p), jnp.float32).at[0, :f_out].set(
        jnp.asarray(b, jnp.float32))
    # Build adjacency directly in bf16 (no n_p^2 f32 intermediate in HBM).
    adj_bf16 = jnp.zeros((n_p, n_p), jnp.bfloat16).at[:n, :n].set(
        adj.astype(jnp.bfloat16))

    # Per-layer constants: hyperbolic bias on the ball and its squared norm.
    hyp_bias = _proj(_expmap0(b_p, c_in), c_in)
    hb_sq = jnp.sum(hyp_bias * hyp_bias, axis=-1, keepdims=True)   # (1, 1) f32 -> SMEM

    # ---- Pass 1: HypLinear -> tangent features (bf16 operand for pass 2) ----
    lin_need = 2 * (tm * f_in_p * 4 + f_in_p * f_out_p * 2
                    + f_out_p * 4 + tm * f_out_p * 2)
    # TODO(synk): wT/hyp_bias have constant block indices; pipeline_mode=
    # pl.Buffered(1) would save their second VMEM buffer on very wide layers.
    x_tangent = pl.pallas_call(
        make_linear_tangent_kernel(c_in),
        out_shape=jax.ShapeDtypeStruct((n_p, f_out_p), jnp.bfloat16),
        grid_spec=pltpu.PrefetchScalarGridSpec(
            num_scalar_prefetch=0,
            grid=(n_p // tm,),
            in_specs=[
                pl.BlockSpec((tm, f_in_p), lambda i: (i, 0)),
                pl.BlockSpec((f_in_p, f_out_p), lambda i: (0, 0)),
                pl.BlockSpec((1, f_out_p), lambda i: (0, 0)),
                pl.BlockSpec(memory_space=pltpu.MemorySpace.SMEM),   # hb_sq scalar
            ],
            out_specs=pl.BlockSpec((tm, f_out_p), lambda i: (i, 0)),
        ),
        compiler_params=pltpu.CompilerParams(
            dimension_semantics=("parallel",),
            vmem_limit_bytes=_vmem_limit(lin_need),
        ),
    )(x_p, wT_bf16, hyp_bias, hb_sq)

    # ---- Pass 2: HypAgg (+ fused HypAct), accumulate into the f32 output ----
    xt_resident = (n_p * f_out_p * 2) <= xt_resident_bytes
    if xt_resident:
        xt_spec = pl.BlockSpec((n_p, f_out_p), lambda i, k: (0, 0))
        xt_bytes = n_p * f_out_p * 2
    else:
        xt_spec = pl.BlockSpec((tk, f_out_p), lambda i, k: (k, 0))
        xt_bytes = tk * f_out_p * 2
    agg_need = 2 * (tm * tk * 2 + xt_bytes + tm * f_out_p * 4)

    # TODO(synk): on v7x the adj stream could additionally be quantized to fp8
    # (e4m3) for the MXU; kept bf16 here for portability to v5e/v6e.
    out_p = pl.pallas_call(
        make_agg_act_kernel(c_in, c_out, tk, xt_resident),
        out_shape=jax.ShapeDtypeStruct((n_p, f_out_p), jnp.float32),
        grid_spec=pltpu.PrefetchScalarGridSpec(
            num_scalar_prefetch=0,
            grid=(n_p // tm, n_p // tk),
            in_specs=[
                pl.BlockSpec((tm, tk), lambda i, k: (i, k)),
                xt_spec,
            ],
            out_specs=pl.BlockSpec((tm, f_out_p), lambda i, k: (i, 0)),
        ),
        compiler_params=pltpu.CompilerParams(
            dimension_semantics=("parallel", "arbitrary"),
            vmem_limit_bytes=_vmem_limit(agg_need),
        ),
    )(adj_bf16, x_tangent)

    return out_p[:n, :f_out]


if __name__ == "__main__":
    # Small graph-conv shapes (N not a tile multiple to exercise padding).
    N = 500
    IN_F = 32
    OUT_F = 32
    C_IN, C_OUT = 1.0, 0.8

    key = jax.random.PRNGKey(0)
    kx, kadj, kw, kb = jax.random.split(key, 4)

    # Node features: small tangent vectors mapped onto the Poincare ball.
    x_tan = 0.05 * jax.random.normal(kx, (N, IN_F), dtype=jnp.float32)
    x = _proj(_expmap0(x_tan, C_IN), C_IN)

    # Dense row-normalized adjacency with self-loops.
    a = (jax.random.uniform(kadj, (N, N), dtype=jnp.float32) > 0.9).astype(jnp.float32)
    a = jnp.maximum(a, a.T) + jnp.eye(N, dtype=jnp.float32)
    adj = a / jnp.sum(a, axis=-1, keepdims=True)

    # HypLinear parameters (xavier_uniform weight; small bias to exercise mobius_add).
    gain = math.sqrt(2.0)
    bound = gain * math.sqrt(6.0 / (IN_F + OUT_F))
    w = jax.random.uniform(kw, (OUT_F, IN_F), minval=-bound, maxval=bound,
                           dtype=jnp.float32)
    b = 0.02 * jax.random.normal(kb, (OUT_F,), dtype=jnp.float32)

    # TODO(synk): use_att=True / local_agg=True branches (DenseAtt, pairwise
    # logmap) and training-mode weight dropout are not implemented.

    out = hyperbolic_graph_conv(x, adj, w, b, C_IN, C_OUT)
    out = jax.block_until_ready(out)

    ref = _ref_forward(x, adj, w, b, C_IN, C_OUT)

    assert out.shape == (N, OUT_F)
    assert bool(jnp.all(jnp.isfinite(out)))
    max_err = float(jnp.max(jnp.abs(out - ref)))
    assert max_err < 5e-2, f"max abs err {max_err}"
    print("KERNEL_OK")
</pallas_src>

<mosaic_0001>
module attributes {stable_mosaic.version = 11 : i64} {
  func.func @kernel(%arg0: i32, %arg1: memref<512x128xf32, #tpu.memory_space<vmem>>, %arg2: memref<128x128xbf16, #tpu.memory_space<vmem>>, %arg3: memref<1x128xf32, #tpu.memory_space<vmem>>, %arg4: memref<1x1xf32, #tpu.memory_space<smem>>, %arg5: memref<512x128xbf16, #tpu.memory_space<vmem>>) attributes {dimension_semantics = [#tpu.dimension_semantics<parallel>], iteration_bounds = array<i64: 1>, scalar_prefetch = 0 : i64, scratch_operands = 0 : i64, tpu.core_type = #tpu.core_type<tc>, window_params = [{transform_indices = @transform_0, window_bounds = array<i64: 512, 128>}, {pipeline_mode = #tpu.pipeline_mode<synchronous>, transform_indices = @transform_1, window_bounds = array<i64: 128, 128>}, {pipeline_mode = #tpu.pipeline_mode<synchronous>, transform_indices = @transform_2, window_bounds = array<i64: 1, 128>}, {transform_indices = @transform_3, window_bounds = array<i64: 1, 1>}, {transform_indices = @transform_4, window_bounds = array<i64: 512, 128>}]} {
    %c0 = arith.constant 0 : index
    %c0_0 = arith.constant 0 : index
    %0 = vector.load %arg1[%c0, %c0_0] : memref<512x128xf32, #tpu.memory_space<vmem>>, vector<512x128xf32>
    %c0_1 = arith.constant 0 : index
    %c0_2 = arith.constant 0 : index
    %1 = vector.load %arg2[%c0_1, %c0_2] : memref<128x128xbf16, #tpu.memory_space<vmem>>, vector<128x128xbf16>
    %c0_3 = arith.constant 0 : index
    %c0_4 = arith.constant 0 : index
    %2 = vector.load %arg3[%c0_3, %c0_4] : memref<1x128xf32, #tpu.memory_space<vmem>>, vector<1x128xf32>
    %c0_5 = arith.constant 0 : index
    %c0_6 = arith.constant 0 : index
    %3 = memref.load %arg4[%c0_5, %c0_6] : memref<1x1xf32, #tpu.memory_space<smem>>
    %4 = arith.mulf %0, %0 : vector<512x128xf32>
    %cst = arith.constant dense<0.000000e+00> : vector<512xf32>
    %5 = vector.multi_reduction <add>, %4, %cst [1] : vector<512x128xf32> to vector<512xf32>
    %6 = vector.shape_cast %5 : vector<512xf32> to vector<512x1xf32>
    %cst_7 = arith.constant 1.000000e-30 : f32
    %7 = vector.broadcast %cst_7 : f32 to vector<512x1xf32>
    %8 = arith.addf %6, %7 : vector<512x1xf32>
    %9 = math.rsqrt %8 : vector<512x1xf32>
    %10 = arith.mulf %6, %9 : vector<512x1xf32>
    %11 = arith.truncf %0 : vector<512x128xf32> to vector<512x128xbf16>
    %cst_8 = arith.constant dense<0.000000e+00> : vector<512x128xf32>
    %12 = tpu.matmul %11, %1, %cst_8 {dimension_numbers = #tpu.dot_dimension_numbers<[1], [0], [0], [1], [0, 0, 1, 1], [], []>} : vector<512x128xbf16>, vector<128x128xbf16>, vector<512x128xf32> -> vector<512x128xf32>
    %13 = arith.mulf %12, %12 : vector<512x128xf32>
    %cst_9 = arith.constant dense<0.000000e+00> : vector<512xf32>
    %14 = vector.multi_reduction <add>, %13, %cst_9 [1] : vector<512x128xf32> to vector<512xf32>
    %15 = vector.shape_cast %14 : vector<512xf32> to vector<512x1xf32>
    %cst_10 = arith.constant 1.000000e-30 : f32
    %16 = vector.broadcast %cst_10 : f32 to vector<512x1xf32>
    %17 = arith.addf %15, %16 : vector<512x1xf32>
    %18 = math.rsqrt %17 : vector<512x1xf32>
    %19 = arith.mulf %15, %18 : vector<512x1xf32>
    %20 = arith.mulf %19, %9 : vector<512x1xf32>
    %cst_11 = arith.constant 1.000000e+00 : f32
    %21 = vector.broadcast %cst_11 : f32 to vector<512x1xf32>
    %22 = arith.mulf %21, %10 : vector<512x1xf32>
    %cst_12 = arith.constant -0.99999988 : f32
    %cst_13 = arith.constant 0.99999988 : f32
    %23 = vector.broadcast %cst_12 : f32 to vector<512x1xf32>
    %24 = arith.maximumf %23, %22 : vector<512x1xf32>
    %25 = vector.broadcast %cst_13 : f32 to vector<512x1xf32>
    %26 = arith.minimumf %25, %24 : vector<512x1xf32>
    %27 = math.log1p %26 : vector<512x1xf32>
    %cst_14 = arith.constant 0.000000e+00 : f32
    %28 = vector.broadcast %cst_14 : f32 to vector<512x1xf32>
    %29 = arith.subf %28, %26 : vector<512x1xf32>
    %30 = math.log1p %29 : vector<512x1xf32>
    %31 = arith.subf %27, %30 : vector<512x1xf32>
    %cst_15 = arith.constant 5.000000e-01 : f32
    %32 = vector.broadcast %cst_15 : f32 to vector<512x1xf32>
    %33 = arith.mulf %32, %31 : vector<512x1xf32>
    %34 = arith.mulf %20, %33 : vector<512x1xf32>
    %35 = math.tanh %34 : vector<512x1xf32>
    %cst_16 = arith.constant 0.995999991 : f32
    %36 = vector.broadcast %cst_16 : f32 to vector<512x1xf32>
    %37 = arith.minimumf %35, %36 : vector<512x1xf32>
    %cst_17 = arith.constant 1.000000e-30 : f32
    %38 = vector.broadcast %cst_17 : f32 to vector<512x1xf32>
    %39 = arith.cmpf ole, %15, %38 : vector<512x1xf32>
    %cst_18 = arith.constant 1.000000e+00 : f32
    %40 = vector.broadcast %cst_18 : f32 to vector<512x1xf32>
    %41 = arith.divf %37, %40 : vector<512x1xf32>
    %42 = arith.mulf %41, %18 : vector<512x1xf32>
    %43 = vector.broadcast %42 : vector<512x1xf32> to vector<512x128xf32>
    %44 = arith.mulf %43, %12 : vector<512x128xf32>
    %cst_19 = arith.constant 0.000000e+00 : f32
    %45 = vector.shape_cast %39 : vector<512x1xi1> to vector<512x1xi1>
    %46 = vector.broadcast %45 : vector<512x1xi1> to vector<512x128xi1>
    %47 = vector.broadcast %cst_19 : f32 to vector<512x128xf32>
    %48 = arith.select %46, %47, %44 : vector<512x128xi1>, vector<512x128xf32>
    %cst_20 = arith.constant 1.000000e+00 : f32
    %49 = vector.broadcast %cst_20 : f32 to vector<512x1xf32>
    %50 = arith.divf %37, %49 : vector<512x1xf32>
    %51 = arith.mulf %50, %50 : vector<512x1xf32>
    %cst_21 = arith.constant 0.000000e+00 : f32
    %52 = vector.broadcast %cst_21 : f32 to vector<512x1xf32>
    %53 = arith.select %39, %52, %51 : vector<512x1xi1>, vector<512x1xf32>
    %54 = vector.broadcast %2 : vector<1x128xf32> to vector<512x128xf32>
    %55 = arith.mulf %48, %54 : vector<512x128xf32>
    %cst_22 = arith.constant dense<0.000000e+00> : vector<512xf32>
    %56 = vector.multi_reduction <add>, %55, %cst_22 [1] : vector<512x128xf32> to vector<512xf32>
    %57 = vector.shape_cast %56 : vector<512xf32> to vector<512x1xf32>
    %cst_23 = arith.constant 2.000000e+00 : f32
    %58 = vector.broadcast %cst_23 : f32 to vector<512x1xf32>
    %59 = arith.mulf %58, %57 : vector<512x1xf32>
    %cst_24 = arith.constant 1.000000e+00 : f32
    %60 = vector.broadcast %cst_24 : f32 to vector<512x1xf32>
    %61 = arith.addf %60, %59 : vector<512x1xf32>
    %cst_25 = arith.constant 1.000000e+00 : f32
    %62 = arith.mulf %cst_25, %3 : f32
    %63 = vector.broadcast %62 : f32 to vector<512x1xf32>
    %64 = arith.addf %61, %63 : vector<512x1xf32>
    %65 = vector.broadcast %64 : vector<512x1xf32> to vector<512x128xf32>
    %66 = arith.mulf %65, %48 : vector<512x128xf32>
    %cst_26 = arith.constant 1.000000e+00 : f32
    %67 = vector.broadcast %cst_26 : f32 to vector<512x1xf32>
    %68 = arith.mulf %67, %53 : vector<512x1xf32>
    %cst_27 = arith.constant 1.000000e+00 : f32
    %69 = vector.broadcast %cst_27 : f32 to vector<512x1xf32>
    %70 = arith.subf %69, %68 : vector<512x1xf32>
    %71 = vector.broadcast %70 : vector<512x1xf32> to vector<512x128xf32>
    %72 = vector.broadcast %2 : vector<1x128xf32> to vector<512x128xf32>
    %73 = arith.mulf %71, %72 : vector<512x128xf32>
    %74 = arith.addf %66, %73 : vector<512x128xf32>
    %cst_28 = arith.constant 2.000000e+00 : f32
    %75 = vector.broadcast %cst_28 : f32 to vector<512x1xf32>
    %76 = arith.mulf %75, %57 : vector<512x1xf32>
    %cst_29 = arith.constant 1.000000e+00 : f32
    %77 = vector.broadcast %cst_29 : f32 to vector<512x1xf32>
    %78 = arith.addf %77, %76 : vector<512x1xf32>
    %cst_30 = arith.constant 1.000000e+00 : f32
    %79 = vector.broadcast %cst_30 : f32 to vector<512x1xf32>
    %80 = arith.mulf %79, %53 : vector<512x1xf32>
    %81 = vector.broadcast %3 : f32 to vector<512x1xf32>
    %82 = arith.mulf %80, %81 : vector<512x1xf32>
    %83 = arith.addf %78, %82 : vector<512x1xf32>
    %cst_31 = arith.constant 1.000000e-15 : f32
    %84 = vector.broadcast %cst_31 : f32 to vector<512x1xf32>
    %85 = arith.maximumf %83, %84 : vector<512x1xf32>
    %86 = tpu.reciprocal %85 {approx = true} : vector<512x1xf32> -> vector<512x1xf32>
    %87 = vector.broadcast %86 : vector<512x1xf32> to vector<512x128xf32>
    %88 = arith.mulf %74, %87 : vector<512x128xf32>
    %89 = arith.mulf %88, %88 : vector<512x128xf32>
    %cst_32 = arith.constant dense<0.000000e+00> : vector<512xf32>
    %90 = vector.multi_reduction <add>, %89, %cst_32 [1] : vector<512x128xf32> to vector<512xf32>
    %91 = vector.shape_cast %90 : vector<512xf32> to vector<512x1xf32>
    %cst_33 = arith.constant 1.000000e-30 : f32
    %92 = vector.broadcast %cst_33 : f32 to vector<512x1xf32>
    %93 = arith.addf %91, %92 : vector<512x1xf32>
    %94 = math.rsqrt %93 : vector<512x1xf32>
    %95 = arith.mulf %91, %94 : vector<512x1xf32>
    %cst_34 = arith.constant 0.995999991 : f32
    %96 = vector.broadcast %cst_34 : f32 to vector<512x1xf32>
    %97 = arith.mulf %96, %94 : vector<512x1xf32>
    %cst_35 = arith.constant 1.000000e+00 : f32
    %98 = vector.broadcast %cst_35 : f32 to vector<512x1xf32>
    %99 = arith.minimumf %98, %97 : vector<512x1xf32>
    %100 = vector.broadcast %99 : vector<512x1xf32> to vector<512x128xf32>
    %101 = arith.mulf %88, %100 : vector<512x128xf32>
    %cst_36 = arith.constant 0.995999991 : f32
    %102 = vector.broadcast %cst_36 : f32 to vector<512x1xf32>
    %103 = arith.minimumf %95, %102 : vector<512x1xf32>
    %cst_37 = arith.constant 1.00401604 : f32
    %104 = vector.broadcast %cst_37 : f32 to vector<512x1xf32>
    %105 = arith.maximumf %94, %104 : vector<512x1xf32>
    %cst_38 = arith.constant 1.000000e+00 : f32
    %106 = vector.broadcast %cst_38 : f32 to vector<512x1xf32>
    %107 = arith.mulf %106, %103 : vector<512x1xf32>
    %cst_39 = arith.constant -0.99999988 : f32
    %cst_40 = arith.constant 0.99999988 : f32
    %108 = vector.broadcast %cst_39 : f32 to vector<512x1xf32>
    %109 = arith.maximumf %108, %107 : vector<512x1xf32>
    %110 = vector.broadcast %cst_40 : f32 to vector<512x1xf32>
    %111 = arith.minimumf %110, %109 : vector<512x1xf32>
    %112 = math.log1p %111 : vector<512x1xf32>
    %cst_41 = arith.constant 0.000000e+00 : f32
    %113 = vector.broadcast %cst_41 : f32 to vector<512x1xf32>
    %114 = arith.subf %113, %111 : vector<512x1xf32>
    %115 = math.log1p %114 : vector<512x1xf32>
    %116 = arith.subf %112, %115 : vector<512x1xf32>
    %cst_42 = arith.constant 5.000000e-01 : f32
    %117 = vector.broadcast %cst_42 : f32 to vector<512x1xf32>
    %118 = arith.mulf %117, %116 : vector<512x1xf32>
    %cst_43 = arith.constant 1.000000e+00 : f32
    %119 = vector.broadcast %cst_43 : f32 to vector<512x1xf32>
    %120 = arith.divf %118, %119 : vector<512x1xf32>
    %121 = arith.mulf %120, %105 : vector<512x1xf32>
    %122 = vector.broadcast %121 : vector<512x1xf32> to vector<512x128xf32>
    %123 = arith.mulf %122, %101 : vector<512x128xf32>
    %124 = arith.truncf %123 : vector<512x128xf32> to vector<512x128xbf16>
    %c0_44 = arith.constant 0 : index
    %c0_45 = arith.constant 0 : index
    %125 = vector.load %arg5[%c0_44, %c0_45] : memref<512x128xbf16, #tpu.memory_space<vmem>>, vector<512x128xbf16>
    tpu.vector_store %arg5[%c0_44, %c0_45], %124 {strides = array<i32>} : memref<512x128xbf16, #tpu.memory_space<vmem>>, vector<512x128xbf16>,
    return
  }
  func.func @transform_0(%arg0: i32) -> (i32, i32) {
    %c0_i32 = arith.constant 0 : i32
    %c0_i32_0 = arith.constant 0 : i32
    return %arg0, %c0_i32 : i32, i32
  }
  func.func @transform_1(%arg0: i32) -> (i32, i32) {
    %c0_i32 = arith.constant 0 : i32
    %c0_i32_0 = arith.constant 0 : i32
    %c0_i32_1 = arith.constant 0 : i32
    return %c0_i32, %c0_i32_0 : i32, i32
  }
  func.func @transform_2(%arg0: i32) -> (i32, i32) {
    %c0_i32 = arith.constant 0 : i32
    %c0_i32_0 = arith.constant 0 : i32
    %c0_i32_1 = arith.constant 0 : i32
    return %c0_i32, %c0_i32_0 : i32, i32
  }
  func.func @transform_3(%arg0: i32) -> (i32, i32) {
    %c0_i32 = arith.constant 0 : i32
    %c0_i32_0 = arith.constant 0 : i32
    %c0_i32_1 = arith.constant 0 : i32
    return %c0_i32, %c0_i32_0 : i32, i32
  }
  func.func @transform_4(%arg0: i32) -> (i32, i32) {
    %c0_i32 = arith.constant 0 : i32
    %c0_i32_0 = arith.constant 0 : i32
    return %arg0, %c0_i32 : i32, i32
  }
}

</mosaic_0001>

<llo_original>
// kernel: tpu_custom_call.1
$region0: #{tpu_custom_call.1}
  #allocation0 [shape = 'u32[]', space=smem, size = 0x4, offset = 0x4, fixed_abs, tag = 'smem constant byte address 0x4 - core index']
  #allocation1 [shape = 'u32[144,128]{1,0:T(1,128)}', space=vmem, size = 0x12000, scoped, tag = 'internal scratch']
  #allocation2 [shape = 'f32[1,1]{1,0:T(1,128)S(6)}', space=smem, size = 0x200, scoped, tag = 'scoped memory for tpu_custom_call.1']
  %s0 = inlined_call_operand.hbm [shape: f32[512,128], index: 0, kind: input, shape index: {}]
  %s1 = inlined_call_operand.hbm [shape: bf16[128,128], index: 1, kind: input, shape index: {}]
  %s2 = inlined_call_operand.vmem [shape: f32[1,128], index: 2, kind: input, shape index: {}]
  %s3 = inlined_call_operand.<no memory space> [shape: f32[1,1], index: 3, kind: input, shape index: {}]
  %s4 = inlined_call_operand.hbm [shape: bf16[512,128], index: 4, kind: output, shape index: {}]
  %s5 = sld [smem:[#allocation0]]
  $region34: #{tpu_custom_call.1} parent=0
    _
  %s7 = ssub.s32 1, %s5
  %s8 = scalar_select 0, %s7, %s5
  %9 = sst [smem:[#allocation2]] %s3
  $region1: #{tpu_custom_call.1} parent=0
    #allocation3 [shape = 'u8[262144]{0}', space=vmem, size = 0x40000, scoped, tag = 'input window, operand 0, single buffered']
    #allocation4 [shape = 's32[1]{0}', space=sflag, size = 0x4, scoped, tag = 'scoped memory for tpu_custom_call.1']
    #allocation5 [shape = 's32[1]{0}', space=sflag, size = 0x4, scoped, tag = 'scoped memory for tpu_custom_call.1']
    #allocation6 [shape = 'u8[32768]{0}', space=vmem, size = 0x8000, scoped, tag = 'input window, operand 1, single buffered']
    #allocation7 [shape = 's32[1]{0}', space=sflag, size = 0x4, scoped, tag = 'scoped memory for tpu_custom_call.1']
    #allocation8 [shape = 'u8[131072]{0}', space=vmem, size = 0x20000, scoped, tag = 'output window, operand 0, single buffered']
    %10 = vsyncpa [#allocation4], 0
    %11 = vsyncpa [#allocation7], 0
    %12 = vsyncpa [#allocation5], 0
    // Predicated region
    $region2: #{tpu_custom_call.1} parent=1 // pred_check
      _
    $region3: #{tpu_custom_call.1} parent=1 // pred_check_branch
      %14 = sbr.rel (0) target = $region5
    $region4: #{tpu_custom_call.1} parent=1 // pred_region
      %s16 = ssub.s32 8192, 8192
      %17 = vsyncadd [#allocation4], %s16
      %s18 = sshll.u32 [#allocation3], 4
      %s19 = int_to_ptr.vmem [resolvable:$true] %s18
      %24 = dma.hbm_to_vmem [thread:$0]  %s0, 8192, %s19, [#allocation4], 128, 128, 8
    $region5: #{tpu_custom_call.1} parent=1 // pred_fallthru
      _
    // Predicated region
    $region6: #{tpu_custom_call.1} parent=1 // pred_check
      _
    $region7: #{tpu_custom_call.1} parent=1 // pred_check_branch
      %26 = sbr.rel (0) target = $region9
    $region8: #{tpu_custom_call.1} parent=1 // pred_region
      %s28 = ssub.s32 1024, 1024
      %29 = vsyncadd [#allocation7], %s28
      %s30 = sshll.u32 [#allocation6], 4
      %s31 = int_to_ptr.vmem [resolvable:$true] %s30
      %36 = dma.hbm_to_vmem [thread:$0]  %s1, 1024, %s31, [#allocation7], 64, 64, 4
    $region9: #{tpu_custom_call.1} parent=1 // pred_fallthru
      _
    // Predicated region
    $region10: #{tpu_custom_call.1} parent=1 // pred_check
      _
    $region11: #{tpu_custom_call.1} parent=1 // pred_check_branch
      %38 = sbr.rel (0) target = $region13
    $region12: #{tpu_custom_call.1} parent=1 // pred_region
      _
    $region13: #{tpu_custom_call.1} parent=1 // pred_fallthru
      _
    // Predicated region
    $region14: #{tpu_custom_call.1} parent=1 // pred_check
      _
    $region15: #{tpu_custom_call.1} parent=1 // pred_check_branch
      %40 = sbr.rel (0) target = $region17
    $region16: #{tpu_custom_call.1} parent=1 // pred_region
      _
    $region17: #{tpu_custom_call.1} parent=1 // pred_fallthru
      _
    // Predicated region
    $region18: #{tpu_custom_call.1} parent=1 // pred_check
      _
    $region19: #{tpu_custom_call.1} parent=1 // pred_check_branch
      %42 = sbr.rel (0) target = $region21
    $region20: #{tpu_custom_call.1} parent=1 // pred_region
      %43 = dma.done [#allocation4], 8192
    $region21: #{tpu_custom_call.1} parent=1 // pred_fallthru
      _
    // Predicated region
    $region22: #{tpu_custom_call.1} parent=1 // pred_check
      _
    $region23: #{tpu_custom_call.1} parent=1 // pred_check_branch
      %45 = sbr.rel (0) target = $region25
    $region24: #{tpu_custom_call.1} parent=1 // pred_region
      %46 = dma.done [#allocation7], 1024
    $region25: #{tpu_custom_call.1} parent=1 // pred_fallthru
      _
    %v48 = vld [vmem:[#allocation3] sm:$0xff]
    %v49 = vld [vmem:[#allocation3 + $0x8] sm:$0xff]
    %v50 = vld [vmem:[#allocation3 + $0x10] sm:$0xff]
    %v51 = vld [vmem:[#allocation3 + $0x18] sm:$0xff]
    %v52 = vld [vmem:[#allocation3 + $0x20] sm:$0xff]
    %v53 = vld [vmem:[#allocation3 + $0x28] sm:$0xff]
    %v54 = vld [vmem:[#allocation3 + $0x30] sm:$0xff]
    %v55 = vld [vmem:[#allocation3 + $0x38] sm:$0xff]
    %v56 = vld [vmem:[#allocation3 + $0x40] sm:$0xff]
    %v57 = vld [vmem:[#allocation3 + $0x48] sm:$0xff]
    %v58 = vld [vmem:[#allocation3 + $0x50] sm:$0xff]
    %v59 = vld [vmem:[#allocation3 + $0x58] sm:$0xff]
    %v60 = vld [vmem:[#allocation3 + $0x60] sm:$0xff]
    %v61 = vld [vmem:[#allocation3 + $0x68] sm:$0xff]
    %v62 = vld [vmem:[#allocation3 + $0x70] sm:$0xff]
    %v63 = vld [vmem:[#allocation3 + $0x78] sm:$0xff]
    %v64 = vld [vmem:[#allocation3 + $0x80] sm:$0xff]
    %v65 = vld [vmem:[#allocation3 + $0x88] sm:$0xff]
    %v66 = vld [vmem:[#allocation3 + $0x90] sm:$0xff]
    %v67 = vld [vmem:[#allocation3 + $0x98] sm:$0xff]
    %v68 = vld [vmem:[#allocation3 + $0xa0] sm:$0xff]
    %v69 = vld [vmem:[#allocation3 + $0xa8] sm:$0xff]
    %v70 = vld [vmem:[#allocation3 + $0xb0] sm:$0xff]
    %v71 = vld [vmem:[#allocation3 + $0xb8] sm:$0xff]
    %v72 = vld [vmem:[#allocation3 + $0xc0] sm:$0xff]
    %v73 = vld [vmem:[#allocation3 + $0xc8] sm:$0xff]
    %v74 = vld [vmem:[#allocation3 + $0xd0] sm:$0xff]
    %v75 = vld [vmem:[#allocation3 + $0xd8] sm:$0xff]
    %v76 = vld [vmem:[#allocation3 + $0xe0] sm:$0xff]
    %v77 = vld [vmem:[#allocation3 + $0xe8] sm:$0xff]
    %v78 = vld [vmem:[#allocation3 + $0xf0] sm:$0xff]
    %v79 = vld [vmem:[#allocation3 + $0xf8] sm:$0xff]
    %v80 = vld [vmem:[#allocation3 + $0x100] sm:$0xff]
    %v81 = vld [vmem:[#allocation3 + $0x108] sm:$0xff]
    %v82 = vld [vmem:[#allocation3 + $0x110] sm:$0xff]
    %v83 = vld [vmem:[#allocation3 + $0x118] sm:$0xff]
    %v84 = vld [vmem:[#allocation3 + $0x120] sm:$0xff]
    %v85 = vld [vmem:[#allocation3 + $0x128] sm:$0xff]
    %v86 = vld [vmem:[#allocation3 + $0x130] sm:$0xff]
    %v87 = vld [vmem:[#allocation3 + $0x138] sm:$0xff]
    %v88 = vld [vmem:[#allocation3 + $0x140] sm:$0xff]
    %v89 = vld [vmem:[#allocation3 + $0x148] sm:$0xff]
    %v90 = vld [vmem:[#allocation3 + $0x150] sm:$0xff]
    %v91 = vld [vmem:[#allocation3 + $0x158] sm:$0xff]
    %v92 = vld [vmem:[#allocation3 + $0x160] sm:$0xff]
    %v93 = vld [vmem:[#allocation3 + $0x168] sm:$0xff]
    %v94 = vld [vmem:[#allocation3 + $0x170] sm:$0xff]
    %v95 = vld [vmem:[#allocation3 + $0x178] sm:$0xff]
    %v96 = vld [vmem:[#allocation3 + $0x180] sm:$0xff]
    %v97 = vld [vmem:[#allocation3 + $0x188] sm:$0xff]
    %v98 = vld [vmem:[#allocation3 + $0x190] sm:$0xff]
    %v99 = vld [vmem:[#allocation3 + $0x198] sm:$0xff]
    %v100 = vld [vmem:[#allocation3 + $0x1a0] sm:$0xff]
    %v101 = vld [vmem:[#allocation3 + $0x1a8] sm:$0xff]
    %v102 = vld [vmem:[#allocation3 + $0x1b0] sm:$0xff]
    %v103 = vld [vmem:[#allocation3 + $0x1b8] sm:$0xff]
    %v104 = vld [vmem:[#allocation3 + $0x1c0] sm:$0xff]
    %v105 = vld [vmem:[#allocation3 + $0x1c8] sm:$0xff]
    %v106 = vld [vmem:[#allocation3 + $0x1d0] sm:$0xff]
    %v107 = vld [vmem:[#allocation3 + $0x1d8] sm:$0xff]
    %v108 = vld [vmem:[#allocation3 + $0x1e0] sm:$0xff]
    %v109 = vld [vmem:[#allocation3 + $0x1e8] sm:$0xff]
    %v110 = vld [vmem:[#allocation3 + $0x1f0] sm:$0xff]
    %v111 = vld [vmem:[#allocation3 + $0x1f8] sm:$0xff]
    %v112 = vld [vmem:[#allocation6] sm:$0xf]
    %v113 = vld [vmem:[#allocation6 + $0x4] sm:$0xf]
    %v114 = vld [vmem:[#allocation6 + $0x8] sm:$0xf]
    %v115 = vld [vmem:[#allocation6 + $0xc] sm:$0xf]
    %v116 = vld [vmem:[#allocation6 + $0x10] sm:$0xf]
    %v117 = vld [vmem:[#allocation6 + $0x14] sm:$0xf]
    %v118 = vld [vmem:[#allocation6 + $0x18] sm:$0xf]
    %v119 = vld [vmem:[#allocation6 + $0x1c] sm:$0xf]
    %v120 = vld [vmem:[#allocation6 + $0x20] sm:$0xf]
    %v121 = vld [vmem:[#allocation6 + $0x24] sm:$0xf]
    %v122 = vld [vmem:[#allocation6 + $0x28] sm:$0xf]
    %v123 = vld [vmem:[#allocation6 + $0x2c] sm:$0xf]
    %v124 = vld [vmem:[#allocation6 + $0x30] sm:$0xf]
    %v125 = vld [vmem:[#allocation6 + $0x34] sm:$0xf]
    %v126 = vld [vmem:[#allocation6 + $0x38] sm:$0xf]
    %v127 = vld [vmem:[#allocation6 + $0x3c] sm:$0xf]
    %v128 = vld [vmem:[%s2] sm:$0x1]
    %s129 = sld [smem:[#allocation2]]
    %v130 = vmul.f32 %v48, %v48
    %v131 = vmul.f32 %v49, %v49
    %v132 = vmul.f32 %v50, %v50
    %v133 = vmul.f32 %v51, %v51
    %v134 = vmul.f32 %v52, %v52
    %v135 = vmul.f32 %v53, %v53
    %v136 = vmul.f32 %v54, %v54
    %v137 = vmul.f32 %v55, %v55
    %v138 = vmul.f32 %v56, %v56
    %v139 = vmul.f32 %v57, %v57
    %v140 = vmul.f32 %v58, %v58
    %v141 = vmul.f32 %v59, %v59
    %v142 = vmul.f32 %v60, %v60
    %v143 = vmul.f32 %v61, %v61
    %v144 = vmul.f32 %v62, %v62
    %v145 = vmul.f32 %v63, %v63
    %v146 = vmul.f32 %v64, %v64
    %v147 = vmul.f32 %v65, %v65
    %v148 = vmul.f32 %v66, %v66
    %v149 = vmul.f32 %v67, %v67
    %v150 = vmul.f32 %v68, %v68
    %v151 = vmul.f32 %v69, %v69
    %v152 = vmul.f32 %v70, %v70
    %v153 = vmul.f32 %v71, %v71
    %v154 = vmul.f32 %v72, %v72
    %v155 = vmul.f32 %v73, %v73
    %v156 = vmul.f32 %v74, %v74
    %v157 = vmul.f32 %v75, %v75
    %v158 = vmul.f32 %v76, %v76
    %v159 = vmul.f32 %v77, %v77
    %v160 = vmul.f32 %v78, %v78
    %v161 = vmul.f32 %v79, %v79
    %v162 = vmul.f32 %v80, %v80
    %v163 = vmul.f32 %v81, %v81
    %v164 = vmul.f32 %v82, %v82
    %v165 = vmul.f32 %v83, %v83
    %v166 = vmul.f32 %v84, %v84
    %v167 = vmul.f32 %v85, %v85
    %v168 = vmul.f32 %v86, %v86
    %v169 = vmul.f32 %v87, %v87
    %v170 = vmul.f32 %v88, %v88
    %v171 = vmul.f32 %v89, %v89
    %v172 = vmul.f32 %v90, %v90
    %v173 = vmul.f32 %v91, %v91
    %v174 = vmul.f32 %v92, %v92
    %v175 = vmul.f32 %v93, %v93
    %v176 = vmul.f32 %v94, %v94
    %v177 = vmul.f32 %v95, %v95
    %v178 = vmul.f32 %v96, %v96
    %v179 = vmul.f32 %v97, %v97
    %v180 = vmul.f32 %v98, %v98
    %v181 = vmul.f32 %v99, %v99
    %v182 = vmul.f32 %v100, %v100
    %v183 = vmul.f32 %v101, %v101
    %v184 = vmul.f32 %v102, %v102
    %v185 = vmul.f32 %v103, %v103
    %v186 = vmul.f32 %v104, %v104
    %v187 = vmul.f32 %v105, %v105
    %v188 = vmul.f32 %v106, %v106
    %v189 = vmul.f32 %v107, %v107
    %v190 = vmul.f32 %v108, %v108
    %v191 = vmul.f32 %v109, %v109
    %v192 = vmul.f32 %v110, %v110
    %v193 = vmul.f32 %v111, %v111
    %194 = vadd.xlane.f32.xlu0 %v130
    %v195 = vpop.xlane.xlu0 %194
    %196 = vadd.xlane.f32.xlu0 %v131
    %v197 = vpop.xlane.xlu0 %196
    %198 = vadd.xlane.f32.xlu0 %v132
    %v199 = vpop.xlane.xlu0 %198
    %200 = vadd.xlane.f32.xlu0 %v133
    %v201 = vpop.xlane.xlu0 %200
    %202 = vadd.xlane.f32.xlu0 %v134
    %v203 = vpop.xlane.xlu0 %202
    %204 = vadd.xlane.f32.xlu0 %v135
    %v205 = vpop.xlane.xlu0 %204
    %206 = vadd.xlane.f32.xlu0 %v136
    %v207 = vpop.xlane.xlu0 %206
    %208 = vadd.xlane.f32.xlu0 %v137
    %v209 = vpop.xlane.xlu0 %208
    %210 = vadd.xlane.f32.xlu0 %v138
    %v211 = vpop.xlane.xlu0 %210
    %212 = vadd.xlane.f32.xlu0 %v139
    %v213 = vpop.xlane.xlu0 %212
    %214 = vadd.xlane.f32.xlu0 %v140
    %v215 = vpop.xlane.xlu0 %214
    %216 = vadd.xlane.f32.xlu0 %v141
    %v217 = vpop.xlane.xlu0 %216
    %218 = vadd.xlane.f32.xlu0 %v142
    %v219 = vpop.xlane.xlu0 %218
    %220 = vadd.xlane.f32.xlu0 %v143
    %v221 = vpop.xlane.xlu0 %220
    %222 = vadd.xlane.f32.xlu0 %v144
    %v223 = vpop.xlane.xlu0 %222
    %224 = vadd.xlane.f32.xlu0 %v145
    %v225 = vpop.xlane.xlu0 %224
    %226 = vadd.xlane.f32.xlu0 %v146
    %v227 = vpop.xlane.xlu0 %226
    %228 = vadd.xlane.f32.xlu0 %v147
    %v229 = vpop.xlane.xlu0 %228
    %230 = vadd.xlane.f32.xlu0 %v148
    %v231 = vpop.xlane.xlu0 %230
    %232 = vadd.xlane.f32.xlu0 %v149
    %v233 = vpop.xlane.xlu0 %232
    %234 = vadd.xlane.f32.xlu0 %v150
    %v235 = vpop.xlane.xlu0 %234
    %236 = vadd.xlane.f32.xlu0 %v151
    %v237 = vpop.xlane.xlu0 %236
    %238 = vadd.xlane.f32.xlu0 %v152
    %v239 = vpop.xlane.xlu0 %238
    %240 = vadd.xlane.f32.xlu0 %v153
    %v241 = vpop.xlane.xlu0 %240
    %242 = vadd.xlane.f32.xlu0 %v154
    %v243 = vpop.xlane.xlu0 %242
    %244 = vadd.xlane.f32.xlu0 %v155
    %v245 = vpop.xlane.xlu0 %244
    %246 = vadd.xlane.f32.xlu0 %v156
    %v247 = vpop.xlane.xlu0 %246
    %248 = vadd.xlane.f32.xlu0 %v157
    %v249 = vpop.xlane.xlu0 %248
    %250 = vadd.xlane.f32.xlu0 %v158
    %v251 = vpop.xlane.xlu0 %250
    %252 = vadd.xlane.f32.xlu0 %v159
    %v253 = vpop.xlane.xlu0 %252
    %254 = vadd.xlane.f32.xlu0 %v160
    %v255 = vpop.xlane.xlu0 %254
    %256 = vadd.xlane.f32.xlu0 %v161
    %v257 = vpop.xlane.xlu0 %256
    %258 = vadd.xlane.f32.xlu0 %v162
    %v259 = vpop.xlane.xlu0 %258
    %260 = vadd.xlane.f32.xlu0 %v163
    %v261 = vpop.xlane.xlu0 %260
    %262 = vadd.xlane.f32.xlu0 %v164
    %v263 = vpop.xlane.xlu0 %262
    %264 = vadd.xlane.f32.xlu0 %v165
    %v265 = vpop.xlane.xlu0 %264
    %266 = vadd.xlane.f32.xlu0 %v166
    %v267 = vpop.xlane.xlu0 %266
    %268 = vadd.xlane.f32.xlu0 %v167
    %v269 = vpop.xlane.xlu0 %268
    %270 = vadd.xlane.f32.xlu0 %v168
    %v271 = vpop.xlane.xlu0 %270
    %272 = vadd.xlane.f32.xlu0 %v169
    %v273 = vpop.xlane.xlu0 %272
    %274 = vadd.xlane.f32.xlu0 %v170
    %v275 = vpop.xlane.xlu0 %274
    %276 = vadd.xlane.f32.xlu0 %v171
    %v277 = vpop.xlane.xlu0 %276
    %278 = vadd.xlane.f32.xlu0 %v172
    %v279 = vpop.xlane.xlu0 %278
    %280 = vadd.xlane.f32.xlu0 %v173
    %v281 = vpop.xlane.xlu0 %280
    %282 = vadd.xlane.f32.xlu0 %v174
    %v283 = vpop.xlane.xlu0 %282
    %284 = vadd.xlane.f32.xlu0 %v175
    %v285 = vpop.xlane.xlu0 %284
    %286 = vadd.xlane.f32.xlu0 %v176
    %v287 = vpop.xlane.xlu0 %286
    %288 = vadd.xlane.f32.xlu0 %v177
    %v289 = vpop.xlane.xlu0 %288
    %290 = vadd.xlane.f32.xlu0 %v178
    %v291 = vpop.xlane.xlu0 %290
    %292 = vadd.xlane.f32.xlu0 %v179
    %v293 = vpop.xlane.xlu0 %292
    %294 = vadd.xlane.f32.xlu0 %v180
    %v295 = vpop.xlane.xlu0 %294
    %296 = vadd.xlane.f32.xlu0 %v181
    %v297 = vpop.xlane.xlu0 %296
    %298 = vadd.xlane.f32.xlu0 %v182
    %v299 = vpop.xlane.xlu0 %298
    %300 = vadd.xlane.f32.xlu0 %v183
    %v301 = vpop.xlane.xlu0 %300
    %302 = vadd.xlane.f32.xlu0 %v184
    %v303 = vpop.xlane.xlu0 %302
    %304 = vadd.xlane.f32.xlu0 %v185
    %v305 = vpop.xlane.xlu0 %304
    %306 = vadd.xlane.f32.xlu0 %v186
    %v307 = vpop.xlane.xlu0 %306
    %308 = vadd.xlane.f32.xlu0 %v187
    %v309 = vpop.xlane.xlu0 %308
    %310 = vadd.xlane.f32.xlu0 %v188
    %v311 = vpop.xlane.xlu0 %310
    %312 = vadd.xlane.f32.xlu0 %v189
    %v313 = vpop.xlane.xlu0 %312
    %314 = vadd.xlane.f32.xlu0 %v190
    %v315 = vpop.xlane.xlu0 %314
    %316 = vadd.xlane.f32.xlu0 %v191
    %v317 = vpop.xlane.xlu0 %316
    %318 = vadd.xlane.f32.xlu0 %v192
    %v319 = vpop.xlane.xlu0 %318
    %320 = vadd.xlane.f32.xlu0 %v193
    %v321 = vpop.xlane.xlu0 %320
    %v322 = vadd.f32 %v195, 1e-30
    %v323 = vadd.f32 %v197, 1e-30
    %v324 = vadd.f32 %v199, 1e-30
    %v325 = vadd.f32 %v201, 1e-30
    %v326 = vadd.f32 %v203, 1e-30
    %v327 = vadd.f32 %v205, 1e-30
    %v328 = vadd.f32 %v207, 1e-30
    %v329 = vadd.f32 %v209, 1e-30
    %v330 = vadd.f32 %v211, 1e-30
    %v331 = vadd.f32 %v213, 1e-30
    %v332 = vadd.f32 %v215, 1e-30
    %v333 = vadd.f32 %v217, 1e-30
    %v334 = vadd.f32 %v219, 1e-30
    %v335 = vadd.f32 %v221, 1e-30
    %v336 = vadd.f32 %v223, 1e-30
    %v337 = vadd.f32 %v225, 1e-30
    %v338 = vadd.f32 %v227, 1e-30
    %v339 = vadd.f32 %v229, 1e-30
    %v340 = vadd.f32 %v231, 1e-30
    %v341 = vadd.f32 %v233, 1e-30
    %v342 = vadd.f32 %v235, 1e-30
    %v343 = vadd.f32 %v237, 1e-30
    %v344 = vadd.f32 %v239, 1e-30
    %v345 = vadd.f32 %v241, 1e-30
    %v346 = vadd.f32 %v243, 1e-30
    %v347 = vadd.f32 %v245, 1e-30
    %v348 = vadd.f32 %v247, 1e-30
    %v349 = vadd.f32 %v249, 1e-30
    %v350 = vadd.f32 %v251, 1e-30
    %v351 = vadd.f32 %v253, 1e-30
    %v352 = vadd.f32 %v255, 1e-30
    %v353 = vadd.f32 %v257, 1e-30
    %v354 = vadd.f32 %v259, 1e-30
    %v355 = vadd.f32 %v261, 1e-30
    %v356 = vadd.f32 %v263, 1e-30
    %v357 = vadd.f32 %v265, 1e-30
    %v358 = vadd.f32 %v267, 1e-30
    %v359 = vadd.f32 %v269, 1e-30
    %v360 = vadd.f32 %v271, 1e-30
    %v361 = vadd.f32 %v273, 1e-30
    %v362 = vadd.f32 %v275, 1e-30
    %v363 = vadd.f32 %v277, 1e-30
    %v364 = vadd.f32 %v279, 1e-30
    %v365 = vadd.f32 %v281, 1e-30
    %v366 = vadd.f32 %v283, 1e-30
    %v367 = vadd.f32 %v285, 1e-30
    %v368 = vadd.f32 %v287, 1e-30
    %v369 = vadd.f32 %v289, 1e-30
    %v370 = vadd.f32 %v291, 1e-30
    %v371 = vadd.f32 %v293, 1e-30
    %v372 = vadd.f32 %v295, 1e-30
    %v373 = vadd.f32 %v297, 1e-30
    %v374 = vadd.f32 %v299, 1e-30
    %v375 = vadd.f32 %v301, 1e-30
    %v376 = vadd.f32 %v303, 1e-30
    %v377 = vadd.f32 %v305, 1e-30
    %v378 = vadd.f32 %v307, 1e-30
    %v379 = vadd.f32 %v309, 1e-30
    %v380 = vadd.f32 %v311, 1e-30
    %v381 = vadd.f32 %v313, 1e-30
    %v382 = vadd.f32 %v315, 1e-30
    %v383 = vadd.f32 %v317, 1e-30
    %v384 = vadd.f32 %v319, 1e-30
    %v385 = vadd.f32 %v321, 1e-30
    %v386 = vrsqrt.pop %v322
    %v387 = vrsqrt.pop %v323
    %v388 = vrsqrt.pop %v324
    %v389 = vrsqrt.pop %v325
    %v390 = vrsqrt.pop %v326
    %v391 = vrsqrt.pop %v327
    %v392 = vrsqrt.pop %v328
    %v393 = vrsqrt.pop %v329
    %v394 = vrsqrt.pop %v330
    %v395 = vrsqrt.pop %v331
    %v396 = vrsqrt.pop %v332
    %v397 = vrsqrt.pop %v333
    %v398 = vrsqrt.pop %v334
    %v399 = vrsqrt.pop %v335
    %v400 = vrsqrt.pop %v336
    %v401 = vrsqrt.pop %v337
    %v402 = vrsqrt.pop %v338
    %v403 = vrsqrt.pop %v339
    %v404 = vrsqrt.pop %v340
    %v405 = vrsqrt.pop %v341
    %v406 = vrsqrt.pop %v342
    %v407 = vrsqrt.pop %v343
    %v408 = vrsqrt.pop %v344
    %v409 = vrsqrt.pop %v345
    %v410 = vrsqrt.pop %v346
    %v411 = vrsqrt.pop %v347
    %v412 = vrsqrt.pop %v348
    %v413 = vrsqrt.pop %v349
    %v414 = vrsqrt.pop %v350
    %v415 = vrsqrt.pop %v351
    %v416 = vrsqrt.pop %v352
    %v417 = vrsqrt.pop %v353
    %v418 = vrsqrt.pop %v354
    %v419 = vrsqrt.pop %v355
    %v420 = vrsqrt.pop %v356
    %v421 = vrsqrt.pop %v357
    %v422 = vrsqrt.pop %v358
    %v423 = vrsqrt.pop %v359
    %v424 = vrsqrt.pop %v360
    %v425 = vrsqrt.pop %v361
    %v426 = vrsqrt.pop %v362
    %v427 = vrsqrt.pop %v363
    %v428 = vrsqrt.pop %v364
    %v429 = vrsqrt.pop %v365
    %v430 = vrsqrt.pop %v366
    %v431 = vrsqrt.pop %v367
    %v432 = vrsqrt.pop %v368
    %v433 = vrsqrt.pop %v369
    %v434 = vrsqrt.pop %v370
    %v435 = vrsqrt.pop %v371
    %v436 = vrsqrt.pop %v372
    %v437 = vrsqrt.pop %v373
    %v438 = vrsqrt.pop %v374
    %v439 = vrsqrt.pop %v375
    %v440 = vrsqrt.pop %v376
    %v441 = vrsqrt.pop %v377
    %v442 = vrsqrt.pop %v378
    %v443 = vrsqrt.pop %v379
    %v444 = vrsqrt.pop %v380
    %v445 = vrsqrt.pop %v381
    %v446 = vrsqrt.pop %v382
    %v447 = vrsqrt.pop %v383
    %v448 = vrsqrt.pop %v384
    %v449 = vrsqrt.pop %v385
    %v450 = vmul.f32 %v195, %v386
    %v451 = vmul.f32 %v197, %v387
    %v452 = vmul.f32 %v199, %v388
    %v453 = vmul.f32 %v201, %v389
    %v454 = vmul.f32 %v203, %v390
    %v455 = vmul.f32 %v205, %v391
    %v456 = vmul.f32 %v207, %v392
    %v457 = vmul.f32 %v209, %v393
    %v458 = vmul.f32 %v211, %v394
    %v459 = vmul.f32 %v213, %v395
    %v460 = vmul.f32 %v215, %v396
    %v461 = vmul.f32 %v217, %v397
    %v462 = vmul.f32 %v219, %v398
    %v463 = vmul.f32 %v221, %v399
    %v464 = vmul.f32 %v223, %v400
    %v465 = vmul.f32 %v225, %v401
    %v466 = vmul.f32 %v227, %v402
    %v467 = vmul.f32 %v229, %v403
    %v468 = vmul.f32 %v231, %v404
    %v469 = vmul.f32 %v233, %v405
    %v470 = vmul.f32 %v235, %v406
    %v471 = vmul.f32 %v237, %v407
    %v472 = vmul.f32 %v239, %v408
    %v473 = vmul.f32 %v241, %v409
    %v474 = vmul.f32 %v243, %v410
    %v475 = vmul.f32 %v245, %v411
    %v476 = vmul.f32 %v247, %v412
    %v477 = vmul.f32 %v249, %v413
    %v478 = vmul.f32 %v251, %v414
    %v479 = vmul.f32 %v253, %v415
    %v480 = vmul.f32 %v255, %v416
    %v481 = vmul.f32 %v257, %v417
    %v482 = vmul.f32 %v259, %v418
    %v483 = vmul.f32 %v261, %v419
    %v484 = vmul.f32 %v263, %v420
    %v485 = vmul.f32 %v265, %v421
    %v486 = vmul.f32 %v267, %v422
    %v487 = vmul.f32 %v269, %v423
    %v488 = vmul.f32 %v271, %v424
    %v489 = vmul.f32 %v273, %v425
    %v490 = vmul.f32 %v275, %v426
    %v491 = vmul.f32 %v277, %v427
    %v492 = vmul.f32 %v279, %v428
    %v493 = vmul.f32 %v281, %v429
    %v494 = vmul.f32 %v283, %v430
    %v495 = vmul.f32 %v285, %v431
    %v496 = vmul.f32 %v287, %v432
    %v497 = vmul.f32 %v289, %v433
    %v498 = vmul.f32 %v291, %v434
    %v499 = vmul.f32 %v293, %v435
    %v500 = vmul.f32 %v295, %v436
    %v501 = vmul.f32 %v297, %v437
    %v502 = vmul.f32 %v299, %v438
    %v503 = vmul.f32 %v301, %v439
    %v504 = vmul.f32 %v303, %v440
    %v505 = vmul.f32 %v305, %v441
    %v506 = vmul.f32 %v307, %v442
    %v507 = vmul.f32 %v309, %v443
    %v508 = vmul.f32 %v311, %v444
    %v509 = vmul.f32 %v313, %v445
    %v510 = vmul.f32 %v315, %v446
    %v511 = vmul.f32 %v317, %v447
    %v512 = vmul.f32 %v319, %v448
    %v513 = vmul.f32 %v321, %v449
    %v514 = vpack.c.bf16 %v49, %v48
    %v515 = vpack.c.bf16 %v51, %v50
    %v516 = vpack.c.bf16 %v53, %v52
    %v517 = vpack.c.bf16 %v55, %v54
    %v518 = vpack.c.bf16 %v57, %v56
    %v519 = vpack.c.bf16 %v59, %v58
    %v520 = vpack.c.bf16 %v61, %v60
    %v521 = vpack.c.bf16 %v63, %v62
    %v522 = vpack.c.bf16 %v65, %v64
    %v523 = vpack.c.bf16 %v67, %v66
    %v524 = vpack.c.bf16 %v69, %v68
    %v525 = vpack.c.bf16 %v71, %v70
    %v526 = vpack.c.bf16 %v73, %v72
    %v527 = vpack.c.bf16 %v75, %v74
    %v528 = vpack.c.bf16 %v77, %v76
    %v529 = vpack.c.bf16 %v79, %v78
    %v530 = vpack.c.bf16 %v81, %v80
    %v531 = vpack.c.bf16 %v83, %v82
    %v532 = vpack.c.bf16 %v85, %v84
    %v533 = vpack.c.bf16 %v87, %v86
    %v534 = vpack.c.bf16 %v89, %v88
    %v535 = vpack.c.bf16 %v91, %v90
    %v536 = vpack.c.bf16 %v93, %v92
    %v537 = vpack.c.bf16 %v95, %v94
    %v538 = vpack.c.bf16 %v97, %v96
    %v539 = vpack.c.bf16 %v99, %v98
    %v540 = vpack.c.bf16 %v101, %v100
    %v541 = vpack.c.bf16 %v103, %v102
    %v542 = vpack.c.bf16 %v105, %v104
    %v543 = vpack.c.bf16 %v107, %v106
    %v544 = vpack.c.bf16 %v109, %v108
    %v545 = vpack.c.bf16 %v111, %v110
    %v562 = vunpack.c.l.b16 %v112
    %v563 = vunpack.c.l.b16 %v113
    %v564 = vunpack.c.l.b16 %v114
    %v565 = vunpack.c.l.b16 %v115
    %v566 = vunpack.c.l.b16 %v116
    %v567 = vunpack.c.l.b16 %v117
    %v568 = vunpack.c.l.b16 %v118
    %v569 = vunpack.c.l.b16 %v119
    %v570 = vunpack.c.l.b16 %v120
    %v571 = vunpack.c.l.b16 %v121
    %v572 = vunpack.c.l.b16 %v122
    %v573 = vunpack.c.l.b16 %v123
    %v574 = vunpack.c.l.b16 %v124
    %v575 = vunpack.c.l.b16 %v125
    %v576 = vunpack.c.l.b16 %v126
    %v577 = vunpack.c.l.b16 %v127
    %v578 = vpack.c.b16 %v563, %v562
    %v579 = vpack.c.b16 %v565, %v564
    %v580 = vpack.c.b16 %v567, %v566
    %v581 = vpack.c.b16 %v569, %v568
    %v582 = vpack.c.b16 %v571, %v570
    %v583 = vpack.c.b16 %v573, %v572
    %v584 = vpack.c.b16 %v575, %v574
    %v585 = vpack.c.b16 %v577, %v576
    %594 = vmatprep.subr.bf16.mxu0 0
    %595 = vmatpush1.bf16.msra.mxu0 %v585
    %596 = vmatprep.subr.bf16.mxu0 0
    %597 = vmatpush1.bf16.msra.mxu0 %v584
    %598 = vmatprep.subr.bf16.mxu0 0
    %599 = vmatpush1.bf16.msra.mxu0 %v583
    %600 = vmatprep.subr.bf16.mxu0 0
    %601 = vmatpush1.bf16.msra.mxu0 %v582
    %602 = vmatprep.subr.bf16.mxu0 0
    %603 = vmatpush1.bf16.msra.mxu0 %v581
    %604 = vmatprep.subr.bf16.mxu0 0
    %605 = vmatpush1.bf16.msra.mxu0 %v580
    %606 = vmatprep.subr.bf16.mxu0 0
    %607 = vmatpush1.bf16.msra.mxu0 %v579
    %608 = vmatprep.subr.bf16.mxu0 0
    %609 = vmatpush1.bf16.msra.mxu0 %v578
    %610 = vmatprep.subr.bf16.mxu0 0
    %611 = vmatpush2.bf16.msra.mxu0 0
    %612 = vmatprep.subr.bf16.mxu0 0
    %613 = vmatpush2.bf16.msra.mxu0 0
    %614 = vmatprep.subr.bf16.mxu0 0
    %615 = vmatpush2.bf16.msra.mxu0 0
    %616 = vmatprep.subr.bf16.mxu0 0
    %617 = vmatpush2.bf16.msra.mxu0 0
    %618 = vmatprep.subr.bf16.mxu0 0
    %619 = vmatpush2.bf16.msra.mxu0 0
    %620 = vmatprep.subr.bf16.mxu0 0
    %621 = vmatpush2.bf16.msra.mxu0 0
    %622 = vmatprep.subr.bf16.mxu0 0
    %623 = vmatpush2.bf16.msra.mxu0 0
    %624 = vmatprep.subr.bf16.mxu0 0
    %625 = vmatpush2.bf16.msra.mxu0 0
    %626 = vmatprep.mubr.bf16.mxu0 0
    %627 = vmatmul.mubr.bf16.gmra.mxu0 %v514
    %v628 = vpop.f32.mrf.mxu0
    %v629 = vadd.f32 0.0, %v628
    %v630 = vpop.f32.mrf.mxu0
    %v631 = vpop.f32.mrf.mxu0
    %v632 = vadd.f32 0.0, %v631
    %v633 = vpop.f32.mrf.mxu0
    %634 = vmatprep.mubr.bf16.mxu0 0
    %635 = vmatmul.mubr.bf16.gmra.mxu0 %v515
    %v636 = vpop.f32.mrf.mxu0
    %v637 = vadd.f32 0.0, %v636
    %v638 = vpop.f32.mrf.mxu0
    %v639 = vpop.f32.mrf.mxu0
    %v640 = vadd.f32 0.0, %v639
    %v641 = vpop.f32.mrf.mxu0
    %642 = vmatprep.mubr.bf16.mxu0 0
    %643 = vmatmul.mubr.bf16.gmra.mxu0 %v516
    %v644 = vpop.f32.mrf.mxu0
    %v645 = vadd.f32 0.0, %v644
    %v646 = vpop.f32.mrf.mxu0
    %v647 = vpop.f32.mrf.mxu0
    %v648 = vadd.f32 0.0, %v647
    %v649 = vpop.f32.mrf.mxu0
    %650 = vmatprep.mubr.bf16.mxu0 0
    %651 = vmatmul.mubr.bf16.gmra.mxu0 %v517
    %v652 = vpop.f32.mrf.mxu0
    %v653 = vadd.f32 0.0, %v652
    %v654 = vpop.f32.mrf.mxu0
    %v655 = vpop.f32.mrf.mxu0
    %v656 = vadd.f32 0.0, %v655
    %v657 = vpop.f32.mrf.mxu0
    %658 = vmatprep.mubr.bf16.mxu0 0
    %659 = vmatmul.mubr.bf16.gmra.mxu0 %v518
    %v660 = vpop.f32.mrf.mxu0
    %v661 = vadd.f32 0.0, %v660
    %v662 = vpop.f32.mrf.mxu0
    %v663 = vpop.f32.mrf.mxu0
    %v664 = vadd.f32 0.0, %v663
    %v665 = vpop.f32.mrf.mxu0
    %666 = vmatprep.mubr.bf16.mxu0 0
    %667 = vmatmul.mubr.bf16.gmra.mxu0 %v519
    %v668 = vpop.f32.mrf.mxu0
    %v669 = vadd.f32 0.0, %v668
    %v670 = vpop.f32.mrf.mxu0
    %v671 = vpop.f32.mrf.mxu0
    %v672 = vadd.f32 0.0, %v671
    %v673 = vpop.f32.mrf.mxu0
    %674 = vmatprep.mubr.bf16.mxu0 0
    %675 = vmatmul.mubr.bf16.gmra.mxu0 %v520
    %v676 = vpop.f32.mrf.mxu0
    %v677 = vadd.f32 0.0, %v676
    %v678 = vpop.f32.mrf.mxu0
    %v679 = vpop.f32.mrf.mxu0
    %v680 = vadd.f32 0.0, %v679
    %v681 = vpop.f32.mrf.mxu0
    %682 = vmatprep.mubr.bf16.mxu0 0
    %683 = vmatmul.mubr.bf16.gmra.mxu0 %v521
    %v684 = vpop.f32.mrf.mxu0
    %v685 = vadd.f32 0.0, %v684
    %v686 = vpop.f32.mrf.mxu0
    %v687 = vpop.f32.mrf.mxu0
    %v688 = vadd.f32 0.0, %v687
    %v689 = vpop.f32.mrf.mxu0
    %690 = vmatprep.mubr.bf16.mxu0 0
    %691 = vmatmul.mubr.bf16.gmra.mxu0 %v522
    %v692 = vpop.f32.mrf.mxu0
    %v693 = vadd.f32 0.0, %v692
    %v694 = vpop.f32.mrf.mxu0
    %v695 = vpop.f32.mrf.mxu0
    %v696 = vadd.f32 0.0, %v695
    %v697 = vpop.f32.mrf.mxu0
    %698 = vmatprep.mubr.bf16.mxu0 0
    %699 = vmatmul.mubr.bf16.gmra.mxu0 %v523
    %v700 = vpop.f32.mrf.mxu0
    %v701 = vadd.f32 0.0, %v700
    %v702 = vpop.f32.mrf.mxu0
    %v703 = vpop.f32.mrf.mxu0
    %v704 = vadd.f32 0.0, %v703
    %v705 = vpop.f32.mrf.mxu0
    %706 = vmatprep.mubr.bf16.mxu0 0
    %707 = vmatmul.mubr.bf16.gmra.mxu0 %v524
    %v708 = vpop.f32.mrf.mxu0
    %v709 = vadd.f32 0.0, %v708
    %v710 = vpop.f32.mrf.mxu0
    %v711 = vpop.f32.mrf.mxu0
    %v712 = vadd.f32 0.0, %v711
    %v713 = vpop.f32.mrf.mxu0
    %714 = vmatprep.mubr.bf16.mxu0 0
    %715 = vmatmul.mubr.bf16.gmra.mxu0 %v525
    %v716 = vpop.f32.mrf.mxu0
    %v717 = vadd.f32 0.0, %v716
    %v718 = vpop.f32.mrf.mxu0
    %v719 = vpop.f32.mrf.mxu0
    %v720 = vadd.f32 0.0, %v719
    %v721 = vpop.f32.mrf.mxu0
    %722 = vmatprep.mubr.bf16.mxu0 0
    %723 = vmatmul.mubr.bf16.gmra.mxu0 %v526
    %v724 = vpop.f32.mrf.mxu0
    %v725 = vadd.f32 0.0, %v724
    %v726 = vpop.f32.mrf.mxu0
    %v727 = vpop.f32.mrf.mxu0
    %v728 = vadd.f32 0.0, %v727
    %v729 = vpop.f32.mrf.mxu0
    %730 = vmatprep.mubr.bf16.mxu0 0
    %731 = vmatmul.mubr.bf16.gmra.mxu0 %v527
    %v732 = vpop.f32.mrf.mxu0
    %v733 = vadd.f32 0.0, %v732
    %v734 = vpop.f32.mrf.mxu0
    %v735 = vpop.f32.mrf.mxu0
    %v736 = vadd.f32 0.0, %v735
    %v737 = vpop.f32.mrf.mxu0
    %738 = vmatprep.mubr.bf16.mxu0 0
    %739 = vmatmul.mubr.bf16.gmra.mxu0 %v528
    %v740 = vpop.f32.mrf.mxu0
    %v741 = vadd.f32 0.0, %v740
    %v742 = vpop.f32.mrf.mxu0
    %v743 = vpop.f32.mrf.mxu0
    %v744 = vadd.f32 0.0, %v743
    %v745 = vpop.f32.mrf.mxu0
    %746 = vmatprep.mubr.bf16.mxu0 0
    %747 = vmatmul.mubr.bf16.gmra.mxu0 %v529
    %v748 = vpop.f32.mrf.mxu0
    %v749 = vadd.f32 0.0, %v748
    %v750 = vpop.f32.mrf.mxu0
    %v751 = vpop.f32.mrf.mxu0
    %v752 = vadd.f32 0.0, %v751
    %v753 = vpop.f32.mrf.mxu0
    %754 = vmatprep.mubr.bf16.mxu0 0
    %755 = vmatmul.mubr.bf16.gmra.mxu0 %v530
    %v756 = vpop.f32.mrf.mxu0
    %v757 = vadd.f32 0.0, %v756
    %v758 = vpop.f32.mrf.mxu0
    %v759 = vpop.f32.mrf.mxu0
    %v760 = vadd.f32 0.0, %v759
    %v761 = vpop.f32.mrf.mxu0
    %762 = vmatprep.mubr.bf16.mxu0 0
    %763 = vmatmul.mubr.bf16.gmra.mxu0 %v531
    %v764 = vpop.f32.mrf.mxu0
    %v765 = vadd.f32 0.0, %v764
    %v766 = vpop.f32.mrf.mxu0
    %v767 = vpop.f32.mrf.mxu0
    %v768 = vadd.f32 0.0, %v767
    %v769 = vpop.f32.mrf.mxu0
    %770 = vmatprep.mubr.bf16.mxu0 0
    %771 = vmatmul.mubr.bf16.gmra.mxu0 %v532
    %v772 = vpop.f32.mrf.mxu0
    %v773 = vadd.f32 0.0, %v772
    %v774 = vpop.f32.mrf.mxu0
    %v775 = vpop.f32.mrf.mxu0
    %v776 = vadd.f32 0.0, %v775
    %v777 = vpop.f32.mrf.mxu0
    %778 = vmatprep.mubr.bf16.mxu0 0
    %779 = vmatmul.mubr.bf16.gmra.mxu0 %v533
    %v780 = vpop.f32.mrf.mxu0
    %v781 = vadd.f32 0.0, %v780
    %v782 = vpop.f32.mrf.mxu0
    %v783 = vpop.f32.mrf.mxu0
    %v784 = vadd.f32 0.0, %v783
    %v785 = vpop.f32.mrf.mxu0
    %786 = vmatprep.mubr.bf16.mxu0 0
    %787 = vmatmul.mubr.bf16.gmra.mxu0 %v534
    %v788 = vpop.f32.mrf.mxu0
    %v789 = vadd.f32 0.0, %v788
    %v790 = vpop.f32.mrf.mxu0
    %v791 = vpop.f32.mrf.mxu0
    %v792 = vadd.f32 0.0, %v791
    %v793 = vpop.f32.mrf.mxu0
    %794 = vmatprep.mubr.bf16.mxu0 0
    %795 = vmatmul.mubr.bf16.gmra.mxu0 %v535
    %v796 = vpop.f32.mrf.mxu0
    %v797 = vadd.f32 0.0, %v796
    %v798 = vpop.f32.mrf.mxu0
    %v799 = vpop.f32.mrf.mxu0
    %v800 = vadd.f32 0.0, %v799
    %v801 = vpop.f32.mrf.mxu0
    %802 = vmatprep.mubr.bf16.mxu0 0
    %803 = vmatmul.mubr.bf16.gmra.mxu0 %v536
    %v804 = vpop.f32.mrf.mxu0
    %v805 = vadd.f32 0.0, %v804
    %v806 = vpop.f32.mrf.mxu0
    %v807 = vpop.f32.mrf.mxu0
    %v808 = vadd.f32 0.0, %v807
    %v809 = vpop.f32.mrf.mxu0
    %810 = vmatprep.mubr.bf16.mxu0 0
    %811 = vmatmul.mubr.bf16.gmra.mxu0 %v537
    %v812 = vpop.f32.mrf.mxu0
    %v813 = vadd.f32 0.0, %v812
    %v814 = vpop.f32.mrf.mxu0
    %v815 = vpop.f32.mrf.mxu0
    %v816 = vadd.f32 0.0, %v815
    %v817 = vpop.f32.mrf.mxu0
    %818 = vmatprep.mubr.bf16.mxu0 0
    %819 = vmatmul.mubr.bf16.gmra.mxu0 %v538
    %v820 = vpop.f32.mrf.mxu0
    %v821 = vadd.f32 0.0, %v820
    %v822 = vpop.f32.mrf.mxu0
    %v823 = vpop.f32.mrf.mxu0
    %v824 = vadd.f32 0.0, %v823
    %v825 = vpop.f32.mrf.mxu0
    %826 = vmatprep.mubr.bf16.mxu0 0
    %827 = vmatmul.mubr.bf16.gmra.mxu0 %v539
    %v828 = vpop.f32.mrf.mxu0
    %v829 = vadd.f32 0.0, %v828
    %v830 = vpop.f32.mrf.mxu0
    %v831 = vpop.f32.mrf.mxu0
    %v832 = vadd.f32 0.0, %v831
    %v833 = vpop.f32.mrf.mxu0
    %834 = vmatprep.mubr.bf16.mxu0 0
    %835 = vmatmul.mubr.bf16.gmra.mxu0 %v540
    %v836 = vpop.f32.mrf.mxu0
    %v837 = vadd.f32 0.0, %v836
    %v838 = vpop.f32.mrf.mxu0
    %v839 = vpop.f32.mrf.mxu0
    %v840 = vadd.f32 0.0, %v839
    %v841 = vpop.f32.mrf.mxu0
    %842 = vmatprep.mubr.bf16.mxu0 0
    %843 = vmatmul.mubr.bf16.gmra.mxu0 %v541
    %v844 = vpop.f32.mrf.mxu0
    %v845 = vadd.f32 0.0, %v844
    %v846 = vpop.f32.mrf.mxu0
    %v847 = vpop.f32.mrf.mxu0
    %v848 = vadd.f32 0.0, %v847
    %v849 = vpop.f32.mrf.mxu0
    %850 = vmatprep.mubr.bf16.mxu0 0
    %851 = vmatmul.mubr.bf16.gmra.mxu0 %v542
    %v852 = vpop.f32.mrf.mxu0
    %v853 = vadd.f32 0.0, %v852
    %v854 = vpop.f32.mrf.mxu0
    %v855 = vpop.f32.mrf.mxu0
    %v856 = vadd.f32 0.0, %v855
    %v857 = vpop.f32.mrf.mxu0
    %858 = vmatprep.mubr.bf16.mxu0 0
    %859 = vmatmul.mubr.bf16.gmra.mxu0 %v543
    %v860 = vpop.f32.mrf.mxu0
    %v861 = vadd.f32 0.0, %v860
    %v862 = vpop.f32.mrf.mxu0
    %v863 = vpop.f32.mrf.mxu0
    %v864 = vadd.f32 0.0, %v863
    %v865 = vpop.f32.mrf.mxu0
    %866 = vmatprep.mubr.bf16.mxu0 0
    %867 = vmatmul.mubr.bf16.gmra.mxu0 %v544
    %v868 = vpop.f32.mrf.mxu0
    %v869 = vadd.f32 0.0, %v868
    %v870 = vpop.f32.mrf.mxu0
    %v871 = vpop.f32.mrf.mxu0
    %v872 = vadd.f32 0.0, %v871
    %v873 = vpop.f32.mrf.mxu0
    %874 = vmatprep.mubr.bf16.mxu0 0
    %875 = vmatmul.mubr.bf16.gmra.mxu0 %v545
    %v876 = vpop.f32.mrf.mxu0
    %v877 = vadd.f32 0.0, %v876
    %v878 = vpop.f32.mrf.mxu0
    %v879 = vpop.f32.mrf.mxu0
    %v880 = vadd.f32 0.0, %v879
    %v881 = vpop.f32.mrf.mxu0
    %882 = vdwg.mxu0
    %v883 = vmul.f32 %v629, %v629
    %v884 = vmul.f32 %v632, %v632
    %v885 = vmul.f32 %v637, %v637
    %v886 = vmul.f32 %v640, %v640
    %v887 = vmul.f32 %v645, %v645
    %v888 = vmul.f32 %v648, %v648
    %v889 = vmul.f32 %v653, %v653
    %v890 = vmul.f32 %v656, %v656
    %v891 = vmul.f32 %v661, %v661
    %v892 = vmul.f32 %v664, %v664
    %v893 = vmul.f32 %v669, %v669
    %v894 = vmul.f32 %v672, %v672
    %v895 = vmul.f32 %v677, %v677
    %v896 = vmul.f32 %v680, %v680
    %v897 = vmul.f32 %v685, %v685
    %v898 = vmul.f32 %v688, %v688
    %v899 = vmul.f32 %v693, %v693
    %v900 = vmul.f32 %v696, %v696
    %v901 = vmul.f32 %v701, %v701
    %v902 = vmul.f32 %v704, %v704
    %v903 = vmul.f32 %v709, %v709
    %v904 = vmul.f32 %v712, %v712
    %v905 = vmul.f32 %v717, %v717
    %v906 = vmul.f32 %v720, %v720
    %v907 = vmul.f32 %v725, %v725
    %v908 = vmul.f32 %v728, %v728
    %v909 = vmul.f32 %v733, %v733
    %v910 = vmul.f32 %v736, %v736
    %v911 = vmul.f32 %v741, %v741
    %v912 = vmul.f32 %v744, %v744
    %v913 = vmul.f32 %v749, %v749
    %v914 = vmul.f32 %v752, %v752
    %v915 = vmul.f32 %v757, %v757
    %v916 = vmul.f32 %v760, %v760
    %v917 = vmul.f32 %v765, %v765
    %v918 = vmul.f32 %v768, %v768
    %v919 = vmul.f32 %v773, %v773
    %v920 = vmul.f32 %v776, %v776
    %v921 = vmul.f32 %v781, %v781
    %v922 = vmul.f32 %v784, %v784
    %v923 = vmul.f32 %v789, %v789
    %v924 = vmul.f32 %v792, %v792
    %v925 = vmul.f32 %v797, %v797
    %v926 = vmul.f32 %v800, %v800
    %v927 = vmul.f32 %v805, %v805
    %v928 = vmul.f32 %v808, %v808
    %v929 = vmul.f32 %v813, %v813
    %v930 = vmul.f32 %v816, %v816
    %v931 = vmul.f32 %v821, %v821
    %v932 = vmul.f32 %v824, %v824
    %v933 = vmul.f32 %v829, %v829
    %v934 = vmul.f32 %v832, %v832
    %v935 = vmul.f32 %v837, %v837
    %v936 = vmul.f32 %v840, %v840
    %v937 = vmul.f32 %v845, %v845
    %v938 = vmul.f32 %v848, %v848
    %v939 = vmul.f32 %v853, %v853
    %v940 = vmul.f32 %v856, %v856
    %v941 = vmul.f32 %v861, %v861
    %v942 = vmul.f32 %v864, %v864
    %v943 = vmul.f32 %v869, %v869
    %v944 = vmul.f32 %v872, %v872
    %v945 = vmul.f32 %v877, %v877
    %v946 = vmul.f32 %v880, %v880
    %947 = vadd.xlane.f32.xlu0 %v883
    %v948 = vpop.xlane.xlu0 %947
    %949 = vadd.xlane.f32.xlu0 %v884
    %v950 = vpop.xlane.xlu0 %949
    %951 = vadd.xlane.f32.xlu0 %v885
    %v952 = vpop.xlane.xlu0 %951
    %953 = vadd.xlane.f32.xlu0 %v886
    %v954 = vpop.xlane.xlu0 %953
    %955 = vadd.xlane.f32.xlu0 %v887
    %v956 = vpop.xlane.xlu0 %955
    %957 = vadd.xlane.f32.xlu0 %v888
    %v958 = vpop.xlane.xlu0 %957
    %959 = vadd.xlane.f32.xlu0 %v889
    %v960 = vpop.xlane.xlu0 %959
    %961 = vadd.xlane.f32.xlu0 %v890
    %v962 = vpop.xlane.xlu0 %961
    %963 = vadd.xlane.f32.xlu0 %v891
    %v964 = vpop.xlane.xlu0 %963
    %965 = vadd.xlane.f32.xlu0 %v892
    %v966 = vpop.xlane.xlu0 %965
    %967 = vadd.xlane.f32.xlu0 %v893
    %v968 = vpop.xlane.xlu0 %967
    %969 = vadd.xlane.f32.xlu0 %v894
    %v970 = vpop.xlane.xlu0 %969
    %971 = vadd.xlane.f32.xlu0 %v895
    %v972 = vpop.xlane.xlu0 %971
    %973 = vadd.xlane.f32.xlu0 %v896
    %v974 = vpop.xlane.xlu0 %973
    %975 = vadd.xlane.f32.xlu0 %v897
    %v976 = vpop.xlane.xlu0 %975
    %977 = vadd.xlane.f32.xlu0 %v898
    %v978 = vpop.xlane.xlu0 %977
    %979 = vadd.xlane.f32.xlu0 %v899
    %v980 = vpop.xlane.xlu0 %979
    %981 = vadd.xlane.f32.xlu0 %v900
    %v982 = vpop.xlane.xlu0 %981
    %983 = vadd.xlane.f32.xlu0 %v901
    %v984 = vpop.xlane.xlu0 %983
    %985 = vadd.xlane.f32.xlu0 %v902
    %v986 = vpop.xlane.xlu0 %985
    %987 = vadd.xlane.f32.xlu0 %v903
    %v988 = vpop.xlane.xlu0 %987
    %989 = vadd.xlane.f32.xlu0 %v904
    %v990 = vpop.xlane.xlu0 %989
    %991 = vadd.xlane.f32.xlu0 %v905
    %v992 = vpop.xlane.xlu0 %991
    %993 = vadd.xlane.f32.xlu0 %v906
    %v994 = vpop.xlane.xlu0 %993
    %995 = vadd.xlane.f32.xlu0 %v907
    %v996 = vpop.xlane.xlu0 %995
    %997 = vadd.xlane.f32.xlu0 %v908
    %v998 = vpop.xlane.xlu0 %997
    %999 = vadd.xlane.f32.xlu0 %v909
    %v1000 = vpop.xlane.xlu0 %999
    %1001 = vadd.xlane.f32.xlu0 %v910
    %v1002 = vpop.xlane.xlu0 %1001
    %1003 = vadd.xlane.f32.xlu0 %v911
    %v1004 = vpop.xlane.xlu0 %1003
    %1005 = vadd.xlane.f32.xlu0 %v912
    %v1006 = vpop.xlane.xlu0 %1005
    %1007 = vadd.xlane.f32.xlu0 %v913
    %v1008 = vpop.xlane.xlu0 %1007
    %1009 = vadd.xlane.f32.xlu0 %v914
    %v1010 = vpop.xlane.xlu0 %1009
    %1011 = vadd.xlane.f32.xlu0 %v915
    %v1012 = vpop.xlane.xlu0 %1011
    %1013 = vadd.xlane.f32.xlu0 %v916
    %v1014 = vpop.xlane.xlu0 %1013
    %1015 = vadd.xlane.f32.xlu0 %v917
    %v1016 = vpop.xlane.xlu0 %1015
    %1017 = vadd.xlane.f32.xlu0 %v918
    %v1018 = vpop.xlane.xlu0 %1017
    %1019 = vadd.xlane.f32.xlu0 %v919
    %v1020 = vpop.xlane.xlu0 %1019
    %1021 = vadd.xlane.f32.xlu0 %v920
    %v1022 = vpop.xlane.xlu0 %1021
    %1023 = vadd.xlane.f32.xlu0 %v921
    %v1024 = vpop.xlane.xlu0 %1023
    %1025 = vadd.xlane.f32.xlu0 %v922
    %v1026 = vpop.xlane.xlu0 %1025
    %1027 = vadd.xlane.f32.xlu0 %v923
    %v1028 = vpop.xlane.xlu0 %1027
    %1029 = vadd.xlane.f32.xlu0 %v924
    %v1030 = vpop.xlane.xlu0 %1029
    %1031 = vadd.xlane.f32.xlu0 %v925
    %v1032 = vpop.xlane.xlu0 %1031
    %1033 = vadd.xlane.f32.xlu0 %v926
    %v1034 = vpop.xlane.xlu0 %1033
    %1035 = vadd.xlane.f32.xlu0 %v927
    %v1036 = vpop.xlane.xlu0 %1035
    %1037 = vadd.xlane.f32.xlu0 %v928
    %v1038 = vpop.xlane.xlu0 %1037
    %1039 = vadd.xlane.f32.xlu0 %v929
    %v1040 = vpop.xlane.xlu0 %1039
    %1041 = vadd.xlane.f32.xlu0 %v930
    %v1042 = vpop.xlane.xlu0 %1041
    %1043 = vadd.xlane.f32.xlu0 %v931
    %v1044 = vpop.xlane.xlu0 %1043
    %1045 = vadd.xlane.f32.xlu0 %v932
    %v1046 = vpop.xlane.xlu0 %1045
    %1047 = vadd.xlane.f32.xlu0 %v933
    %v1048 = vpop.xlane.xlu0 %1047
    %1049 = vadd.xlane.f32.xlu0 %v934
    %v1050 = vpop.xlane.xlu0 %1049
    %1051 = vadd.xlane.f32.xlu0 %v935
    %v1052 = vpop.xlane.xlu0 %1051
    %1053 = vadd.xlane.f32.xlu0 %v936
    %v1054 = vpop.xlane.xlu0 %1053
    %1055 = vadd.xlane.f32.xlu0 %v937
    %v1056 = vpop.xlane.xlu0 %1055
    %1057 = vadd.xlane.f32.xlu0 %v938
    %v1058 = vpop.xlane.xlu0 %1057
    %1059 = vadd.xlane.f32.xlu0 %v939
    %v1060 = vpop.xlane.xlu0 %1059
    %1061 = vadd.xlane.f32.xlu0 %v940
    %v1062 = vpop.xlane.xlu0 %1061
    %1063 = vadd.xlane.f32.xlu0 %v941
    %v1064 = vpop.xlane.xlu0 %1063
    %1065 = vadd.xlane.f32.xlu0 %v942
    %v1066 = vpop.xlane.xlu0 %1065
    %1067 = vadd.xlane.f32.xlu0 %v943
    %v1068 = vpop.xlane.xlu0 %1067
    %1069 = vadd.xlane.f32.xlu0 %v944
    %v1070 = vpop.xlane.xlu0 %1069
    %1071 = vadd.xlane.f32.xlu0 %v945
    %v1072 = vpop.xlane.xlu0 %1071
    %1073 = vadd.xlane.f32.xlu0 %v946
    %v1074 = vpop.xlane.xlu0 %1073
    %v1075 = vadd.f32 %v948, 1e-30
    %v1076 = vadd.f32 %v950, 1e-30
    %v1077 = vadd.f32 %v952, 1e-30
    %v1078 = vadd.f32 %v954, 1e-30
    %v1079 = vadd.f32 %v956, 1e-30
    %v1080 = vadd.f32 %v958, 1e-30
    %v1081 = vadd.f32 %v960, 1e-30
    %v1082 = vadd.f32 %v962, 1e-30
    %v1083 = vadd.f32 %v964, 1e-30
    %v1084 = vadd.f32 %v966, 1e-30
    %v1085 = vadd.f32 %v968, 1e-30
    %v1086 = vadd.f32 %v970, 1e-30
    %v1087 = vadd.f32 %v972, 1e-30
    %v1088 = vadd.f32 %v974, 1e-30
    %v1089 = vadd.f32 %v976, 1e-30
    %v1090 = vadd.f32 %v978, 1e-30
    %v1091 = vadd.f32 %v980, 1e-30
    %v1092 = vadd.f32 %v982, 1e-30
    %v1093 = vadd.f32 %v984, 1e-30
    %v1094 = vadd.f32 %v986, 1e-30
    %v1095 = vadd.f32 %v988, 1e-30
    %v1096 = vadd.f32 %v990, 1e-30
    %v1097 = vadd.f32 %v992, 1e-30
    %v1098 = vadd.f32 %v994, 1e-30
    %v1099 = vadd.f32 %v996, 1e-30
    %v1100 = vadd.f32 %v998, 1e-30
    %v1101 = vadd.f32 %v1000, 1e-30
    %v1102 = vadd.f32 %v1002, 1e-30
    %v1103 = vadd.f32 %v1004, 1e-30
    %v1104 = vadd.f32 %v1006, 1e-30
    %v1105 = vadd.f32 %v1008, 1e-30
    %v1106 = vadd.f32 %v1010, 1e-30
    %v1107 = vadd.f32 %v1012, 1e-30
    %v1108 = vadd.f32 %v1014, 1e-30
    %v1109 = vadd.f32 %v1016, 1e-30
    %v1110 = vadd.f32 %v1018, 1e-30
    %v1111 = vadd.f32 %v1020, 1e-30
    %v1112 = vadd.f32 %v1022, 1e-30
    %v1113 = vadd.f32 %v1024, 1e-30
    %v1114 = vadd.f32 %v1026, 1e-30
    %v1115 = vadd.f32 %v1028, 1e-30
    %v1116 = vadd.f32 %v1030, 1e-30
    %v1117 = vadd.f32 %v1032, 1e-30
    %v1118 = vadd.f32 %v1034, 1e-30
    %v1119 = vadd.f32 %v1036, 1e-30
    %v1120 = vadd.f32 %v1038, 1e-30
    %v1121 = vadd.f32 %v1040, 1e-30
    %v1122 = vadd.f32 %v1042, 1e-30
    %v1123 = vadd.f32 %v1044, 1e-30
    %v1124 = vadd.f32 %v1046, 1e-30
    %v1125 = vadd.f32 %v1048, 1e-30
    %v1126 = vadd.f32 %v1050, 1e-30
    %v1127 = vadd.f32 %v1052, 1e-30
    %v1128 = vadd.f32 %v1054, 1e-30
    %v1129 = vadd.f32 %v1056, 1e-30
    %v1130 = vadd.f32 %v1058, 1e-30
    %v1131 = vadd.f32 %v1060, 1e-30
    %v1132 = vadd.f32 %v1062, 1e-30
    %v1133 = vadd.f32 %v1064, 1e-30
    %v1134 = vadd.f32 %v1066, 1e-30
    %v1135 = vadd.f32 %v1068, 1e-30
    %v1136 = vadd.f32 %v1070, 1e-30
    %v1137 = vadd.f32 %v1072, 1e-30
    %v1138 = vadd.f32 %v1074, 1e-30
    %v1139 = vrsqrt.pop %v1075
    %v1140 = vrsqrt.pop %v1076
    %v1141 = vrsqrt.pop %v1077
    %v1142 = vrsqrt.pop %v1078
    %v1143 = vrsqrt.pop %v1079
    %v1144 = vrsqrt.pop %v1080
    %v1145 = vrsqrt.pop %v1081
    %v1146 = vrsqrt.pop %v1082
    %v1147 = vrsqrt.pop %v1083
    %v1148 = vrsqrt.pop %v1084
    %v1149 = vrsqrt.pop %v1085
    %v1150 = vrsqrt.pop %v1086
    %v1151 = vrsqrt.pop %v1087
    %v1152 = vrsqrt.pop %v1088
    %v1153 = vrsqrt.pop %v1089
    %v1154 = vrsqrt.pop %v1090
    %v1155 = vrsqrt.pop %v1091
    %v1156 = vrsqrt.pop %v1092
    %v1157 = vrsqrt.pop %v1093
    %v1158 = vrsqrt.pop %v1094
    %v1159 = vrsqrt.pop %v1095
    %v1160 = vrsqrt.pop %v1096
    %v1161 = vrsqrt.pop %v1097
    %v1162 = vrsqrt.pop %v1098
    %v1163 = vrsqrt.pop %v1099
    %v1164 = vrsqrt.pop %v1100
    %v1165 = vrsqrt.pop %v1101
    %v1166 = vrsqrt.pop %v1102
    %v1167 = vrsqrt.pop %v1103
    %v1168 = vrsqrt.pop %v1104
    %v1169 = vrsqrt.pop %v1105
    %v1170 = vrsqrt.pop %v1106
    %v1171 = vrsqrt.pop %v1107
    %v1172 = vrsqrt.pop %v1108
    %v1173 = vrsqrt.pop %v1109
    %v1174 = vrsqrt.pop %v1110
    %v1175 = vrsqrt.pop %v1111
    %v1176 = vrsqrt.pop %v1112
    %v1177 = vrsqrt.pop %v1113
    %v1178 = vrsqrt.pop %v1114
    %v1179 = vrsqrt.pop %v1115
    %v1180 = vrsqrt.pop %v1116
    %v1181 = vrsqrt.pop %v1117
    %v1182 = vrsqrt.pop %v1118
    %v1183 = vrsqrt.pop %v1119
    %v1184 = vrsqrt.pop %v1120
    %v1185 = vrsqrt.pop %v1121
    %v1186 = vrsqrt.pop %v1122
    %v1187 = vrsqrt.pop %v1123
    %v1188 = vrsqrt.pop %v1124
    %v1189 = vrsqrt.pop %v1125
    %v1190 = vrsqrt.pop %v1126
    %v1191 = vrsqrt.pop %v1127
    %v1192 = vrsqrt.pop %v1128
    %v1193 = vrsqrt.pop %v1129
    %v1194 = vrsqrt.pop %v1130
    %v1195 = vrsqrt.pop %v1131
    %v1196 = vrsqrt.pop %v1132
    %v1197 = vrsqrt.pop %v1133
    %v1198 = vrsqrt.pop %v1134
    %v1199 = vrsqrt.pop %v1135
    %v1200 = vrsqrt.pop %v1136
    %v1201 = vrsqrt.pop %v1137
    %v1202 = vrsqrt.pop %v1138
    %v1203 = vmul.f32 %v948, %v1139
    %v1204 = vmul.f32 %v950, %v1140
    %v1205 = vmul.f32 %v952, %v1141
    %v1206 = vmul.f32 %v954, %v1142
    %v1207 = vmul.f32 %v956, %v1143
    %v1208 = vmul.f32 %v958, %v1144
    %v1209 = vmul.f32 %v960, %v1145
    %v1210 = vmul.f32 %v962, %v1146
    %v1211 = vmul.f32 %v964, %v1147
    %v1212 = vmul.f32 %v966, %v1148
    %v1213 = vmul.f32 %v968, %v1149
    %v1214 = vmul.f32 %v970, %v1150
    %v1215 = vmul.f32 %v972, %v1151
    %v1216 = vmul.f32 %v974, %v1152
    %v1217 = vmul.f32 %v976, %v1153
    %v1218 = vmul.f32 %v978, %v1154
    %v1219 = vmul.f32 %v980, %v1155
    %v1220 = vmul.f32 %v982, %v1156
    %v1221 = vmul.f32 %v984, %v1157
    %v1222 = vmul.f32 %v986, %v1158
    %v1223 = vmul.f32 %v988, %v1159
    %v1224 = vmul.f32 %v990, %v1160
    %v1225 = vmul.f32 %v992, %v1161
    %v1226 = vmul.f32 %v994, %v1162
    %v1227 = vmul.f32 %v996, %v1163
    %v1228 = vmul.f32 %v998, %v1164
    %v1229 = vmul.f32 %v1000, %v1165
    %v1230 = vmul.f32 %v1002, %v1166
    %v1231 = vmul.f32 %v1004, %v1167
    %v1232 = vmul.f32 %v1006, %v1168
    %v1233 = vmul.f32 %v1008, %v1169
    %v1234 = vmul.f32 %v1010, %v1170
    %v1235 = vmul.f32 %v1012, %v1171
    %v1236 = vmul.f32 %v1014, %v1172
    %v1237 = vmul.f32 %v1016, %v1173
    %v1238 = vmul.f32 %v1018, %v1174
    %v1239 = vmul.f32 %v1020, %v1175
    %v1240 = vmul.f32 %v1022, %v1176
    %v1241 = vmul.f32 %v1024, %v1177
    %v1242 = vmul.f32 %v1026, %v1178
    %v1243 = vmul.f32 %v1028, %v1179
    %v1244 = vmul.f32 %v1030, %v1180
    %v1245 = vmul.f32 %v1032, %v1181
    %v1246 = vmul.f32 %v1034, %v1182
    %v1247 = vmul.f32 %v1036, %v1183
    %v1248 = vmul.f32 %v1038, %v1184
    %v1249 = vmul.f32 %v1040, %v1185
    %v1250 = vmul.f32 %v1042, %v1186
    %v1251 = vmul.f32 %v1044, %v1187
    %v1252 = vmul.f32 %v1046, %v1188
    %v1253 = vmul.f32 %v1048, %v1189
    %v1254 = vmul.f32 %v1050, %v1190
    %v1255 = vmul.f32 %v1052, %v1191
    %v1256 = vmul.f32 %v1054, %v1192
    %v1257 = vmul.f32 %v1056, %v1193
    %v1258 = vmul.f32 %v1058, %v1194
    %v1259 = vmul.f32 %v1060, %v1195
    %v1260 = vmul.f32 %v1062, %v1196
    %v1261 = vmul.f32 %v1064, %v1197
    %v1262 = vmul.f32 %v1066, %v1198
    %v1263 = vmul.f32 %v1068, %v1199
    %v1264 = vmul.f32 %v1070, %v1200
    %v1265 = vmul.f32 %v1072, %v1201
    %v1266 = vmul.f32 %v1074, %v1202
    %v1267 = vmul.f32 %v1203, %v386
    %v1268 = vmul.f32 %v1204, %v387
    %v1269 = vmul.f32 %v1205, %v388
    %v1270 = vmul.f32 %v1206, %v389
    %v1271 = vmul.f32 %v1207, %v390
    %v1272 = vmul.f32 %v1208, %v391
    %v1273 = vmul.f32 %v1209, %v392
    %v1274 = vmul.f32 %v1210, %v393
    %v1275 = vmul.f32 %v1211, %v394
    %v1276 = vmul.f32 %v1212, %v395
    %v1277 = vmul.f32 %v1213, %v396
    %v1278 = vmul.f32 %v1214, %v397
    %v1279 = vmul.f32 %v1215, %v398
    %v1280 = vmul.f32 %v1216, %v399
    %v1281 = vmul.f32 %v1217, %v400
    %v1282 = vmul.f32 %v1218, %v401
    %v1283 = vmul.f32 %v1219, %v402
    %v1284 = vmul.f32 %v1220, %v403
    %v1285 = vmul.f32 %v1221, %v404
    %v1286 = vmul.f32 %v1222, %v405
    %v1287 = vmul.f32 %v1223, %v406
    %v1288 = vmul.f32 %v1224, %v407
    %v1289 = vmul.f32 %v1225, %v408
    %v1290 = vmul.f32 %v1226, %v409
    %v1291 = vmul.f32 %v1227, %v410
    %v1292 = vmul.f32 %v1228, %v411
    %v1293 = vmul.f32 %v1229, %v412
    %v1294 = vmul.f32 %v1230, %v413
    %v1295 = vmul.f32 %v1231, %v414
    %v1296 = vmul.f32 %v1232, %v415
    %v1297 = vmul.f32 %v1233, %v416
    %v1298 = vmul.f32 %v1234, %v417
    %v1299 = vmul.f32 %v1235, %v418
    %v1300 = vmul.f32 %v1236, %v419
    %v1301 = vmul.f32 %v1237, %v420
    %v1302 = vmul.f32 %v1238, %v421
    %v1303 = vmul.f32 %v1239, %v422
    %v1304 = vmul.f32 %v1240, %v423
    %v1305 = vmul.f32 %v1241, %v424
    %v1306 = vmul.f32 %v1242, %v425
    %v1307 = vmul.f32 %v1243, %v426
    %v1308 = vmul.f32 %v1244, %v427
    %v1309 = vmul.f32 %v1245, %v428
    %v1310 = vmul.f32 %v1246, %v429
    %v1311 = vmul.f32 %v1247, %v430
    %v1312 = vmul.f32 %v1248, %v431
    %v1313 = vmul.f32 %v1249, %v432
    %v1314 = vmul.f32 %v1250, %v433
    %v1315 = vmul.f32 %v1251, %v434
    %v1316 = vmul.f32 %v1252, %v435
    %v1317 = vmul.f32 %v1253, %v436
    %v1318 = vmul.f32 %v1254, %v437
    %v1319 = vmul.f32 %v1255, %v438
    %v1320 = vmul.f32 %v1256, %v439
    %v1321 = vmul.f32 %v1257, %v440
    %v1322 = vmul.f32 %v1258, %v441
    %v1323 = vmul.f32 %v1259, %v442
    %v1324 = vmul.f32 %v1260, %v443
    %v1325 = vmul.f32 %v1261, %v444
    %v1326 = vmul.f32 %v1262, %v445
    %v1327 = vmul.f32 %v1263, %v446
    %v1328 = vmul.f32 %v1264, %v447
    %v1329 = vmul.f32 %v1265, %v448
    %v1330 = vmul.f32 %v1266, %v449
    %v1331 = vmax.f32 %v450, -0.9999999
    %v1332 = vmax.f32 %v451, -0.9999999
    %v1333 = vmax.f32 %v452, -0.9999999
    %v1334 = vmax.f32 %v453, -0.9999999
    %v1335 = vmax.f32 %v454, -0.9999999
    %v1336 = vmax.f32 %v455, -0.9999999
    %v1337 = vmax.f32 %v456, -0.9999999
    %v1338 = vmax.f32 %v457, -0.9999999
    %v1339 = vmax.f32 %v458, -0.9999999
    %v1340 = vmax.f32 %v459, -0.9999999
    %v1341 = vmax.f32 %v460, -0.9999999
    %v1342 = vmax.f32 %v461, -0.9999999
    %v1343 = vmax.f32 %v462, -0.9999999
    %v1344 = vmax.f32 %v463, -0.9999999
    %v1345 = vmax.f32 %v464, -0.9999999
    %v1346 = vmax.f32 %v465, -0.9999999
    %v1347 = vmax.f32 %v466, -0.9999999
    %v1348 = vmax.f32 %v467, -0.9999999
    %v1349 = vmax.f32 %v468, -0.9999999
    %v1350 = vmax.f32 %v469, -0.9999999
    %v1351 = vmax.f32 %v470, -0.9999999
    %v1352 = vmax.f32 %v471, -0.9999999
    %v1353 = vmax.f32 %v472, -0.9999999
    %v1354 = vmax.f32 %v473, -0.9999999
    %v1355 = vmax.f32 %v474, -0.9999999
    %v1356 = vmax.f32 %v475, -0.9999999
    %v1357 = vmax.f32 %v476, -0.9999999
    %v1358 = vmax.f32 %v477, -0.9999999
    %v1359 = vmax.f32 %v478, -0.9999999
    %v1360 = vmax.f32 %v479, -0.9999999
    %v1361 = vmax.f32 %v480, -0.9999999
    %v1362 = vmax.f32 %v481, -0.9999999
    %v1363 = vmax.f32 %v482, -0.9999999
    %v1364 = vmax.f32 %v483, -0.9999999
    %v1365 = vmax.f32 %v484, -0.9999999
    %v1366 = vmax.f32 %v485, -0.9999999
    %v1367 = vmax.f32 %v486, -0.9999999
    %v1368 = vmax.f32 %v487, -0.9999999
    %v1369 = vmax.f32 %v488, -0.9999999
    %v1370 = vmax.f32 %v489, -0.9999999
    %v1371 = vmax.f32 %v490, -0.9999999
    %v1372 = vmax.f32 %v491, -0.9999999
    %v1373 = vmax.f32 %v492, -0.9999999
    %v1374 = vmax.f32 %v493, -0.9999999
    %v1375 = vmax.f32 %v494, -0.9999999
    %v1376 = vmax.f32 %v495, -0.9999999
    %v1377 = vmax.f32 %v496, -0.9999999
    %v1378 = vmax.f32 %v497, -0.9999999
    %v1379 = vmax.f32 %v498, -0.9999999
    %v1380 = vmax.f32 %v499, -0.9999999
    %v1381 = vmax.f32 %v500, -0.9999999
    %v1382 = vmax.f32 %v501, -0.9999999
    %v1383 = vmax.f32 %v502, -0.9999999
    %v1384 = vmax.f32 %v503, -0.9999999
    %v1385 = vmax.f32 %v504, -0.9999999
    %v1386 = vmax.f32 %v505, -0.9999999
    %v1387 = vmax.f32 %v506, -0.9999999
    %v1388 = vmax.f32 %v507, -0.9999999
    %v1389 = vmax.f32 %v508, -0.9999999
    %v1390 = vmax.f32 %v509, -0.9999999
    %v1391 = vmax.f32 %v510, -0.9999999
    %v1392 = vmax.f32 %v511, -0.9999999
    %v1393 = vmax.f32 %v512, -0.9999999
    %v1394 = vmax.f32 %v513, -0.9999999
    %v1395 = vmin.f32 %v1331, 0.9999999
    %v1396 = vmin.f32 %v1332, 0.9999999
    %v1397 = vmin.f32 %v1333, 0.9999999
    %v1398 = vmin.f32 %v1334, 0.9999999
    %v1399 = vmin.f32 %v1335, 0.9999999
    %v1400 = vmin.f32 %v1336, 0.9999999
    %v1401 = vmin.f32 %v1337, 0.9999999
    %v1402 = vmin.f32 %v1338, 0.9999999
    %v1403 = vmin.f32 %v1339, 0.9999999
    %v1404 = vmin.f32 %v1340, 0.9999999
    %v1405 = vmin.f32 %v1341, 0.9999999
    %v1406 = vmin.f32 %v1342, 0.9999999
    %v1407 = vmin.f32 %v1343, 0.9999999
    %v1408 = vmin.f32 %v1344, 0.9999999
    %v1409 = vmin.f32 %v1345, 0.9999999
    %v1410 = vmin.f32 %v1346, 0.9999999
    %v1411 = vmin.f32 %v1347, 0.9999999
    %v1412 = vmin.f32 %v1348, 0.9999999
    %v1413 = vmin.f32 %v1349, 0.9999999
    %v1414 = vmin.f32 %v1350, 0.9999999
    %v1415 = vmin.f32 %v1351, 0.9999999
    %v1416 = vmin.f32 %v1352, 0.9999999
    %v1417 = vmin.f32 %v1353, 0.9999999
    %v1418 = vmin.f32 %v1354, 0.9999999
    %v1419 = vmin.f32 %v1355, 0.9999999
    %v1420 = vmin.f32 %v1356, 0.9999999
    %v1421 = vmin.f32 %v1357, 0.9999999
    %v1422 = vmin.f32 %v1358, 0.9999999
    %v1423 = vmin.f32 %v1359, 0.9999999
    %v1424 = vmin.f32 %v1360, 0.9999999
    %v1425 = vmin.f32 %v1361, 0.9999999
    %v1426 = vmin.f32 %v1362, 0.9999999
    %v1427 = vmin.f32 %v1363, 0.9999999
    %v1428 = vmin.f32 %v1364, 0.9999999
    %v1429 = vmin.f32 %v1365, 0.9999999
    %v1430 = vmin.f32 %v1366, 0.9999999
    %v1431 = vmin.f32 %v1367, 0.9999999
    %v1432 = vmin.f32 %v1368, 0.9999999
    %v1433 = vmin.f32 %v1369, 0.9999999
    %v1434 = vmin.f32 %v1370, 0.9999999
    %v1435 = vmin.f32 %v1371, 0.9999999
    %v1436 = vmin.f32 %v1372, 0.9999999
    %v1437 = vmin.f32 %v1373, 0.9999999
    %v1438 = vmin.f32 %v1374, 0.9999999
    %v1439 = vmin.f32 %v1375, 0.9999999
    %v1440 = vmin.f32 %v1376, 0.9999999
    %v1441 = vmin.f32 %v1377, 0.9999999
    %v1442 = vmin.f32 %v1378, 0.9999999
    %v1443 = vmin.f32 %v1379, 0.9999999
    %v1444 = vmin.f32 %v1380, 0.9999999
    %v1445 = vmin.f32 %v1381, 0.9999999
    %v1446 = vmin.f32 %v1382, 0.9999999
    %v1447 = vmin.f32 %v1383, 0.9999999
    %v1448 = vmin.f32 %v1384, 0.9999999
    %v1449 = vmin.f32 %v1385, 0.9999999
    %v1450 = vmin.f32 %v1386, 0.9999999
    %v1451 = vmin.f32 %v1387, 0.9999999
    %v1452 = vmin.f32 %v1388, 0.9999999
    %v1453 = vmin.f32 %v1389, 0.9999999
    %v1454 = vmin.f32 %v1390, 0.9999999
    %v1455 = vmin.f32 %v1391, 0.9999999
    %v1456 = vmin.f32 %v1392, 0.9999999
    %v1457 = vmin.f32 %v1393, 0.9999999
    %v1458 = vmin.f32 %v1394, 0.9999999
    %v1459 = vadd.f32 %v1395, 1.0
    %v1460 = vlog2.pop %v1459
    %v1461 = vmul.f32 %v1460, 0.6931472
    %v1462 = vmul.f32 -0.5, %v1395
    %v1463 = vadd.f32 %v1462, 1.0
    %v1464 = vmul.f32 %v1463, %v1395
    %v1465 = vand.u32 2147483647, %v1395
    %vm1466 = vcmp.lt.f32.partialorder %v1465, 0.0004427343
    %v1467 = vsel %vm1466, %v1464, %v1461
    %v1468 = vadd.f32 %v1396, 1.0
    %v1469 = vlog2.pop %v1468
    %v1470 = vmul.f32 %v1469, 0.6931472
    %v1471 = vmul.f32 -0.5, %v1396
    %v1472 = vadd.f32 %v1471, 1.0
    %v1473 = vmul.f32 %v1472, %v1396
    %v1474 = vand.u32 2147483647, %v1396
    %vm1475 = vcmp.lt.f32.partialorder %v1474, 0.0004427343
    %v1476 = vsel %vm1475, %v1473, %v1470
    %v1477 = vadd.f32 %v1397, 1.0
    %v1478 = vlog2.pop %v1477
    %v1479 = vmul.f32 %v1478, 0.6931472
    %v1480 = vmul.f32 -0.5, %v1397
    %v1481 = vadd.f32 %v1480, 1.0
    %v1482 = vmul.f32 %v1481, %v1397
    %v1483 = vand.u32 2147483647, %v1397
    %vm1484 = vcmp.lt.f32.partialorder %v1483, 0.0004427343
    %v1485 = vsel %vm1484, %v1482, %v1479
    %v1486 = vadd.f32 %v1398, 1.0
    %v1487 = vlog2.pop %v1486
    %v1488 = vmul.f32 %v1487, 0.6931472
    %v1489 = vmul.f32 -0.5, %v1398
    %v1490 = vadd.f32 %v1489, 1.0
    %v1491 = vmul.f32 %v1490, %v1398
    %v1492 = vand.u32 2147483647, %v1398
    %vm1493 = vcmp.lt.f32.partialorder %v1492, 0.0004427343
    %v1494 = vsel %vm1493, %v1491, %v1488
    %v1495 = vadd.f32 %v1399, 1.0
    %v1496 = vlog2.pop %v1495
    %v1497 = vmul.f32 %v1496, 0.6931472
    %v1498 = vmul.f32 -0.5, %v1399
    %v1499 = vadd.f32 %v1498, 1.0
    %v1500 = vmul.f32 %v1499, %v1399
    %v1501 = vand.u32 2147483647, %v1399
    %vm1502 = vcmp.lt.f32.partialorder %v1501, 0.0004427343
    %v1503 = vsel %vm1502, %v1500, %v1497
    %v1504 = vadd.f32 %v1400, 1.0
    %v1505 = vlog2.pop %v1504
    %v1506 = vmul.f32 %v1505, 0.6931472
    %v1507 = vmul.f32 -0.5, %v1400
    %v1508 = vadd.f32 %v1507, 1.0
    %v1509 = vmul.f32 %v1508, %v1400
    %v1510 = vand.u32 2147483647, %v1400
    %vm1511 = vcmp.lt.f32.partialorder %v1510, 0.0004427343
    %v1512 = vsel %vm1511, %v1509, %v1506
    %v1513 = vadd.f32 %v1401, 1.0
    %v1514 = vlog2.pop %v1513
    %v1515 = vmul.f32 %v1514, 0.6931472
    %v1516 = vmul.f32 -0.5, %v1401
    %v1517 = vadd.f32 %v1516, 1.0
    %v1518 = vmul.f32 %v1517, %v1401
    %v1519 = vand.u32 2147483647, %v1401
    %vm1520 = vcmp.lt.f32.partialorder %v1519, 0.0004427343
    %v1521 = vsel %vm1520, %v1518, %v1515
    %v1522 = vadd.f32 %v1402, 1.0
    %v1523 = vlog2.pop %v1522
    %v1524 = vmul.f32 %v1523, 0.6931472
    %v1525 = vmul.f32 -0.5, %v1402
    %v1526 = vadd.f32 %v1525, 1.0
    %v1527 = vmul.f32 %v1526, %v1402
    %v1528 = vand.u32 2147483647, %v1402
    %vm1529 = vcmp.lt.f32.partialorder %v1528, 0.0004427343
    %v1530 = vsel %vm1529, %v1527, %v1524
    %v1531 = vadd.f32 %v1403, 1.0
    %v1532 = vlog2.pop %v1531
    %v1533 = vmul.f32 %v1532, 0.6931472
    %v1534 = vmul.f32 -0.5, %v1403
    %v1535 = vadd.f32 %v1534, 1.0
    %v1536 = vmul.f32 %v1535, %v1403
    %v1537 = vand.u32 2147483647, %v1403
    %vm1538 = vcmp.lt.f32.partialorder %v1537, 0.0004427343
    %v1539 = vsel %vm1538, %v1536, %v1533
    %v1540 = vadd.f32 %v1404, 1.0
    %v1541 = vlog2.pop %v1540
    %v1542 = vmul.f32 %v1541, 0.6931472
    %v1543 = vmul.f32 -0.5, %v1404
    %v1544 = vadd.f32 %v1543, 1.0
    %v1545 = vmul.f32 %v1544, %v1404
    %v1546 = vand.u32 2147483647, %v1404
    %vm1547 = vcmp.lt.f32.partialorder %v1546, 0.0004427343
    %v1548 = vsel %vm1547, %v1545, %v1542
    %v1549 = vadd.f32 %v1405, 1.0
    %v1550 = vlog2.pop %v1549
    %v1551 = vmul.f32 %v1550, 0.6931472
    %v1552 = vmul.f32 -0.5, %v1405
    %v1553 = vadd.f32 %v1552, 1.0
    %v1554 = vmul.f32 %v1553, %v1405
    %v1555 = vand.u32 2147483647, %v1405
    %vm1556 = vcmp.lt.f32.partialorder %v1555, 0.0004427343
    %v1557 = vsel %vm1556, %v1554, %v1551
    %v1558 = vadd.f32 %v1406, 1.0
    %v1559 = vlog2.pop %v1558
    %v1560 = vmul.f32 %v1559, 0.6931472
    %v1561 = vmul.f32 -0.5, %v1406
    %v1562 = vadd.f32 %v1561, 1.0
    %v1563 = vmul.f32 %v1562, %v1406
    %v1564 = vand.u32 2147483647, %v1406
    %vm1565 = vcmp.lt.f32.partialorder %v1564, 0.0004427343
    %v1566 = vsel %vm1565, %v1563, %v1560
    %v1567 = vadd.f32 %v1407, 1.0
    %v1568 = vlog2.pop %v1567
    %v1569 = vmul.f32 %v1568, 0.6931472
    %v1570 = vmul.f32 -0.5, %v1407
    %v1571 = vadd.f32 %v1570, 1.0
    %v1572 = vmul.f32 %v1571, %v1407
    %v1573 = vand.u32 2147483647, %v1407
    %vm1574 = vcmp.lt.f32.partialorder %v1573, 0.0004427343
    %v1575 = vsel %vm1574, %v1572, %v1569
    %v1576 = vadd.f32 %v1408, 1.0
    %v1577 = vlog2.pop %v1576
    %v1578 = vmul.f32 %v1577, 0.6931472
    %v1579 = vmul.f32 -0.5, %v1408
    %v1580 = vadd.f32 %v1579, 1.0
    %v1581 = vmul.f32 %v1580, %v1408
    %v1582 = vand.u32 2147483647, %v1408
    %vm1583 = vcmp.lt.f32.partialorder %v1582, 0.0004427343
    %v1584 = vsel %vm1583, %v1581, %v1578
    %v1585 = vadd.f32 %v1409, 1.0
    %v1586 = vlog2.pop %v1585
    %v1587 = vmul.f32 %v1586, 0.6931472
    %v1588 = vmul.f32 -0.5, %v1409
    %v1589 = vadd.f32 %v1588, 1.0
    %v1590 = vmul.f32 %v1589, %v1409
    %v1591 = vand.u32 2147483647, %v1409
    %vm1592 = vcmp.lt.f32.partialorder %v1591, 0.0004427343
    %v1593 = vsel %vm1592, %v1590, %v1587
    %v1594 = vadd.f32 %v1410, 1.0
    %v1595 = vlog2.pop %v1594
    %v1596 = vmul.f32 %v1595, 0.6931472
    %v1597 = vmul.f32 -0.5, %v1410
    %v1598 = vadd.f32 %v1597, 1.0
    %v1599 = vmul.f32 %v1598, %v1410
    %v1600 = vand.u32 2147483647, %v1410
    %vm1601 = vcmp.lt.f32.partialorder %v1600, 0.0004427343
    %v1602 = vsel %vm1601, %v1599, %v1596
    %v1603 = vadd.f32 %v1411, 1.0
    %v1604 = vlog2.pop %v1603
    %v1605 = vmul.f32 %v1604, 0.6931472
    %v1606 = vmul.f32 -0.5, %v1411
    %v1607 = vadd.f32 %v1606, 1.0
    %v1608 = vmul.f32 %v1607, %v1411
    %v1609 = vand.u32 2147483647, %v1411
    %vm1610 = vcmp.lt.f32.partialorder %v1609, 0.0004427343
    %v1611 = vsel %vm1610, %v1608, %v1605
    %v1612 = vadd.f32 %v1412, 1.0
    %v1613 = vlog2.pop %v1612
    %v1614 = vmul.f32 %v1613, 0.6931472
    %v1615 = vmul.f32 -0.5, %v1412
    %v1616 = vadd.f32 %v1615, 1.0
    %v1617 = vmul.f32 %v1616, %v1412
    %v1618 = vand.u32 2147483647, %v1412
    %vm1619 = vcmp.lt.f32.partialorder %v1618, 0.0004427343
    %v1620 = vsel %vm1619, %v1617, %v1614
    %v1621 = vadd.f32 %v1413, 1.0
    %v1622 = vlog2.pop %v1621
    %v1623 = vmul.f32 %v1622, 0.6931472
    %v1624 = vmul.f32 -0.5, %v1413
    %v1625 = vadd.f32 %v1624, 1.0
    %v1626 = vmul.f32 %v1625, %v1413
    %v1627 = vand.u32 2147483647, %v1413
    %vm1628 = vcmp.lt.f32.partialorder %v1627, 0.0004427343
    %v1629 = vsel %vm1628, %v1626, %v1623
    %v1630 = vadd.f32 %v1414, 1.0
    %v1631 = vlog2.pop %v1630
    %v1632 = vmul.f32 %v1631, 0.6931472
    %v1633 = vmul.f32 -0.5, %v1414
    %v1634 = vadd.f32 %v1633, 1.0
    %v1635 = vmul.f32 %v1634, %v1414
    %v1636 = vand.u32 2147483647, %v1414
    %vm1637 = vcmp.lt.f32.partialorder %v1636, 0.0004427343
    %v1638 = vsel %vm1637, %v1635, %v1632
    %v1639 = vadd.f32 %v1415, 1.0
    %v1640 = vlog2.pop %v1639
    %v1641 = vmul.f32 %v1640, 0.6931472
    %v1642 = vmul.f32 -0.5, %v1415
    %v1643 = vadd.f32 %v1642, 1.0
    %v1644 = vmul.f32 %v1643, %v1415
    %v1645 = vand.u32 2147483647, %v1415
    %vm1646 = vcmp.lt.f32.partialorder %v1645, 0.0004427343
    %v1647 = vsel %vm1646, %v1644, %v1641
    %v1648 = vadd.f32 %v1416, 1.0
    %v1649 = vlog2.pop %v1648
    %v1650 = vmul.f32 %v1649, 0.6931472
    %v1651 = vmul.f32 -0.5, %v1416
    %v1652 = vadd.f32 %v1651, 1.0
    %v1653 = vmul.f32 %v1652, %v1416
    %v1654 = vand.u32 2147483647, %v1416
    %vm1655 = vcmp.lt.f32.partialorder %v1654, 0.0004427343
    %v1656 = vsel %vm1655, %v1653, %v1650
    %v1657 = vadd.f32 %v1417, 1.0
    %v1658 = vlog2.pop %v1657
    %v1659 = vmul.f32 %v1658, 0.6931472
    %v1660 = vmul.f32 -0.5, %v1417
    %v1661 = vadd.f32 %v1660, 1.0
    %v1662 = vmul.f32 %v1661, %v1417
    %v1663 = vand.u32 2147483647, %v1417
    %vm1664 = vcmp.lt.f32.partialorder %v1663, 0.0004427343
    %v1665 = vsel %vm1664, %v1662, %v1659
    %v1666 = vadd.f32 %v1418, 1.0
    %v1667 = vlog2.pop %v1666
    %v1668 = vmul.f32 %v1667, 0.6931472
    %v1669 = vmul.f32 -0.5, %v1418
    %v1670 = vadd.f32 %v1669, 1.0
    %v1671 = vmul.f32 %v1670, %v1418
    %v1672 = vand.u32 2147483647, %v1418
    %vm1673 = vcmp.lt.f32.partialorder %v1672, 0.0004427343
    %v1674 = vsel %vm1673, %v1671, %v1668
    %v1675 = vadd.f32 %v1419, 1.0
    %v1676 = vlog2.pop %v1675
    %v1677 = vmul.f32 %v1676, 0.6931472
    %v1678 = vmul.f32 -0.5, %v1419
    %v1679 = vadd.f32 %v1678, 1.0
    %v1680 = vmul.f32 %v1679, %v1419
    %v1681 = vand.u32 2147483647, %v1419
    %vm1682 = vcmp.lt.f32.partialorder %v1681, 0.0004427343
    %v1683 = vsel %vm1682, %v1680, %v1677
    %v1684 = vadd.f32 %v1420, 1.0
    %v1685 = vlog2.pop %v1684
    %v1686 = vmul.f32 %v1685, 0.6931472
    %v1687 = vmul.f32 -0.5, %v1420
    %v1688 = vadd.f32 %v1687, 1.0
    %v1689 = vmul.f32 %v1688, %v1420
    %v1690 = vand.u32 2147483647, %v1420
    %vm1691 = vcmp.lt.f32.partialorder %v1690, 0.0004427343
    %v1692 = vsel %vm1691, %v1689, %v1686
    %v1693 = vadd.f32 %v1421, 1.0
    %v1694 = vlog2.pop %v1693
    %v1695 = vmul.f32 %v1694, 0.6931472
    %v1696 = vmul.f32 -0.5, %v1421
    %v1697 = vadd.f32 %v1696, 1.0
    %v1698 = vmul.f32 %v1697, %v1421
    %v1699 = vand.u32 2147483647, %v1421
    %vm1700 = vcmp.lt.f32.partialorder %v1699, 0.0004427343
    %v1701 = vsel %vm1700, %v1698, %v1695
    %v1702 = vadd.f32 %v1422, 1.0
    %v1703 = vlog2.pop %v1702
    %v1704 = vmul.f32 %v1703, 0.6931472
    %v1705 = vmul.f32 -0.5, %v1422
    %v1706 = vadd.f32 %v1705, 1.0
    %v1707 = vmul.f32 %v1706, %v1422
    %v1708 = vand.u32 2147483647, %v1422
    %vm1709 = vcmp.lt.f32.partialorder %v1708, 0.0004427343
    %v1710 = vsel %vm1709, %v1707, %v1704
    %v1711 = vadd.f32 %v1423, 1.0
    %v1712 = vlog2.pop %v1711
    %v1713 = vmul.f32 %v1712, 0.6931472
    %v1714 = vmul.f32 -0.5, %v1423
    %v1715 = vadd.f32 %v1714, 1.0
    %v1716 = vmul.f32 %v1715, %v1423
    %v1717 = vand.u32 2147483647, %v1423
    %vm1718 = vcmp.lt.f32.partialorder %v1717, 0.0004427343
    %v1719 = vsel %vm1718, %v1716, %v1713
    %v1720 = vadd.f32 %v1424, 1.0
    %v1721 = vlog2.pop %v1720
    %v1722 = vmul.f32 %v1721, 0.6931472
    %v1723 = vmul.f32 -0.5, %v1424
    %v1724 = vadd.f32 %v1723, 1.0
    %v1725 = vmul.f32 %v1724, %v1424
    %v1726 = vand.u32 2147483647, %v1424
    %vm1727 = vcmp.lt.f32.partialorder %v1726, 0.0004427343
    %v1728 = vsel %vm1727, %v1725, %v1722
    %v1729 = vadd.f32 %v1425, 1.0
    %v1730 = vlog2.pop %v1729
    %v1731 = vmul.f32 %v1730, 0.6931472
    %v1732 = vmul.f32 -0.5, %v1425
    %v1733 = vadd.f32 %v1732, 1.0
    %v1734 = vmul.f32 %v1733, %v1425
    %v1735 = vand.u32 2147483647, %v1425
    %vm1736 = vcmp.lt.f32.partialorder %v1735, 0.0004427343
    %v1737 = vsel %vm1736, %v1734, %v1731
    %v1738 = vadd.f32 %v1426, 1.0
    %v1739 = vlog2.pop %v1738
    %v1740 = vmul.f32 %v1739, 0.6931472
    %v1741 = vmul.f32 -0.5, %v1426
    %v1742 = vadd.f32 %v1741, 1.0
    %v1743 = vmul.f32 %v1742, %v1426
    %v1744 = vand.u32 2147483647, %v1426
    %vm1745 = vcmp.lt.f32.partialorder %v1744, 0.0004427343
    %v1746 = vsel %vm1745, %v1743, %v1740
    %v1747 = vadd.f32 %v1427, 1.0
    %v1748 = vlog2.pop %v1747
    %v1749 = vmul.f32 %v1748, 0.6931472
    %v1750 = vmul.f32 -0.5, %v1427
    %v1751 = vadd.f32 %v1750, 1.0
    %v1752 = vmul.f32 %v1751, %v1427
    %v1753 = vand.u32 2147483647, %v1427
    %vm1754 = vcmp.lt.f32.partialorder %v1753, 0.0004427343
    %v1755 = vsel %vm1754, %v1752, %v1749
    %v1756 = vadd.f32 %v1428, 1.0
    %v1757 = vlog2.pop %v1756
    %v1758 = vmul.f32 %v1757, 0.6931472
    %v1759 = vmul.f32 -0.5, %v1428
    %v1760 = vadd.f32 %v1759, 1.0
    %v1761 = vmul.f32 %v1760, %v1428
    %v1762 = vand.u32 2147483647, %v1428
    %vm1763 = vcmp.lt.f32.partialorder %v1762, 0.0004427343
    %v1764 = vsel %vm1763, %v1761, %v1758
    %v1765 = vadd.f32 %v1429, 1.0
    %v1766 = vlog2.pop %v1765
    %v1767 = vmul.f32 %v1766, 0.6931472
    %v1768 = vmul.f32 -0.5, %v1429
    %v1769 = vadd.f32 %v1768, 1.0
    %v1770 = vmul.f32 %v1769, %v1429
    %v1771 = vand.u32 2147483647, %v1429
    %vm1772 = vcmp.lt.f32.partialorder %v1771, 0.0004427343
    %v1773 = vsel %vm1772, %v1770, %v1767
    %v1774 = vadd.f32 %v1430, 1.0
    %v1775 = vlog2.pop %v1774
    %v1776 = vmul.f32 %v1775, 0.6931472
    %v1777 = vmul.f32 -0.5, %v1430
    %v1778 = vadd.f32 %v1777, 1.0
    %v1779 = vmul.f32 %v1778, %v1430
    %v1780 = vand.u32 2147483647, %v1430
    %vm1781 = vcmp.lt.f32.partialorder %v1780, 0.0004427343
    %v1782 = vsel %vm1781, %v1779, %v1776
    %v1783 = vadd.f32 %v1431, 1.0
    %v1784 = vlog2.pop %v1783
    %v1785 = vmul.f32 %v1784, 0.6931472
    %v1786 = vmul.f32 -0.5, %v1431
    %v1787 = vadd.f32 %v1786, 1.0
    %v1788 = vmul.f32 %v1787, %v1431
    %v1789 = vand.u32 2147483647, %v1431
    %vm1790 = vcmp.lt.f32.partialorder %v1789, 0.0004427343
    %v1791 = vsel %vm1790, %v1788, %v1785
    %v1792 = vadd.f32 %v1432, 1.0
    %v1793 = vlog2.pop %v1792
    %v1794 = vmul.f32 %v1793, 0.6931472
    %v1795 = vmul.f32 -0.5, %v1432
    %v1796 = vadd.f32 %v1795, 1.0
    %v1797 = vmul.f32 %v1796, %v1432
    %v1798 = vand.u32 2147483647, %v1432
    %vm1799 = vcmp.lt.f32.partialorder %v1798, 0.0004427343
    %v1800 = vsel %vm1799, %v1797, %v1794
    %v1801 = vadd.f32 %v1433, 1.0
    %v1802 = vlog2.pop %v1801
    %v1803 = vmul.f32 %v1802, 0.6931472
    %v1804 = vmul.f32 -0.5, %v1433
    %v1805 = vadd.f32 %v1804, 1.0
    %v1806 = vmul.f32 %v1805, %v1433
    %v1807 = vand.u32 2147483647, %v1433
    %vm1808 = vcmp.lt.f32.partialorder %v1807, 0.0004427343
    %v1809 = vsel %vm1808, %v1806, %v1803
    %v1810 = vadd.f32 %v1434, 1.0
    %v1811 = vlog2.pop %v1810
    %v1812 = vmul.f32 %v1811, 0.6931472
    %v1813 = vmul.f32 -0.5, %v1434
    %v1814 = vadd.f32 %v1813, 1.0
    %v1815 = vmul.f32 %v1814, %v1434
    %v1816 = vand.u32 2147483647, %v1434
    %vm1817 = vcmp.lt.f32.partialorder %v1816, 0.0004427343
    %v1818 = vsel %vm1817, %v1815, %v1812
    %v1819 = vadd.f32 %v1435, 1.0
    %v1820 = vlog2.pop %v1819
    %v1821 = vmul.f32 %v1820, 0.6931472
    %v1822 = vmul.f32 -0.5, %v1435
    %v1823 = vadd.f32 %v1822, 1.0
    %v1824 = vmul.f32 %v1823, %v1435
    %v1825 = vand.u32 2147483647, %v1435
    %vm1826 = vcmp.lt.f32.partialorder %v1825, 0.0004427343
    %v1827 = vsel %vm1826, %v1824, %v1821
    %v1828 = vadd.f32 %v1436, 1.0
    %v1829 = vlog2.pop %v1828
    %v1830 = vmul.f32 %v1829, 0.6931472
    %v1831 = vmul.f32 -0.5, %v1436
    %v1832 = vadd.f32 %v1831, 1.0
    %v1833 = vmul.f32 %v1832, %v1436
    %v1834 = vand.u32 2147483647, %v1436
    %vm1835 = vcmp.lt.f32.partialorder %v1834, 0.0004427343
    %v1836 = vsel %vm1835, %v1833, %v1830
    %v1837 = vadd.f32 %v1437, 1.0
    %v1838 = vlog2.pop %v1837
    %v1839 = vmul.f32 %v1838, 0.6931472
    %v1840 = vmul.f32 -0.5, %v1437
    %v1841 = vadd.f32 %v1840, 1.0
    %v1842 = vmul.f32 %v1841, %v1437
    %v1843 = vand.u32 2147483647, %v1437
    %vm1844 = vcmp.lt.f32.partialorder %v1843, 0.0004427343
    %v1845 = vsel %vm1844, %v1842, %v1839
    %v1846 = vadd.f32 %v1438, 1.0
    %v1847 = vlog2.pop %v1846
    %v1848 = vmul.f32 %v1847, 0.6931472
    %v1849 = vmul.f32 -0.5, %v1438
    %v1850 = vadd.f32 %v1849, 1.0
    %v1851 = vmul.f32 %v1850, %v1438
    %v1852 = vand.u32 2147483647, %v1438
    %vm1853 = vcmp.lt.f32.partialorder %v1852, 0.0004427343
    %v1854 = vsel %vm1853, %v1851, %v1848
    %v1855 = vadd.f32 %v1439, 1.0
    %v1856 = vlog2.pop %v1855
    %v1857 = vmul.f32 %v1856, 0.6931472
    %v1858 = vmul.f32 -0.5, %v1439
    %v1859 = vadd.f32 %v1858, 1.0
    %v1860 = vmul.f32 %v1859, %v1439
    %v1861 = vand.u32 2147483647, %v1439
    %vm1862 = vcmp.lt.f32.partialorder %v1861, 0.0004427343
    %v1863 = vsel %vm1862, %v1860, %v1857
    %v1864 = vadd.f32 %v1440, 1.0
    %v1865 = vlog2.pop %v1864
    %v1866 = vmul.f32 %v1865, 0.6931472
    %v1867 = vmul.f32 -0.5, %v1440
    %v1868 = vadd.f32 %v1867, 1.0
    %v1869 = vmul.f32 %v1868, %v1440
    %v1870 = vand.u32 2147483647, %v1440
    %vm1871 = vcmp.lt.f32.partialorder %v1870, 0.0004427343
    %v1872 = vsel %vm1871, %v1869, %v1866
    %v1873 = vadd.f32 %v1441, 1.0
    %v1874 = vlog2.pop %v1873
    %v1875 = vmul.f32 %v1874, 0.6931472
    %v1876 = vmul.f32 -0.5, %v1441
    %v1877 = vadd.f32 %v1876, 1.0
    %v1878 = vmul.f32 %v1877, %v1441
    %v1879 = vand.u32 2147483647, %v1441
    %vm1880 = vcmp.lt.f32.partialorder %v1879, 0.0004427343
    %v1881 = vsel %vm1880, %v1878, %v1875
    %v1882 = vadd.f32 %v1442, 1.0
    %v1883 = vlog2.pop %v1882
    %v1884 = vmul.f32 %v1883, 0.6931472
    %v1885 = vmul.f32 -0.5, %v1442
    %v1886 = vadd.f32 %v1885, 1.0
    %v1887 = vmul.f32 %v1886, %v1442
    %v1888 = vand.u32 2147483647, %v1442
    %vm1889 = vcmp.lt.f32.partialorder %v1888, 0.0004427343
    %v1890 = vsel %vm1889, %v1887, %v1884
    %v1891 = vadd.f32 %v1443, 1.0
    %v1892 = vlog2.pop %v1891
    %v1893 = vmul.f32 %v1892, 0.6931472
    %v1894 = vmul.f32 -0.5, %v1443
    %v1895 = vadd.f32 %v1894, 1.0
    %v1896 = vmul.f32 %v1895, %v1443
    %v1897 = vand.u32 2147483647, %v1443
    %vm1898 = vcmp.lt.f32.partialorder %v1897, 0.0004427343
    %v1899 = vsel %vm1898, %v1896, %v1893
    %v1900 = vadd.f32 %v1444, 1.0
    %v1901 = vlog2.pop %v1900
    %v1902 = vmul.f32 %v1901, 0.6931472
    %v1903 = vmul.f32 -0.5, %v1444
    %v1904 = vadd.f32 %v1903, 1.0
    %v1905 = vmul.f32 %v1904, %v1444
    %v1906 = vand.u32 2147483647, %v1444
    %vm1907 = vcmp.lt.f32.partialorder %v1906, 0.0004427343
    %v1908 = vsel %vm1907, %v1905, %v1902
    %v1909 = vadd.f32 %v1445, 1.0
    %v1910 = vlog2.pop %v1909
    %v1911 = vmul.f32 %v1910, 0.6931472
    %v1912 = vmul.f32 -0.5, %v1445
    %v1913 = vadd.f32 %v1912, 1.0
    %v1914 = vmul.f32 %v1913, %v1445
    %v1915 = vand.u32 2147483647, %v1445
    %vm1916 = vcmp.lt.f32.partialorder %v1915, 0.0004427343
    %v1917 = vsel %vm1916, %v1914, %v1911
    %v1918 = vadd.f32 %v1446, 1.0
    %v1919 = vlog2.pop %v1918
    %v1920 = vmul.f32 %v1919, 0.6931472
    %v1921 = vmul.f32 -0.5, %v1446
    %v1922 = vadd.f32 %v1921, 1.0
    %v1923 = vmul.f32 %v1922, %v1446
    %v1924 = vand.u32 2147483647, %v1446
    %vm1925 = vcmp.lt.f32.partialorder %v1924, 0.0004427343
    %v1926 = vsel %vm1925, %v1923, %v1920
    %v1927 = vadd.f32 %v1447, 1.0
    %v1928 = vlog2.pop %v1927
    %v1929 = vmul.f32 %v1928, 0.6931472
    %v1930 = vmul.f32 -0.5, %v1447
    %v1931 = vadd.f32 %v1930, 1.0
    %v1932 = vmul.f32 %v1931, %v1447
    %v1933 = vand.u32 2147483647, %v1447
    %vm1934 = vcmp.lt.f32.partialorder %v1933, 0.0004427343
    %v1935 = vsel %vm1934, %v1932, %v1929
    %v1936 = vadd.f32 %v1448, 1.0
    %v1937 = vlog2.pop %v1936
    %v1938 = vmul.f32 %v1937, 0.6931472
    %v1939 = vmul.f32 -0.5, %v1448
    %v1940 = vadd.f32 %v1939, 1.0
    %v1941 = vmul.f32 %v1940, %v1448
    %v1942 = vand.u32 2147483647, %v1448
    %vm1943 = vcmp.lt.f32.partialorder %v1942, 0.0004427343
    %v1944 = vsel %vm1943, %v1941, %v1938
    %v1945 = vadd.f32 %v1449, 1.0
    %v1946 = vlog2.pop %v1945
    %v1947 = vmul.f32 %v1946, 0.6931472
    %v1948 = vmul.f32 -0.5, %v1449
    %v1949 = vadd.f32 %v1948, 1.0
    %v1950 = vmul.f32 %v1949, %v1449
    %v1951 = vand.u32 2147483647, %v1449
    %vm1952 = vcmp.lt.f32.partialorder %v1951, 0.0004427343
    %v1953 = vsel %vm1952, %v1950, %v1947
    %v1954 = vadd.f32 %v1450, 1.0
    %v1955 = vlog2.pop %v1954
    %v1956 = vmul.f32 %v1955, 0.6931472
    %v1957 = vmul.f32 -0.5, %v1450
    %v1958 = vadd.f32 %v1957, 1.0
    %v1959 = vmul.f32 %v1958, %v1450
    %v1960 = vand.u32 2147483647, %v1450
    %vm1961 = vcmp.lt.f32.partialorder %v1960, 0.0004427343
    %v1962 = vsel %vm1961, %v1959, %v1956
    %v1963 = vadd.f32 %v1451, 1.0
    %v1964 = vlog2.pop %v1963
    %v1965 = vmul.f32 %v1964, 0.6931472
    %v1966 = vmul.f32 -0.5, %v1451
    %v1967 = vadd.f32 %v1966, 1.0
    %v1968 = vmul.f32 %v1967, %v1451
    %v1969 = vand.u32 2147483647, %v1451
    %vm1970 = vcmp.lt.f32.partialorder %v1969, 0.0004427343
    %v1971 = vsel %vm1970, %v1968, %v1965
    %v1972 = vadd.f32 %v1452, 1.0
    %v1973 = vlog2.pop %v1972
    %v1974 = vmul.f32 %v1973, 0.6931472
    %v1975 = vmul.f32 -0.5, %v1452
    %v1976 = vadd.f32 %v1975, 1.0
    %v1977 = vmul.f32 %v1976, %v1452
    %v1978 = vand.u32 2147483647, %v1452
    %vm1979 = vcmp.lt.f32.partialorder %v1978, 0.0004427343
    %v1980 = vsel %vm1979, %v1977, %v1974
    %v1981 = vadd.f32 %v1453, 1.0
    %v1982 = vlog2.pop %v1981
    %v1983 = vmul.f32 %v1982, 0.6931472
    %v1984 = vmul.f32 -0.5, %v1453
    %v1985 = vadd.f32 %v1984, 1.0
    %v1986 = vmul.f32 %v1985, %v1453
    %v1987 = vand.u32 2147483647, %v1453
    %vm1988 = vcmp.lt.f32.partialorder %v1987, 0.0004427343
    %v1989 = vsel %vm1988, %v1986, %v1983
    %v1990 = vadd.f32 %v1454, 1.0
    %v1991 = vlog2.pop %v1990
    %v1992 = vmul.f32 %v1991, 0.6931472
    %v1993 = vmul.f32 -0.5, %v1454
    %v1994 = vadd.f32 %v1993, 1.0
    %v1995 = vmul.f32 %v1994, %v1454
    %v1996 = vand.u32 2147483647, %v1454
    %vm1997 = vcmp.lt.f32.partialorder %v1996, 0.0004427343
    %v1998 = vsel %vm1997, %v1995, %v1992
    %v1999 = vadd.f32 %v1455, 1.0
    %v2000 = vlog2.pop %v1999
    %v2001 = vmul.f32 %v2000, 0.6931472
    %v2002 = vmul.f32 -0.5, %v1455
    %v2003 = vadd.f32 %v2002, 1.0
    %v2004 = vmul.f32 %v2003, %v1455
    %v2005 = vand.u32 2147483647, %v1455
    %vm2006 = vcmp.lt.f32.partialorder %v2005, 0.0004427343
    %v2007 = vsel %vm2006, %v2004, %v2001
    %v2008 = vadd.f32 %v1456, 1.0
    %v2009 = vlog2.pop %v2008
    %v2010 = vmul.f32 %v2009, 0.6931472
    %v2011 = vmul.f32 -0.5, %v1456
    %v2012 = vadd.f32 %v2011, 1.0
    %v2013 = vmul.f32 %v2012, %v1456
    %v2014 = vand.u32 2147483647, %v1456
    %vm2015 = vcmp.lt.f32.partialorder %v2014, 0.0004427343
    %v2016 = vsel %vm2015, %v2013, %v2010
    %v2017 = vadd.f32 %v1457, 1.0
    %v2018 = vlog2.pop %v2017
    %v2019 = vmul.f32 %v2018, 0.6931472
    %v2020 = vmul.f32 -0.5, %v1457
    %v2021 = vadd.f32 %v2020, 1.0
    %v2022 = vmul.f32 %v2021, %v1457
    %v2023 = vand.u32 2147483647, %v1457
    %vm2024 = vcmp.lt.f32.partialorder %v2023, 0.0004427343
    %v2025 = vsel %vm2024, %v2022, %v2019
    %v2026 = vadd.f32 %v1458, 1.0
    %v2027 = vlog2.pop %v2026
    %v2028 = vmul.f32 %v2027, 0.6931472
    %v2029 = vmul.f32 -0.5, %v1458
    %v2030 = vadd.f32 %v2029, 1.0
    %v2031 = vmul.f32 %v2030, %v1458
    %v2032 = vand.u32 2147483647, %v1458
    %vm2033 = vcmp.lt.f32.partialorder %v2032, 0.0004427343
    %v2034 = vsel %vm2033, %v2031, %v2028
    %v2035 = vsub.f32 0.0, %v1395
    %v2036 = vsub.f32 0.0, %v1396
    %v2037 = vsub.f32 0.0, %v1397
    %v2038 = vsub.f32 0.0, %v1398
    %v2039 = vsub.f32 0.0, %v1399
    %v2040 = vsub.f32 0.0, %v1400
    %v2041 = vsub.f32 0.0, %v1401
    %v2042 = vsub.f32 0.0, %v1402
    %v2043 = vsub.f32 0.0, %v1403
    %v2044 = vsub.f32 0.0, %v1404
    %v2045 = vsub.f32 0.0, %v1405
    %v2046 = vsub.f32 0.0, %v1406
    %v2047 = vsub.f32 0.0, %v1407
    %v2048 = vsub.f32 0.0, %v1408
    %v2049 = vsub.f32 0.0, %v1409
    %v2050 = vsub.f32 0.0, %v1410
    %v2051 = vsub.f32 0.0, %v1411
    %v2052 = vsub.f32 0.0, %v1412
    %v2053 = vsub.f32 0.0, %v1413
    %v2054 = vsub.f32 0.0, %v1414
    %v2055 = vsub.f32 0.0, %v1415
    %v2056 = vsub.f32 0.0, %v1416
    %v2057 = vsub.f32 0.0, %v1417
    %v2058 = vsub.f32 0.0, %v1418
    %v2059 = vsub.f32 0.0, %v1419
    %v2060 = vsub.f32 0.0, %v1420
    %v2061 = vsub.f32 0.0, %v1421
    %v2062 = vsub.f32 0.0, %v1422
    %v2063 = vsub.f32 0.0, %v1423
    %v2064 = vsub.f32 0.0, %v1424
    %v2065 = vsub.f32 0.0, %v1425
    %v2066 = vsub.f32 0.0, %v1426
    %v2067 = vsub.f32 0.0, %v1427
    %v2068 = vsub.f32 0.0, %v1428
    %v2069 = vsub.f32 0.0, %v1429
    %v2070 = vsub.f32 0.0, %v1430
    %v2071 = vsub.f32 0.0, %v1431
    %v2072 = vsub.f32 0.0, %v1432
    %v2073 = vsub.f32 0.0, %v1433
    %v2074 = vsub.f32 0.0, %v1434
    %v2075 = vsub.f32 0.0, %v1435
    %v2076 = vsub.f32 0.0, %v1436
    %v2077 = vsub.f32 0.0, %v1437
    %v2078 = vsub.f32 0.0, %v1438
    %v2079 = vsub.f32 0.0, %v1439
    %v2080 = vsub.f32 0.0, %v1440
    %v2081 = vsub.f32 0.0, %v1441
    %v2082 = vsub.f32 0.0, %v1442
    %v2083 = vsub.f32 0.0, %v1443
    %v2084 = vsub.f32 0.0, %v1444
    %v2085 = vsub.f32 0.0, %v1445
    %v2086 = vsub.f32 0.0, %v1446
    %v2087 = vsub.f32 0.0, %v1447
    %v2088 = vsub.f32 0.0, %v1448
    %v2089 = vsub.f32 0.0, %v1449
    %v2090 = vsub.f32 0.0, %v1450
    %v2091 = vsub.f32 0.0, %v1451
    %v2092 = vsub.f32 0.0, %v1452
    %v2093 = vsub.f32 0.0, %v1453
    %v2094 = vsub.f32 0.0, %v1454
    %v2095 = vsub.f32 0.0, %v1455
    %v2096 = vsub.f32 0.0, %v1456
    %v2097 = vsub.f32 0.0, %v1457
    %v2098 = vsub.f32 0.0, %v1458
    %v2099 = vadd.f32 %v2035, 1.0
    %v2100 = vlog2.pop %v2099
    %v2101 = vmul.f32 %v2100, 0.6931472
    %v2102 = vmul.f32 -0.5, %v2035
    %v2103 = vadd.f32 %v2102, 1.0
    %v2104 = vmul.f32 %v2103, %v2035
    %v2105 = vand.u32 2147483647, %v2035
    %vm2106 = vcmp.lt.f32.partialorder %v2105, 0.0004427343
    %v2107 = vsel %vm2106, %v2104, %v2101
    %v2108 = vadd.f32 %v2036, 1.0
    %v2109 = vlog2.pop %v2108
    %v2110 = vmul.f32 %v2109, 0.6931472
    %v2111 = vmul.f32 -0.5, %v2036
    %v2112 = vadd.f32 %v2111, 1.0
    %v2113 = vmul.f32 %v2112, %v2036
    %v2114 = vand.u32 2147483647, %v2036
    %vm2115 = vcmp.lt.f32.partialorder %v2114, 0.0004427343
    %v2116 = vsel %vm2115, %v2113, %v2110
    %v2117 = vadd.f32 %v2037, 1.0
    %v2118 = vlog2.pop %v2117
    %v2119 = vmul.f32 %v2118, 0.6931472
    %v2120 = vmul.f32 -0.5, %v2037
    %v2121 = vadd.f32 %v2120, 1.0
    %v2122 = vmul.f32 %v2121, %v2037
    %v2123 = vand.u32 2147483647, %v2037
    %vm2124 = vcmp.lt.f32.partialorder %v2123, 0.0004427343
    %v2125 = vsel %vm2124, %v2122, %v2119
    %v2126 = vadd.f32 %v2038, 1.0
    %v2127 = vlog2.pop %v2126
    %v2128 = vmul.f32 %v2127, 0.6931472
    %v2129 = vmul.f32 -0.5, %v2038
    %v2130 = vadd.f32 %v2129, 1.0
    %v2131 = vmul.f32 %v2130, %v2038
    %v2132 = vand.u32 2147483647, %v2038
    %vm2133 = vcmp.lt.f32.partialorder %v2132, 0.0004427343
    %v2134 = vsel %vm2133, %v2131, %v2128
    %v2135 = vadd.f32 %v2039, 1.0
    %v2136 = vlog2.pop %v2135
    %v2137 = vmul.f32 %v2136, 0.6931472
    %v2138 = vmul.f32 -0.5, %v2039
    %v2139 = vadd.f32 %v2138, 1.0
    %v2140 = vmul.f32 %v2139, %v2039
    %v2141 = vand.u32 2147483647, %v2039
    %vm2142 = vcmp.lt.f32.partialorder %v2141, 0.0004427343
    %v2143 = vsel %vm2142, %v2140, %v2137
    %v2144 = vadd.f32 %v2040, 1.0
    %v2145 = vlog2.pop %v2144
    %v2146 = vmul.f32 %v2145, 0.6931472
    %v2147 = vmul.f32 -0.5, %v2040
    %v2148 = vadd.f32 %v2147, 1.0
    %v2149 = vmul.f32 %v2148, %v2040
    %v2150 = vand.u32 2147483647, %v2040
    %vm2151 = vcmp.lt.f32.partialorder %v2150, 0.0004427343
    %v2152 = vsel %vm2151, %v2149, %v2146
    %v2153 = vadd.f32 %v2041, 1.0
    %v2154 = vlog2.pop %v2153
    %v2155 = vmul.f32 %v2154, 0.6931472
    %v2156 = vmul.f32 -0.5, %v2041
    %v2157 = vadd.f32 %v2156, 1.0
    %v2158 = vmul.f32 %v2157, %v2041
    %v2159 = vand.u32 2147483647, %v2041
    %vm2160 = vcmp.lt.f32.partialorder %v2159, 0.0004427343
    %v2161 = vsel %vm2160, %v2158, %v2155
    %v2162 = vadd.f32 %v2042, 1.0
    %v2163 = vlog2.pop %v2162
    %v2164 = vmul.f32 %v2163, 0.6931472
    %v2165 = vmul.f32 -0.5, %v2042
    %v2166 = vadd.f32 %v2165, 1.0
    %v2167 = vmul.f32 %v2166, %v2042
    %v2168 = vand.u32 2147483647, %v2042
    %vm2169 = vcmp.lt.f32.partialorder %v2168, 0.0004427343
    %v2170 = vsel %vm2169, %v2167, %v2164
    %v2171 = vadd.f32 %v2043, 1.0
    %v2172 = vlog2.pop %v2171
    %v2173 = vmul.f32 %v2172, 0.6931472
    %v2174 = vmul.f32 -0.5, %v2043
    %v2175 = vadd.f32 %v2174, 1.0
    %v2176 = vmul.f32 %v2175, %v2043
    %v2177 = vand.u32 2147483647, %v2043
    %vm2178 = vcmp.lt.f32.partialorder %v2177, 0.0004427343
    %v2179 = vsel %vm2178, %v2176, %v2173
    %v2180 = vadd.f32 %v2044, 1.0
    %v2181 = vlog2.pop %v2180
    %v2182 = vmul.f32 %v2181, 0.6931472
    %v2183 = vmul.f32 -0.5, %v2044
    %v2184 = vadd.f32 %v2183, 1.0
    %v2185 = vmul.f32 %v2184, %v2044
    %v2186 = vand.u32 2147483647, %v2044
    %vm2187 = vcmp.lt.f32.partialorder %v2186, 0.0004427343
    %v2188 = vsel %vm2187, %v2185, %v2182
    %v2189 = vadd.f32 %v2045, 1.0
    %v2190 = vlog2.pop %v2189
    %v2191 = vmul.f32 %v2190, 0.6931472
    %v2192 = vmul.f32 -0.5, %v2045
    %v2193 = vadd.f32 %v2192, 1.0
    %v2194 = vmul.f32 %v2193, %v2045
    %v2195 = vand.u32 2147483647, %v2045
    %vm2196 = vcmp.lt.f32.partialorder %v2195, 0.0004427343
    %v2197 = vsel %vm2196, %v2194, %v2191
    %v2198 = vadd.f32 %v2046, 1.0
    %v2199 = vlog2.pop %v2198
    %v2200 = vmul.f32 %v2199, 0.6931472
    %v2201 = vmul.f32 -0.5, %v2046
    %v2202 = vadd.f32 %v2201, 1.0
    %v2203 = vmul.f32 %v2202, %v2046
    %v2204 = vand.u32 2147483647, %v2046
    %vm2205 = vcmp.lt.f32.partialorder %v2204, 0.0004427343
    %v2206 = vsel %vm2205, %v2203, %v2200
    %v2207 = vadd.f32 %v2047, 1.0
    %v2208 = vlog2.pop %v2207
    %v2209 = vmul.f32 %v2208, 0.6931472
    %v2210 = vmul.f32 -0.5, %v2047
    %v2211 = vadd.f32 %v2210, 1.0
    %v2212 = vmul.f32 %v2211, %v2047
    %v2213 = vand.u32 2147483647, %v2047
    %vm2214 = vcmp.lt.f32.partialorder %v2213, 0.0004427343
    %v2215 = vsel %vm2214, %v2212, %v2209
    %v2216 = vadd.f32 %v2048, 1.0
    %v2217 = vlog2.pop %v2216
    %v2218 = vmul.f32 %v2217, 0.6931472
    %v2219 = vmul.f32 -0.5, %v2048
    %v2220 = vadd.f32 %v2219, 1.0
    %v2221 = vmul.f32 %v2220, %v2048
    %v2222 = vand.u32 2147483647, %v2048
    %vm2223 = vcmp.lt.f32.partialorder %v2222, 0.0004427343
    %v2224 = vsel %vm2223, %v2221, %v2218
    %v2225 = vadd.f32 %v2049, 1.0
    %v2226 = vlog2.pop %v2225
    %v2227 = vmul.f32 %v2226, 0.6931472
    %v2228 = vmul.f32 -0.5, %v2049
    %v2229 = vadd.f32 %v2228, 1.0
    %v2230 = vmul.f32 %v2229, %v2049
    %v2231 = vand.u32 2147483647, %v2049
    %vm2232 = vcmp.lt.f32.partialorder %v2231, 0.0004427343
    %v2233 = vsel %vm2232, %v2230, %v2227
    %v2234 = vadd.f32 %v2050, 1.0
    %v2235 = vlog2.pop %v2234
    %v2236 = vmul.f32 %v2235, 0.6931472
    %v2237 = vmul.f32 -0.5, %v2050
    %v2238 = vadd.f32 %v2237, 1.0
    %v2239 = vmul.f32 %v2238, %v2050
    %v2240 = vand.u32 2147483647, %v2050
    %vm2241 = vcmp.lt.f32.partialorder %v2240, 0.0004427343
    %v2242 = vsel %vm2241, %v2239, %v2236
    %v2243 = vadd.f32 %v2051, 1.0
    %v2244 = vlog2.pop %v2243
    %v2245 = vmul.f32 %v2244, 0.6931472
    %v2246 = vmul.f32 -0.5, %v2051
    %v2247 = vadd.f32 %v2246, 1.0
    %v2248 = vmul.f32 %v2247, %v2051
    %v2249 = vand.u32 2147483647, %v2051
    %vm2250 = vcmp.lt.f32.partialorder %v2249, 0.0004427343
    %v2251 = vsel %vm2250, %v2248, %v2245
    %v2252 = vadd.f32 %v2052, 1.0
    %v2253 = vlog2.pop %v2252
    %v2254 = vmul.f32 %v2253, 0.6931472
    %v2255 = vmul.f32 -0.5, %v2052
    %v2256 = vadd.f32 %v2255, 1.0
    %v2257 = vmul.f32 %v2256, %v2052
    %v2258 = vand.u32 2147483647, %v2052
    %vm2259 = vcmp.lt.f32.partialorder %v2258, 0.0004427343
    %v2260 = vsel %vm2259, %v2257, %v2254
    %v2261 = vadd.f32 %v2053, 1.0
    %v2262 = vlog2.pop %v2261
    %v2263 = vmul.f32 %v2262, 0.6931472
    %v2264 = vmul.f32 -0.5, %v2053
    %v2265 = vadd.f32 %v2264, 1.0
    %v2266 = vmul.f32 %v2265, %v2053
    %v2267 = vand.u32 2147483647, %v2053
    %vm2268 = vcmp.lt.f32.partialorder %v2267, 0.0004427343
    %v2269 = vsel %vm2268, %v2266, %v2263
    %v2270 = vadd.f32 %v2054, 1.0
    %v2271 = vlog2.pop %v2270
    %v2272 = vmul.f32 %v2271, 0.6931472
    %v2273 = vmul.f32 -0.5, %v2054
    %v2274 = vadd.f32 %v2273, 1.0
    %v2275 = vmul.f32 %v2274, %v2054
    %v2276 = vand.u32 2147483647, %v2054
    %vm2277 = vcmp.lt.f32.partialorder %v2276, 0.0004427343
    %v2278 = vsel %vm2277, %v2275, %v2272
    %v2279 = vadd.f32 %v2055, 1.0
    %v2280 = vlog2.pop %v2279
    %v2281 = vmul.f32 %v2280, 0.6931472
    %v2282 = vmul.f32 -0.5, %v2055
    %v2283 = vadd.f32 %v2282, 1.0
    %v2284 = vmul.f32 %v2283, %v2055
    %v2285 = vand.u32 2147483647, %v2055
    %vm2286 = vcmp.lt.f32.partialorder %v2285, 0.0004427343
    %v2287 = vsel %vm2286, %v2284, %v2281
    %v2288 = vadd.f32 %v2056, 1.0
    %v2289 = vlog2.pop %v2288
    %v2290 = vmul.f32 %v2289, 0.6931472
    %v2291 = vmul.f32 -0.5, %v2056
    %v2292 = vadd.f32 %v2291, 1.0
    %v2293 = vmul.f32 %v2292, %v2056
    %v2294 = vand.u32 2147483647, %v2056
    %vm2295 = vcmp.lt.f32.partialorder %v2294, 0.0004427343
    %v2296 = vsel %vm2295, %v2293, %v2290
    %v2297 = vadd.f32 %v2057, 1.0
    %v2298 = vlog2.pop %v2297
    %v2299 = vmul.f32 %v2298, 0.6931472
    %v2300 = vmul.f32 -0.5, %v2057
    %v2301 = vadd.f32 %v2300, 1.0
    %v2302 = vmul.f32 %v2301, %v2057
    %v2303 = vand.u32 2147483647, %v2057
    %vm2304 = vcmp.lt.f32.partialorder %v2303, 0.0004427343
    %v2305 = vsel %vm2304, %v2302, %v2299
    %v2306 = vadd.f32 %v2058, 1.0
    %v2307 = vlog2.pop %v2306
    %v2308 = vmul.f32 %v2307, 0.6931472
    %v2309 = vmul.f32 -0.5, %v2058
    %v2310 = vadd.f32 %v2309, 1.0
    %v2311 = vmul.f32 %v2310, %v2058
    %v2312 = vand.u32 2147483647, %v2058
    %vm2313 = vcmp.lt.f32.partialorder %v2312, 0.0004427343
    %v2314 = vsel %vm2313, %v2311, %v2308
    %v2315 = vadd.f32 %v2059, 1.0
    %v2316 = vlog2.pop %v2315
    %v2317 = vmul.f32 %v2316, 0.6931472
    %v2318 = vmul.f32 -0.5, %v2059
    %v2319 = vadd.f32 %v2318, 1.0
    %v2320 = vmul.f32 %v2319, %v2059
    %v2321 = vand.u32 2147483647, %v2059
    %vm2322 = vcmp.lt.f32.partialorder %v2321, 0.0004427343
    %v2323 = vsel %vm2322, %v2320, %v2317
    %v2324 = vadd.f32 %v2060, 1.0
    %v2325 = vlog2.pop %v2324
    %v2326 = vmul.f32 %v2325, 0.6931472
    %v2327 = vmul.f32 -0.5, %v2060
    %v2328 = vadd.f32 %v2327, 1.0
    %v2329 = vmul.f32 %v2328, %v2060
    %v2330 = vand.u32 2147483647, %v2060
    %vm2331 = vcmp.lt.f32.partialorder %v2330, 0.0004427343
    %v2332 = vsel %vm2331, %v2329, %v2326
    %v2333 = vadd.f32 %v2061, 1.0
    %v2334 = vlog2.pop %v2333
    %v2335 = vmul.f32 %v2334, 0.6931472
    %v2336 = vmul.f32 -0.5, %v2061
    %v2337 = vadd.f32 %v2336, 1.0
    %v2338 = vmul.f32 %v2337, %v2061
    %v2339 = vand.u32 2147483647, %v2061
    %vm2340 = vcmp.lt.f32.partialorder %v2339, 0.0004427343
    %v2341 = vsel %vm2340, %v2338, %v2335
    %v2342 = vadd.f32 %v2062, 1.0
    %v2343 = vlog2.pop %v2342
    %v2344 = vmul.f32 %v2343, 0.6931472
    %v2345 = vmul.f32 -0.5, %v2062
    %v2346 = vadd.f32 %v2345, 1.0
    %v2347 = vmul.f32 %v2346, %v2062
    %v2348 = vand.u32 2147483647, %v2062
    %vm2349 = vcmp.lt.f32.partialorder %v2348, 0.0004427343
    %v2350 = vsel %vm2349, %v2347, %v2344
    %v2351 = vadd.f32 %v2063, 1.0
    %v2352 = vlog2.pop %v2351
    %v2353 = vmul.f32 %v2352, 0.6931472
    %v2354 = vmul.f32 -0.5, %v2063
    %v2355 = vadd.f32 %v2354, 1.0
    %v2356 = vmul.f32 %v2355, %v2063
    %v2357 = vand.u32 2147483647, %v2063
    %vm2358 = vcmp.lt.f32.partialorder %v2357, 0.0004427343
    %v2359 = vsel %vm2358, %v2356, %v2353
    %v2360 = vadd.f32 %v2064, 1.0
    %v2361 = vlog2.pop %v2360
    %v2362 = vmul.f32 %v2361, 0.6931472
    %v2363 = vmul.f32 -0.5, %v2064
    %v2364 = vadd.f32 %v2363, 1.0
    %v2365 = vmul.f32 %v2364, %v2064
    %v2366 = vand.u32 2147483647, %v2064
    %vm2367 = vcmp.lt.f32.partialorder %v2366, 0.0004427343
    %v2368 = vsel %vm2367, %v2365, %v2362
    %v2369 = vadd.f32 %v2065, 1.0
    %v2370 = vlog2.pop %v2369
    %v2371 = vmul.f32 %v2370, 0.6931472
    %v2372 = vmul.f32 -0.5, %v2065
    %v2373 = vadd.f32 %v2372, 1.0
    %v2374 = vmul.f32 %v2373, %v2065
    %v2375 = vand.u32 2147483647, %v2065
    %vm2376 = vcmp.lt.f32.partialorder %v2375, 0.0004427343
    %v2377 = vsel %vm2376, %v2374, %v2371
    %v2378 = vadd.f32 %v2066, 1.0
    %v2379 = vlog2.pop %v2378
    %v2380 = vmul.f32 %v2379, 0.6931472
    %v2381 = vmul.f32 -0.5, %v2066
    %v2382 = vadd.f32 %v2381, 1.0
    %v2383 = vmul.f32 %v2382, %v2066
    %v2384 = vand.u32 2147483647, %v2066
    %vm2385 = vcmp.lt.f32.partialorder %v2384, 0.0004427343
    %v2386 = vsel %vm2385, %v2383, %v2380
    %v2387 = vadd.f32 %v2067, 1.0
    %v2388 = vlog2.pop %v2387
    %v2389 = vmul.f32 %v2388, 0.6931472
    %v2390 = vmul.f32 -0.5, %v2067
    %v2391 = vadd.f32 %v2390, 1.0
    %v2392 = vmul.f32 %v2391, %v2067
    %v2393 = vand.u32 2147483647, %v2067
    %vm2394 = vcmp.lt.f32.partialorder %v2393, 0.0004427343
    %v2395 = vsel %vm2394, %v2392, %v2389
    %v2396 = vadd.f32 %v2068, 1.0
    %v2397 = vlog2.pop %v2396
    %v2398 = vmul.f32 %v2397, 0.6931472
    %v2399 = vmul.f32 -0.5, %v2068
    %v2400 = vadd.f32 %v2399, 1.0
    %v2401 = vmul.f32 %v2400, %v2068
    %v2402 = vand.u32 2147483647, %v2068
    %vm2403 = vcmp.lt.f32.partialorder %v2402, 0.0004427343
    %v2404 = vsel %vm2403, %v2401, %v2398
    %v2405 = vadd.f32 %v2069, 1.0
    %v2406 = vlog2.pop %v2405
    %v2407 = vmul.f32 %v2406, 0.6931472
    %v2408 = vmul.f32 -0.5, %v2069
    %v2409 = vadd.f32 %v2408, 1.0
    %v2410 = vmul.f32 %v2409, %v2069
    %v2411 = vand.u32 2147483647, %v2069
    %vm2412 = vcmp.lt.f32.partialorder %v2411, 0.0004427343
    %v2413 = vsel %vm2412, %v2410, %v2407
    %v2414 = vadd.f32 %v2070, 1.0
    %v2415 = vlog2.pop %v2414
    %v2416 = vmul.f32 %v2415, 0.6931472
    %v2417 = vmul.f32 -0.5, %v2070
    %v2418 = vadd.f32 %v2417, 1.0
    %v2419 = vmul.f32 %v2418, %v2070
    %v2420 = vand.u32 2147483647, %v2070
    %vm2421 = vcmp.lt.f32.partialorder %v2420, 0.0004427343
    %v2422 = vsel %vm2421, %v2419, %v2416
    %v2423 = vadd.f32 %v2071, 1.0
    %v2424 = vlog2.pop %v2423
    %v2425 = vmul.f32 %v2424, 0.6931472
    %v2426 = vmul.f32 -0.5, %v2071
    %v2427 = vadd.f32 %v2426, 1.0
    %v2428 = vmul.f32 %v2427, %v2071
    %v2429 = vand.u32 2147483647, %v2071
    %vm2430 = vcmp.lt.f32.partialorder %v2429, 0.0004427343
    %v2431 = vsel %vm2430, %v2428, %v2425
    %v2432 = vadd.f32 %v2072, 1.0
    %v2433 = vlog2.pop %v2432
    %v2434 = vmul.f32 %v2433, 0.6931472
    %v2435 = vmul.f32 -0.5, %v2072
    %v2436 = vadd.f32 %v2435, 1.0
    %v2437 = vmul.f32 %v2436, %v2072
    %v2438 = vand.u32 2147483647, %v2072
    %vm2439 = vcmp.lt.f32.partialorder %v2438, 0.0004427343
    %v2440 = vsel %vm2439, %v2437, %v2434
    %v2441 = vadd.f32 %v2073, 1.0
    %v2442 = vlog2.pop %v2441
    %v2443 = vmul.f32 %v2442, 0.6931472
    %v2444 = vmul.f32 -0.5, %v2073
    %v2445 = vadd.f32 %v2444, 1.0
    %v2446 = vmul.f32 %v2445, %v2073
    %v2447 = vand.u32 2147483647, %v2073
    %vm2448 = vcmp.lt.f32.partialorder %v2447, 0.0004427343
    %v2449 = vsel %vm2448, %v2446, %v2443
    %v2450 = vadd.f32 %v2074, 1.0
    %v2451 = vlog2.pop %v2450
    %v2452 = vmul.f32 %v2451, 0.6931472
    %v2453 = vmul.f32 -0.5, %v2074
    %v2454 = vadd.f32 %v2453, 1.0
    %v2455 = vmul.f32 %v2454, %v2074
    %v2456 = vand.u32 2147483647, %v2074
    %vm2457 = vcmp.lt.f32.partialorder %v2456, 0.0004427343
    %v2458 = vsel %vm2457, %v2455, %v2452
    %v2459 = vadd.f32 %v2075, 1.0
    %v2460 = vlog2.pop %v2459
    %v2461 = vmul.f32 %v2460, 0.6931472
    %v2462 = vmul.f32 -0.5, %v2075
    %v2463 = vadd.f32 %v2462, 1.0
    %v2464 = vmul.f32 %v2463, %v2075
    %v2465 = vand.u32 2147483647, %v2075
    %vm2466 = vcmp.lt.f32.partialorder %v2465, 0.0004427343
    %v2467 = vsel %vm2466, %v2464, %v2461
    %v2468 = vadd.f32 %v2076, 1.0
    %v2469 = vlog2.pop %v2468
    %v2470 = vmul.f32 %v2469, 0.6931472
    %v2471 = vmul.f32 -0.5, %v2076
    %v2472 = vadd.f32 %v2471, 1.0
    %v2473 = vmul.f32 %v2472, %v2076
    %v2474 = vand.u32 2147483647, %v2076
    %vm2475 = vcmp.lt.f32.partialorder %v2474, 0.0004427343
    %v2476 = vsel %vm2475, %v2473, %v2470
    %v2477 = vadd.f32 %v2077, 1.0
    %v2478 = vlog2.pop %v2477
    %v2479 = vmul.f32 %v2478, 0.6931472
    %v2480 = vmul.f32 -0.5, %v2077
    %v2481 = vadd.f32 %v2480, 1.0
    %v2482 = vmul.f32 %v2481, %v2077
    %v2483 = vand.u32 2147483647, %v2077
    %vm2484 = vcmp.lt.f32.partialorder %v2483, 0.0004427343
    %v2485 = vsel %vm2484, %v2482, %v2479
    %v2486 = vadd.f32 %v2078, 1.0
    %v2487 = vlog2.pop %v2486
    %v2488 = vmul.f32 %v2487, 0.6931472
    %v2489 = vmul.f32 -0.5, %v2078
    %v2490 = vadd.f32 %v2489, 1.0
    %v2491 = vmul.f32 %v2490, %v2078
    %v2492 = vand.u32 2147483647, %v2078
    %vm2493 = vcmp.lt.f32.partialorder %v2492, 0.0004427343
    %v2494 = vsel %vm2493, %v2491, %v2488
    %v2495 = vadd.f32 %v2079, 1.0
    %v2496 = vlog2.pop %v2495
    %v2497 = vmul.f32 %v2496, 0.6931472
    %v2498 = vmul.f32 -0.5, %v2079
    %v2499 = vadd.f32 %v2498, 1.0
    %v2500 = vmul.f32 %v2499, %v2079
    %v2501 = vand.u32 2147483647, %v2079
    %vm2502 = vcmp.lt.f32.partialorder %v2501, 0.0004427343
    %v2503 = vsel %vm2502, %v2500, %v2497
    %v2504 = vadd.f32 %v2080, 1.0
    %v2505 = vlog2.pop %v2504
    %v2506 = vmul.f32 %v2505, 0.6931472
    %v2507 = vmul.f32 -0.5, %v2080
    %v2508 = vadd.f32 %v2507, 1.0
    %v2509 = vmul.f32 %v2508, %v2080
    %v2510 = vand.u32 2147483647, %v2080
    %vm2511 = vcmp.lt.f32.partialorder %v2510, 0.0004427343
    %v2512 = vsel %vm2511, %v2509, %v2506
    %v2513 = vadd.f32 %v2081, 1.0
    %v2514 = vlog2.pop %v2513
    %v2515 = vmul.f32 %v2514, 0.6931472
    %v2516 = vmul.f32 -0.5, %v2081
    %v2517 = vadd.f32 %v2516, 1.0
    %v2518 = vmul.f32 %v2517, %v2081
    %v2519 = vand.u32 2147483647, %v2081
    %vm2520 = vcmp.lt.f32.partialorder %v2519, 0.0004427343
    %v2521 = vsel %vm2520, %v2518, %v2515
    %v2522 = vadd.f32 %v2082, 1.0
    %v2523 = vlog2.pop %v2522
    %v2524 = vmul.f32 %v2523, 0.6931472
    %v2525 = vmul.f32 -0.5, %v2082
    %v2526 = vadd.f32 %v2525, 1.0
    %v2527 = vmul.f32 %v2526, %v2082
    %v2528 = vand.u32 2147483647, %v2082
    %vm2529 = vcmp.lt.f32.partialorder %v2528, 0.0004427343
    %v2530 = vsel %vm2529, %v2527, %v2524
    %v2531 = vadd.f32 %v2083, 1.0
    %v2532 = vlog2.pop %v2531
    %v2533 = vmul.f32 %v2532, 0.6931472
    %v2534 = vmul.f32 -0.5, %v2083
    %v2535 = vadd.f32 %v2534, 1.0
    %v2536 = vmul.f32 %v2535, %v2083
    %v2537 = vand.u32 2147483647, %v2083
    %vm2538 = vcmp.lt.f32.partialorder %v2537, 0.0004427343
    %v2539 = vsel %vm2538, %v2536, %v2533
    %v2540 = vadd.f32 %v2084, 1.0
    %v2541 = vlog2.pop %v2540
    %v2542 = vmul.f32 %v2541, 0.6931472
    %v2543 = vmul.f32 -0.5, %v2084
    %v2544 = vadd.f32 %v2543, 1.0
    %v2545 = vmul.f32 %v2544, %v2084
    %v2546 = vand.u32 2147483647, %v2084
    %vm2547 = vcmp.lt.f32.partialorder %v2546, 0.0004427343
    %v2548 = vsel %vm2547, %v2545, %v2542
    %v2549 = vadd.f32 %v2085, 1.0
    %v2550 = vlog2.pop %v2549
    %v2551 = vmul.f32 %v2550, 0.6931472
    %v2552 = vmul.f32 -0.5, %v2085
    %v2553 = vadd.f32 %v2552, 1.0
    %v2554 = vmul.f32 %v2553, %v2085
    %v2555 = vand.u32 2147483647, %v2085
    %vm2556 = vcmp.lt.f32.partialorder %v2555, 0.0004427343
    %v2557 = vsel %vm2556, %v2554, %v2551
    %v2558 = vadd.f32 %v2086, 1.0
    %v2559 = vlog2.pop %v2558
    %v2560 = vmul.f32 %v2559, 0.6931472
    %v2561 = vmul.f32 -0.5, %v2086
    %v2562 = vadd.f32 %v2561, 1.0
    %v2563 = vmul.f32 %v2562, %v2086
    %v2564 = vand.u32 2147483647, %v2086
    %vm2565 = vcmp.lt.f32.partialorder %v2564, 0.0004427343
    %v2566 = vsel %vm2565, %v2563, %v2560
    %v2567 = vadd.f32 %v2087, 1.0
    %v2568 = vlog2.pop %v2567
    %v2569 = vmul.f32 %v2568, 0.6931472
    %v2570 = vmul.f32 -0.5, %v2087
    %v2571 = vadd.f32 %v2570, 1.0
    %v2572 = vmul.f32 %v2571, %v2087
    %v2573 = vand.u32 2147483647, %v2087
    %vm2574 = vcmp.lt.f32.partialorder %v2573, 0.0004427343
    %v2575 = vsel %vm2574, %v2572, %v2569
    %v2576 = vadd.f32 %v2088, 1.0
    %v2577 = vlog2.pop %v2576
    %v2578 = vmul.f32 %v2577, 0.6931472
    %v2579 = vmul.f32 -0.5, %v2088
    %v2580 = vadd.f32 %v2579, 1.0
    %v2581 = vmul.f32 %v2580, %v2088
    %v2582 = vand.u32 2147483647, %v2088
    %vm2583 = vcmp.lt.f32.partialorder %v2582, 0.0004427343
    %v2584 = vsel %vm2583, %v2581, %v2578
    %v2585 = vadd.f32 %v2089, 1.0
    %v2586 = vlog2.pop %v2585
    %v2587 = vmul.f32 %v2586, 0.6931472
    %v2588 = vmul.f32 -0.5, %v2089
    %v2589 = vadd.f32 %v2588, 1.0
    %v2590 = vmul.f32 %v2589, %v2089
    %v2591 = vand.u32 2147483647, %v2089
    %vm2592 = vcmp.lt.f32.partialorder %v2591, 0.0004427343
    %v2593 = vsel %vm2592, %v2590, %v2587
    %v2594 = vadd.f32 %v2090, 1.0
    %v2595 = vlog2.pop %v2594
    %v2596 = vmul.f32 %v2595, 0.6931472
    %v2597 = vmul.f32 -0.5, %v2090
    %v2598 = vadd.f32 %v2597, 1.0
    %v2599 = vmul.f32 %v2598, %v2090
    %v2600 = vand.u32 2147483647, %v2090
    %vm2601 = vcmp.lt.f32.partialorder %v2600, 0.0004427343
    %v2602 = vsel %vm2601, %v2599, %v2596
    %v2603 = vadd.f32 %v2091, 1.0
    %v2604 = vlog2.pop %v2603
    %v2605 = vmul.f32 %v2604, 0.6931472
    %v2606 = vmul.f32 -0.5, %v2091
    %v2607 = vadd.f32 %v2606, 1.0
    %v2608 = vmul.f32 %v2607, %v2091
    %v2609 = vand.u32 2147483647, %v2091
    %vm2610 = vcmp.lt.f32.partialorder %v2609, 0.0004427343
    %v2611 = vsel %vm2610, %v2608, %v2605
    %v2612 = vadd.f32 %v2092, 1.0
    %v2613 = vlog2.pop %v2612
    %v2614 = vmul.f32 %v2613, 0.6931472
    %v2615 = vmul.f32 -0.5, %v2092
    %v2616 = vadd.f32 %v2615, 1.0
    %v2617 = vmul.f32 %v2616, %v2092
    %v2618 = vand.u32 2147483647, %v2092
    %vm2619 = vcmp.lt.f32.partialorder %v2618, 0.0004427343
    %v2620 = vsel %vm2619, %v2617, %v2614
    %v2621 = vadd.f32 %v2093, 1.0
    %v2622 = vlog2.pop %v2621
    %v2623 = vmul.f32 %v2622, 0.6931472
    %v2624 = vmul.f32 -0.5, %v2093
    %v2625 = vadd.f32 %v2624, 1.0
    %v2626 = vmul.f32 %v2625, %v2093
    %v2627 = vand.u32 2147483647, %v2093
    %vm2628 = vcmp.lt.f32.partialorder %v2627, 0.0004427343
    %v2629 = vsel %vm2628, %v2626, %v2623
    %v2630 = vadd.f32 %v2094, 1.0
    %v2631 = vlog2.pop %v2630
    %v2632 = vmul.f32 %v2631, 0.6931472
    %v2633 = vmul.f32 -0.5, %v2094
    %v2634 = vadd.f32 %v2633, 1.0
    %v2635 = vmul.f32 %v2634, %v2094
    %v2636 = vand.u32 2147483647, %v2094
    %vm2637 = vcmp.lt.f32.partialorder %v2636, 0.0004427343
    %v2638 = vsel %vm2637, %v2635, %v2632
    %v2639 = vadd.f32 %v2095, 1.0
    %v2640 = vlog2.pop %v2639
    %v2641 = vmul.f32 %v2640, 0.6931472
    %v2642 = vmul.f32 -0.5, %v2095
    %v2643 = vadd.f32 %v2642, 1.0
    %v2644 = vmul.f32 %v2643, %v2095
    %v2645 = vand.u32 2147483647, %v2095
    %vm2646 = vcmp.lt.f32.partialorder %v2645, 0.0004427343
    %v2647 = vsel %vm2646, %v2644, %v2641
    %v2648 = vadd.f32 %v2096, 1.0
    %v2649 = vlog2.pop %v2648
    %v2650 = vmul.f32 %v2649, 0.6931472
    %v2651 = vmul.f32 -0.5, %v2096
    %v2652 = vadd.f32 %v2651, 1.0
    %v2653 = vmul.f32 %v2652, %v2096
    %v2654 = vand.u32 2147483647, %v2096
    %vm2655 = vcmp.lt.f32.partialorder %v2654, 0.0004427343
    %v2656 = vsel %vm2655, %v2653, %v2650
    %v2657 = vadd.f32 %v2097, 1.0
    %v2658 = vlog2.pop %v2657
    %v2659 = vmul.f32 %v2658, 0.6931472
    %v2660 = vmul.f32 -0.5, %v2097
    %v2661 = vadd.f32 %v2660, 1.0
    %v2662 = vmul.f32 %v2661, %v2097
    %v2663 = vand.u32 2147483647, %v2097
    %vm2664 = vcmp.lt.f32.partialorder %v2663, 0.0004427343
    %v2665 = vsel %vm2664, %v2662, %v2659
    %v2666 = vadd.f32 %v2098, 1.0
    %v2667 = vlog2.pop %v2666
    %v2668 = vmul.f32 %v2667, 0.6931472
    %v2669 = vmul.f32 -0.5, %v2098
    %v2670 = vadd.f32 %v2669, 1.0
    %v2671 = vmul.f32 %v2670, %v2098
    %v2672 = vand.u32 2147483647, %v2098
    %vm2673 = vcmp.lt.f32.partialorder %v2672, 0.0004427343
    %v2674 = vsel %vm2673, %v2671, %v2668
    %v2675 = vsub.f32 %v1467, %v2107
    %v2676 = vsub.f32 %v1476, %v2116
    %v2677 = vsub.f32 %v1485, %v2125
    %v2678 = vsub.f32 %v1494, %v2134
    %v2679 = vsub.f32 %v1503, %v2143
    %v2680 = vsub.f32 %v1512, %v2152
    %v2681 = vsub.f32 %v1521, %v2161
    %v2682 = vsub.f32 %v1530, %v2170
    %v2683 = vsub.f32 %v1539, %v2179
    %v2684 = vsub.f32 %v1548, %v2188
    %v2685 = vsub.f32 %v1557, %v2197
    %v2686 = vsub.f32 %v1566, %v2206
    %v2687 = vsub.f32 %v1575, %v2215
    %v2688 = vsub.f32 %v1584, %v2224
    %v2689 = vsub.f32 %v1593, %v2233
    %v2690 = vsub.f32 %v1602, %v2242
    %v2691 = vsub.f32 %v1611, %v2251
    %v2692 = vsub.f32 %v1620, %v2260
    %v2693 = vsub.f32 %v1629, %v2269
    %v2694 = vsub.f32 %v1638, %v2278
    %v2695 = vsub.f32 %v1647, %v2287
    %v2696 = vsub.f32 %v1656, %v2296
    %v2697 = vsub.f32 %v1665, %v2305
    %v2698 = vsub.f32 %v1674, %v2314
    %v2699 = vsub.f32 %v1683, %v2323
    %v2700 = vsub.f32 %v1692, %v2332
    %v2701 = vsub.f32 %v1701, %v2341
    %v2702 = vsub.f32 %v1710, %v2350
    %v2703 = vsub.f32 %v1719, %v2359
    %v2704 = vsub.f32 %v1728, %v2368
    %v2705 = vsub.f32 %v1737, %v2377
    %v2706 = vsub.f32 %v1746, %v2386
    %v2707 = vsub.f32 %v1755, %v2395
    %v2708 = vsub.f32 %v1764, %v2404
    %v2709 = vsub.f32 %v1773, %v2413
    %v2710 = vsub.f32 %v1782, %v2422
    %v2711 = vsub.f32 %v1791, %v2431
    %v2712 = vsub.f32 %v1800, %v2440
    %v2713 = vsub.f32 %v1809, %v2449
    %v2714 = vsub.f32 %v1818, %v2458
    %v2715 = vsub.f32 %v1827, %v2467
    %v2716 = vsub.f32 %v1836, %v2476
    %v2717 = vsub.f32 %v1845, %v2485
    %v2718 = vsub.f32 %v1854, %v2494
    %v2719 = vsub.f32 %v1863, %v2503
    %v2720 = vsub.f32 %v1872, %v2512
    %v2721 = vsub.f32 %v1881, %v2521
    %v2722 = vsub.f32 %v1890, %v2530
    %v2723 = vsub.f32 %v1899, %v2539
    %v2724 = vsub.f32 %v1908, %v2548
    %v2725 = vsub.f32 %v1917, %v2557
    %v2726 = vsub.f32 %v1926, %v2566
    %v2727 = vsub.f32 %v1935, %v2575
    %v2728 = vsub.f32 %v1944, %v2584
    %v2729 = vsub.f32 %v1953, %v2593
    %v2730 = vsub.f32 %v1962, %v2602
    %v2731 = vsub.f32 %v1971, %v2611
    %v2732 = vsub.f32 %v1980, %v2620
    %v2733 = vsub.f32 %v1989, %v2629
    %v2734 = vsub.f32 %v1998, %v2638
    %v2735 = vsub.f32 %v2007, %v2647
    %v2736 = vsub.f32 %v2016, %v2656
    %v2737 = vsub.f32 %v2025, %v2665
    %v2738 = vsub.f32 %v2034, %v2674
    %v2739 = vmul.f32 %v2675, 0.5
    %v2740 = vmul.f32 %v2676, 0.5
    %v2741 = vmul.f32 %v2677, 0.5
    %v2742 = vmul.f32 %v2678, 0.5
    %v2743 = vmul.f32 %v2679, 0.5
    %v2744 = vmul.f32 %v2680, 0.5
    %v2745 = vmul.f32 %v2681, 0.5
    %v2746 = vmul.f32 %v2682, 0.5
    %v2747 = vmul.f32 %v2683, 0.5
    %v2748 = vmul.f32 %v2684, 0.5
    %v2749 = vmul.f32 %v2685, 0.5
    %v2750 = vmul.f32 %v2686, 0.5
    %v2751 = vmul.f32 %v2687, 0.5
    %v2752 = vmul.f32 %v2688, 0.5
    %v2753 = vmul.f32 %v2689, 0.5
    %v2754 = vmul.f32 %v2690, 0.5
    %v2755 = vmul.f32 %v2691, 0.5
    %v2756 = vmul.f32 %v2692, 0.5
    %v2757 = vmul.f32 %v2693, 0.5
    %v2758 = vmul.f32 %v2694, 0.5
    %v2759 = vmul.f32 %v2695, 0.5
    %v2760 = vmul.f32 %v2696, 0.5
    %v2761 = vmul.f32 %v2697, 0.5
    %v2762 = vmul.f32 %v2698, 0.5
    %v2763 = vmul.f32 %v2699, 0.5
    %v2764 = vmul.f32 %v2700, 0.5
    %v2765 = vmul.f32 %v2701, 0.5
    %v2766 = vmul.f32 %v2702, 0.5
    %v2767 = vmul.f32 %v2703, 0.5
    %v2768 = vmul.f32 %v2704, 0.5
    %v2769 = vmul.f32 %v2705, 0.5
    %v2770 = vmul.f32 %v2706, 0.5
    %v2771 = vmul.f32 %v2707, 0.5
    %v2772 = vmul.f32 %v2708, 0.5
    %v2773 = vmul.f32 %v2709, 0.5
    %v2774 = vmul.f32 %v2710, 0.5
    %v2775 = vmul.f32 %v2711, 0.5
    %v2776 = vmul.f32 %v2712, 0.5
    %v2777 = vmul.f32 %v2713, 0.5
    %v2778 = vmul.f32 %v2714, 0.5
    %v2779 = vmul.f32 %v2715, 0.5
    %v2780 = vmul.f32 %v2716, 0.5
    %v2781 = vmul.f32 %v2717, 0.5
    %v2782 = vmul.f32 %v2718, 0.5
    %v2783 = vmul.f32 %v2719, 0.5
    %v2784 = vmul.f32 %v2720, 0.5
    %v2785 = vmul.f32 %v2721, 0.5
    %v2786 = vmul.f32 %v2722, 0.5
    %v2787 = vmul.f32 %v2723, 0.5
    %v2788 = vmul.f32 %v2724, 0.5
    %v2789 = vmul.f32 %v2725, 0.5
    %v2790 = vmul.f32 %v2726, 0.5
    %v2791 = vmul.f32 %v2727, 0.5
    %v2792 = vmul.f32 %v2728, 0.5
    %v2793 = vmul.f32 %v2729, 0.5
    %v2794 = vmul.f32 %v2730, 0.5
    %v2795 = vmul.f32 %v2731, 0.5
    %v2796 = vmul.f32 %v2732, 0.5
    %v2797 = vmul.f32 %v2733, 0.5
    %v2798 = vmul.f32 %v2734, 0.5
    %v2799 = vmul.f32 %v2735, 0.5
    %v2800 = vmul.f32 %v2736, 0.5
    %v2801 = vmul.f32 %v2737, 0.5
    %v2802 = vmul.f32 %v2738, 0.5
    %v2803 = vmul.f32 %v1267, %v2739
    %v2804 = vmul.f32 %v1268, %v2740
    %v2805 = vmul.f32 %v1269, %v2741
    %v2806 = vmul.f32 %v1270, %v2742
    %v2807 = vmul.f32 %v1271, %v2743
    %v2808 = vmul.f32 %v1272, %v2744
    %v2809 = vmul.f32 %v1273, %v2745
    %v2810 = vmul.f32 %v1274, %v2746
    %v2811 = vmul.f32 %v1275, %v2747
    %v2812 = vmul.f32 %v1276, %v2748
    %v2813 = vmul.f32 %v1277, %v2749
    %v2814 = vmul.f32 %v1278, %v2750
    %v2815 = vmul.f32 %v1279, %v2751
    %v2816 = vmul.f32 %v1280, %v2752
    %v2817 = vmul.f32 %v1281, %v2753
    %v2818 = vmul.f32 %v1282, %v2754
    %v2819 = vmul.f32 %v1283, %v2755
    %v2820 = vmul.f32 %v1284, %v2756
    %v2821 = vmul.f32 %v1285, %v2757
    %v2822 = vmul.f32 %v1286, %v2758
    %v2823 = vmul.f32 %v1287, %v2759
    %v2824 = vmul.f32 %v1288, %v2760
    %v2825 = vmul.f32 %v1289, %v2761
    %v2826 = vmul.f32 %v1290, %v2762
    %v2827 = vmul.f32 %v1291, %v2763
    %v2828 = vmul.f32 %v1292, %v2764
    %v2829 = vmul.f32 %v1293, %v2765
    %v2830 = vmul.f32 %v1294, %v2766
    %v2831 = vmul.f32 %v1295, %v2767
    %v2832 = vmul.f32 %v1296, %v2768
    %v2833 = vmul.f32 %v1297, %v2769
    %v2834 = vmul.f32 %v1298, %v2770
    %v2835 = vmul.f32 %v1299, %v2771
    %v2836 = vmul.f32 %v1300, %v2772
    %v2837 = vmul.f32 %v1301, %v2773
    %v2838 = vmul.f32 %v1302, %v2774
    %v2839 = vmul.f32 %v1303, %v2775
    %v2840 = vmul.f32 %v1304, %v2776
    %v2841 = vmul.f32 %v1305, %v2777
    %v2842 = vmul.f32 %v1306, %v2778
    %v2843 = vmul.f32 %v1307, %v2779
    %v2844 = vmul.f32 %v1308, %v2780
    %v2845 = vmul.f32 %v1309, %v2781
    %v2846 = vmul.f32 %v1310, %v2782
    %v2847 = vmul.f32 %v1311, %v2783
    %v2848 = vmul.f32 %v1312, %v2784
    %v2849 = vmul.f32 %v1313, %v2785
    %v2850 = vmul.f32 %v1314, %v2786
    %v2851 = vmul.f32 %v1315, %v2787
    %v2852 = vmul.f32 %v1316, %v2788
    %v2853 = vmul.f32 %v1317, %v2789
    %v2854 = vmul.f32 %v1318, %v2790
    %v2855 = vmul.f32 %v1319, %v2791
    %v2856 = vmul.f32 %v1320, %v2792
    %v2857 = vmul.f32 %v1321, %v2793
    %v2858 = vmul.f32 %v1322, %v2794
    %v2859 = vmul.f32 %v1323, %v2795
    %v2860 = vmul.f32 %v1324, %v2796
    %v2861 = vmul.f32 %v1325, %v2797
    %v2862 = vmul.f32 %v1326, %v2798
    %v2863 = vmul.f32 %v1327, %v2799
    %v2864 = vmul.f32 %v1328, %v2800
    %v2865 = vmul.f32 %v1329, %v2801
    %v2866 = vmul.f32 %v1330, %v2802
    %v2867 = vtanh.pop %v2803
    %v2868 = vtanh.pop %v2804
    %v2869 = vtanh.pop %v2805
    %v2870 = vtanh.pop %v2806
    %v2871 = vtanh.pop %v2807
    %v2872 = vtanh.pop %v2808
    %v2873 = vtanh.pop %v2809
    %v2874 = vtanh.pop %v2810
    %v2875 = vtanh.pop %v2811
    %v2876 = vtanh.pop %v2812
    %v2877 = vtanh.pop %v2813
    %v2878 = vtanh.pop %v2814
    %v2879 = vtanh.pop %v2815
    %v2880 = vtanh.pop %v2816
    %v2881 = vtanh.pop %v2817
    %v2882 = vtanh.pop %v2818
    %v2883 = vtanh.pop %v2819
    %v2884 = vtanh.pop %v2820
    %v2885 = vtanh.pop %v2821
    %v2886 = vtanh.pop %v2822
    %v2887 = vtanh.pop %v2823
    %v2888 = vtanh.pop %v2824
    %v2889 = vtanh.pop %v2825
    %v2890 = vtanh.pop %v2826
    %v2891 = vtanh.pop %v2827
    %v2892 = vtanh.pop %v2828
    %v2893 = vtanh.pop %v2829
    %v2894 = vtanh.pop %v2830
    %v2895 = vtanh.pop %v2831
    %v2896 = vtanh.pop %v2832
    %v2897 = vtanh.pop %v2833
    %v2898 = vtanh.pop %v2834
    %v2899 = vtanh.pop %v2835
    %v2900 = vtanh.pop %v2836
    %v2901 = vtanh.pop %v2837
    %v2902 = vtanh.pop %v2838
    %v2903 = vtanh.pop %v2839
    %v2904 = vtanh.pop %v2840
    %v2905 = vtanh.pop %v2841
    %v2906 = vtanh.pop %v2842
    %v2907 = vtanh.pop %v2843
    %v2908 = vtanh.pop %v2844
    %v2909 = vtanh.pop %v2845
    %v2910 = vtanh.pop %v2846
    %v2911 = vtanh.pop %v2847
    %v2912 = vtanh.pop %v2848
    %v2913 = vtanh.pop %v2849
    %v2914 = vtanh.pop %v2850
    %v2915 = vtanh.pop %v2851
    %v2916 = vtanh.pop %v2852
    %v2917 = vtanh.pop %v2853
    %v2918 = vtanh.pop %v2854
    %v2919 = vtanh.pop %v2855
    %v2920 = vtanh.pop %v2856
    %v2921 = vtanh.pop %v2857
    %v2922 = vtanh.pop %v2858
    %v2923 = vtanh.pop %v2859
    %v2924 = vtanh.pop %v2860
    %v2925 = vtanh.pop %v2861
    %v2926 = vtanh.pop %v2862
    %v2927 = vtanh.pop %v2863
    %v2928 = vtanh.pop %v2864
    %v2929 = vtanh.pop %v2865
    %v2930 = vtanh.pop %v2866
    %v2931 = vmin.f32 %v2867, 0.996
    %v2932 = vmin.f32 %v2868, 0.996
    %v2933 = vmin.f32 %v2869, 0.996
    %v2934 = vmin.f32 %v2870, 0.996
    %v2935 = vmin.f32 %v2871, 0.996
    %v2936 = vmin.f32 %v2872, 0.996
    %v2937 = vmin.f32 %v2873, 0.996
    %v2938 = vmin.f32 %v2874, 0.996
    %v2939 = vmin.f32 %v2875, 0.996
    %v2940 = vmin.f32 %v2876, 0.996
    %v2941 = vmin.f32 %v2877, 0.996
    %v2942 = vmin.f32 %v2878, 0.996
    %v2943 = vmin.f32 %v2879, 0.996
    %v2944 = vmin.f32 %v2880, 0.996
    %v2945 = vmin.f32 %v2881, 0.996
    %v2946 = vmin.f32 %v2882, 0.996
    %v2947 = vmin.f32 %v2883, 0.996
    %v2948 = vmin.f32 %v2884, 0.996
    %v2949 = vmin.f32 %v2885, 0.996
    %v2950 = vmin.f32 %v2886, 0.996
    %v2951 = vmin.f32 %v2887, 0.996
    %v2952 = vmin.f32 %v2888, 0.996
    %v2953 = vmin.f32 %v2889, 0.996
    %v2954 = vmin.f32 %v2890, 0.996
    %v2955 = vmin.f32 %v2891, 0.996
    %v2956 = vmin.f32 %v2892, 0.996
    %v2957 = vmin.f32 %v2893, 0.996
    %v2958 = vmin.f32 %v2894, 0.996
    %v2959 = vmin.f32 %v2895, 0.996
    %v2960 = vmin.f32 %v2896, 0.996
    %v2961 = vmin.f32 %v2897, 0.996
    %v2962 = vmin.f32 %v2898, 0.996
    %v2963 = vmin.f32 %v2899, 0.996
    %v2964 = vmin.f32 %v2900, 0.996
    %v2965 = vmin.f32 %v2901, 0.996
    %v2966 = vmin.f32 %v2902, 0.996
    %v2967 = vmin.f32 %v2903, 0.996
    %v2968 = vmin.f32 %v2904, 0.996
    %v2969 = vmin.f32 %v2905, 0.996
    %v2970 = vmin.f32 %v2906, 0.996
    %v2971 = vmin.f32 %v2907, 0.996
    %v2972 = vmin.f32 %v2908, 0.996
    %v2973 = vmin.f32 %v2909, 0.996
    %v2974 = vmin.f32 %v2910, 0.996
    %v2975 = vmin.f32 %v2911, 0.996
    %v2976 = vmin.f32 %v2912, 0.996
    %v2977 = vmin.f32 %v2913, 0.996
    %v2978 = vmin.f32 %v2914, 0.996
    %v2979 = vmin.f32 %v2915, 0.996
    %v2980 = vmin.f32 %v2916, 0.996
    %v2981 = vmin.f32 %v2917, 0.996
    %v2982 = vmin.f32 %v2918, 0.996
    %v2983 = vmin.f32 %v2919, 0.996
    %v2984 = vmin.f32 %v2920, 0.996
    %v2985 = vmin.f32 %v2921, 0.996
    %v2986 = vmin.f32 %v2922, 0.996
    %v2987 = vmin.f32 %v2923, 0.996
    %v2988 = vmin.f32 %v2924, 0.996
    %v2989 = vmin.f32 %v2925, 0.996
    %v2990 = vmin.f32 %v2926, 0.996
    %v2991 = vmin.f32 %v2927, 0.996
    %v2992 = vmin.f32 %v2928, 0.996
    %v2993 = vmin.f32 %v2929, 0.996
    %v2994 = vmin.f32 %v2930, 0.996
    %vm2995 = vcmp.le.f32.partialorder %v948, 1e-30
    %vm2996 = vcmp.le.f32.partialorder %v950, 1e-30
    %vm2997 = vcmp.le.f32.partialorder %v952, 1e-30
    %vm2998 = vcmp.le.f32.partialorder %v954, 1e-30
    %vm2999 = vcmp.le.f32.partialorder %v956, 1e-30
    %vm3000 = vcmp.le.f32.partialorder %v958, 1e-30
    %vm3001 = vcmp.le.f32.partialorder %v960, 1e-30
    %vm3002 = vcmp.le.f32.partialorder %v962, 1e-30
    %vm3003 = vcmp.le.f32.partialorder %v964, 1e-30
    %vm3004 = vcmp.le.f32.partialorder %v966, 1e-30
    %vm3005 = vcmp.le.f32.partialorder %v968, 1e-30
    %vm3006 = vcmp.le.f32.partialorder %v970, 1e-30
    %vm3007 = vcmp.le.f32.partialorder %v972, 1e-30
    %vm3008 = vcmp.le.f32.partialorder %v974, 1e-30
    %vm3009 = vcmp.le.f32.partialorder %v976, 1e-30
    %vm3010 = vcmp.le.f32.partialorder %v978, 1e-30
    %vm3011 = vcmp.le.f32.partialorder %v980, 1e-30
    %vm3012 = vcmp.le.f32.partialorder %v982, 1e-30
    %vm3013 = vcmp.le.f32.partialorder %v984, 1e-30
    %vm3014 = vcmp.le.f32.partialorder %v986, 1e-30
    %vm3015 = vcmp.le.f32.partialorder %v988, 1e-30
    %vm3016 = vcmp.le.f32.partialorder %v990, 1e-30
    %vm3017 = vcmp.le.f32.partialorder %v992, 1e-30
    %vm3018 = vcmp.le.f32.partialorder %v994, 1e-30
    %vm3019 = vcmp.le.f32.partialorder %v996, 1e-30
    %vm3020 = vcmp.le.f32.partialorder %v998, 1e-30
    %vm3021 = vcmp.le.f32.partialorder %v1000, 1e-30
    %vm3022 = vcmp.le.f32.partialorder %v1002, 1e-30
    %vm3023 = vcmp.le.f32.partialorder %v1004, 1e-30
    %vm3024 = vcmp.le.f32.partialorder %v1006, 1e-30
    %vm3025 = vcmp.le.f32.partialorder %v1008, 1e-30
    %vm3026 = vcmp.le.f32.partialorder %v1010, 1e-30
    %vm3027 = vcmp.le.f32.partialorder %v1012, 1e-30
    %vm3028 = vcmp.le.f32.partialorder %v1014, 1e-30
    %vm3029 = vcmp.le.f32.partialorder %v1016, 1e-30
    %vm3030 = vcmp.le.f32.partialorder %v1018, 1e-30
    %vm3031 = vcmp.le.f32.partialorder %v1020, 1e-30
    %vm3032 = vcmp.le.f32.partialorder %v1022, 1e-30
    %vm3033 = vcmp.le.f32.partialorder %v1024, 1e-30
    %vm3034 = vcmp.le.f32.partialorder %v1026, 1e-30
    %vm3035 = vcmp.le.f32.partialorder %v1028, 1e-30
    %vm3036 = vcmp.le.f32.partialorder %v1030, 1e-30
    %vm3037 = vcmp.le.f32.partialorder %v1032, 1e-30
    %vm3038 = vcmp.le.f32.partialorder %v1034, 1e-30
    %vm3039 = vcmp.le.f32.partialorder %v1036, 1e-30
    %vm3040 = vcmp.le.f32.partialorder %v1038, 1e-30
    %vm3041 = vcmp.le.f32.partialorder %v1040, 1e-30
    %vm3042 = vcmp.le.f32.partialorder %v1042, 1e-30
    %vm3043 = vcmp.le.f32.partialorder %v1044, 1e-30
    %vm3044 = vcmp.le.f32.partialorder %v1046, 1e-30
    %vm3045 = vcmp.le.f32.partialorder %v1048, 1e-30
    %vm3046 = vcmp.le.f32.partialorder %v1050, 1e-30
    %vm3047 = vcmp.le.f32.partialorder %v1052, 1e-30
    %vm3048 = vcmp.le.f32.partialorder %v1054, 1e-30
    %vm3049 = vcmp.le.f32.partialorder %v1056, 1e-30
    %vm3050 = vcmp.le.f32.partialorder %v1058, 1e-30
    %vm3051 = vcmp.le.f32.partialorder %v1060, 1e-30
    %vm3052 = vcmp.le.f32.partialorder %v1062, 1e-30
    %vm3053 = vcmp.le.f32.partialorder %v1064, 1e-30
    %vm3054 = vcmp.le.f32.partialorder %v1066, 1e-30
    %vm3055 = vcmp.le.f32.partialorder %v1068, 1e-30
    %vm3056 = vcmp.le.f32.partialorder %v1070, 1e-30
    %vm3057 = vcmp.le.f32.partialorder %v1072, 1e-30
    %vm3058 = vcmp.le.f32.partialorder %v1074, 1e-30
    %v3059 = vmul.f32 %v2931, %v1139
    %v3060 = vmul.f32 %v2932, %v1140
    %v3061 = vmul.f32 %v2933, %v1141
    %v3062 = vmul.f32 %v2934, %v1142
    %v3063 = vmul.f32 %v2935, %v1143
    %v3064 = vmul.f32 %v2936, %v1144
    %v3065 = vmul.f32 %v2937, %v1145
    %v3066 = vmul.f32 %v2938, %v1146
    %v3067 = vmul.f32 %v2939, %v1147
    %v3068 = vmul.f32 %v2940, %v1148
    %v3069 = vmul.f32 %v2941, %v1149
    %v3070 = vmul.f32 %v2942, %v1150
    %v3071 = vmul.f32 %v2943, %v1151
    %v3072 = vmul.f32 %v2944, %v1152
    %v3073 = vmul.f32 %v2945, %v1153
    %v3074 = vmul.f32 %v2946, %v1154
    %v3075 = vmul.f32 %v2947, %v1155
    %v3076 = vmul.f32 %v2948, %v1156
    %v3077 = vmul.f32 %v2949, %v1157
    %v3078 = vmul.f32 %v2950, %v1158
    %v3079 = vmul.f32 %v2951, %v1159
    %v3080 = vmul.f32 %v2952, %v1160
    %v3081 = vmul.f32 %v2953, %v1161
    %v3082 = vmul.f32 %v2954, %v1162
    %v3083 = vmul.f32 %v2955, %v1163
    %v3084 = vmul.f32 %v2956, %v1164
    %v3085 = vmul.f32 %v2957, %v1165
    %v3086 = vmul.f32 %v2958, %v1166
    %v3087 = vmul.f32 %v2959, %v1167
    %v3088 = vmul.f32 %v2960, %v1168
    %v3089 = vmul.f32 %v2961, %v1169
    %v3090 = vmul.f32 %v2962, %v1170
    %v3091 = vmul.f32 %v2963, %v1171
    %v3092 = vmul.f32 %v2964, %v1172
    %v3093 = vmul.f32 %v2965, %v1173
    %v3094 = vmul.f32 %v2966, %v1174
    %v3095 = vmul.f32 %v2967, %v1175
    %v3096 = vmul.f32 %v2968, %v1176
    %v3097 = vmul.f32 %v2969, %v1177
    %v3098 = vmul.f32 %v2970, %v1178
    %v3099 = vmul.f32 %v2971, %v1179
    %v3100 = vmul.f32 %v2972, %v1180
    %v3101 = vmul.f32 %v2973, %v1181
    %v3102 = vmul.f32 %v2974, %v1182
    %v3103 = vmul.f32 %v2975, %v1183
    %v3104 = vmul.f32 %v2976, %v1184
    %v3105 = vmul.f32 %v2977, %v1185
    %v3106 = vmul.f32 %v2978, %v1186
    %v3107 = vmul.f32 %v2979, %v1187
    %v3108 = vmul.f32 %v2980, %v1188
    %v3109 = vmul.f32 %v2981, %v1189
    %v3110 = vmul.f32 %v2982, %v1190
    %v3111 = vmul.f32 %v2983, %v1191
    %v3112 = vmul.f32 %v2984, %v1192
    %v3113 = vmul.f32 %v2985, %v1193
    %v3114 = vmul.f32 %v2986, %v1194
    %v3115 = vmul.f32 %v2987, %v1195
    %v3116 = vmul.f32 %v2988, %v1196
    %v3117 = vmul.f32 %v2989, %v1197
    %v3118 = vmul.f32 %v2990, %v1198
    %v3119 = vmul.f32 %v2991, %v1199
    %v3120 = vmul.f32 %v2992, %v1200
    %v3121 = vmul.f32 %v2993, %v1201
    %v3122 = vmul.f32 %v2994, %v1202
    %v3123 = vmul.f32 %v3059, %v629
    %v3124 = vmul.f32 %v3060, %v632
    %v3125 = vmul.f32 %v3061, %v637
    %v3126 = vmul.f32 %v3062, %v640
    %v3127 = vmul.f32 %v3063, %v645
    %v3128 = vmul.f32 %v3064, %v648
    %v3129 = vmul.f32 %v3065, %v653
    %v3130 = vmul.f32 %v3066, %v656
    %v3131 = vmul.f32 %v3067, %v661
    %v3132 = vmul.f32 %v3068, %v664
    %v3133 = vmul.f32 %v3069, %v669
    %v3134 = vmul.f32 %v3070, %v672
    %v3135 = vmul.f32 %v3071, %v677
    %v3136 = vmul.f32 %v3072, %v680
    %v3137 = vmul.f32 %v3073, %v685
    %v3138 = vmul.f32 %v3074, %v688
    %v3139 = vmul.f32 %v3075, %v693
    %v3140 = vmul.f32 %v3076, %v696
    %v3141 = vmul.f32 %v3077, %v701
    %v3142 = vmul.f32 %v3078, %v704
    %v3143 = vmul.f32 %v3079, %v709
    %v3144 = vmul.f32 %v3080, %v712
    %v3145 = vmul.f32 %v3081, %v717
    %v3146 = vmul.f32 %v3082, %v720
    %v3147 = vmul.f32 %v3083, %v725
    %v3148 = vmul.f32 %v3084, %v728
    %v3149 = vmul.f32 %v3085, %v733
    %v3150 = vmul.f32 %v3086, %v736
    %v3151 = vmul.f32 %v3087, %v741
    %v3152 = vmul.f32 %v3088, %v744
    %v3153 = vmul.f32 %v3089, %v749
    %v3154 = vmul.f32 %v3090, %v752
    %v3155 = vmul.f32 %v3091, %v757
    %v3156 = vmul.f32 %v3092, %v760
    %v3157 = vmul.f32 %v3093, %v765
    %v3158 = vmul.f32 %v3094, %v768
    %v3159 = vmul.f32 %v3095, %v773
    %v3160 = vmul.f32 %v3096, %v776
    %v3161 = vmul.f32 %v3097, %v781
    %v3162 = vmul.f32 %v3098, %v784
    %v3163 = vmul.f32 %v3099, %v789
    %v3164 = vmul.f32 %v3100, %v792
    %v3165 = vmul.f32 %v3101, %v797
    %v3166 = vmul.f32 %v3102, %v800
    %v3167 = vmul.f32 %v3103, %v805
    %v3168 = vmul.f32 %v3104, %v808
    %v3169 = vmul.f32 %v3105, %v813
    %v3170 = vmul.f32 %v3106, %v816
    %v3171 = vmul.f32 %v3107, %v821
    %v3172 = vmul.f32 %v3108, %v824
    %v3173 = vmul.f32 %v3109, %v829
    %v3174 = vmul.f32 %v3110, %v832
    %v3175 = vmul.f32 %v3111, %v837
    %v3176 = vmul.f32 %v3112, %v840
    %v3177 = vmul.f32 %v3113, %v845
    %v3178 = vmul.f32 %v3114, %v848
    %v3179 = vmul.f32 %v3115, %v853
    %v3180 = vmul.f32 %v3116, %v856
    %v3181 = vmul.f32 %v3117, %v861
    %v3182 = vmul.f32 %v3118, %v864
    %v3183 = vmul.f32 %v3119, %v869
    %v3184 = vmul.f32 %v3120, %v872
    %v3185 = vmul.f32 %v3121, %v877
    %v3186 = vmul.f32 %v3122, %v880
    %v3187 = vsel %vm2995, 1, 0
    %v3188 = vsel %vm2996, 1, 0
    %v3189 = vsel %vm2997, 1, 0
    %v3190 = vsel %vm2998, 1, 0
    %v3191 = vsel %vm2999, 1, 0
    %v3192 = vsel %vm3000, 1, 0
    %v3193 = vsel %vm3001, 1, 0
    %v3194 = vsel %vm3002, 1, 0
    %v3195 = vsel %vm3003, 1, 0
    %v3196 = vsel %vm3004, 1, 0
    %v3197 = vsel %vm3005, 1, 0
    %v3198 = vsel %vm3006, 1, 0
    %v3199 = vsel %vm3007, 1, 0
    %v3200 = vsel %vm3008, 1, 0
    %v3201 = vsel %vm3009, 1, 0
    %v3202 = vsel %vm3010, 1, 0
    %v3203 = vsel %vm3011, 1, 0
    %v3204 = vsel %vm3012, 1, 0
    %v3205 = vsel %vm3013, 1, 0
    %v3206 = vsel %vm3014, 1, 0
    %v3207 = vsel %vm3015, 1, 0
    %v3208 = vsel %vm3016, 1, 0
    %v3209 = vsel %vm3017, 1, 0
    %v3210 = vsel %vm3018, 1, 0
    %v3211 = vsel %vm3019, 1, 0
    %v3212 = vsel %vm3020, 1, 0
    %v3213 = vsel %vm3021, 1, 0
    %v3214 = vsel %vm3022, 1, 0
    %v3215 = vsel %vm3023, 1, 0
    %v3216 = vsel %vm3024, 1, 0
    %v3217 = vsel %vm3025, 1, 0
    %v3218 = vsel %vm3026, 1, 0
    %v3219 = vsel %vm3027, 1, 0
    %v3220 = vsel %vm3028, 1, 0
    %v3221 = vsel %vm3029, 1, 0
    %v3222 = vsel %vm3030, 1, 0
    %v3223 = vsel %vm3031, 1, 0
    %v3224 = vsel %vm3032, 1, 0
    %v3225 = vsel %vm3033, 1, 0
    %v3226 = vsel %vm3034, 1, 0
    %v3227 = vsel %vm3035, 1, 0
    %v3228 = vsel %vm3036, 1, 0
    %v3229 = vsel %vm3037, 1, 0
    %v3230 = vsel %vm3038, 1, 0
    %v3231 = vsel %vm3039, 1, 0
    %v3232 = vsel %vm3040, 1, 0
    %v3233 = vsel %vm3041, 1, 0
    %v3234 = vsel %vm3042, 1, 0
    %v3235 = vsel %vm3043, 1, 0
    %v3236 = vsel %vm3044, 1, 0
    %v3237 = vsel %vm3045, 1, 0
    %v3238 = vsel %vm3046, 1, 0
    %v3239 = vsel %vm3047, 1, 0
    %v3240 = vsel %vm3048, 1, 0
    %v3241 = vsel %vm3049, 1, 0
    %v3242 = vsel %vm3050, 1, 0
    %v3243 = vsel %vm3051, 1, 0
    %v3244 = vsel %vm3052, 1, 0
    %v3245 = vsel %vm3053, 1, 0
    %v3246 = vsel %vm3054, 1, 0
    %v3247 = vsel %vm3055, 1, 0
    %v3248 = vsel %vm3056, 1, 0
    %v3249 = vsel %vm3057, 1, 0
    %v3250 = vsel %vm3058, 1, 0
    %vm3251 = vcmp.eq.s32.totalorder %v3187, 1
    %vm3252 = vcmp.eq.s32.totalorder %v3188, 1
    %vm3253 = vcmp.eq.s32.totalorder %v3189, 1
    %vm3254 = vcmp.eq.s32.totalorder %v3190, 1
    %vm3255 = vcmp.eq.s32.totalorder %v3191, 1
    %vm3256 = vcmp.eq.s32.totalorder %v3192, 1
    %vm3257 = vcmp.eq.s32.totalorder %v3193, 1
    %vm3258 = vcmp.eq.s32.totalorder %v3194, 1
    %vm3259 = vcmp.eq.s32.totalorder %v3195, 1
    %vm3260 = vcmp.eq.s32.totalorder %v3196, 1
    %vm3261 = vcmp.eq.s32.totalorder %v3197, 1
    %vm3262 = vcmp.eq.s32.totalorder %v3198, 1
    %vm3263 = vcmp.eq.s32.totalorder %v3199, 1
    %vm3264 = vcmp.eq.s32.totalorder %v3200, 1
    %vm3265 = vcmp.eq.s32.totalorder %v3201, 1
    %vm3266 = vcmp.eq.s32.totalorder %v3202, 1
    %vm3267 = vcmp.eq.s32.totalorder %v3203, 1
    %vm3268 = vcmp.eq.s32.totalorder %v3204, 1
    %vm3269 = vcmp.eq.s32.totalorder %v3205, 1
    %vm3270 = vcmp.eq.s32.totalorder %v3206, 1
    %vm3271 = vcmp.eq.s32.totalorder %v3207, 1
    %vm3272 = vcmp.eq.s32.totalorder %v3208, 1
    %vm3273 = vcmp.eq.s32.totalorder %v3209, 1
    %vm3274 = vcmp.eq.s32.totalorder %v3210, 1
    %vm3275 = vcmp.eq.s32.totalorder %v3211, 1
    %vm3276 = vcmp.eq.s32.totalorder %v3212, 1
    %vm3277 = vcmp.eq.s32.totalorder %v3213, 1
    %vm3278 = vcmp.eq.s32.totalorder %v3214, 1
    %vm3279 = vcmp.eq.s32.totalorder %v3215, 1
    %vm3280 = vcmp.eq.s32.totalorder %v3216, 1
    %vm3281 = vcmp.eq.s32.totalorder %v3217, 1
    %vm3282 = vcmp.eq.s32.totalorder %v3218, 1
    %vm3283 = vcmp.eq.s32.totalorder %v3219, 1
    %vm3284 = vcmp.eq.s32.totalorder %v3220, 1
    %vm3285 = vcmp.eq.s32.totalorder %v3221, 1
    %vm3286 = vcmp.eq.s32.totalorder %v3222, 1
    %vm3287 = vcmp.eq.s32.totalorder %v3223, 1
    %vm3288 = vcmp.eq.s32.totalorder %v3224, 1
    %vm3289 = vcmp.eq.s32.totalorder %v3225, 1
    %vm3290 = vcmp.eq.s32.totalorder %v3226, 1
    %vm3291 = vcmp.eq.s32.totalorder %v3227, 1
    %vm3292 = vcmp.eq.s32.totalorder %v3228, 1
    %vm3293 = vcmp.eq.s32.totalorder %v3229, 1
    %vm3294 = vcmp.eq.s32.totalorder %v3230, 1
    %vm3295 = vcmp.eq.s32.totalorder %v3231, 1
    %vm3296 = vcmp.eq.s32.totalorder %v3232, 1
    %vm3297 = vcmp.eq.s32.totalorder %v3233, 1
    %vm3298 = vcmp.eq.s32.totalorder %v3234, 1
    %vm3299 = vcmp.eq.s32.totalorder %v3235, 1
    %vm3300 = vcmp.eq.s32.totalorder %v3236, 1
    %vm3301 = vcmp.eq.s32.totalorder %v3237, 1
    %vm3302 = vcmp.eq.s32.totalorder %v3238, 1
    %vm3303 = vcmp.eq.s32.totalorder %v3239, 1
    %vm3304 = vcmp.eq.s32.totalorder %v3240, 1
    %vm3305 = vcmp.eq.s32.totalorder %v3241, 1
    %vm3306 = vcmp.eq.s32.totalorder %v3242, 1
    %vm3307 = vcmp.eq.s32.totalorder %v3243, 1
    %vm3308 = vcmp.eq.s32.totalorder %v3244, 1
    %vm3309 = vcmp.eq.s32.totalorder %v3245, 1
    %vm3310 = vcmp.eq.s32.totalorder %v3246, 1
    %vm3311 = vcmp.eq.s32.totalorder %v3247, 1
    %vm3312 = vcmp.eq.s32.totalorder %v3248, 1
    %vm3313 = vcmp.eq.s32.totalorder %v3249, 1
    %vm3314 = vcmp.eq.s32.totalorder %v3250, 1
    %v3315 = vsel %vm3251, 0.0, %v3123
    %v3316 = vsel %vm3252, 0.0, %v3124
    %v3317 = vsel %vm3253, 0.0, %v3125
    %v3318 = vsel %vm3254, 0.0, %v3126
    %v3319 = vsel %vm3255, 0.0, %v3127
    %v3320 = vsel %vm3256, 0.0, %v3128
    %v3321 = vsel %vm3257, 0.0, %v3129
    %v3322 = vsel %vm3258, 0.0, %v3130
    %v3323 = vsel %vm3259, 0.0, %v3131
    %v3324 = vsel %vm3260, 0.0, %v3132
    %v3325 = vsel %vm3261, 0.0, %v3133
    %v3326 = vsel %vm3262, 0.0, %v3134
    %v3327 = vsel %vm3263, 0.0, %v3135
    %v3328 = vsel %vm3264, 0.0, %v3136
    %v3329 = vsel %vm3265, 0.0, %v3137
    %v3330 = vsel %vm3266, 0.0, %v3138
    %v3331 = vsel %vm3267, 0.0, %v3139
    %v3332 = vsel %vm3268, 0.0, %v3140
    %v3333 = vsel %vm3269, 0.0, %v3141
    %v3334 = vsel %vm3270, 0.0, %v3142
    %v3335 = vsel %vm3271, 0.0, %v3143
    %v3336 = vsel %vm3272, 0.0, %v3144
    %v3337 = vsel %vm3273, 0.0, %v3145
    %v3338 = vsel %vm3274, 0.0, %v3146
    %v3339 = vsel %vm3275, 0.0, %v3147
    %v3340 = vsel %vm3276, 0.0, %v3148
    %v3341 = vsel %vm3277, 0.0, %v3149
    %v3342 = vsel %vm3278, 0.0, %v3150
    %v3343 = vsel %vm3279, 0.0, %v3151
    %v3344 = vsel %vm3280, 0.0, %v3152
    %v3345 = vsel %vm3281, 0.0, %v3153
    %v3346 = vsel %vm3282, 0.0, %v3154
    %v3347 = vsel %vm3283, 0.0, %v3155
    %v3348 = vsel %vm3284, 0.0, %v3156
    %v3349 = vsel %vm3285, 0.0, %v3157
    %v3350 = vsel %vm3286, 0.0, %v3158
    %v3351 = vsel %vm3287, 0.0, %v3159
    %v3352 = vsel %vm3288, 0.0, %v3160
    %v3353 = vsel %vm3289, 0.0, %v3161
    %v3354 = vsel %vm3290, 0.0, %v3162
    %v3355 = vsel %vm3291, 0.0, %v3163
    %v3356 = vsel %vm3292, 0.0, %v3164
    %v3357 = vsel %vm3293, 0.0, %v3165
    %v3358 = vsel %vm3294, 0.0, %v3166
    %v3359 = vsel %vm3295, 0.0, %v3167
    %v3360 = vsel %vm3296, 0.0, %v3168
    %v3361 = vsel %vm3297, 0.0, %v3169
    %v3362 = vsel %vm3298, 0.0, %v3170
    %v3363 = vsel %vm3299, 0.0, %v3171
    %v3364 = vsel %vm3300, 0.0, %v3172
    %v3365 = vsel %vm3301, 0.0, %v3173
    %v3366 = vsel %vm3302, 0.0, %v3174
    %v3367 = vsel %vm3303, 0.0, %v3175
    %v3368 = vsel %vm3304, 0.0, %v3176
    %v3369 = vsel %vm3305, 0.0, %v3177
    %v3370 = vsel %vm3306, 0.0, %v3178
    %v3371 = vsel %vm3307, 0.0, %v3179
    %v3372 = vsel %vm3308, 0.0, %v3180
    %v3373 = vsel %vm3309, 0.0, %v3181
    %v3374 = vsel %vm3310, 0.0, %v3182
    %v3375 = vsel %vm3311, 0.0, %v3183
    %v3376 = vsel %vm3312, 0.0, %v3184
    %v3377 = vsel %vm3313, 0.0, %v3185
    %v3378 = vsel %vm3314, 0.0, %v3186
    %v3379 = vmul.f32 %v2931, %v2931
    %v3380 = vmul.f32 %v2932, %v2932
    %v3381 = vmul.f32 %v2933, %v2933
    %v3382 = vmul.f32 %v2934, %v2934
    %v3383 = vmul.f32 %v2935, %v2935
    %v3384 = vmul.f32 %v2936, %v2936
    %v3385 = vmul.f32 %v2937, %v2937
    %v3386 = vmul.f32 %v2938, %v2938
    %v3387 = vmul.f32 %v2939, %v2939
    %v3388 = vmul.f32 %v2940, %v2940
    %v3389 = vmul.f32 %v2941, %v2941
    %v3390 = vmul.f32 %v2942, %v2942
    %v3391 = vmul.f32 %v2943, %v2943
    %v3392 = vmul.f32 %v2944, %v2944
    %v3393 = vmul.f32 %v2945, %v2945
    %v3394 = vmul.f32 %v2946, %v2946
    %v3395 = vmul.f32 %v2947, %v2947
    %v3396 = vmul.f32 %v2948, %v2948
    %v3397 = vmul.f32 %v2949, %v2949
    %v3398 = vmul.f32 %v2950, %v2950
    %v3399 = vmul.f32 %v2951, %v2951
    %v3400 = vmul.f32 %v2952, %v2952
    %v3401 = vmul.f32 %v2953, %v2953
    %v3402 = vmul.f32 %v2954, %v2954
    %v3403 = vmul.f32 %v2955, %v2955
    %v3404 = vmul.f32 %v2956, %v2956
    %v3405 = vmul.f32 %v2957, %v2957
    %v3406 = vmul.f32 %v2958, %v2958
    %v3407 = vmul.f32 %v2959, %v2959
    %v3408 = vmul.f32 %v2960, %v2960
    %v3409 = vmul.f32 %v2961, %v2961
    %v3410 = vmul.f32 %v2962, %v2962
    %v3411 = vmul.f32 %v2963, %v2963
    %v3412 = vmul.f32 %v2964, %v2964
    %v3413 = vmul.f32 %v2965, %v2965
    %v3414 = vmul.f32 %v2966, %v2966
    %v3415 = vmul.f32 %v2967, %v2967
    %v3416 = vmul.f32 %v2968, %v2968
    %v3417 = vmul.f32 %v2969, %v2969
    %v3418 = vmul.f32 %v2970, %v2970
    %v3419 = vmul.f32 %v2971, %v2971
    %v3420 = vmul.f32 %v2972, %v2972
    %v3421 = vmul.f32 %v2973, %v2973
    %v3422 = vmul.f32 %v2974, %v2974
    %v3423 = vmul.f32 %v2975, %v2975
    %v3424 = vmul.f32 %v2976, %v2976
    %v3425 = vmul.f32 %v2977, %v2977
    %v3426 = vmul.f32 %v2978, %v2978
    %v3427 = vmul.f32 %v2979, %v2979
    %v3428 = vmul.f32 %v2980, %v2980
    %v3429 = vmul.f32 %v2981, %v2981
    %v3430 = vmul.f32 %v2982, %v2982
    %v3431 = vmul.f32 %v2983, %v2983
    %v3432 = vmul.f32 %v2984, %v2984
    %v3433 = vmul.f32 %v2985, %v2985
    %v3434 = vmul.f32 %v2986, %v2986
    %v3435 = vmul.f32 %v2987, %v2987
    %v3436 = vmul.f32 %v2988, %v2988
    %v3437 = vmul.f32 %v2989, %v2989
    %v3438 = vmul.f32 %v2990, %v2990
    %v3439 = vmul.f32 %v2991, %v2991
    %v3440 = vmul.f32 %v2992, %v2992
    %v3441 = vmul.f32 %v2993, %v2993
    %v3442 = vmul.f32 %v2994, %v2994
    %v3443 = vsel %vm2995, 0.0, %v3379
    %v3444 = vsel %vm2996, 0.0, %v3380
    %v3445 = vsel %vm2997, 0.0, %v3381
    %v3446 = vsel %vm2998, 0.0, %v3382
    %v3447 = vsel %vm2999, 0.0, %v3383
    %v3448 = vsel %vm3000, 0.0, %v3384
    %v3449 = vsel %vm3001, 0.0, %v3385
    %v3450 = vsel %vm3002, 0.0, %v3386
    %v3451 = vsel %vm3003, 0.0, %v3387
    %v3452 = vsel %vm3004, 0.0, %v3388
    %v3453 = vsel %vm3005, 0.0, %v3389
    %v3454 = vsel %vm3006, 0.0, %v3390
    %v3455 = vsel %vm3007, 0.0, %v3391
    %v3456 = vsel %vm3008, 0.0, %v3392
    %v3457 = vsel %vm3009, 0.0, %v3393
    %v3458 = vsel %vm3010, 0.0, %v3394
    %v3459 = vsel %vm3011, 0.0, %v3395
    %v3460 = vsel %vm3012, 0.0, %v3396
    %v3461 = vsel %vm3013, 0.0, %v3397
    %v3462 = vsel %vm3014, 0.0, %v3398
    %v3463 = vsel %vm3015, 0.0, %v3399
    %v3464 = vsel %vm3016, 0.0, %v3400
    %v3465 = vsel %vm3017, 0.0, %v3401
    %v3466 = vsel %vm3018, 0.0, %v3402
    %v3467 = vsel %vm3019, 0.0, %v3403
    %v3468 = vsel %vm3020, 0.0, %v3404
    %v3469 = vsel %vm3021, 0.0, %v3405
    %v3470 = vsel %vm3022, 0.0, %v3406
    %v3471 = vsel %vm3023, 0.0, %v3407
    %v3472 = vsel %vm3024, 0.0, %v3408
    %v3473 = vsel %vm3025, 0.0, %v3409
    %v3474 = vsel %vm3026, 0.0, %v3410
    %v3475 = vsel %vm3027, 0.0, %v3411
    %v3476 = vsel %vm3028, 0.0, %v3412
    %v3477 = vsel %vm3029, 0.0, %v3413
    %v3478 = vsel %vm3030, 0.0, %v3414
    %v3479 = vsel %vm3031, 0.0, %v3415
    %v3480 = vsel %vm3032, 0.0, %v3416
    %v3481 = vsel %vm3033, 0.0, %v3417
    %v3482 = vsel %vm3034, 0.0, %v3418
    %v3483 = vsel %vm3035, 0.0, %v3419
    %v3484 = vsel %vm3036, 0.0, %v3420
    %v3485 = vsel %vm3037, 0.0, %v3421
    %v3486 = vsel %vm3038, 0.0, %v3422
    %v3487 = vsel %vm3039, 0.0, %v3423
    %v3488 = vsel %vm3040, 0.0, %v3424
    %v3489 = vsel %vm3041, 0.0, %v3425
    %v3490 = vsel %vm3042, 0.0, %v3426
    %v3491 = vsel %vm3043, 0.0, %v3427
    %v3492 = vsel %vm3044, 0.0, %v3428
    %v3493 = vsel %vm3045, 0.0, %v3429
    %v3494 = vsel %vm3046, 0.0, %v3430
    %v3495 = vsel %vm3047, 0.0, %v3431
    %v3496 = vsel %vm3048, 0.0, %v3432
    %v3497 = vsel %vm3049, 0.0, %v3433
    %v3498 = vsel %vm3050, 0.0, %v3434
    %v3499 = vsel %vm3051, 0.0, %v3435
    %v3500 = vsel %vm3052, 0.0, %v3436
    %v3501 = vsel %vm3053, 0.0, %v3437
    %v3502 = vsel %vm3054, 0.0, %v3438
    %v3503 = vsel %vm3055, 0.0, %v3439
    %v3504 = vsel %vm3056, 0.0, %v3440
    %v3505 = vsel %vm3057, 0.0, %v3441
    %v3506 = vsel %vm3058, 0.0, %v3442
    %v3508 = vlaneseq
    %v3509 = vshrl.u32 %v3508, 7
    %v3510 = vsub.s32 0, %v3509
    %v3511 = vrot.slane %v128, %v3510
    %v3513 = vmul.f32 %v3315, %v3511
    %v3514 = vmul.f32 %v3316, %v3511
    %v3515 = vmul.f32 %v3317, %v3511
    %v3516 = vmul.f32 %v3318, %v3511
    %v3517 = vmul.f32 %v3319, %v3511
    %v3518 = vmul.f32 %v3320, %v3511
    %v3519 = vmul.f32 %v3321, %v3511
    %v3520 = vmul.f32 %v3322, %v3511
    %v3521 = vmul.f32 %v3323, %v3511
    %v3522 = vmul.f32 %v3324, %v3511
    %v3523 = vmul.f32 %v3325, %v3511
    %v3524 = vmul.f32 %v3326, %v3511
    %v3525 = vmul.f32 %v3327, %v3511
    %v3526 = vmul.f32 %v3328, %v3511
    %v3527 = vmul.f32 %v3329, %v3511
    %v3528 = vmul.f32 %v3330, %v3511
    %v3529 = vmul.f32 %v3331, %v3511
    %v3530 = vmul.f32 %v3332, %v3511
    %v3531 = vmul.f32 %v3333, %v3511
    %v3532 = vmul.f32 %v3334, %v3511
    %v3533 = vmul.f32 %v3335, %v3511
    %v3534 = vmul.f32 %v3336, %v3511
    %v3535 = vmul.f32 %v3337, %v3511
    %v3536 = vmul.f32 %v3338, %v3511
    %v3537 = vmul.f32 %v3339, %v3511
    %v3538 = vmul.f32 %v3340, %v3511
    %v3539 = vmul.f32 %v3341, %v3511
    %v3540 = vmul.f32 %v3342, %v3511
    %v3541 = vmul.f32 %v3343, %v3511
    %v3542 = vmul.f32 %v3344, %v3511
    %v3543 = vmul.f32 %v3345, %v3511
    %v3544 = vmul.f32 %v3346, %v3511
    %v3545 = vmul.f32 %v3347, %v3511
    %v3546 = vmul.f32 %v3348, %v3511
    %v3547 = vmul.f32 %v3349, %v3511
    %v3548 = vmul.f32 %v3350, %v3511
    %v3549 = vmul.f32 %v3351, %v3511
    %v3550 = vmul.f32 %v3352, %v3511
    %v3551 = vmul.f32 %v3353, %v3511
    %v3552 = vmul.f32 %v3354, %v3511
    %v3553 = vmul.f32 %v3355, %v3511
    %v3554 = vmul.f32 %v3356, %v3511
    %v3555 = vmul.f32 %v3357, %v3511
    %v3556 = vmul.f32 %v3358, %v3511
    %v3557 = vmul.f32 %v3359, %v3511
    %v3558 = vmul.f32 %v3360, %v3511
    %v3559 = vmul.f32 %v3361, %v3511
    %v3560 = vmul.f32 %v3362, %v3511
    %v3561 = vmul.f32 %v3363, %v3511
    %v3562 = vmul.f32 %v3364, %v3511
    %v3563 = vmul.f32 %v3365, %v3511
    %v3564 = vmul.f32 %v3366, %v3511
    %v3565 = vmul.f32 %v3367, %v3511
    %v3566 = vmul.f32 %v3368, %v3511
    %v3567 = vmul.f32 %v3369, %v3511
    %v3568 = vmul.f32 %v3370, %v3511
    %v3569 = vmul.f32 %v3371, %v3511
    %v3570 = vmul.f32 %v3372, %v3511
    %v3571 = vmul.f32 %v3373, %v3511
    %v3572 = vmul.f32 %v3374, %v3511
    %v3573 = vmul.f32 %v3375, %v3511
    %v3574 = vmul.f32 %v3376, %v3511
    %v3575 = vmul.f32 %v3377, %v3511
    %v3576 = vmul.f32 %v3378, %v3511
    %3577 = vadd.xlane.f32.xlu0 %v3513
    %v3578 = vpop.xlane.xlu0 %3577
    %3579 = vadd.xlane.f32.xlu0 %v3514
    %v3580 = vpop.xlane.xlu0 %3579
    %3581 = vadd.xlane.f32.xlu0 %v3515
    %v3582 = vpop.xlane.xlu0 %3581
    %3583 = vadd.xlane.f32.xlu0 %v3516
    %v3584 = vpop.xlane.xlu0 %3583
    %3585 = vadd.xlane.f32.xlu0 %v3517
    %v3586 = vpop.xlane.xlu0 %3585
    %3587 = vadd.xlane.f32.xlu0 %v3518
    %v3588 = vpop.xlane.xlu0 %3587
    %3589 = vadd.xlane.f32.xlu0 %v3519
    %v3590 = vpop.xlane.xlu0 %3589
    %3591 = vadd.xlane.f32.xlu0 %v3520
    %v3592 = vpop.xlane.xlu0 %3591
    %3593 = vadd.xlane.f32.xlu0 %v3521
    %v3594 = vpop.xlane.xlu0 %3593
    %3595 = vadd.xlane.f32.xlu0 %v3522
    %v3596 = vpop.xlane.xlu0 %3595
    %3597 = vadd.xlane.f32.xlu0 %v3523
    %v3598 = vpop.xlane.xlu0 %3597
    %3599 = vadd.xlane.f32.xlu0 %v3524
    %v3600 = vpop.xlane.xlu0 %3599
    %3601 = vadd.xlane.f32.xlu0 %v3525
    %v3602 = vpop.xlane.xlu0 %3601
    %3603 = vadd.xlane.f32.xlu0 %v3526
    %v3604 = vpop.xlane.xlu0 %3603
    %3605 = vadd.xlane.f32.xlu0 %v3527
    %v3606 = vpop.xlane.xlu0 %3605
    %3607 = vadd.xlane.f32.xlu0 %v3528
    %v3608 = vpop.xlane.xlu0 %3607
    %3609 = vadd.xlane.f32.xlu0 %v3529
    %v3610 = vpop.xlane.xlu0 %3609
    %3611 = vadd.xlane.f32.xlu0 %v3530
    %v3612 = vpop.xlane.xlu0 %3611
    %3613 = vadd.xlane.f32.xlu0 %v3531
    %v3614 = vpop.xlane.xlu0 %3613
    %3615 = vadd.xlane.f32.xlu0 %v3532
    %v3616 = vpop.xlane.xlu0 %3615
    %3617 = vadd.xlane.f32.xlu0 %v3533
    %v3618 = vpop.xlane.xlu0 %3617
    %3619 = vadd.xlane.f32.xlu0 %v3534
    %v3620 = vpop.xlane.xlu0 %3619
    %3621 = vadd.xlane.f32.xlu0 %v3535
    %v3622 = vpop.xlane.xlu0 %3621
    %3623 = vadd.xlane.f32.xlu0 %v3536
    %v3624 = vpop.xlane.xlu0 %3623
    %3625 = vadd.xlane.f32.xlu0 %v3537
    %v3626 = vpop.xlane.xlu0 %3625
    %3627 = vadd.xlane.f32.xlu0 %v3538
    %v3628 = vpop.xlane.xlu0 %3627
    %3629 = vadd.xlane.f32.xlu0 %v3539
    %v3630 = vpop.xlane.xlu0 %3629
    %3631 = vadd.xlane.f32.xlu0 %v3540
    %v3632 = vpop.xlane.xlu0 %3631
    %3633 = vadd.xlane.f32.xlu0 %v3541
    %v3634 = vpop.xlane.xlu0 %3633
    %3635 = vadd.xlane.f32.xlu0 %v3542
    %v3636 = vpop.xlane.xlu0 %3635
    %3637 = vadd.xlane.f32.xlu0 %v3543
    %v3638 = vpop.xlane.xlu0 %3637
    %3639 = vadd.xlane.f32.xlu0 %v3544
    %v3640 = vpop.xlane.xlu0 %3639
    %3641 = vadd.xlane.f32.xlu0 %v3545
    %v3642 = vpop.xlane.xlu0 %3641
    %3643 = vadd.xlane.f32.xlu0 %v3546
    %v3644 = vpop.xlane.xlu0 %3643
    %3645 = vadd.xlane.f32.xlu0 %v3547
    %v3646 = vpop.xlane.xlu0 %3645
    %3647 = vadd.xlane.f32.xlu0 %v3548
    %v3648 = vpop.xlane.xlu0 %3647
    %3649 = vadd.xlane.f32.xlu0 %v3549
    %v3650 = vpop.xlane.xlu0 %3649
    %3651 = vadd.xlane.f32.xlu0 %v3550
    %v3652 = vpop.xlane.xlu0 %3651
    %3653 = vadd.xlane.f32.xlu0 %v3551
    %v3654 = vpop.xlane.xlu0 %3653
    %3655 = vadd.xlane.f32.xlu0 %v3552
    %v3656 = vpop.xlane.xlu0 %3655
    %3657 = vadd.xlane.f32.xlu0 %v3553
    %v3658 = vpop.xlane.xlu0 %3657
    %3659 = vadd.xlane.f32.xlu0 %v3554
    %v3660 = vpop.xlane.xlu0 %3659
    %3661 = vadd.xlane.f32.xlu0 %v3555
    %v3662 = vpop.xlane.xlu0 %3661
    %3663 = vadd.xlane.f32.xlu0 %v3556
    %v3664 = vpop.xlane.xlu0 %3663
    %3665 = vadd.xlane.f32.xlu0 %v3557
    %v3666 = vpop.xlane.xlu0 %3665
    %3667 = vadd.xlane.f32.xlu0 %v3558
    %v3668 = vpop.xlane.xlu0 %3667
    %3669 = vadd.xlane.f32.xlu0 %v3559
    %v3670 = vpop.xlane.xlu0 %3669
    %3671 = vadd.xlane.f32.xlu0 %v3560
    %v3672 = vpop.xlane.xlu0 %3671
    %3673 = vadd.xlane.f32.xlu0 %v3561
    %v3674 = vpop.xlane.xlu0 %3673
    %3675 = vadd.xlane.f32.xlu0 %v3562
    %v3676 = vpop.xlane.xlu0 %3675
    %3677 = vadd.xlane.f32.xlu0 %v3563
    %v3678 = vpop.xlane.xlu0 %3677
    %3679 = vadd.xlane.f32.xlu0 %v3564
    %v3680 = vpop.xlane.xlu0 %3679
    %3681 = vadd.xlane.f32.xlu0 %v3565
    %v3682 = vpop.xlane.xlu0 %3681
    %3683 = vadd.xlane.f32.xlu0 %v3566
    %v3684 = vpop.xlane.xlu0 %3683
    %3685 = vadd.xlane.f32.xlu0 %v3567
    %v3686 = vpop.xlane.xlu0 %3685
    %3687 = vadd.xlane.f32.xlu0 %v3568
    %v3688 = vpop.xlane.xlu0 %3687
    %3689 = vadd.xlane.f32.xlu0 %v3569
    %v3690 = vpop.xlane.xlu0 %3689
    %3691 = vadd.xlane.f32.xlu0 %v3570
    %v3692 = vpop.xlane.xlu0 %3691
    %3693 = vadd.xlane.f32.xlu0 %v3571
    %v3694 = vpop.xlane.xlu0 %3693
    %3695 = vadd.xlane.f32.xlu0 %v3572
    %v3696 = vpop.xlane.xlu0 %3695
    %3697 = vadd.xlane.f32.xlu0 %v3573
    %v3698 = vpop.xlane.xlu0 %3697
    %3699 = vadd.xlane.f32.xlu0 %v3574
    %v3700 = vpop.xlane.xlu0 %3699
    %3701 = vadd.xlane.f32.xlu0 %v3575
    %v3702 = vpop.xlane.xlu0 %3701
    %3703 = vadd.xlane.f32.xlu0 %v3576
    %v3704 = vpop.xlane.xlu0 %3703
    %v3705 = vmul.f32 %v3578, 2.0
    %v3706 = vmul.f32 %v3580, 2.0
    %v3707 = vmul.f32 %v3582, 2.0
    %v3708 = vmul.f32 %v3584, 2.0
    %v3709 = vmul.f32 %v3586, 2.0
    %v3710 = vmul.f32 %v3588, 2.0
    %v3711 = vmul.f32 %v3590, 2.0
    %v3712 = vmul.f32 %v3592, 2.0
    %v3713 = vmul.f32 %v3594, 2.0
    %v3714 = vmul.f32 %v3596, 2.0
    %v3715 = vmul.f32 %v3598, 2.0
    %v3716 = vmul.f32 %v3600, 2.0
    %v3717 = vmul.f32 %v3602, 2.0
    %v3718 = vmul.f32 %v3604, 2.0
    %v3719 = vmul.f32 %v3606, 2.0
    %v3720 = vmul.f32 %v3608, 2.0
    %v3721 = vmul.f32 %v3610, 2.0
    %v3722 = vmul.f32 %v3612, 2.0
    %v3723 = vmul.f32 %v3614, 2.0
    %v3724 = vmul.f32 %v3616, 2.0
    %v3725 = vmul.f32 %v3618, 2.0
    %v3726 = vmul.f32 %v3620, 2.0
    %v3727 = vmul.f32 %v3622, 2.0
    %v3728 = vmul.f32 %v3624, 2.0
    %v3729 = vmul.f32 %v3626, 2.0
    %v3730 = vmul.f32 %v3628, 2.0
    %v3731 = vmul.f32 %v3630, 2.0
    %v3732 = vmul.f32 %v3632, 2.0
    %v3733 = vmul.f32 %v3634, 2.0
    %v3734 = vmul.f32 %v3636, 2.0
    %v3735 = vmul.f32 %v3638, 2.0
    %v3736 = vmul.f32 %v3640, 2.0
    %v3737 = vmul.f32 %v3642, 2.0
    %v3738 = vmul.f32 %v3644, 2.0
    %v3739 = vmul.f32 %v3646, 2.0
    %v3740 = vmul.f32 %v3648, 2.0
    %v3741 = vmul.f32 %v3650, 2.0
    %v3742 = vmul.f32 %v3652, 2.0
    %v3743 = vmul.f32 %v3654, 2.0
    %v3744 = vmul.f32 %v3656, 2.0
    %v3745 = vmul.f32 %v3658, 2.0
    %v3746 = vmul.f32 %v3660, 2.0
    %v3747 = vmul.f32 %v3662, 2.0
    %v3748 = vmul.f32 %v3664, 2.0
    %v3749 = vmul.f32 %v3666, 2.0
    %v3750 = vmul.f32 %v3668, 2.0
    %v3751 = vmul.f32 %v3670, 2.0
    %v3752 = vmul.f32 %v3672, 2.0
    %v3753 = vmul.f32 %v3674, 2.0
    %v3754 = vmul.f32 %v3676, 2.0
    %v3755 = vmul.f32 %v3678, 2.0
    %v3756 = vmul.f32 %v3680, 2.0
    %v3757 = vmul.f32 %v3682, 2.0
    %v3758 = vmul.f32 %v3684, 2.0
    %v3759 = vmul.f32 %v3686, 2.0
    %v3760 = vmul.f32 %v3688, 2.0
    %v3761 = vmul.f32 %v3690, 2.0
    %v3762 = vmul.f32 %v3692, 2.0
    %v3763 = vmul.f32 %v3694, 2.0
    %v3764 = vmul.f32 %v3696, 2.0
    %v3765 = vmul.f32 %v3698, 2.0
    %v3766 = vmul.f32 %v3700, 2.0
    %v3767 = vmul.f32 %v3702, 2.0
    %v3768 = vmul.f32 %v3704, 2.0
    %v3769 = vadd.f32 %v3705, 1.0
    %v3770 = vadd.f32 %v3706, 1.0
    %v3771 = vadd.f32 %v3707, 1.0
    %v3772 = vadd.f32 %v3708, 1.0
    %v3773 = vadd.f32 %v3709, 1.0
    %v3774 = vadd.f32 %v3710, 1.0
    %v3775 = vadd.f32 %v3711, 1.0
    %v3776 = vadd.f32 %v3712, 1.0
    %v3777 = vadd.f32 %v3713, 1.0
    %v3778 = vadd.f32 %v3714, 1.0
    %v3779 = vadd.f32 %v3715, 1.0
    %v3780 = vadd.f32 %v3716, 1.0
    %v3781 = vadd.f32 %v3717, 1.0
    %v3782 = vadd.f32 %v3718, 1.0
    %v3783 = vadd.f32 %v3719, 1.0
    %v3784 = vadd.f32 %v3720, 1.0
    %v3785 = vadd.f32 %v3721, 1.0
    %v3786 = vadd.f32 %v3722, 1.0
    %v3787 = vadd.f32 %v3723, 1.0
    %v3788 = vadd.f32 %v3724, 1.0
    %v3789 = vadd.f32 %v3725, 1.0
    %v3790 = vadd.f32 %v3726, 1.0
    %v3791 = vadd.f32 %v3727, 1.0
    %v3792 = vadd.f32 %v3728, 1.0
    %v3793 = vadd.f32 %v3729, 1.0
    %v3794 = vadd.f32 %v3730, 1.0
    %v3795 = vadd.f32 %v3731, 1.0
    %v3796 = vadd.f32 %v3732, 1.0
    %v3797 = vadd.f32 %v3733, 1.0
    %v3798 = vadd.f32 %v3734, 1.0
    %v3799 = vadd.f32 %v3735, 1.0
    %v3800 = vadd.f32 %v3736, 1.0
    %v3801 = vadd.f32 %v3737, 1.0
    %v3802 = vadd.f32 %v3738, 1.0
    %v3803 = vadd.f32 %v3739, 1.0
    %v3804 = vadd.f32 %v3740, 1.0
    %v3805 = vadd.f32 %v3741, 1.0
    %v3806 = vadd.f32 %v3742, 1.0
    %v3807 = vadd.f32 %v3743, 1.0
    %v3808 = vadd.f32 %v3744, 1.0
    %v3809 = vadd.f32 %v3745, 1.0
    %v3810 = vadd.f32 %v3746, 1.0
    %v3811 = vadd.f32 %v3747, 1.0
    %v3812 = vadd.f32 %v3748, 1.0
    %v3813 = vadd.f32 %v3749, 1.0
    %v3814 = vadd.f32 %v3750, 1.0
    %v3815 = vadd.f32 %v3751, 1.0
    %v3816 = vadd.f32 %v3752, 1.0
    %v3817 = vadd.f32 %v3753, 1.0
    %v3818 = vadd.f32 %v3754, 1.0
    %v3819 = vadd.f32 %v3755, 1.0
    %v3820 = vadd.f32 %v3756, 1.0
    %v3821 = vadd.f32 %v3757, 1.0
    %v3822 = vadd.f32 %v3758, 1.0
    %v3823 = vadd.f32 %v3759, 1.0
    %v3824 = vadd.f32 %v3760, 1.0
    %v3825 = vadd.f32 %v3761, 1.0
    %v3826 = vadd.f32 %v3762, 1.0
    %v3827 = vadd.f32 %v3763, 1.0
    %v3828 = vadd.f32 %v3764, 1.0
    %v3829 = vadd.f32 %v3765, 1.0
    %v3830 = vadd.f32 %v3766, 1.0
    %v3831 = vadd.f32 %v3767, 1.0
    %v3832 = vadd.f32 %v3768, 1.0
    %v3833 = vstv %s129
    %v3834 = vadd.f32 %v3769, %v3833
    %v3835 = vadd.f32 %v3770, %v3833
    %v3836 = vadd.f32 %v3771, %v3833
    %v3837 = vadd.f32 %v3772, %v3833
    %v3838 = vadd.f32 %v3773, %v3833
    %v3839 = vadd.f32 %v3774, %v3833
    %v3840 = vadd.f32 %v3775, %v3833
    %v3841 = vadd.f32 %v3776, %v3833
    %v3842 = vadd.f32 %v3777, %v3833
    %v3843 = vadd.f32 %v3778, %v3833
    %v3844 = vadd.f32 %v3779, %v3833
    %v3845 = vadd.f32 %v3780, %v3833
    %v3846 = vadd.f32 %v3781, %v3833
    %v3847 = vadd.f32 %v3782, %v3833
    %v3848 = vadd.f32 %v3783, %v3833
    %v3849 = vadd.f32 %v3784, %v3833
    %v3850 = vadd.f32 %v3785, %v3833
    %v3851 = vadd.f32 %v3786, %v3833
    %v3852 = vadd.f32 %v3787, %v3833
    %v3853 = vadd.f32 %v3788, %v3833
    %v3854 = vadd.f32 %v3789, %v3833
    %v3855 = vadd.f32 %v3790, %v3833
    %v3856 = vadd.f32 %v3791, %v3833
    %v3857 = vadd.f32 %v3792, %v3833
    %v3858 = vadd.f32 %v3793, %v3833
    %v3859 = vadd.f32 %v3794, %v3833
    %v3860 = vadd.f32 %v3795, %v3833
    %v3861 = vadd.f32 %v3796, %v3833
    %v3862 = vadd.f32 %v3797, %v3833
    %v3863 = vadd.f32 %v3798, %v3833
    %v3864 = vadd.f32 %v3799, %v3833
    %v3865 = vadd.f32 %v3800, %v3833
    %v3866 = vadd.f32 %v3801, %v3833
    %v3867 = vadd.f32 %v3802, %v3833
    %v3868 = vadd.f32 %v3803, %v3833
    %v3869 = vadd.f32 %v3804, %v3833
    %v3870 = vadd.f32 %v3805, %v3833
    %v3871 = vadd.f32 %v3806, %v3833
    %v3872 = vadd.f32 %v3807, %v3833
    %v3873 = vadd.f32 %v3808, %v3833
    %v3874 = vadd.f32 %v3809, %v3833
    %v3875 = vadd.f32 %v3810, %v3833
    %v3876 = vadd.f32 %v3811, %v3833
    %v3877 = vadd.f32 %v3812, %v3833
    %v3878 = vadd.f32 %v3813, %v3833
    %v3879 = vadd.f32 %v3814, %v3833
    %v3880 = vadd.f32 %v3815, %v3833
    %v3881 = vadd.f32 %v3816, %v3833
    %v3882 = vadd.f32 %v3817, %v3833
    %v3883 = vadd.f32 %v3818, %v3833
    %v3884 = vadd.f32 %v3819, %v3833
    %v3885 = vadd.f32 %v3820, %v3833
    %v3886 = vadd.f32 %v3821, %v3833
    %v3887 = vadd.f32 %v3822, %v3833
    %v3888 = vadd.f32 %v3823, %v3833
    %v3889 = vadd.f32 %v3824, %v3833
    %v3890 = vadd.f32 %v3825, %v3833
    %v3891 = vadd.f32 %v3826, %v3833
    %v3892 = vadd.f32 %v3827, %v3833
    %v3893 = vadd.f32 %v3828, %v3833
    %v3894 = vadd.f32 %v3829, %v3833
    %v3895 = vadd.f32 %v3830, %v3833
    %v3896 = vadd.f32 %v3831, %v3833
    %v3897 = vadd.f32 %v3832, %v3833
    %v3898 = vmul.f32 %v3834, %v3315
    %v3899 = vmul.f32 %v3835, %v3316
    %v3900 = vmul.f32 %v3836, %v3317
    %v3901 = vmul.f32 %v3837, %v3318
    %v3902 = vmul.f32 %v3838, %v3319
    %v3903 = vmul.f32 %v3839, %v3320
    %v3904 = vmul.f32 %v3840, %v3321
    %v3905 = vmul.f32 %v3841, %v3322
    %v3906 = vmul.f32 %v3842, %v3323
    %v3907 = vmul.f32 %v3843, %v3324
    %v3908 = vmul.f32 %v3844, %v3325
    %v3909 = vmul.f32 %v3845, %v3326
    %v3910 = vmul.f32 %v3846, %v3327
    %v3911 = vmul.f32 %v3847, %v3328
    %v3912 = vmul.f32 %v3848, %v3329
    %v3913 = vmul.f32 %v3849, %v3330
    %v3914 = vmul.f32 %v3850, %v3331
    %v3915 = vmul.f32 %v3851, %v3332
    %v3916 = vmul.f32 %v3852, %v3333
    %v3917 = vmul.f32 %v3853, %v3334
    %v3918 = vmul.f32 %v3854, %v3335
    %v3919 = vmul.f32 %v3855, %v3336
    %v3920 = vmul.f32 %v3856, %v3337
    %v3921 = vmul.f32 %v3857, %v3338
    %v3922 = vmul.f32 %v3858, %v3339
    %v3923 = vmul.f32 %v3859, %v3340
    %v3924 = vmul.f32 %v3860, %v3341
    %v3925 = vmul.f32 %v3861, %v3342
    %v3926 = vmul.f32 %v3862, %v3343
    %v3927 = vmul.f32 %v3863, %v3344
    %v3928 = vmul.f32 %v3864, %v3345
    %v3929 = vmul.f32 %v3865, %v3346
    %v3930 = vmul.f32 %v3866, %v3347
    %v3931 = vmul.f32 %v3867, %v3348
    %v3932 = vmul.f32 %v3868, %v3349
    %v3933 = vmul.f32 %v3869, %v3350
    %v3934 = vmul.f32 %v3870, %v3351
    %v3935 = vmul.f32 %v3871, %v3352
    %v3936 = vmul.f32 %v3872, %v3353
    %v3937 = vmul.f32 %v3873, %v3354
    %v3938 = vmul.f32 %v3874, %v3355
    %v3939 = vmul.f32 %v3875, %v3356
    %v3940 = vmul.f32 %v3876, %v3357
    %v3941 = vmul.f32 %v3877, %v3358
    %v3942 = vmul.f32 %v3878, %v3359
    %v3943 = vmul.f32 %v3879, %v3360
    %v3944 = vmul.f32 %v3880, %v3361
    %v3945 = vmul.f32 %v3881, %v3362
    %v3946 = vmul.f32 %v3882, %v3363
    %v3947 = vmul.f32 %v3883, %v3364
    %v3948 = vmul.f32 %v3884, %v3365
    %v3949 = vmul.f32 %v3885, %v3366
    %v3950 = vmul.f32 %v3886, %v3367
    %v3951 = vmul.f32 %v3887, %v3368
    %v3952 = vmul.f32 %v3888, %v3369
    %v3953 = vmul.f32 %v3889, %v3370
    %v3954 = vmul.f32 %v3890, %v3371
    %v3955 = vmul.f32 %v3891, %v3372
    %v3956 = vmul.f32 %v3892, %v3373
    %v3957 = vmul.f32 %v3893, %v3374
    %v3958 = vmul.f32 %v3894, %v3375
    %v3959 = vmul.f32 %v3895, %v3376
    %v3960 = vmul.f32 %v3896, %v3377
    %v3961 = vmul.f32 %v3897, %v3378
    %v3962 = vsub.f32 1.0, %v3443
    %v3963 = vsub.f32 1.0, %v3444
    %v3964 = vsub.f32 1.0, %v3445
    %v3965 = vsub.f32 1.0, %v3446
    %v3966 = vsub.f32 1.0, %v3447
    %v3967 = vsub.f32 1.0, %v3448
    %v3968 = vsub.f32 1.0, %v3449
    %v3969 = vsub.f32 1.0, %v3450
    %v3970 = vsub.f32 1.0, %v3451
    %v3971 = vsub.f32 1.0, %v3452
    %v3972 = vsub.f32 1.0, %v3453
    %v3973 = vsub.f32 1.0, %v3454
    %v3974 = vsub.f32 1.0, %v3455
    %v3975 = vsub.f32 1.0, %v3456
    %v3976 = vsub.f32 1.0, %v3457
    %v3977 = vsub.f32 1.0, %v3458
    %v3978 = vsub.f32 1.0, %v3459
    %v3979 = vsub.f32 1.0, %v3460
    %v3980 = vsub.f32 1.0, %v3461
    %v3981 = vsub.f32 1.0, %v3462
    %v3982 = vsub.f32 1.0, %v3463
    %v3983 = vsub.f32 1.0, %v3464
    %v3984 = vsub.f32 1.0, %v3465
    %v3985 = vsub.f32 1.0, %v3466
    %v3986 = vsub.f32 1.0, %v3467
    %v3987 = vsub.f32 1.0, %v3468
    %v3988 = vsub.f32 1.0, %v3469
    %v3989 = vsub.f32 1.0, %v3470
    %v3990 = vsub.f32 1.0, %v3471
    %v3991 = vsub.f32 1.0, %v3472
    %v3992 = vsub.f32 1.0, %v3473
    %v3993 = vsub.f32 1.0, %v3474
    %v3994 = vsub.f32 1.0, %v3475
    %v3995 = vsub.f32 1.0, %v3476
    %v3996 = vsub.f32 1.0, %v3477
    %v3997 = vsub.f32 1.0, %v3478
    %v3998 = vsub.f32 1.0, %v3479
    %v3999 = vsub.f32 1.0, %v3480
    %v4000 = vsub.f32 1.0, %v3481
    %v4001 = vsub.f32 1.0, %v3482
    %v4002 = vsub.f32 1.0, %v3483
    %v4003 = vsub.f32 1.0, %v3484
    %v4004 = vsub.f32 1.0, %v3485
    %v4005 = vsub.f32 1.0, %v3486
    %v4006 = vsub.f32 1.0, %v3487
    %v4007 = vsub.f32 1.0, %v3488
    %v4008 = vsub.f32 1.0, %v3489
    %v4009 = vsub.f32 1.0, %v3490
    %v4010 = vsub.f32 1.0, %v3491
    %v4011 = vsub.f32 1.0, %v3492
    %v4012 = vsub.f32 1.0, %v3493
    %v4013 = vsub.f32 1.0, %v3494
    %v4014 = vsub.f32 1.0, %v3495
    %v4015 = vsub.f32 1.0, %v3496
    %v4016 = vsub.f32 1.0, %v3497
    %v4017 = vsub.f32 1.0, %v3498
    %v4018 = vsub.f32 1.0, %v3499
    %v4019 = vsub.f32 1.0, %v3500
    %v4020 = vsub.f32 1.0, %v3501
    %v4021 = vsub.f32 1.0, %v3502
    %v4022 = vsub.f32 1.0, %v3503
    %v4023 = vsub.f32 1.0, %v3504
    %v4024 = vsub.f32 1.0, %v3505
    %v4025 = vsub.f32 1.0, %v3506
    %v4026 = vmul.f32 %v3962, %v3511
    %v4027 = vmul.f32 %v3963, %v3511
    %v4028 = vmul.f32 %v3964, %v3511
    %v4029 = vmul.f32 %v3965, %v3511
    %v4030 = vmul.f32 %v3966, %v3511
    %v4031 = vmul.f32 %v3967, %v3511
    %v4032 = vmul.f32 %v3968, %v3511
    %v4033 = vmul.f32 %v3969, %v3511
    %v4034 = vmul.f32 %v3970, %v3511
    %v4035 = vmul.f32 %v3971, %v3511
    %v4036 = vmul.f32 %v3972, %v3511
    %v4037 = vmul.f32 %v3973, %v3511
    %v4038 = vmul.f32 %v3974, %v3511
    %v4039 = vmul.f32 %v3975, %v3511
    %v4040 = vmul.f32 %v3976, %v3511
    %v4041 = vmul.f32 %v3977, %v3511
    %v4042 = vmul.f32 %v3978, %v3511
    %v4043 = vmul.f32 %v3979, %v3511
    %v4044 = vmul.f32 %v3980, %v3511
    %v4045 = vmul.f32 %v3981, %v3511
    %v4046 = vmul.f32 %v3982, %v3511
    %v4047 = vmul.f32 %v3983, %v3511
    %v4048 = vmul.f32 %v3984, %v3511
    %v4049 = vmul.f32 %v3985, %v3511
    %v4050 = vmul.f32 %v3986, %v3511
    %v4051 = vmul.f32 %v3987, %v3511
    %v4052 = vmul.f32 %v3988, %v3511
    %v4053 = vmul.f32 %v3989, %v3511
    %v4054 = vmul.f32 %v3990, %v3511
    %v4055 = vmul.f32 %v3991, %v3511
    %v4056 = vmul.f32 %v3992, %v3511
    %v4057 = vmul.f32 %v3993, %v3511
    %v4058 = vmul.f32 %v3994, %v3511
    %v4059 = vmul.f32 %v3995, %v3511
    %v4060 = vmul.f32 %v3996, %v3511
    %v4061 = vmul.f32 %v3997, %v3511
    %v4062 = vmul.f32 %v3998, %v3511
    %v4063 = vmul.f32 %v3999, %v3511
    %v4064 = vmul.f32 %v4000, %v3511
    %v4065 = vmul.f32 %v4001, %v3511
    %v4066 = vmul.f32 %v4002, %v3511
    %v4067 = vmul.f32 %v4003, %v3511
    %v4068 = vmul.f32 %v4004, %v3511
    %v4069 = vmul.f32 %v4005, %v3511
    %v4070 = vmul.f32 %v4006, %v3511
    %v4071 = vmul.f32 %v4007, %v3511
    %v4072 = vmul.f32 %v4008, %v3511
    %v4073 = vmul.f32 %v4009, %v3511
    %v4074 = vmul.f32 %v4010, %v3511
    %v4075 = vmul.f32 %v4011, %v3511
    %v4076 = vmul.f32 %v4012, %v3511
    %v4077 = vmul.f32 %v4013, %v3511
    %v4078 = vmul.f32 %v4014, %v3511
    %v4079 = vmul.f32 %v4015, %v3511
    %v4080 = vmul.f32 %v4016, %v3511
    %v4081 = vmul.f32 %v4017, %v3511
    %v4082 = vmul.f32 %v4018, %v3511
    %v4083 = vmul.f32 %v4019, %v3511
    %v4084 = vmul.f32 %v4020, %v3511
    %v4085 = vmul.f32 %v4021, %v3511
    %v4086 = vmul.f32 %v4022, %v3511
    %v4087 = vmul.f32 %v4023, %v3511
    %v4088 = vmul.f32 %v4024, %v3511
    %v4089 = vmul.f32 %v4025, %v3511
    %v4090 = vadd.f32 %v3898, %v4026
    %v4091 = vadd.f32 %v3899, %v4027
    %v4092 = vadd.f32 %v3900, %v4028
    %v4093 = vadd.f32 %v3901, %v4029
    %v4094 = vadd.f32 %v3902, %v4030
    %v4095 = vadd.f32 %v3903, %v4031
    %v4096 = vadd.f32 %v3904, %v4032
    %v4097 = vadd.f32 %v3905, %v4033
    %v4098 = vadd.f32 %v3906, %v4034
    %v4099 = vadd.f32 %v3907, %v4035
    %v4100 = vadd.f32 %v3908, %v4036
    %v4101 = vadd.f32 %v3909, %v4037
    %v4102 = vadd.f32 %v3910, %v4038
    %v4103 = vadd.f32 %v3911, %v4039
    %v4104 = vadd.f32 %v3912, %v4040
    %v4105 = vadd.f32 %v3913, %v4041
    %v4106 = vadd.f32 %v3914, %v4042
    %v4107 = vadd.f32 %v3915, %v4043
    %v4108 = vadd.f32 %v3916, %v4044
    %v4109 = vadd.f32 %v3917, %v4045
    %v4110 = vadd.f32 %v3918, %v4046
    %v4111 = vadd.f32 %v3919, %v4047
    %v4112 = vadd.f32 %v3920, %v4048
    %v4113 = vadd.f32 %v3921, %v4049
    %v4114 = vadd.f32 %v3922, %v4050
    %v4115 = vadd.f32 %v3923, %v4051
    %v4116 = vadd.f32 %v3924, %v4052
    %v4117 = vadd.f32 %v3925, %v4053
    %v4118 = vadd.f32 %v3926, %v4054
    %v4119 = vadd.f32 %v3927, %v4055
    %v4120 = vadd.f32 %v3928, %v4056
    %v4121 = vadd.f32 %v3929, %v4057
    %v4122 = vadd.f32 %v3930, %v4058
    %v4123 = vadd.f32 %v3931, %v4059
    %v4124 = vadd.f32 %v3932, %v4060
    %v4125 = vadd.f32 %v3933, %v4061
    %v4126 = vadd.f32 %v3934, %v4062
    %v4127 = vadd.f32 %v3935, %v4063
    %v4128 = vadd.f32 %v3936, %v4064
    %v4129 = vadd.f32 %v3937, %v4065
    %v4130 = vadd.f32 %v3938, %v4066
    %v4131 = vadd.f32 %v3939, %v4067
    %v4132 = vadd.f32 %v3940, %v4068
    %v4133 = vadd.f32 %v3941, %v4069
    %v4134 = vadd.f32 %v3942, %v4070
    %v4135 = vadd.f32 %v3943, %v4071
    %v4136 = vadd.f32 %v3944, %v4072
    %v4137 = vadd.f32 %v3945, %v4073
    %v4138 = vadd.f32 %v3946, %v4074
    %v4139 = vadd.f32 %v3947, %v4075
    %v4140 = vadd.f32 %v3948, %v4076
    %v4141 = vadd.f32 %v3949, %v4077
    %v4142 = vadd.f32 %v3950, %v4078
    %v4143 = vadd.f32 %v3951, %v4079
    %v4144 = vadd.f32 %v3952, %v4080
    %v4145 = vadd.f32 %v3953, %v4081
    %v4146 = vadd.f32 %v3954, %v4082
    %v4147 = vadd.f32 %v3955, %v4083
    %v4148 = vadd.f32 %v3956, %v4084
    %v4149 = vadd.f32 %v3957, %v4085
    %v4150 = vadd.f32 %v3958, %v4086
    %v4151 = vadd.f32 %v3959, %v4087
    %v4152 = vadd.f32 %v3960, %v4088
    %v4153 = vadd.f32 %v3961, %v4089
    %v4154 = vmul.f32 %v3443, %v3833
    %v4155 = vmul.f32 %v3444, %v3833
    %v4156 = vmul.f32 %v3445, %v3833
    %v4157 = vmul.f32 %v3446, %v3833
    %v4158 = vmul.f32 %v3447, %v3833
    %v4159 = vmul.f32 %v3448, %v3833
    %v4160 = vmul.f32 %v3449, %v3833
    %v4161 = vmul.f32 %v3450, %v3833
    %v4162 = vmul.f32 %v3451, %v3833
    %v4163 = vmul.f32 %v3452, %v3833
    %v4164 = vmul.f32 %v3453, %v3833
    %v4165 = vmul.f32 %v3454, %v3833
    %v4166 = vmul.f32 %v3455, %v3833
    %v4167 = vmul.f32 %v3456, %v3833
    %v4168 = vmul.f32 %v3457, %v3833
    %v4169 = vmul.f32 %v3458, %v3833
    %v4170 = vmul.f32 %v3459, %v3833
    %v4171 = vmul.f32 %v3460, %v3833
    %v4172 = vmul.f32 %v3461, %v3833
    %v4173 = vmul.f32 %v3462, %v3833
    %v4174 = vmul.f32 %v3463, %v3833
    %v4175 = vmul.f32 %v3464, %v3833
    %v4176 = vmul.f32 %v3465, %v3833
    %v4177 = vmul.f32 %v3466, %v3833
    %v4178 = vmul.f32 %v3467, %v3833
    %v4179 = vmul.f32 %v3468, %v3833
    %v4180 = vmul.f32 %v3469, %v3833
    %v4181 = vmul.f32 %v3470, %v3833
    %v4182 = vmul.f32 %v3471, %v3833
    %v4183 = vmul.f32 %v3472, %v3833
    %v4184 = vmul.f32 %v3473, %v3833
    %v4185 = vmul.f32 %v3474, %v3833
    %v4186 = vmul.f32 %v3475, %v3833
    %v4187 = vmul.f32 %v3476, %v3833
    %v4188 = vmul.f32 %v3477, %v3833
    %v4189 = vmul.f32 %v3478, %v3833
    %v4190 = vmul.f32 %v3479, %v3833
    %v4191 = vmul.f32 %v3480, %v3833
    %v4192 = vmul.f32 %v3481, %v3833
    %v4193 = vmul.f32 %v3482, %v3833
    %v4194 = vmul.f32 %v3483, %v3833
    %v4195 = vmul.f32 %v3484, %v3833
    %v4196 = vmul.f32 %v3485, %v3833
    %v4197 = vmul.f32 %v3486, %v3833
    %v4198 = vmul.f32 %v3487, %v3833
    %v4199 = vmul.f32 %v3488, %v3833
    %v4200 = vmul.f32 %v3489, %v3833
    %v4201 = vmul.f32 %v3490, %v3833
    %v4202 = vmul.f32 %v3491, %v3833
    %v4203 = vmul.f32 %v3492, %v3833
    %v4204 = vmul.f32 %v3493, %v3833
    %v4205 = vmul.f32 %v3494, %v3833
    %v4206 = vmul.f32 %v3495, %v3833
    %v4207 = vmul.f32 %v3496, %v3833
    %v4208 = vmul.f32 %v3497, %v3833
    %v4209 = vmul.f32 %v3498, %v3833
    %v4210 = vmul.f32 %v3499, %v3833
    %v4211 = vmul.f32 %v3500, %v3833
    %v4212 = vmul.f32 %v3501, %v3833
    %v4213 = vmul.f32 %v3502, %v3833
    %v4214 = vmul.f32 %v3503, %v3833
    %v4215 = vmul.f32 %v3504, %v3833
    %v4216 = vmul.f32 %v3505, %v3833
    %v4217 = vmul.f32 %v3506, %v3833
    %v4218 = vadd.f32 %v3769, %v4154
    %v4219 = vadd.f32 %v3770, %v4155
    %v4220 = vadd.f32 %v3771, %v4156
    %v4221 = vadd.f32 %v3772, %v4157
    %v4222 = vadd.f32 %v3773, %v4158
    %v4223 = vadd.f32 %v3774, %v4159
    %v4224 = vadd.f32 %v3775, %v4160
    %v4225 = vadd.f32 %v3776, %v4161
    %v4226 = vadd.f32 %v3777, %v4162
    %v4227 = vadd.f32 %v3778, %v4163
    %v4228 = vadd.f32 %v3779, %v4164
    %v4229 = vadd.f32 %v3780, %v4165
    %v4230 = vadd.f32 %v3781, %v4166
    %v4231 = vadd.f32 %v3782, %v4167
    %v4232 = vadd.f32 %v3783, %v4168
    %v4233 = vadd.f32 %v3784, %v4169
    %v4234 = vadd.f32 %v3785, %v4170
    %v4235 = vadd.f32 %v3786, %v4171
    %v4236 = vadd.f32 %v3787, %v4172
    %v4237 = vadd.f32 %v3788, %v4173
    %v4238 = vadd.f32 %v3789, %v4174
    %v4239 = vadd.f32 %v3790, %v4175
    %v4240 = vadd.f32 %v3791, %v4176
    %v4241 = vadd.f32 %v3792, %v4177
    %v4242 = vadd.f32 %v3793, %v4178
    %v4243 = vadd.f32 %v3794, %v4179
    %v4244 = vadd.f32 %v3795, %v4180
    %v4245 = vadd.f32 %v3796, %v4181
    %v4246 = vadd.f32 %v3797, %v4182
    %v4247 = vadd.f32 %v3798, %v4183
    %v4248 = vadd.f32 %v3799, %v4184
    %v4249 = vadd.f32 %v3800, %v4185
    %v4250 = vadd.f32 %v3801, %v4186
    %v4251 = vadd.f32 %v3802, %v4187
    %v4252 = vadd.f32 %v3803, %v4188
    %v4253 = vadd.f32 %v3804, %v4189
    %v4254 = vadd.f32 %v3805, %v4190
    %v4255 = vadd.f32 %v3806, %v4191
    %v4256 = vadd.f32 %v3807, %v4192
    %v4257 = vadd.f32 %v3808, %v4193
    %v4258 = vadd.f32 %v3809, %v4194
    %v4259 = vadd.f32 %v3810, %v4195
    %v4260 = vadd.f32 %v3811, %v4196
    %v4261 = vadd.f32 %v3812, %v4197
    %v4262 = vadd.f32 %v3813, %v4198
    %v4263 = vadd.f32 %v3814, %v4199
    %v4264 = vadd.f32 %v3815, %v4200
    %v4265 = vadd.f32 %v3816, %v4201
    %v4266 = vadd.f32 %v3817, %v4202
    %v4267 = vadd.f32 %v3818, %v4203
    %v4268 = vadd.f32 %v3819, %v4204
    %v4269 = vadd.f32 %v3820, %v4205
    %v4270 = vadd.f32 %v3821, %v4206
    %v4271 = vadd.f32 %v3822, %v4207
    %v4272 = vadd.f32 %v3823, %v4208
    %v4273 = vadd.f32 %v3824, %v4209
    %v4274 = vadd.f32 %v3825, %v4210
    %v4275 = vadd.f32 %v3826, %v4211
    %v4276 = vadd.f32 %v3827, %v4212
    %v4277 = vadd.f32 %v3828, %v4213
    %v4278 = vadd.f32 %v3829, %v4214
    %v4279 = vadd.f32 %v3830, %v4215
    %v4280 = vadd.f32 %v3831, %v4216
    %v4281 = vadd.f32 %v3832, %v4217
    %v4282 = vmax.f32 %v4218, 1e-15
    %v4283 = vmax.f32 %v4219, 1e-15
    %v4284 = vmax.f32 %v4220, 1e-15
    %v4285 = vmax.f32 %v4221, 1e-15
    %v4286 = vmax.f32 %v4222, 1e-15
    %v4287 = vmax.f32 %v4223, 1e-15
    %v4288 = vmax.f32 %v4224, 1e-15
    %v4289 = vmax.f32 %v4225, 1e-15
    %v4290 = vmax.f32 %v4226, 1e-15
    %v4291 = vmax.f32 %v4227, 1e-15
    %v4292 = vmax.f32 %v4228, 1e-15
    %v4293 = vmax.f32 %v4229, 1e-15
    %v4294 = vmax.f32 %v4230, 1e-15
    %v4295 = vmax.f32 %v4231, 1e-15
    %v4296 = vmax.f32 %v4232, 1e-15
    %v4297 = vmax.f32 %v4233, 1e-15
    %v4298 = vmax.f32 %v4234, 1e-15
    %v4299 = vmax.f32 %v4235, 1e-15
    %v4300 = vmax.f32 %v4236, 1e-15
    %v4301 = vmax.f32 %v4237, 1e-15
    %v4302 = vmax.f32 %v4238, 1e-15
    %v4303 = vmax.f32 %v4239, 1e-15
    %v4304 = vmax.f32 %v4240, 1e-15
    %v4305 = vmax.f32 %v4241, 1e-15
    %v4306 = vmax.f32 %v4242, 1e-15
    %v4307 = vmax.f32 %v4243, 1e-15
    %v4308 = vmax.f32 %v4244, 1e-15
    %v4309 = vmax.f32 %v4245, 1e-15
    %v4310 = vmax.f32 %v4246, 1e-15
    %v4311 = vmax.f32 %v4247, 1e-15
    %v4312 = vmax.f32 %v4248, 1e-15
    %v4313 = vmax.f32 %v4249, 1e-15
    %v4314 = vmax.f32 %v4250, 1e-15
    %v4315 = vmax.f32 %v4251, 1e-15
    %v4316 = vmax.f32 %v4252, 1e-15
    %v4317 = vmax.f32 %v4253, 1e-15
    %v4318 = vmax.f32 %v4254, 1e-15
    %v4319 = vmax.f32 %v4255, 1e-15
    %v4320 = vmax.f32 %v4256, 1e-15
    %v4321 = vmax.f32 %v4257, 1e-15
    %v4322 = vmax.f32 %v4258, 1e-15
    %v4323 = vmax.f32 %v4259, 1e-15
    %v4324 = vmax.f32 %v4260, 1e-15
    %v4325 = vmax.f32 %v4261, 1e-15
    %v4326 = vmax.f32 %v4262, 1e-15
    %v4327 = vmax.f32 %v4263, 1e-15
    %v4328 = vmax.f32 %v4264, 1e-15
    %v4329 = vmax.f32 %v4265, 1e-15
    %v4330 = vmax.f32 %v4266, 1e-15
    %v4331 = vmax.f32 %v4267, 1e-15
    %v4332 = vmax.f32 %v4268, 1e-15
    %v4333 = vmax.f32 %v4269, 1e-15
    %v4334 = vmax.f32 %v4270, 1e-15
    %v4335 = vmax.f32 %v4271, 1e-15
    %v4336 = vmax.f32 %v4272, 1e-15
    %v4337 = vmax.f32 %v4273, 1e-15
    %v4338 = vmax.f32 %v4274, 1e-15
    %v4339 = vmax.f32 %v4275, 1e-15
    %v4340 = vmax.f32 %v4276, 1e-15
    %v4341 = vmax.f32 %v4277, 1e-15
    %v4342 = vmax.f32 %v4278, 1e-15
    %v4343 = vmax.f32 %v4279, 1e-15
    %v4344 = vmax.f32 %v4280, 1e-15
    %v4345 = vmax.f32 %v4281, 1e-15
    %v4346 = vrcp.pop %v4282
    %v4347 = vrcp.pop %v4283
    %v4348 = vrcp.pop %v4284
    %v4349 = vrcp.pop %v4285
    %v4350 = vrcp.pop %v4286
    %v4351 = vrcp.pop %v4287
    %v4352 = vrcp.pop %v4288
    %v4353 = vrcp.pop %v4289
    %v4354 = vrcp.pop %v4290
    %v4355 = vrcp.pop %v4291
    %v4356 = vrcp.pop %v4292
    %v4357 = vrcp.pop %v4293
    %v4358 = vrcp.pop %v4294
    %v4359 = vrcp.pop %v4295
    %v4360 = vrcp.pop %v4296
    %v4361 = vrcp.pop %v4297
    %v4362 = vrcp.pop %v4298
    %v4363 = vrcp.pop %v4299
    %v4364 = vrcp.pop %v4300
    %v4365 = vrcp.pop %v4301
    %v4366 = vrcp.pop %v4302
    %v4367 = vrcp.pop %v4303
    %v4368 = vrcp.pop %v4304
    %v4369 = vrcp.pop %v4305
    %v4370 = vrcp.pop %v4306
    %v4371 = vrcp.pop %v4307
    %v4372 = vrcp.pop %v4308
    %v4373 = vrcp.pop %v4309
    %v4374 = vrcp.pop %v4310
    %v4375 = vrcp.pop %v4311
    %v4376 = vrcp.pop %v4312
    %v4377 = vrcp.pop %v4313
    %v4378 = vrcp.pop %v4314
    %v4379 = vrcp.pop %v4315
    %v4380 = vrcp.pop %v4316
    %v4381 = vrcp.pop %v4317
    %v4382 = vrcp.pop %v4318
    %v4383 = vrcp.pop %v4319
    %v4384 = vrcp.pop %v4320
    %v4385 = vrcp.pop %v4321
    %v4386 = vrcp.pop %v4322
    %v4387 = vrcp.pop %v4323
    %v4388 = vrcp.pop %v4324
    %v4389 = vrcp.pop %v4325
    %v4390 = vrcp.pop %v4326
    %v4391 = vrcp.pop %v4327
    %v4392 = vrcp.pop %v4328
    %v4393 = vrcp.pop %v4329
    %v4394 = vrcp.pop %v4330
    %v4395 = vrcp.pop %v4331
    %v4396 = vrcp.pop %v4332
    %v4397 = vrcp.pop %v4333
    %v4398 = vrcp.pop %v4334
    %v4399 = vrcp.pop %v4335
    %v4400 = vrcp.pop %v4336
    %v4401 = vrcp.pop %v4337
    %v4402 = vrcp.pop %v4338
    %v4403 = vrcp.pop %v4339
    %v4404 = vrcp.pop %v4340
    %v4405 = vrcp.pop %v4341
    %v4406 = vrcp.pop %v4342
    %v4407 = vrcp.pop %v4343
    %v4408 = vrcp.pop %v4344
    %v4409 = vrcp.pop %v4345
    %v4410 = vmul.f32 %v4090, %v4346
    %v4411 = vmul.f32 %v4091, %v4347
    %v4412 = vmul.f32 %v4092, %v4348
    %v4413 = vmul.f32 %v4093, %v4349
    %v4414 = vmul.f32 %v4094, %v4350
    %v4415 = vmul.f32 %v4095, %v4351
    %v4416 = vmul.f32 %v4096, %v4352
    %v4417 = vmul.f32 %v4097, %v4353
    %v4418 = vmul.f32 %v4098, %v4354
    %v4419 = vmul.f32 %v4099, %v4355
    %v4420 = vmul.f32 %v4100, %v4356
    %v4421 = vmul.f32 %v4101, %v4357
    %v4422 = vmul.f32 %v4102, %v4358
    %v4423 = vmul.f32 %v4103, %v4359
    %v4424 = vmul.f32 %v4104, %v4360
    %v4425 = vmul.f32 %v4105, %v4361
    %v4426 = vmul.f32 %v4106, %v4362
    %v4427 = vmul.f32 %v4107, %v4363
    %v4428 = vmul.f32 %v4108, %v4364
    %v4429 = vmul.f32 %v4109, %v4365
    %v4430 = vmul.f32 %v4110, %v4366
    %v4431 = vmul.f32 %v4111, %v4367
    %v4432 = vmul.f32 %v4112, %v4368
    %v4433 = vmul.f32 %v4113, %v4369
    %v4434 = vmul.f32 %v4114, %v4370
    %v4435 = vmul.f32 %v4115, %v4371
    %v4436 = vmul.f32 %v4116, %v4372
    %v4437 = vmul.f32 %v4117, %v4373
    %v4438 = vmul.f32 %v4118, %v4374
    %v4439 = vmul.f32 %v4119, %v4375
    %v4440 = vmul.f32 %v4120, %v4376
    %v4441 = vmul.f32 %v4121, %v4377
    %v4442 = vmul.f32 %v4122, %v4378
    %v4443 = vmul.f32 %v4123, %v4379
    %v4444 = vmul.f32 %v4124, %v4380
    %v4445 = vmul.f32 %v4125, %v4381
    %v4446 = vmul.f32 %v4126, %v4382
    %v4447 = vmul.f32 %v4127, %v4383
    %v4448 = vmul.f32 %v4128, %v4384
    %v4449 = vmul.f32 %v4129, %v4385
    %v4450 = vmul.f32 %v4130, %v4386
    %v4451 = vmul.f32 %v4131, %v4387
    %v4452 = vmul.f32 %v4132, %v4388
    %v4453 = vmul.f32 %v4133, %v4389
    %v4454 = vmul.f32 %v4134, %v4390
    %v4455 = vmul.f32 %v4135, %v4391
    %v4456 = vmul.f32 %v4136, %v4392
    %v4457 = vmul.f32 %v4137, %v4393
    %v4458 = vmul.f32 %v4138, %v4394
    %v4459 = vmul.f32 %v4139, %v4395
    %v4460 = vmul.f32 %v4140, %v4396
    %v4461 = vmul.f32 %v4141, %v4397
    %v4462 = vmul.f32 %v4142, %v4398
    %v4463 = vmul.f32 %v4143, %v4399
    %v4464 = vmul.f32 %v4144, %v4400
    %v4465 = vmul.f32 %v4145, %v4401
    %v4466 = vmul.f32 %v4146, %v4402
    %v4467 = vmul.f32 %v4147, %v4403
    %v4468 = vmul.f32 %v4148, %v4404
    %v4469 = vmul.f32 %v4149, %v4405
    %v4470 = vmul.f32 %v4150, %v4406
    %v4471 = vmul.f32 %v4151, %v4407
    %v4472 = vmul.f32 %v4152, %v4408
    %v4473 = vmul.f32 %v4153, %v4409
    %v4474 = vmul.f32 %v4410, %v4410
    %v4475 = vmul.f32 %v4411, %v4411
    %v4476 = vmul.f32 %v4412, %v4412
    %v4477 = vmul.f32 %v4413, %v4413
    %v4478 = vmul.f32 %v4414, %v4414
    %v4479 = vmul.f32 %v4415, %v4415
    %v4480 = vmul.f32 %v4416, %v4416
    %v4481 = vmul.f32 %v4417, %v4417
    %v4482 = vmul.f32 %v4418, %v4418
    %v4483 = vmul.f32 %v4419, %v4419
    %v4484 = vmul.f32 %v4420, %v4420
    %v4485 = vmul.f32 %v4421, %v4421
    %v4486 = vmul.f32 %v4422, %v4422
    %v4487 = vmul.f32 %v4423, %v4423
    %v4488 = vmul.f32 %v4424, %v4424
    %v4489 = vmul.f32 %v4425, %v4425
    %v4490 = vmul.f32 %v4426, %v4426
    %v4491 = vmul.f32 %v4427, %v4427
    %v4492 = vmul.f32 %v4428, %v4428
    %v4493 = vmul.f32 %v4429, %v4429
    %v4494 = vmul.f32 %v4430, %v4430
    %v4495 = vmul.f32 %v4431, %v4431
    %v4496 = vmul.f32 %v4432, %v4432
    %v4497 = vmul.f32 %v4433, %v4433
    %v4498 = vmul.f32 %v4434, %v4434
    %v4499 = vmul.f32 %v4435, %v4435
    %v4500 = vmul.f32 %v4436, %v4436
    %v4501 = vmul.f32 %v4437, %v4437
    %v4502 = vmul.f32 %v4438, %v4438
    %v4503 = vmul.f32 %v4439, %v4439
    %v4504 = vmul.f32 %v4440, %v4440
    %v4505 = vmul.f32 %v4441, %v4441
    %v4506 = vmul.f32 %v4442, %v4442
    %v4507 = vmul.f32 %v4443, %v4443
    %v4508 = vmul.f32 %v4444, %v4444
    %v4509 = vmul.f32 %v4445, %v4445
    %v4510 = vmul.f32 %v4446, %v4446
    %v4511 = vmul.f32 %v4447, %v4447
    %v4512 = vmul.f32 %v4448, %v4448
    %v4513 = vmul.f32 %v4449, %v4449
    %v4514 = vmul.f32 %v4450, %v4450
    %v4515 = vmul.f32 %v4451, %v4451
    %v4516 = vmul.f32 %v4452, %v4452
    %v4517 = vmul.f32 %v4453, %v4453
    %v4518 = vmul.f32 %v4454, %v4454
    %v4519 = vmul.f32 %v4455, %v4455
    %v4520 = vmul.f32 %v4456, %v4456
    %v4521 = vmul.f32 %v4457, %v4457
    %v4522 = vmul.f32 %v4458, %v4458
    %v4523 = vmul.f32 %v4459, %v4459
    %v4524 = vmul.f32 %v4460, %v4460
    %v4525 = vmul.f32 %v4461, %v4461
    %v4526 = vmul.f32 %v4462, %v4462
    %v4527 = vmul.f32 %v4463, %v4463
    %v4528 = vmul.f32 %v4464, %v4464
    %v4529 = vmul.f32 %v4465, %v4465
    %v4530 = vmul.f32 %v4466, %v4466
    %v4531 = vmul.f32 %v4467, %v4467
    %v4532 = vmul.f32 %v4468, %v4468
    %v4533 = vmul.f32 %v4469, %v4469
    %v4534 = vmul.f32 %v4470, %v4470
    %v4535 = vmul.f32 %v4471, %v4471
    %v4536 = vmul.f32 %v4472, %v4472
    %v4537 = vmul.f32 %v4473, %v4473
    %4538 = vadd.xlane.f32.xlu0 %v4474
    %v4539 = vpop.xlane.xlu0 %4538
    %4540 = vadd.xlane.f32.xlu0 %v4475
    %v4541 = vpop.xlane.xlu0 %4540
    %4542 = vadd.xlane.f32.xlu0 %v4476
    %v4543 = vpop.xlane.xlu0 %4542
    %4544 = vadd.xlane.f32.xlu0 %v4477
    %v4545 = vpop.xlane.xlu0 %4544
    %4546 = vadd.xlane.f32.xlu0 %v4478
    %v4547 = vpop.xlane.xlu0 %4546
    %4548 = vadd.xlane.f32.xlu0 %v4479
    %v4549 = vpop.xlane.xlu0 %4548
    %4550 = vadd.xlane.f32.xlu0 %v4480
    %v4551 = vpop.xlane.xlu0 %4550
    %4552 = vadd.xlane.f32.xlu0 %v4481
    %v4553 = vpop.xlane.xlu0 %4552
    %4554 = vadd.xlane.f32.xlu0 %v4482
    %v4555 = vpop.xlane.xlu0 %4554
    %4556 = vadd.xlane.f32.xlu0 %v4483
    %v4557 = vpop.xlane.xlu0 %4556
    %4558 = vadd.xlane.f32.xlu0 %v4484
    %v4559 = vpop.xlane.xlu0 %4558
    %4560 = vadd.xlane.f32.xlu0 %v4485
    %v4561 = vpop.xlane.xlu0 %4560
    %4562 = vadd.xlane.f32.xlu0 %v4486
    %v4563 = vpop.xlane.xlu0 %4562
    %4564 = vadd.xlane.f32.xlu0 %v4487
    %v4565 = vpop.xlane.xlu0 %4564
    %4566 = vadd.xlane.f32.xlu0 %v4488
    %v4567 = vpop.xlane.xlu0 %4566
    %4568 = vadd.xlane.f32.xlu0 %v4489
    %v4569 = vpop.xlane.xlu0 %4568
    %4570 = vadd.xlane.f32.xlu0 %v4490
    %v4571 = vpop.xlane.xlu0 %4570
    %4572 = vadd.xlane.f32.xlu0 %v4491
    %v4573 = vpop.xlane.xlu0 %4572
    %4574 = vadd.xlane.f32.xlu0 %v4492
    %v4575 = vpop.xlane.xlu0 %4574
    %4576 = vadd.xlane.f32.xlu0 %v4493
    %v4577 = vpop.xlane.xlu0 %4576
    %4578 = vadd.xlane.f32.xlu0 %v4494
    %v4579 = vpop.xlane.xlu0 %4578
    %4580 = vadd.xlane.f32.xlu0 %v4495
    %v4581 = vpop.xlane.xlu0 %4580
    %4582 = vadd.xlane.f32.xlu0 %v4496
    %v4583 = vpop.xlane.xlu0 %4582
    %4584 = vadd.xlane.f32.xlu0 %v4497
    %v4585 = vpop.xlane.xlu0 %4584
    %4586 = vadd.xlane.f32.xlu0 %v4498
    %v4587 = vpop.xlane.xlu0 %4586
    %4588 = vadd.xlane.f32.xlu0 %v4499
    %v4589 = vpop.xlane.xlu0 %4588
    %4590 = vadd.xlane.f32.xlu0 %v4500
    %v4591 = vpop.xlane.xlu0 %4590
    %4592 = vadd.xlane.f32.xlu0 %v4501
    %v4593 = vpop.xlane.xlu0 %4592
    %4594 = vadd.xlane.f32.xlu0 %v4502
    %v4595 = vpop.xlane.xlu0 %4594
    %4596 = vadd.xlane.f32.xlu0 %v4503
    %v4597 = vpop.xlane.xlu0 %4596
    %4598 = vadd.xlane.f32.xlu0 %v4504
    %v4599 = vpop.xlane.xlu0 %4598
    %4600 = vadd.xlane.f32.xlu0 %v4505
    %v4601 = vpop.xlane.xlu0 %4600
    %4602 = vadd.xlane.f32.xlu0 %v4506
    %v4603 = vpop.xlane.xlu0 %4602
    %4604 = vadd.xlane.f32.xlu0 %v4507
    %v4605 = vpop.xlane.xlu0 %4604
    %4606 = vadd.xlane.f32.xlu0 %v4508
    %v4607 = vpop.xlane.xlu0 %4606
    %4608 = vadd.xlane.f32.xlu0 %v4509
    %v4609 = vpop.xlane.xlu0 %4608
    %4610 = vadd.xlane.f32.xlu0 %v4510
    %v4611 = vpop.xlane.xlu0 %4610
    %4612 = vadd.xlane.f32.xlu0 %v4511
    %v4613 = vpop.xlane.xlu0 %4612
    %4614 = vadd.xlane.f32.xlu0 %v4512
    %v4615 = vpop.xlane.xlu0 %4614
    %4616 = vadd.xlane.f32.xlu0 %v4513
    %v4617 = vpop.xlane.xlu0 %4616
    %4618 = vadd.xlane.f32.xlu0 %v4514
    %v4619 = vpop.xlane.xlu0 %4618
    %4620 = vadd.xlane.f32.xlu0 %v4515
    %v4621 = vpop.xlane.xlu0 %4620
    %4622 = vadd.xlane.f32.xlu0 %v4516
    %v4623 = vpop.xlane.xlu0 %4622
    %4624 = vadd.xlane.f32.xlu0 %v4517
    %v4625 = vpop.xlane.xlu0 %4624
    %4626 = vadd.xlane.f32.xlu0 %v4518
    %v4627 = vpop.xlane.xlu0 %4626
    %4628 = vadd.xlane.f32.xlu0 %v4519
    %v4629 = vpop.xlane.xlu0 %4628
    %4630 = vadd.xlane.f32.xlu0 %v4520
    %v4631 = vpop.xlane.xlu0 %4630
    %4632 = vadd.xlane.f32.xlu0 %v4521
    %v4633 = vpop.xlane.xlu0 %4632
    %4634 = vadd.xlane.f32.xlu0 %v4522
    %v4635 = vpop.xlane.xlu0 %4634
    %4636 = vadd.xlane.f32.xlu0 %v4523
    %v4637 = vpop.xlane.xlu0 %4636
    %4638 = vadd.xlane.f32.xlu0 %v4524
    %v4639 = vpop.xlane.xlu0 %4638
    %4640 = vadd.xlane.f32.xlu0 %v4525
    %v4641 = vpop.xlane.xlu0 %4640
    %4642 = vadd.xlane.f32.xlu0 %v4526
    %v4643 = vpop.xlane.xlu0 %4642
    %4644 = vadd.xlane.f32.xlu0 %v4527
    %v4645 = vpop.xlane.xlu0 %4644
    %4646 = vadd.xlane.f32.xlu0 %v4528
    %v4647 = vpop.xlane.xlu0 %4646
    %4648 = vadd.xlane.f32.xlu0 %v4529
    %v4649 = vpop.xlane.xlu0 %4648
    %4650 = vadd.xlane.f32.xlu0 %v4530
    %v4651 = vpop.xlane.xlu0 %4650
    %4652 = vadd.xlane.f32.xlu0 %v4531
    %v4653 = vpop.xlane.xlu0 %4652
    %4654 = vadd.xlane.f32.xlu0 %v4532
    %v4655 = vpop.xlane.xlu0 %4654
    %4656 = vadd.xlane.f32.xlu0 %v4533
    %v4657 = vpop.xlane.xlu0 %4656
    %4658 = vadd.xlane.f32.xlu0 %v4534
    %v4659 = vpop.xlane.xlu0 %4658
    %4660 = vadd.xlane.f32.xlu0 %v4535
    %v4661 = vpop.xlane.xlu0 %4660
    %4662 = vadd.xlane.f32.xlu0 %v4536
    %v4663 = vpop.xlane.xlu0 %4662
    %4664 = vadd.xlane.f32.xlu0 %v4537
    %v4665 = vpop.xlane.xlu0 %4664
    %v4666 = vadd.f32 %v4539, 1e-30
    %v4667 = vadd.f32 %v4541, 1e-30
    %v4668 = vadd.f32 %v4543, 1e-30
    %v4669 = vadd.f32 %v4545, 1e-30
    %v4670 = vadd.f32 %v4547, 1e-30
    %v4671 = vadd.f32 %v4549, 1e-30
    %v4672 = vadd.f32 %v4551, 1e-30
    %v4673 = vadd.f32 %v4553, 1e-30
    %v4674 = vadd.f32 %v4555, 1e-30
    %v4675 = vadd.f32 %v4557, 1e-30
    %v4676 = vadd.f32 %v4559, 1e-30
    %v4677 = vadd.f32 %v4561, 1e-30
    %v4678 = vadd.f32 %v4563, 1e-30
    %v4679 = vadd.f32 %v4565, 1e-30
    %v4680 = vadd.f32 %v4567, 1e-30
    %v4681 = vadd.f32 %v4569, 1e-30
    %v4682 = vadd.f32 %v4571, 1e-30
    %v4683 = vadd.f32 %v4573, 1e-30
    %v4684 = vadd.f32 %v4575, 1e-30
    %v4685 = vadd.f32 %v4577, 1e-30
    %v4686 = vadd.f32 %v4579, 1e-30
    %v4687 = vadd.f32 %v4581, 1e-30
    %v4688 = vadd.f32 %v4583, 1e-30
    %v4689 = vadd.f32 %v4585, 1e-30
    %v4690 = vadd.f32 %v4587, 1e-30
    %v4691 = vadd.f32 %v4589, 1e-30
    %v4692 = vadd.f32 %v4591, 1e-30
    %v4693 = vadd.f32 %v4593, 1e-30
    %v4694 = vadd.f32 %v4595, 1e-30
    %v4695 = vadd.f32 %v4597, 1e-30
    %v4696 = vadd.f32 %v4599, 1e-30
    %v4697 = vadd.f32 %v4601, 1e-30
    %v4698 = vadd.f32 %v4603, 1e-30
    %v4699 = vadd.f32 %v4605, 1e-30
    %v4700 = vadd.f32 %v4607, 1e-30
    %v4701 = vadd.f32 %v4609, 1e-30
    %v4702 = vadd.f32 %v4611, 1e-30
    %v4703 = vadd.f32 %v4613, 1e-30
    %v4704 = vadd.f32 %v4615, 1e-30
    %v4705 = vadd.f32 %v4617, 1e-30
    %v4706 = vadd.f32 %v4619, 1e-30
    %v4707 = vadd.f32 %v4621, 1e-30
    %v4708 = vadd.f32 %v4623, 1e-30
    %v4709 = vadd.f32 %v4625, 1e-30
    %v4710 = vadd.f32 %v4627, 1e-30
    %v4711 = vadd.f32 %v4629, 1e-30
    %v4712 = vadd.f32 %v4631, 1e-30
    %v4713 = vadd.f32 %v4633, 1e-30
    %v4714 = vadd.f32 %v4635, 1e-30
    %v4715 = vadd.f32 %v4637, 1e-30
    %v4716 = vadd.f32 %v4639, 1e-30
    %v4717 = vadd.f32 %v4641, 1e-30
    %v4718 = vadd.f32 %v4643, 1e-30
    %v4719 = vadd.f32 %v4645, 1e-30
    %v4720 = vadd.f32 %v4647, 1e-30
    %v4721 = vadd.f32 %v4649, 1e-30
    %v4722 = vadd.f32 %v4651, 1e-30
    %v4723 = vadd.f32 %v4653, 1e-30
    %v4724 = vadd.f32 %v4655, 1e-30
    %v4725 = vadd.f32 %v4657, 1e-30
    %v4726 = vadd.f32 %v4659, 1e-30
    %v4727 = vadd.f32 %v4661, 1e-30
    %v4728 = vadd.f32 %v4663, 1e-30
    %v4729 = vadd.f32 %v4665, 1e-30
    %v4730 = vrsqrt.pop %v4666
    %v4731 = vrsqrt.pop %v4667
    %v4732 = vrsqrt.pop %v4668
    %v4733 = vrsqrt.pop %v4669
    %v4734 = vrsqrt.pop %v4670
    %v4735 = vrsqrt.pop %v4671
    %v4736 = vrsqrt.pop %v4672
    %v4737 = vrsqrt.pop %v4673
    %v4738 = vrsqrt.pop %v4674
    %v4739 = vrsqrt.pop %v4675
    %v4740 = vrsqrt.pop %v4676
    %v4741 = vrsqrt.pop %v4677
    %v4742 = vrsqrt.pop %v4678
    %v4743 = vrsqrt.pop %v4679
    %v4744 = vrsqrt.pop %v4680
    %v4745 = vrsqrt.pop %v4681
    %v4746 = vrsqrt.pop %v4682
    %v4747 = vrsqrt.pop %v4683
    %v4748 = vrsqrt.pop %v4684
    %v4749 = vrsqrt.pop %v4685
    %v4750 = vrsqrt.pop %v4686
    %v4751 = vrsqrt.pop %v4687
    %v4752 = vrsqrt.pop %v4688
    %v4753 = vrsqrt.pop %v4689
    %v4754 = vrsqrt.pop %v4690
    %v4755 = vrsqrt.pop %v4691
    %v4756 = vrsqrt.pop %v4692
    %v4757 = vrsqrt.pop %v4693
    %v4758 = vrsqrt.pop %v4694
    %v4759 = vrsqrt.pop %v4695
    %v4760 = vrsqrt.pop %v4696
    %v4761 = vrsqrt.pop %v4697
    %v4762 = vrsqrt.pop %v4698
    %v4763 = vrsqrt.pop %v4699
    %v4764 = vrsqrt.pop %v4700
    %v4765 = vrsqrt.pop %v4701
    %v4766 = vrsqrt.pop %v4702
    %v4767 = vrsqrt.pop %v4703
    %v4768 = vrsqrt.pop %v4704
    %v4769 = vrsqrt.pop %v4705
    %v4770 = vrsqrt.pop %v4706
    %v4771 = vrsqrt.pop %v4707
    %v4772 = vrsqrt.pop %v4708
    %v4773 = vrsqrt.pop %v4709
    %v4774 = vrsqrt.pop %v4710
    %v4775 = vrsqrt.pop %v4711
    %v4776 = vrsqrt.pop %v4712
    %v4777 = vrsqrt.pop %v4713
    %v4778 = vrsqrt.pop %v4714
    %v4779 = vrsqrt.pop %v4715
    %v4780 = vrsqrt.pop %v4716
    %v4781 = vrsqrt.pop %v4717
    %v4782 = vrsqrt.pop %v4718
    %v4783 = vrsqrt.pop %v4719
    %v4784 = vrsqrt.pop %v4720
    %v4785 = vrsqrt.pop %v4721
    %v4786 = vrsqrt.pop %v4722
    %v4787 = vrsqrt.pop %v4723
    %v4788 = vrsqrt.pop %v4724
    %v4789 = vrsqrt.pop %v4725
    %v4790 = vrsqrt.pop %v4726
    %v4791 = vrsqrt.pop %v4727
    %v4792 = vrsqrt.pop %v4728
    %v4793 = vrsqrt.pop %v4729
    %v4794 = vmul.f32 %v4539, %v4730
    %v4795 = vmul.f32 %v4541, %v4731
    %v4796 = vmul.f32 %v4543, %v4732
    %v4797 = vmul.f32 %v4545, %v4733
    %v4798 = vmul.f32 %v4547, %v4734
    %v4799 = vmul.f32 %v4549, %v4735
    %v4800 = vmul.f32 %v4551, %v4736
    %v4801 = vmul.f32 %v4553, %v4737
    %v4802 = vmul.f32 %v4555, %v4738
    %v4803 = vmul.f32 %v4557, %v4739
    %v4804 = vmul.f32 %v4559, %v4740
    %v4805 = vmul.f32 %v4561, %v4741
    %v4806 = vmul.f32 %v4563, %v4742
    %v4807 = vmul.f32 %v4565, %v4743
    %v4808 = vmul.f32 %v4567, %v4744
    %v4809 = vmul.f32 %v4569, %v4745
    %v4810 = vmul.f32 %v4571, %v4746
    %v4811 = vmul.f32 %v4573, %v4747
    %v4812 = vmul.f32 %v4575, %v4748
    %v4813 = vmul.f32 %v4577, %v4749
    %v4814 = vmul.f32 %v4579, %v4750
    %v4815 = vmul.f32 %v4581, %v4751
    %v4816 = vmul.f32 %v4583, %v4752
    %v4817 = vmul.f32 %v4585, %v4753
    %v4818 = vmul.f32 %v4587, %v4754
    %v4819 = vmul.f32 %v4589, %v4755
    %v4820 = vmul.f32 %v4591, %v4756
    %v4821 = vmul.f32 %v4593, %v4757
    %v4822 = vmul.f32 %v4595, %v4758
    %v4823 = vmul.f32 %v4597, %v4759
    %v4824 = vmul.f32 %v4599, %v4760
    %v4825 = vmul.f32 %v4601, %v4761
    %v4826 = vmul.f32 %v4603, %v4762
    %v4827 = vmul.f32 %v4605, %v4763
    %v4828 = vmul.f32 %v4607, %v4764
    %v4829 = vmul.f32 %v4609, %v4765
    %v4830 = vmul.f32 %v4611, %v4766
    %v4831 = vmul.f32 %v4613, %v4767
    %v4832 = vmul.f32 %v4615, %v4768
    %v4833 = vmul.f32 %v4617, %v4769
    %v4834 = vmul.f32 %v4619, %v4770
    %v4835 = vmul.f32 %v4621, %v4771
    %v4836 = vmul.f32 %v4623, %v4772
    %v4837 = vmul.f32 %v4625, %v4773
    %v4838 = vmul.f32 %v4627, %v4774
    %v4839 = vmul.f32 %v4629, %v4775
    %v4840 = vmul.f32 %v4631, %v4776
    %v4841 = vmul.f32 %v4633, %v4777
    %v4842 = vmul.f32 %v4635, %v4778
    %v4843 = vmul.f32 %v4637, %v4779
    %v4844 = vmul.f32 %v4639, %v4780
    %v4845 = vmul.f32 %v4641, %v4781
    %v4846 = vmul.f32 %v4643, %v4782
    %v4847 = vmul.f32 %v4645, %v4783
    %v4848 = vmul.f32 %v4647, %v4784
    %v4849 = vmul.f32 %v4649, %v4785
    %v4850 = vmul.f32 %v4651, %v4786
    %v4851 = vmul.f32 %v4653, %v4787
    %v4852 = vmul.f32 %v4655, %v4788
    %v4853 = vmul.f32 %v4657, %v4789
    %v4854 = vmul.f32 %v4659, %v4790
    %v4855 = vmul.f32 %v4661, %v4791
    %v4856 = vmul.f32 %v4663, %v4792
    %v4857 = vmul.f32 %v4665, %v4793
    %v4858 = vmul.f32 %v4730, 0.996
    %v4859 = vmul.f32 %v4731, 0.996
    %v4860 = vmul.f32 %v4732, 0.996
    %v4861 = vmul.f32 %v4733, 0.996
    %v4862 = vmul.f32 %v4734, 0.996
    %v4863 = vmul.f32 %v4735, 0.996
    %v4864 = vmul.f32 %v4736, 0.996
    %v4865 = vmul.f32 %v4737, 0.996
    %v4866 = vmul.f32 %v4738, 0.996
    %v4867 = vmul.f32 %v4739, 0.996
    %v4868 = vmul.f32 %v4740, 0.996
    %v4869 = vmul.f32 %v4741, 0.996
    %v4870 = vmul.f32 %v4742, 0.996
    %v4871 = vmul.f32 %v4743, 0.996
    %v4872 = vmul.f32 %v4744, 0.996
    %v4873 = vmul.f32 %v4745, 0.996
    %v4874 = vmul.f32 %v4746, 0.996
    %v4875 = vmul.f32 %v4747, 0.996
    %v4876 = vmul.f32 %v4748, 0.996
    %v4877 = vmul.f32 %v4749, 0.996
    %v4878 = vmul.f32 %v4750, 0.996
    %v4879 = vmul.f32 %v4751, 0.996
    %v4880 = vmul.f32 %v4752, 0.996
    %v4881 = vmul.f32 %v4753, 0.996
    %v4882 = vmul.f32 %v4754, 0.996
    %v4883 = vmul.f32 %v4755, 0.996
    %v4884 = vmul.f32 %v4756, 0.996
    %v4885 = vmul.f32 %v4757, 0.996
    %v4886 = vmul.f32 %v4758, 0.996
    %v4887 = vmul.f32 %v4759, 0.996
    %v4888 = vmul.f32 %v4760, 0.996
    %v4889 = vmul.f32 %v4761, 0.996
    %v4890 = vmul.f32 %v4762, 0.996
    %v4891 = vmul.f32 %v4763, 0.996
    %v4892 = vmul.f32 %v4764, 0.996
    %v4893 = vmul.f32 %v4765, 0.996
    %v4894 = vmul.f32 %v4766, 0.996
    %v4895 = vmul.f32 %v4767, 0.996
    %v4896 = vmul.f32 %v4768, 0.996
    %v4897 = vmul.f32 %v4769, 0.996
    %v4898 = vmul.f32 %v4770, 0.996
    %v4899 = vmul.f32 %v4771, 0.996
    %v4900 = vmul.f32 %v4772, 0.996
    %v4901 = vmul.f32 %v4773, 0.996
    %v4902 = vmul.f32 %v4774, 0.996
    %v4903 = vmul.f32 %v4775, 0.996
    %v4904 = vmul.f32 %v4776, 0.996
    %v4905 = vmul.f32 %v4777, 0.996
    %v4906 = vmul.f32 %v4778, 0.996
    %v4907 = vmul.f32 %v4779, 0.996
    %v4908 = vmul.f32 %v4780, 0.996
    %v4909 = vmul.f32 %v4781, 0.996
    %v4910 = vmul.f32 %v4782, 0.996
    %v4911 = vmul.f32 %v4783, 0.996
    %v4912 = vmul.f32 %v4784, 0.996
    %v4913 = vmul.f32 %v4785, 0.996
    %v4914 = vmul.f32 %v4786, 0.996
    %v4915 = vmul.f32 %v4787, 0.996
    %v4916 = vmul.f32 %v4788, 0.996
    %v4917 = vmul.f32 %v4789, 0.996
    %v4918 = vmul.f32 %v4790, 0.996
    %v4919 = vmul.f32 %v4791, 0.996
    %v4920 = vmul.f32 %v4792, 0.996
    %v4921 = vmul.f32 %v4793, 0.996
    %v4922 = vmin.f32 %v4858, 1.0
    %v4923 = vmin.f32 %v4859, 1.0
    %v4924 = vmin.f32 %v4860, 1.0
    %v4925 = vmin.f32 %v4861, 1.0
    %v4926 = vmin.f32 %v4862, 1.0
    %v4927 = vmin.f32 %v4863, 1.0
    %v4928 = vmin.f32 %v4864, 1.0
    %v4929 = vmin.f32 %v4865, 1.0
    %v4930 = vmin.f32 %v4866, 1.0
    %v4931 = vmin.f32 %v4867, 1.0
    %v4932 = vmin.f32 %v4868, 1.0
    %v4933 = vmin.f32 %v4869, 1.0
    %v4934 = vmin.f32 %v4870, 1.0
    %v4935 = vmin.f32 %v4871, 1.0
    %v4936 = vmin.f32 %v4872, 1.0
    %v4937 = vmin.f32 %v4873, 1.0
    %v4938 = vmin.f32 %v4874, 1.0
    %v4939 = vmin.f32 %v4875, 1.0
    %v4940 = vmin.f32 %v4876, 1.0
    %v4941 = vmin.f32 %v4877, 1.0
    %v4942 = vmin.f32 %v4878, 1.0
    %v4943 = vmin.f32 %v4879, 1.0
    %v4944 = vmin.f32 %v4880, 1.0
    %v4945 = vmin.f32 %v4881, 1.0
    %v4946 = vmin.f32 %v4882, 1.0
    %v4947 = vmin.f32 %v4883, 1.0
    %v4948 = vmin.f32 %v4884, 1.0
    %v4949 = vmin.f32 %v4885, 1.0
    %v4950 = vmin.f32 %v4886, 1.0
    %v4951 = vmin.f32 %v4887, 1.0
    %v4952 = vmin.f32 %v4888, 1.0
    %v4953 = vmin.f32 %v4889, 1.0
    %v4954 = vmin.f32 %v4890, 1.0
    %v4955 = vmin.f32 %v4891, 1.0
    %v4956 = vmin.f32 %v4892, 1.0
    %v4957 = vmin.f32 %v4893, 1.0
    %v4958 = vmin.f32 %v4894, 1.0
    %v4959 = vmin.f32 %v4895, 1.0
    %v4960 = vmin.f32 %v4896, 1.0
    %v4961 = vmin.f32 %v4897, 1.0
    %v4962 = vmin.f32 %v4898, 1.0
    %v4963 = vmin.f32 %v4899, 1.0
    %v4964 = vmin.f32 %v4900, 1.0
    %v4965 = vmin.f32 %v4901, 1.0
    %v4966 = vmin.f32 %v4902, 1.0
    %v4967 = vmin.f32 %v4903, 1.0
    %v4968 = vmin.f32 %v4904, 1.0
    %v4969 = vmin.f32 %v4905, 1.0
    %v4970 = vmin.f32 %v4906, 1.0
    %v4971 = vmin.f32 %v4907, 1.0
    %v4972 = vmin.f32 %v4908, 1.0
    %v4973 = vmin.f32 %v4909, 1.0
    %v4974 = vmin.f32 %v4910, 1.0
    %v4975 = vmin.f32 %v4911, 1.0
    %v4976 = vmin.f32 %v4912, 1.0
    %v4977 = vmin.f32 %v4913, 1.0
    %v4978 = vmin.f32 %v4914, 1.0
    %v4979 = vmin.f32 %v4915, 1.0
    %v4980 = vmin.f32 %v4916, 1.0
    %v4981 = vmin.f32 %v4917, 1.0
    %v4982 = vmin.f32 %v4918, 1.0
    %v4983 = vmin.f32 %v4919, 1.0
    %v4984 = vmin.f32 %v4920, 1.0
    %v4985 = vmin.f32 %v4921, 1.0
    %v4986 = vmul.f32 %v4410, %v4922
    %v4987 = vmul.f32 %v4411, %v4923
    %v4988 = vmul.f32 %v4412, %v4924
    %v4989 = vmul.f32 %v4413, %v4925
    %v4990 = vmul.f32 %v4414, %v4926
    %v4991 = vmul.f32 %v4415, %v4927
    %v4992 = vmul.f32 %v4416, %v4928
    %v4993 = vmul.f32 %v4417, %v4929
    %v4994 = vmul.f32 %v4418, %v4930
    %v4995 = vmul.f32 %v4419, %v4931
    %v4996 = vmul.f32 %v4420, %v4932
    %v4997 = vmul.f32 %v4421, %v4933
    %v4998 = vmul.f32 %v4422, %v4934
    %v4999 = vmul.f32 %v4423, %v4935
    %v5000 = vmul.f32 %v4424, %v4936
    %v5001 = vmul.f32 %v4425, %v4937
    %v5002 = vmul.f32 %v4426, %v4938
    %v5003 = vmul.f32 %v4427, %v4939
    %v5004 = vmul.f32 %v4428, %v4940
    %v5005 = vmul.f32 %v4429, %v4941
    %v5006 = vmul.f32 %v4430, %v4942
    %v5007 = vmul.f32 %v4431, %v4943
    %v5008 = vmul.f32 %v4432, %v4944
    %v5009 = vmul.f32 %v4433, %v4945
    %v5010 = vmul.f32 %v4434, %v4946
    %v5011 = vmul.f32 %v4435, %v4947
    %v5012 = vmul.f32 %v4436, %v4948
    %v5013 = vmul.f32 %v4437, %v4949
    %v5014 = vmul.f32 %v4438, %v4950
    %v5015 = vmul.f32 %v4439, %v4951
    %v5016 = vmul.f32 %v4440, %v4952
    %v5017 = vmul.f32 %v4441, %v4953
    %v5018 = vmul.f32 %v4442, %v4954
    %v5019 = vmul.f32 %v4443, %v4955
    %v5020 = vmul.f32 %v4444, %v4956
    %v5021 = vmul.f32 %v4445, %v4957
    %v5022 = vmul.f32 %v4446, %v4958
    %v5023 = vmul.f32 %v4447, %v4959
    %v5024 = vmul.f32 %v4448, %v4960
    %v5025 = vmul.f32 %v4449, %v4961
    %v5026 = vmul.f32 %v4450, %v4962
    %v5027 = vmul.f32 %v4451, %v4963
    %v5028 = vmul.f32 %v4452, %v4964
    %v5029 = vmul.f32 %v4453, %v4965
    %v5030 = vmul.f32 %v4454, %v4966
    %v5031 = vmul.f32 %v4455, %v4967
    %v5032 = vmul.f32 %v4456, %v4968
    %v5033 = vmul.f32 %v4457, %v4969
    %v5034 = vmul.f32 %v4458, %v4970
    %v5035 = vmul.f32 %v4459, %v4971
    %v5036 = vmul.f32 %v4460, %v4972
    %v5037 = vmul.f32 %v4461, %v4973
    %v5038 = vmul.f32 %v4462, %v4974
    %v5039 = vmul.f32 %v4463, %v4975
    %v5040 = vmul.f32 %v4464, %v4976
    %v5041 = vmul.f32 %v4465, %v4977
    %v5042 = vmul.f32 %v4466, %v4978
    %v5043 = vmul.f32 %v4467, %v4979
    %v5044 = vmul.f32 %v4468, %v4980
    %v5045 = vmul.f32 %v4469, %v4981
    %v5046 = vmul.f32 %v4470, %v4982
    %v5047 = vmul.f32 %v4471, %v4983
    %v5048 = vmul.f32 %v4472, %v4984
    %v5049 = vmul.f32 %v4473, %v4985
    %v5050 = vmin.f32 %v4794, 0.996
    %v5051 = vmin.f32 %v4795, 0.996
    %v5052 = vmin.f32 %v4796, 0.996
    %v5053 = vmin.f32 %v4797, 0.996
    %v5054 = vmin.f32 %v4798, 0.996
    %v5055 = vmin.f32 %v4799, 0.996
    %v5056 = vmin.f32 %v4800, 0.996
    %v5057 = vmin.f32 %v4801, 0.996
    %v5058 = vmin.f32 %v4802, 0.996
    %v5059 = vmin.f32 %v4803, 0.996
    %v5060 = vmin.f32 %v4804, 0.996
    %v5061 = vmin.f32 %v4805, 0.996
    %v5062 = vmin.f32 %v4806, 0.996
    %v5063 = vmin.f32 %v4807, 0.996
    %v5064 = vmin.f32 %v4808, 0.996
    %v5065 = vmin.f32 %v4809, 0.996
    %v5066 = vmin.f32 %v4810, 0.996
    %v5067 = vmin.f32 %v4811, 0.996
    %v5068 = vmin.f32 %v4812, 0.996
    %v5069 = vmin.f32 %v4813, 0.996
    %v5070 = vmin.f32 %v4814, 0.996
    %v5071 = vmin.f32 %v4815, 0.996
    %v5072 = vmin.f32 %v4816, 0.996
    %v5073 = vmin.f32 %v4817, 0.996
    %v5074 = vmin.f32 %v4818, 0.996
    %v5075 = vmin.f32 %v4819, 0.996
    %v5076 = vmin.f32 %v4820, 0.996
    %v5077 = vmin.f32 %v4821, 0.996
    %v5078 = vmin.f32 %v4822, 0.996
    %v5079 = vmin.f32 %v4823, 0.996
    %v5080 = vmin.f32 %v4824, 0.996
    %v5081 = vmin.f32 %v4825, 0.996
    %v5082 = vmin.f32 %v4826, 0.996
    %v5083 = vmin.f32 %v4827, 0.996
    %v5084 = vmin.f32 %v4828, 0.996
    %v5085 = vmin.f32 %v4829, 0.996
    %v5086 = vmin.f32 %v4830, 0.996
    %v5087 = vmin.f32 %v4831, 0.996
    %v5088 = vmin.f32 %v4832, 0.996
    %v5089 = vmin.f32 %v4833, 0.996
    %v5090 = vmin.f32 %v4834, 0.996
    %v5091 = vmin.f32 %v4835, 0.996
    %v5092 = vmin.f32 %v4836, 0.996
    %v5093 = vmin.f32 %v4837, 0.996
    %v5094 = vmin.f32 %v4838, 0.996
    %v5095 = vmin.f32 %v4839, 0.996
    %v5096 = vmin.f32 %v4840, 0.996
    %v5097 = vmin.f32 %v4841, 0.996
    %v5098 = vmin.f32 %v4842, 0.996
    %v5099 = vmin.f32 %v4843, 0.996
    %v5100 = vmin.f32 %v4844, 0.996
    %v5101 = vmin.f32 %v4845, 0.996
    %v5102 = vmin.f32 %v4846, 0.996
    %v5103 = vmin.f32 %v4847, 0.996
    %v5104 = vmin.f32 %v4848, 0.996
    %v5105 = vmin.f32 %v4849, 0.996
    %v5106 = vmin.f32 %v4850, 0.996
    %v5107 = vmin.f32 %v4851, 0.996
    %v5108 = vmin.f32 %v4852, 0.996
    %v5109 = vmin.f32 %v4853, 0.996
    %v5110 = vmin.f32 %v4854, 0.996
    %v5111 = vmin.f32 %v4855, 0.996
    %v5112 = vmin.f32 %v4856, 0.996
    %v5113 = vmin.f32 %v4857, 0.996
    %v5114 = vmax.f32 %v4730, 1.004016
    %v5115 = vmax.f32 %v4731, 1.004016
    %v5116 = vmax.f32 %v4732, 1.004016
    %v5117 = vmax.f32 %v4733, 1.004016
    %v5118 = vmax.f32 %v4734, 1.004016
    %v5119 = vmax.f32 %v4735, 1.004016
    %v5120 = vmax.f32 %v4736, 1.004016
    %v5121 = vmax.f32 %v4737, 1.004016
    %v5122 = vmax.f32 %v4738, 1.004016
    %v5123 = vmax.f32 %v4739, 1.004016
    %v5124 = vmax.f32 %v4740, 1.004016
    %v5125 = vmax.f32 %v4741, 1.004016
    %v5126 = vmax.f32 %v4742, 1.004016
    %v5127 = vmax.f32 %v4743, 1.004016
    %v5128 = vmax.f32 %v4744, 1.004016
    %v5129 = vmax.f32 %v4745, 1.004016
    %v5130 = vmax.f32 %v4746, 1.004016
    %v5131 = vmax.f32 %v4747, 1.004016
    %v5132 = vmax.f32 %v4748, 1.004016
    %v5133 = vmax.f32 %v4749, 1.004016
    %v5134 = vmax.f32 %v4750, 1.004016
    %v5135 = vmax.f32 %v4751, 1.004016
    %v5136 = vmax.f32 %v4752, 1.004016
    %v5137 = vmax.f32 %v4753, 1.004016
    %v5138 = vmax.f32 %v4754, 1.004016
    %v5139 = vmax.f32 %v4755, 1.004016
    %v5140 = vmax.f32 %v4756, 1.004016
    %v5141 = vmax.f32 %v4757, 1.004016
    %v5142 = vmax.f32 %v4758, 1.004016
    %v5143 = vmax.f32 %v4759, 1.004016
    %v5144 = vmax.f32 %v4760, 1.004016
    %v5145 = vmax.f32 %v4761, 1.004016
    %v5146 = vmax.f32 %v4762, 1.004016
    %v5147 = vmax.f32 %v4763, 1.004016
    %v5148 = vmax.f32 %v4764, 1.004016
    %v5149 = vmax.f32 %v4765, 1.004016
    %v5150 = vmax.f32 %v4766, 1.004016
    %v5151 = vmax.f32 %v4767, 1.004016
    %v5152 = vmax.f32 %v4768, 1.004016
    %v5153 = vmax.f32 %v4769, 1.004016
    %v5154 = vmax.f32 %v4770, 1.004016
    %v5155 = vmax.f32 %v4771, 1.004016
    %v5156 = vmax.f32 %v4772, 1.004016
    %v5157 = vmax.f32 %v4773, 1.004016
    %v5158 = vmax.f32 %v4774, 1.004016
    %v5159 = vmax.f32 %v4775, 1.004016
    %v5160 = vmax.f32 %v4776, 1.004016
    %v5161 = vmax.f32 %v4777, 1.004016
    %v5162 = vmax.f32 %v4778, 1.004016
    %v5163 = vmax.f32 %v4779, 1.004016
    %v5164 = vmax.f32 %v4780, 1.004016
    %v5165 = vmax.f32 %v4781, 1.004016
    %v5166 = vmax.f32 %v4782, 1.004016
    %v5167 = vmax.f32 %v4783, 1.004016
    %v5168 = vmax.f32 %v4784, 1.004016
    %v5169 = vmax.f32 %v4785, 1.004016
    %v5170 = vmax.f32 %v4786, 1.004016
    %v5171 = vmax.f32 %v4787, 1.004016
    %v5172 = vmax.f32 %v4788, 1.004016
    %v5173 = vmax.f32 %v4789, 1.004016
    %v5174 = vmax.f32 %v4790, 1.004016
    %v5175 = vmax.f32 %v4791, 1.004016
    %v5176 = vmax.f32 %v4792, 1.004016
    %v5177 = vmax.f32 %v4793, 1.004016
    %v5178 = vmax.f32 %v5050, -0.9999999
    %v5179 = vmax.f32 %v5051, -0.9999999
    %v5180 = vmax.f32 %v5052, -0.9999999
    %v5181 = vmax.f32 %v5053, -0.9999999
    %v5182 = vmax.f32 %v5054, -0.9999999
    %v5183 = vmax.f32 %v5055, -0.9999999
    %v5184 = vmax.f32 %v5056, -0.9999999
    %v5185 = vmax.f32 %v5057, -0.9999999
    %v5186 = vmax.f32 %v5058, -0.9999999
    %v5187 = vmax.f32 %v5059, -0.9999999
    %v5188 = vmax.f32 %v5060, -0.9999999
    %v5189 = vmax.f32 %v5061, -0.9999999
    %v5190 = vmax.f32 %v5062, -0.9999999
    %v5191 = vmax.f32 %v5063, -0.9999999
    %v5192 = vmax.f32 %v5064, -0.9999999
    %v5193 = vmax.f32 %v5065, -0.9999999
    %v5194 = vmax.f32 %v5066, -0.9999999
    %v5195 = vmax.f32 %v5067, -0.9999999
    %v5196 = vmax.f32 %v5068, -0.9999999
    %v5197 = vmax.f32 %v5069, -0.9999999
    %v5198 = vmax.f32 %v5070, -0.9999999
    %v5199 = vmax.f32 %v5071, -0.9999999
    %v5200 = vmax.f32 %v5072, -0.9999999
    %v5201 = vmax.f32 %v5073, -0.9999999
    %v5202 = vmax.f32 %v5074, -0.9999999
    %v5203 = vmax.f32 %v5075, -0.9999999
    %v5204 = vmax.f32 %v5076, -0.9999999
    %v5205 = vmax.f32 %v5077, -0.9999999
    %v5206 = vmax.f32 %v5078, -0.9999999
    %v5207 = vmax.f32 %v5079, -0.9999999
    %v5208 = vmax.f32 %v5080, -0.9999999
    %v5209 = vmax.f32 %v5081, -0.9999999
    %v5210 = vmax.f32 %v5082, -0.9999999
    %v5211 = vmax.f32 %v5083, -0.9999999
    %v5212 = vmax.f32 %v5084, -0.9999999
    %v5213 = vmax.f32 %v5085, -0.9999999
    %v5214 = vmax.f32 %v5086, -0.9999999
    %v5215 = vmax.f32 %v5087, -0.9999999
    %v5216 = vmax.f32 %v5088, -0.9999999
    %v5217 = vmax.f32 %v5089, -0.9999999
    %v5218 = vmax.f32 %v5090, -0.9999999
    %v5219 = vmax.f32 %v5091, -0.9999999
    %v5220 = vmax.f32 %v5092, -0.9999999
    %v5221 = vmax.f32 %v5093, -0.9999999
    %v5222 = vmax.f32 %v5094, -0.9999999
    %v5223 = vmax.f32 %v5095, -0.9999999
    %v5224 = vmax.f32 %v5096, -0.9999999
    %v5225 = vmax.f32 %v5097, -0.9999999
    %v5226 = vmax.f32 %v5098, -0.9999999
    %v5227 = vmax.f32 %v5099, -0.9999999
    %v5228 = vmax.f32 %v5100, -0.9999999
    %v5229 = vmax.f32 %v5101, -0.9999999
    %v5230 = vmax.f32 %v5102, -0.9999999
    %v5231 = vmax.f32 %v5103, -0.9999999
    %v5232 = vmax.f32 %v5104, -0.9999999
    %v5233 = vmax.f32 %v5105, -0.9999999
    %v5234 = vmax.f32 %v5106, -0.9999999
    %v5235 = vmax.f32 %v5107, -0.9999999
    %v5236 = vmax.f32 %v5108, -0.9999999
    %v5237 = vmax.f32 %v5109, -0.9999999
    %v5238 = vmax.f32 %v5110, -0.9999999
    %v5239 = vmax.f32 %v5111, -0.9999999
    %v5240 = vmax.f32 %v5112, -0.9999999
    %v5241 = vmax.f32 %v5113, -0.9999999
    %v5242 = vmin.f32 %v5178, 0.9999999
    %v5243 = vmin.f32 %v5179, 0.9999999
    %v5244 = vmin.f32 %v5180, 0.9999999
    %v5245 = vmin.f32 %v5181, 0.9999999
    %v5246 = vmin.f32 %v5182, 0.9999999
    %v5247 = vmin.f32 %v5183, 0.9999999
    %v5248 = vmin.f32 %v5184, 0.9999999
    %v5249 = vmin.f32 %v5185, 0.9999999
    %v5250 = vmin.f32 %v5186, 0.9999999
    %v5251 = vmin.f32 %v5187, 0.9999999
    %v5252 = vmin.f32 %v5188, 0.9999999
    %v5253 = vmin.f32 %v5189, 0.9999999
    %v5254 = vmin.f32 %v5190, 0.9999999
    %v5255 = vmin.f32 %v5191, 0.9999999
    %v5256 = vmin.f32 %v5192, 0.9999999
    %v5257 = vmin.f32 %v5193, 0.9999999
    %v5258 = vmin.f32 %v5194, 0.9999999
    %v5259 = vmin.f32 %v5195, 0.9999999
    %v5260 = vmin.f32 %v5196, 0.9999999
    %v5261 = vmin.f32 %v5197, 0.9999999
    %v5262 = vmin.f32 %v5198, 0.9999999
    %v5263 = vmin.f32 %v5199, 0.9999999
    %v5264 = vmin.f32 %v5200, 0.9999999
    %v5265 = vmin.f32 %v5201, 0.9999999
    %v5266 = vmin.f32 %v5202, 0.9999999
    %v5267 = vmin.f32 %v5203, 0.9999999
    %v5268 = vmin.f32 %v5204, 0.9999999
    %v5269 = vmin.f32 %v5205, 0.9999999
    %v5270 = vmin.f32 %v5206, 0.9999999
    %v5271 = vmin.f32 %v5207, 0.9999999
    %v5272 = vmin.f32 %v5208, 0.9999999
    %v5273 = vmin.f32 %v5209, 0.9999999
    %v5274 = vmin.f32 %v5210, 0.9999999
    %v5275 = vmin.f32 %v5211, 0.9999999
    %v5276 = vmin.f32 %v5212, 0.9999999
    %v5277 = vmin.f32 %v5213, 0.9999999
    %v5278 = vmin.f32 %v5214, 0.9999999
    %v5279 = vmin.f32 %v5215, 0.9999999
    %v5280 = vmin.f32 %v5216, 0.9999999
    %v5281 = vmin.f32 %v5217, 0.9999999
    %v5282 = vmin.f32 %v5218, 0.9999999
    %v5283 = vmin.f32 %v5219, 0.9999999
    %v5284 = vmin.f32 %v5220, 0.9999999
    %v5285 = vmin.f32 %v5221, 0.9999999
    %v5286 = vmin.f32 %v5222, 0.9999999
    %v5287 = vmin.f32 %v5223, 0.9999999
    %v5288 = vmin.f32 %v5224, 0.9999999
    %v5289 = vmin.f32 %v5225, 0.9999999
    %v5290 = vmin.f32 %v5226, 0.9999999
    %v5291 = vmin.f32 %v5227, 0.9999999
    %v5292 = vmin.f32 %v5228, 0.9999999
    %v5293 = vmin.f32 %v5229, 0.9999999
    %v5294 = vmin.f32 %v5230, 0.9999999
    %v5295 = vmin.f32 %v5231, 0.9999999
    %v5296 = vmin.f32 %v5232, 0.9999999
    %v5297 = vmin.f32 %v5233, 0.9999999
    %v5298 = vmin.f32 %v5234, 0.9999999
    %v5299 = vmin.f32 %v5235, 0.9999999
    %v5300 = vmin.f32 %v5236, 0.9999999
    %v5301 = vmin.f32 %v5237, 0.9999999
    %v5302 = vmin.f32 %v5238, 0.9999999
    %v5303 = vmin.f32 %v5239, 0.9999999
    %v5304 = vmin.f32 %v5240, 0.9999999
    %v5305 = vmin.f32 %v5241, 0.9999999
    %v5306 = vadd.f32 %v5242, 1.0
    %v5307 = vlog2.pop %v5306
    %v5308 = vmul.f32 %v5307, 0.6931472
    %v5309 = vmul.f32 -0.5, %v5242
    %v5310 = vadd.f32 %v5309, 1.0
    %v5311 = vmul.f32 %v5310, %v5242
    %v5312 = vand.u32 2147483647, %v5242
    %vm5313 = vcmp.lt.f32.partialorder %v5312, 0.0004427343
    %v5314 = vsel %vm5313, %v5311, %v5308
    %v5315 = vadd.f32 %v5243, 1.0
    %v5316 = vlog2.pop %v5315
    %v5317 = vmul.f32 %v5316, 0.6931472
    %v5318 = vmul.f32 -0.5, %v5243
    %v5319 = vadd.f32 %v5318, 1.0
    %v5320 = vmul.f32 %v5319, %v5243
    %v5321 = vand.u32 2147483647, %v5243
    %vm5322 = vcmp.lt.f32.partialorder %v5321, 0.0004427343
    %v5323 = vsel %vm5322, %v5320, %v5317
    %v5324 = vadd.f32 %v5244, 1.0
    %v5325 = vlog2.pop %v5324
    %v5326 = vmul.f32 %v5325, 0.6931472
    %v5327 = vmul.f32 -0.5, %v5244
    %v5328 = vadd.f32 %v5327, 1.0
    %v5329 = vmul.f32 %v5328, %v5244
    %v5330 = vand.u32 2147483647, %v5244
    %vm5331 = vcmp.lt.f32.partialorder %v5330, 0.0004427343
    %v5332 = vsel %vm5331, %v5329, %v5326
    %v5333 = vadd.f32 %v5245, 1.0
    %v5334 = vlog2.pop %v5333
    %v5335 = vmul.f32 %v5334, 0.6931472
    %v5336 = vmul.f32 -0.5, %v5245
    %v5337 = vadd.f32 %v5336, 1.0
    %v5338 = vmul.f32 %v5337, %v5245
    %v5339 = vand.u32 2147483647, %v5245
    %vm5340 = vcmp.lt.f32.partialorder %v5339, 0.0004427343
    %v5341 = vsel %vm5340, %v5338, %v5335
    %v5342 = vadd.f32 %v5246, 1.0
    %v5343 = vlog2.pop %v5342
    %v5344 = vmul.f32 %v5343, 0.6931472
    %v5345 = vmul.f32 -0.5, %v5246
    %v5346 = vadd.f32 %v5345, 1.0
    %v5347 = vmul.f32 %v5346, %v5246
    %v5348 = vand.u32 2147483647, %v5246
    %vm5349 = vcmp.lt.f32.partialorder %v5348, 0.0004427343
    %v5350 = vsel %vm5349, %v5347, %v5344
    %v5351 = vadd.f32 %v5247, 1.0
    %v5352 = vlog2.pop %v5351
    %v5353 = vmul.f32 %v5352, 0.6931472
    %v5354 = vmul.f32 -0.5, %v5247
    %v5355 = vadd.f32 %v5354, 1.0
    %v5356 = vmul.f32 %v5355, %v5247
    %v5357 = vand.u32 2147483647, %v5247
    %vm5358 = vcmp.lt.f32.partialorder %v5357, 0.0004427343
    %v5359 = vsel %vm5358, %v5356, %v5353
    %v5360 = vadd.f32 %v5248, 1.0
    %v5361 = vlog2.pop %v5360
    %v5362 = vmul.f32 %v5361, 0.6931472
    %v5363 = vmul.f32 -0.5, %v5248
    %v5364 = vadd.f32 %v5363, 1.0
    %v5365 = vmul.f32 %v5364, %v5248
    %v5366 = vand.u32 2147483647, %v5248
    %vm5367 = vcmp.lt.f32.partialorder %v5366, 0.0004427343
    %v5368 = vsel %vm5367, %v5365, %v5362
    %v5369 = vadd.f32 %v5249, 1.0
    %v5370 = vlog2.pop %v5369
    %v5371 = vmul.f32 %v5370, 0.6931472
    %v5372 = vmul.f32 -0.5, %v5249
    %v5373 = vadd.f32 %v5372, 1.0
    %v5374 = vmul.f32 %v5373, %v5249
    %v5375 = vand.u32 2147483647, %v5249
    %vm5376 = vcmp.lt.f32.partialorder %v5375, 0.0004427343
    %v5377 = vsel %vm5376, %v5374, %v5371
    %v5378 = vadd.f32 %v5250, 1.0
    %v5379 = vlog2.pop %v5378
    %v5380 = vmul.f32 %v5379, 0.6931472
    %v5381 = vmul.f32 -0.5, %v5250
    %v5382 = vadd.f32 %v5381, 1.0
    %v5383 = vmul.f32 %v5382, %v5250
    %v5384 = vand.u32 2147483647, %v5250
    %vm5385 = vcmp.lt.f32.partialorder %v5384, 0.0004427343
    %v5386 = vsel %vm5385, %v5383, %v5380
    %v5387 = vadd.f32 %v5251, 1.0
    %v5388 = vlog2.pop %v5387
    %v5389 = vmul.f32 %v5388, 0.6931472
    %v5390 = vmul.f32 -0.5, %v5251
    %v5391 = vadd.f32 %v5390, 1.0
    %v5392 = vmul.f32 %v5391, %v5251
    %v5393 = vand.u32 2147483647, %v5251
    %vm5394 = vcmp.lt.f32.partialorder %v5393, 0.0004427343
    %v5395 = vsel %vm5394, %v5392, %v5389
    %v5396 = vadd.f32 %v5252, 1.0
    %v5397 = vlog2.pop %v5396
    %v5398 = vmul.f32 %v5397, 0.6931472
    %v5399 = vmul.f32 -0.5, %v5252
    %v5400 = vadd.f32 %v5399, 1.0
    %v5401 = vmul.f32 %v5400, %v5252
    %v5402 = vand.u32 2147483647, %v5252
    %vm5403 = vcmp.lt.f32.partialorder %v5402, 0.0004427343
    %v5404 = vsel %vm5403, %v5401, %v5398
    %v5405 = vadd.f32 %v5253, 1.0
    %v5406 = vlog2.pop %v5405
    %v5407 = vmul.f32 %v5406, 0.6931472
    %v5408 = vmul.f32 -0.5, %v5253
    %v5409 = vadd.f32 %v5408, 1.0
    %v5410 = vmul.f32 %v5409, %v5253
    %v5411 = vand.u32 2147483647, %v5253
    %vm5412 = vcmp.lt.f32.partialorder %v5411, 0.0004427343
    %v5413 = vsel %vm5412, %v5410, %v5407
    %v5414 = vadd.f32 %v5254, 1.0
    %v5415 = vlog2.pop %v5414
    %v5416 = vmul.f32 %v5415, 0.6931472
    %v5417 = vmul.f32 -0.5, %v5254
    %v5418 = vadd.f32 %v5417, 1.0
    %v5419 = vmul.f32 %v5418, %v5254
    %v5420 = vand.u32 2147483647, %v5254
    %vm5421 = vcmp.lt.f32.partialorder %v5420, 0.0004427343
    %v5422 = vsel %vm5421, %v5419, %v5416
    %v5423 = vadd.f32 %v5255, 1.0
    %v5424 = vlog2.pop %v5423
    %v5425 = vmul.f32 %v5424, 0.6931472
    %v5426 = vmul.f32 -0.5, %v5255
    %v5427 = vadd.f32 %v5426, 1.0
    %v5428 = vmul.f32 %v5427, %v5255
    %v5429 = vand.u32 2147483647, %v5255
    %vm5430 = vcmp.lt.f32.partialorder %v5429, 0.0004427343
    %v5431 = vsel %vm5430, %v5428, %v5425
    %v5432 = vadd.f32 %v5256, 1.0
    %v5433 = vlog2.pop %v5432
    %v5434 = vmul.f32 %v5433, 0.6931472
    %v5435 = vmul.f32 -0.5, %v5256
    %v5436 = vadd.f32 %v5435, 1.0
    %v5437 = vmul.f32 %v5436, %v5256
    %v5438 = vand.u32 2147483647, %v5256
    %vm5439 = vcmp.lt.f32.partialorder %v5438, 0.0004427343
    %v5440 = vsel %vm5439, %v5437, %v5434
    %v5441 = vadd.f32 %v5257, 1.0
    %v5442 = vlog2.pop %v5441
    %v5443 = vmul.f32 %v5442, 0.6931472
    %v5444 = vmul.f32 -0.5, %v5257
    %v5445 = vadd.f32 %v5444, 1.0
    %v5446 = vmul.f32 %v5445, %v5257
    %v5447 = vand.u32 2147483647, %v5257
    %vm5448 = vcmp.lt.f32.partialorder %v5447, 0.0004427343
    %v5449 = vsel %vm5448, %v5446, %v5443
    %v5450 = vadd.f32 %v5258, 1.0
    %v5451 = vlog2.pop %v5450
    %v5452 = vmul.f32 %v5451, 0.6931472
    %v5453 = vmul.f32 -0.5, %v5258
    %v5454 = vadd.f32 %v5453, 1.0
    %v5455 = vmul.f32 %v5454, %v5258
    %v5456 = vand.u32 2147483647, %v5258
    %vm5457 = vcmp.lt.f32.partialorder %v5456, 0.0004427343
    %v5458 = vsel %vm5457, %v5455, %v5452
    %v5459 = vadd.f32 %v5259, 1.0
    %v5460 = vlog2.pop %v5459
    %v5461 = vmul.f32 %v5460, 0.6931472
    %v5462 = vmul.f32 -0.5, %v5259
    %v5463 = vadd.f32 %v5462, 1.0
    %v5464 = vmul.f32 %v5463, %v5259
    %v5465 = vand.u32 2147483647, %v5259
    %vm5466 = vcmp.lt.f32.partialorder %v5465, 0.0004427343
    %v5467 = vsel %vm5466, %v5464, %v5461
    %v5468 = vadd.f32 %v5260, 1.0
    %v5469 = vlog2.pop %v5468
    %v5470 = vmul.f32 %v5469, 0.6931472
    %v5471 = vmul.f32 -0.5, %v5260
    %v5472 = vadd.f32 %v5471, 1.0
    %v5473 = vmul.f32 %v5472, %v5260
    %v5474 = vand.u32 2147483647, %v5260
    %vm5475 = vcmp.lt.f32.partialorder %v5474, 0.0004427343
    %v5476 = vsel %vm5475, %v5473, %v5470
    %v5477 = vadd.f32 %v5261, 1.0
    %v5478 = vlog2.pop %v5477
    %v5479 = vmul.f32 %v5478, 0.6931472
    %v5480 = vmul.f32 -0.5, %v5261
    %v5481 = vadd.f32 %v5480, 1.0
    %v5482 = vmul.f32 %v5481, %v5261
    %v5483 = vand.u32 2147483647, %v5261
    %vm5484 = vcmp.lt.f32.partialorder %v5483, 0.0004427343
    %v5485 = vsel %vm5484, %v5482, %v5479
    %v5486 = vadd.f32 %v5262, 1.0
    %v5487 = vlog2.pop %v5486
    %v5488 = vmul.f32 %v5487, 0.6931472
    %v5489 = vmul.f32 -0.5, %v5262
    %v5490 = vadd.f32 %v5489, 1.0
    %v5491 = vmul.f32 %v5490, %v5262
    %v5492 = vand.u32 2147483647, %v5262
    %vm5493 = vcmp.lt.f32.partialorder %v5492, 0.0004427343
    %v5494 = vsel %vm5493, %v5491, %v5488
    %v5495 = vadd.f32 %v5263, 1.0
    %v5496 = vlog2.pop %v5495
    %v5497 = vmul.f32 %v5496, 0.6931472
    %v5498 = vmul.f32 -0.5, %v5263
    %v5499 = vadd.f32 %v5498, 1.0
    %v5500 = vmul.f32 %v5499, %v5263
    %v5501 = vand.u32 2147483647, %v5263
    %vm5502 = vcmp.lt.f32.partialorder %v5501, 0.0004427343
    %v5503 = vsel %vm5502, %v5500, %v5497
    %v5504 = vadd.f32 %v5264, 1.0
    %v5505 = vlog2.pop %v5504
    %v5506 = vmul.f32 %v5505, 0.6931472
    %v5507 = vmul.f32 -0.5, %v5264
    %v5508 = vadd.f32 %v5507, 1.0
    %v5509 = vmul.f32 %v5508, %v5264
    %v5510 = vand.u32 2147483647, %v5264
    %vm5511 = vcmp.lt.f32.partialorder %v5510, 0.0004427343
    %v5512 = vsel %vm5511, %v5509, %v5506
    %v5513 = vadd.f32 %v5265, 1.0
    %v5514 = vlog2.pop %v5513
    %v5515 = vmul.f32 %v5514, 0.6931472
    %v5516 = vmul.f32 -0.5, %v5265
    %v5517 = vadd.f32 %v5516, 1.0
    %v5518 = vmul.f32 %v5517, %v5265
    %v5519 = vand.u32 2147483647, %v5265
    %vm5520 = vcmp.lt.f32.partialorder %v5519, 0.0004427343
    %v5521 = vsel %vm5520, %v5518, %v5515
    %v5522 = vadd.f32 %v5266, 1.0
    %v5523 = vlog2.pop %v5522
    %v5524 = vmul.f32 %v5523, 0.6931472
    %v5525 = vmul.f32 -0.5, %v5266
    %v5526 = vadd.f32 %v5525, 1.0
    %v5527 = vmul.f32 %v5526, %v5266
    %v5528 = vand.u32 2147483647, %v5266
    %vm5529 = vcmp.lt.f32.partialorder %v5528, 0.0004427343
    %v5530 = vsel %vm5529, %v5527, %v5524
    %v5531 = vadd.f32 %v5267, 1.0
    %v5532 = vlog2.pop %v5531
    %v5533 = vmul.f32 %v5532, 0.6931472
    %v5534 = vmul.f32 -0.5, %v5267
    %v5535 = vadd.f32 %v5534, 1.0
    %v5536 = vmul.f32 %v5535, %v5267
    %v5537 = vand.u32 2147483647, %v5267
    %vm5538 = vcmp.lt.f32.partialorder %v5537, 0.0004427343
    %v5539 = vsel %vm5538, %v5536, %v5533
    %v5540 = vadd.f32 %v5268, 1.0
    %v5541 = vlog2.pop %v5540
    %v5542 = vmul.f32 %v5541, 0.6931472
    %v5543 = vmul.f32 -0.5, %v5268
    %v5544 = vadd.f32 %v5543, 1.0
    %v5545 = vmul.f32 %v5544, %v5268
    %v5546 = vand.u32 2147483647, %v5268
    %vm5547 = vcmp.lt.f32.partialorder %v5546, 0.0004427343
    %v5548 = vsel %vm5547, %v5545, %v5542
    %v5549 = vadd.f32 %v5269, 1.0
    %v5550 = vlog2.pop %v5549
    %v5551 = vmul.f32 %v5550, 0.6931472
    %v5552 = vmul.f32 -0.5, %v5269
    %v5553 = vadd.f32 %v5552, 1.0
    %v5554 = vmul.f32 %v5553, %v5269
    %v5555 = vand.u32 2147483647, %v5269
    %vm5556 = vcmp.lt.f32.partialorder %v5555, 0.0004427343
    %v5557 = vsel %vm5556, %v5554, %v5551
    %v5558 = vadd.f32 %v5270, 1.0
    %v5559 = vlog2.pop %v5558
    %v5560 = vmul.f32 %v5559, 0.6931472
    %v5561 = vmul.f32 -0.5, %v5270
    %v5562 = vadd.f32 %v5561, 1.0
    %v5563 = vmul.f32 %v5562, %v5270
    %v5564 = vand.u32 2147483647, %v5270
    %vm5565 = vcmp.lt.f32.partialorder %v5564, 0.0004427343
    %v5566 = vsel %vm5565, %v5563, %v5560
    %v5567 = vadd.f32 %v5271, 1.0
    %v5568 = vlog2.pop %v5567
    %v5569 = vmul.f32 %v5568, 0.6931472
    %v5570 = vmul.f32 -0.5, %v5271
    %v5571 = vadd.f32 %v5570, 1.0
    %v5572 = vmul.f32 %v5571, %v5271
    %v5573 = vand.u32 2147483647, %v5271
    %vm5574 = vcmp.lt.f32.partialorder %v5573, 0.0004427343
    %v5575 = vsel %vm5574, %v5572, %v5569
    %v5576 = vadd.f32 %v5272, 1.0
    %v5577 = vlog2.pop %v5576
    %v5578 = vmul.f32 %v5577, 0.6931472
    %v5579 = vmul.f32 -0.5, %v5272
    %v5580 = vadd.f32 %v5579, 1.0
    %v5581 = vmul.f32 %v5580, %v5272
    %v5582 = vand.u32 2147483647, %v5272
    %vm5583 = vcmp.lt.f32.partialorder %v5582, 0.0004427343
    %v5584 = vsel %vm5583, %v5581, %v5578
    %v5585 = vadd.f32 %v5273, 1.0
    %v5586 = vlog2.pop %v5585
    %v5587 = vmul.f32 %v5586, 0.6931472
    %v5588 = vmul.f32 -0.5, %v5273
    %v5589 = vadd.f32 %v5588, 1.0
    %v5590 = vmul.f32 %v5589, %v5273
    %v5591 = vand.u32 2147483647, %v5273
    %vm5592 = vcmp.lt.f32.partialorder %v5591, 0.0004427343
    %v5593 = vsel %vm5592, %v5590, %v5587
    %v5594 = vadd.f32 %v5274, 1.0
    %v5595 = vlog2.pop %v5594
    %v5596 = vmul.f32 %v5595, 0.6931472
    %v5597 = vmul.f32 -0.5, %v5274
    %v5598 = vadd.f32 %v5597, 1.0
    %v5599 = vmul.f32 %v5598, %v5274
    %v5600 = vand.u32 2147483647, %v5274
    %vm5601 = vcmp.lt.f32.partialorder %v5600, 0.0004427343
    %v5602 = vsel %vm5601, %v5599, %v5596
    %v5603 = vadd.f32 %v5275, 1.0
    %v5604 = vlog2.pop %v5603
    %v5605 = vmul.f32 %v5604, 0.6931472
    %v5606 = vmul.f32 -0.5, %v5275
    %v5607 = vadd.f32 %v5606, 1.0
    %v5608 = vmul.f32 %v5607, %v5275
    %v5609 = vand.u32 2147483647, %v5275
    %vm5610 = vcmp.lt.f32.partialorder %v5609, 0.0004427343
    %v5611 = vsel %vm5610, %v5608, %v5605
    %v5612 = vadd.f32 %v5276, 1.0
    %v5613 = vlog2.pop %v5612
    %v5614 = vmul.f32 %v5613, 0.6931472
    %v5615 = vmul.f32 -0.5, %v5276
    %v5616 = vadd.f32 %v5615, 1.0
    %v5617 = vmul.f32 %v5616, %v5276
    %v5618 = vand.u32 2147483647, %v5276
    %vm5619 = vcmp.lt.f32.partialorder %v5618, 0.0004427343
    %v5620 = vsel %vm5619, %v5617, %v5614
    %v5621 = vadd.f32 %v5277, 1.0
    %v5622 = vlog2.pop %v5621
    %v5623 = vmul.f32 %v5622, 0.6931472
    %v5624 = vmul.f32 -0.5, %v5277
    %v5625 = vadd.f32 %v5624, 1.0
    %v5626 = vmul.f32 %v5625, %v5277
    %v5627 = vand.u32 2147483647, %v5277
    %vm5628 = vcmp.lt.f32.partialorder %v5627, 0.0004427343
    %v5629 = vsel %vm5628, %v5626, %v5623
    %v5630 = vadd.f32 %v5278, 1.0
    %v5631 = vlog2.pop %v5630
    %v5632 = vmul.f32 %v5631, 0.6931472
    %v5633 = vmul.f32 -0.5, %v5278
    %v5634 = vadd.f32 %v5633, 1.0
    %v5635 = vmul.f32 %v5634, %v5278
    %v5636 = vand.u32 2147483647, %v5278
    %vm5637 = vcmp.lt.f32.partialorder %v5636, 0.0004427343
    %v5638 = vsel %vm5637, %v5635, %v5632
    %v5639 = vadd.f32 %v5279, 1.0
    %v5640 = vlog2.pop %v5639
    %v5641 = vmul.f32 %v5640, 0.6931472
    %v5642 = vmul.f32 -0.5, %v5279
    %v5643 = vadd.f32 %v5642, 1.0
    %v5644 = vmul.f32 %v5643, %v5279
    %v5645 = vand.u32 2147483647, %v5279
    %vm5646 = vcmp.lt.f32.partialorder %v5645, 0.0004427343
    %v5647 = vsel %vm5646, %v5644, %v5641
    %v5648 = vadd.f32 %v5280, 1.0
    %v5649 = vlog2.pop %v5648
    %v5650 = vmul.f32 %v5649, 0.6931472
    %v5651 = vmul.f32 -0.5, %v5280
    %v5652 = vadd.f32 %v5651, 1.0
    %v5653 = vmul.f32 %v5652, %v5280
    %v5654 = vand.u32 2147483647, %v5280
    %vm5655 = vcmp.lt.f32.partialorder %v5654, 0.0004427343
    %v5656 = vsel %vm5655, %v5653, %v5650
    %v5657 = vadd.f32 %v5281, 1.0
    %v5658 = vlog2.pop %v5657
    %v5659 = vmul.f32 %v5658, 0.6931472
    %v5660 = vmul.f32 -0.5, %v5281
    %v5661 = vadd.f32 %v5660, 1.0
    %v5662 = vmul.f32 %v5661, %v5281
    %v5663 = vand.u32 2147483647, %v5281
    %vm5664 = vcmp.lt.f32.partialorder %v5663, 0.0004427343
    %v5665 = vsel %vm5664, %v5662, %v5659
    %v5666 = vadd.f32 %v5282, 1.0
    %v5667 = vlog2.pop %v5666
    %v5668 = vmul.f32 %v5667, 0.6931472
    %v5669 = vmul.f32 -0.5, %v5282
    %v5670 = vadd.f32 %v5669, 1.0
    %v5671 = vmul.f32 %v5670, %v5282
    %v5672 = vand.u32 2147483647, %v5282
    %vm5673 = vcmp.lt.f32.partialorder %v5672, 0.0004427343
    %v5674 = vsel %vm5673, %v5671, %v5668
    %v5675 = vadd.f32 %v5283, 1.0
    %v5676 = vlog2.pop %v5675
    %v5677 = vmul.f32 %v5676, 0.6931472
    %v5678 = vmul.f32 -0.5, %v5283
    %v5679 = vadd.f32 %v5678, 1.0
    %v5680 = vmul.f32 %v5679, %v5283
    %v5681 = vand.u32 2147483647, %v5283
    %vm5682 = vcmp.lt.f32.partialorder %v5681, 0.0004427343
    %v5683 = vsel %vm5682, %v5680, %v5677
    %v5684 = vadd.f32 %v5284, 1.0
    %v5685 = vlog2.pop %v5684
    %v5686 = vmul.f32 %v5685, 0.6931472
    %v5687 = vmul.f32 -0.5, %v5284
    %v5688 = vadd.f32 %v5687, 1.0
    %v5689 = vmul.f32 %v5688, %v5284
    %v5690 = vand.u32 2147483647, %v5284
    %vm5691 = vcmp.lt.f32.partialorder %v5690, 0.0004427343
    %v5692 = vsel %vm5691, %v5689, %v5686
    %v5693 = vadd.f32 %v5285, 1.0
    %v5694 = vlog2.pop %v5693
    %v5695 = vmul.f32 %v5694, 0.6931472
    %v5696 = vmul.f32 -0.5, %v5285
    %v5697 = vadd.f32 %v5696, 1.0
    %v5698 = vmul.f32 %v5697, %v5285
    %v5699 = vand.u32 2147483647, %v5285
    %vm5700 = vcmp.lt.f32.partialorder %v5699, 0.0004427343
    %v5701 = vsel %vm5700, %v5698, %v5695
    %v5702 = vadd.f32 %v5286, 1.0
    %v5703 = vlog2.pop %v5702
    %v5704 = vmul.f32 %v5703, 0.6931472
    %v5705 = vmul.f32 -0.5, %v5286
    %v5706 = vadd.f32 %v5705, 1.0
    %v5707 = vmul.f32 %v5706, %v5286
    %v5708 = vand.u32 2147483647, %v5286
    %vm5709 = vcmp.lt.f32.partialorder %v5708, 0.0004427343
    %v5710 = vsel %vm5709, %v5707, %v5704
    %v5711 = vadd.f32 %v5287, 1.0
    %v5712 = vlog2.pop %v5711
    %v5713 = vmul.f32 %v5712, 0.6931472
    %v5714 = vmul.f32 -0.5, %v5287
    %v5715 = vadd.f32 %v5714, 1.0
    %v5716 = vmul.f32 %v5715, %v5287
    %v5717 = vand.u32 2147483647, %v5287
    %vm5718 = vcmp.lt.f32.partialorder %v5717, 0.0004427343
    %v5719 = vsel %vm5718, %v5716, %v5713
    %v5720 = vadd.f32 %v5288, 1.0
    %v5721 = vlog2.pop %v5720
    %v5722 = vmul.f32 %v5721, 0.6931472
    %v5723 = vmul.f32 -0.5, %v5288
    %v5724 = vadd.f32 %v5723, 1.0
    %v5725 = vmul.f32 %v5724, %v5288
    %v5726 = vand.u32 2147483647, %v5288
    %vm5727 = vcmp.lt.f32.partialorder %v5726, 0.0004427343
    %v5728 = vsel %vm5727, %v5725, %v5722
    %v5729 = vadd.f32 %v5289, 1.0
    %v5730 = vlog2.pop %v5729
    %v5731 = vmul.f32 %v5730, 0.6931472
    %v5732 = vmul.f32 -0.5, %v5289
    %v5733 = vadd.f32 %v5732, 1.0
    %v5734 = vmul.f32 %v5733, %v5289
    %v5735 = vand.u32 2147483647, %v5289
    %vm5736 = vcmp.lt.f32.partialorder %v5735, 0.0004427343
    %v5737 = vsel %vm5736, %v5734, %v5731
    %v5738 = vadd.f32 %v5290, 1.0
    %v5739 = vlog2.pop %v5738
    %v5740 = vmul.f32 %v5739, 0.6931472
    %v5741 = vmul.f32 -0.5, %v5290
    %v5742 = vadd.f32 %v5741, 1.0
    %v5743 = vmul.f32 %v5742, %v5290
    %v5744 = vand.u32 2147483647, %v5290
    %vm5745 = vcmp.lt.f32.partialorder %v5744, 0.0004427343
    %v5746 = vsel %vm5745, %v5743, %v5740
    %v5747 = vadd.f32 %v5291, 1.0
    %v5748 = vlog2.pop %v5747
    %v5749 = vmul.f32 %v5748, 0.6931472
    %v5750 = vmul.f32 -0.5, %v5291
    %v5751 = vadd.f32 %v5750, 1.0
    %v5752 = vmul.f32 %v5751, %v5291
    %v5753 = vand.u32 2147483647, %v5291
    %vm5754 = vcmp.lt.f32.partialorder %v5753, 0.0004427343
    %v5755 = vsel %vm5754, %v5752, %v5749
    %v5756 = vadd.f32 %v5292, 1.0
    %v5757 = vlog2.pop %v5756
    %v5758 = vmul.f32 %v5757, 0.6931472
    %v5759 = vmul.f32 -0.5, %v5292
    %v5760 = vadd.f32 %v5759, 1.0
    %v5761 = vmul.f32 %v5760, %v5292
    %v5762 = vand.u32 2147483647, %v5292
    %vm5763 = vcmp.lt.f32.partialorder %v5762, 0.0004427343
    %v5764 = vsel %vm5763, %v5761, %v5758
    %v5765 = vadd.f32 %v5293, 1.0
    %v5766 = vlog2.pop %v5765
    %v5767 = vmul.f32 %v5766, 0.6931472
    %v5768 = vmul.f32 -0.5, %v5293
    %v5769 = vadd.f32 %v5768, 1.0
    %v5770 = vmul.f32 %v5769, %v5293
    %v5771 = vand.u32 2147483647, %v5293
    %vm5772 = vcmp.lt.f32.partialorder %v5771, 0.0004427343
    %v5773 = vsel %vm5772, %v5770, %v5767
    %v5774 = vadd.f32 %v5294, 1.0
    %v5775 = vlog2.pop %v5774
    %v5776 = vmul.f32 %v5775, 0.6931472
    %v5777 = vmul.f32 -0.5, %v5294
    %v5778 = vadd.f32 %v5777, 1.0
    %v5779 = vmul.f32 %v5778, %v5294
    %v5780 = vand.u32 2147483647, %v5294
    %vm5781 = vcmp.lt.f32.partialorder %v5780, 0.0004427343
    %v5782 = vsel %vm5781, %v5779, %v5776
    %v5783 = vadd.f32 %v5295, 1.0
    %v5784 = vlog2.pop %v5783
    %v5785 = vmul.f32 %v5784, 0.6931472
    %v5786 = vmul.f32 -0.5, %v5295
    %v5787 = vadd.f32 %v5786, 1.0
    %v5788 = vmul.f32 %v5787, %v5295
    %v5789 = vand.u32 2147483647, %v5295
    %vm5790 = vcmp.lt.f32.partialorder %v5789, 0.0004427343
    %v5791 = vsel %vm5790, %v5788, %v5785
    %v5792 = vadd.f32 %v5296, 1.0
    %v5793 = vlog2.pop %v5792
    %v5794 = vmul.f32 %v5793, 0.6931472
    %v5795 = vmul.f32 -0.5, %v5296
    %v5796 = vadd.f32 %v5795, 1.0
    %v5797 = vmul.f32 %v5796, %v5296
    %v5798 = vand.u32 2147483647, %v5296
    %vm5799 = vcmp.lt.f32.partialorder %v5798, 0.0004427343
    %v5800 = vsel %vm5799, %v5797, %v5794
    %v5801 = vadd.f32 %v5297, 1.0
    %v5802 = vlog2.pop %v5801
    %v5803 = vmul.f32 %v5802, 0.6931472
    %v5804 = vmul.f32 -0.5, %v5297
    %v5805 = vadd.f32 %v5804, 1.0
    %v5806 = vmul.f32 %v5805, %v5297
    %v5807 = vand.u32 2147483647, %v5297
    %vm5808 = vcmp.lt.f32.partialorder %v5807, 0.0004427343
    %v5809 = vsel %vm5808, %v5806, %v5803
    %v5810 = vadd.f32 %v5298, 1.0
    %v5811 = vlog2.pop %v5810
    %v5812 = vmul.f32 %v5811, 0.6931472
    %v5813 = vmul.f32 -0.5, %v5298
    %v5814 = vadd.f32 %v5813, 1.0
    %v5815 = vmul.f32 %v5814, %v5298
    %v5816 = vand.u32 2147483647, %v5298
    %vm5817 = vcmp.lt.f32.partialorder %v5816, 0.0004427343
    %v5818 = vsel %vm5817, %v5815, %v5812
    %v5819 = vadd.f32 %v5299, 1.0
    %v5820 = vlog2.pop %v5819
    %v5821 = vmul.f32 %v5820, 0.6931472
    %v5822 = vmul.f32 -0.5, %v5299
    %v5823 = vadd.f32 %v5822, 1.0
    %v5824 = vmul.f32 %v5823, %v5299
    %v5825 = vand.u32 2147483647, %v5299
    %vm5826 = vcmp.lt.f32.partialorder %v5825, 0.0004427343
    %v5827 = vsel %vm5826, %v5824, %v5821
    %v5828 = vadd.f32 %v5300, 1.0
    %v5829 = vlog2.pop %v5828
    %v5830 = vmul.f32 %v5829, 0.6931472
    %v5831 = vmul.f32 -0.5, %v5300
    %v5832 = vadd.f32 %v5831, 1.0
    %v5833 = vmul.f32 %v5832, %v5300
    %v5834 = vand.u32 2147483647, %v5300
    %vm5835 = vcmp.lt.f32.partialorder %v5834, 0.0004427343
    %v5836 = vsel %vm5835, %v5833, %v5830
    %v5837 = vadd.f32 %v5301, 1.0
    %v5838 = vlog2.pop %v5837
    %v5839 = vmul.f32 %v5838, 0.6931472
    %v5840 = vmul.f32 -0.5, %v5301
    %v5841 = vadd.f32 %v5840, 1.0
    %v5842 = vmul.f32 %v5841, %v5301
    %v5843 = vand.u32 2147483647, %v5301
    %vm5844 = vcmp.lt.f32.partialorder %v5843, 0.0004427343
    %v5845 = vsel %vm5844, %v5842, %v5839
    %v5846 = vadd.f32 %v5302, 1.0
    %v5847 = vlog2.pop %v5846
    %v5848 = vmul.f32 %v5847, 0.6931472
    %v5849 = vmul.f32 -0.5, %v5302
    %v5850 = vadd.f32 %v5849, 1.0
    %v5851 = vmul.f32 %v5850, %v5302
    %v5852 = vand.u32 2147483647, %v5302
    %vm5853 = vcmp.lt.f32.partialorder %v5852, 0.0004427343
    %v5854 = vsel %vm5853, %v5851, %v5848
    %v5855 = vadd.f32 %v5303, 1.0
    %v5856 = vlog2.pop %v5855
    %v5857 = vmul.f32 %v5856, 0.6931472
    %v5858 = vmul.f32 -0.5, %v5303
    %v5859 = vadd.f32 %v5858, 1.0
    %v5860 = vmul.f32 %v5859, %v5303
    %v5861 = vand.u32 2147483647, %v5303
    %vm5862 = vcmp.lt.f32.partialorder %v5861, 0.0004427343
    %v5863 = vsel %vm5862, %v5860, %v5857
    %v5864 = vadd.f32 %v5304, 1.0
    %v5865 = vlog2.pop %v5864
    %v5866 = vmul.f32 %v5865, 0.6931472
    %v5867 = vmul.f32 -0.5, %v5304
    %v5868 = vadd.f32 %v5867, 1.0
    %v5869 = vmul.f32 %v5868, %v5304
    %v5870 = vand.u32 2147483647, %v5304
    %vm5871 = vcmp.lt.f32.partialorder %v5870, 0.0004427343
    %v5872 = vsel %vm5871, %v5869, %v5866
    %v5873 = vadd.f32 %v5305, 1.0
    %v5874 = vlog2.pop %v5873
    %v5875 = vmul.f32 %v5874, 0.6931472
    %v5876 = vmul.f32 -0.5, %v5305
    %v5877 = vadd.f32 %v5876, 1.0
    %v5878 = vmul.f32 %v5877, %v5305
    %v5879 = vand.u32 2147483647, %v5305
    %vm5880 = vcmp.lt.f32.partialorder %v5879, 0.0004427343
    %v5881 = vsel %vm5880, %v5878, %v5875
    %v5882 = vsub.f32 0.0, %v5242
    %v5883 = vsub.f32 0.0, %v5243
    %v5884 = vsub.f32 0.0, %v5244
    %v5885 = vsub.f32 0.0, %v5245
    %v5886 = vsub.f32 0.0, %v5246
    %v5887 = vsub.f32 0.0, %v5247
    %v5888 = vsub.f32 0.0, %v5248
    %v5889 = vsub.f32 0.0, %v5249
    %v5890 = vsub.f32 0.0, %v5250
    %v5891 = vsub.f32 0.0, %v5251
    %v5892 = vsub.f32 0.0, %v5252
    %v5893 = vsub.f32 0.0, %v5253
    %v5894 = vsub.f32 0.0, %v5254
    %v5895 = vsub.f32 0.0, %v5255
    %v5896 = vsub.f32 0.0, %v5256
    %v5897 = vsub.f32 0.0, %v5257
    %v5898 = vsub.f32 0.0, %v5258
    %v5899 = vsub.f32 0.0, %v5259
    %v5900 = vsub.f32 0.0, %v5260
    %v5901 = vsub.f32 0.0, %v5261
    %v5902 = vsub.f32 0.0, %v5262
    %v5903 = vsub.f32 0.0, %v5263
    %v5904 = vsub.f32 0.0, %v5264
    %v5905 = vsub.f32 0.0, %v5265
    %v5906 = vsub.f32 0.0, %v5266
    %v5907 = vsub.f32 0.0, %v5267
    %v5908 = vsub.f32 0.0, %v5268
    %v5909 = vsub.f32 0.0, %v5269
    %v5910 = vsub.f32 0.0, %v5270
    %v5911 = vsub.f32 0.0, %v5271
    %v5912 = vsub.f32 0.0, %v5272
    %v5913 = vsub.f32 0.0, %v5273
    %v5914 = vsub.f32 0.0, %v5274
    %v5915 = vsub.f32 0.0, %v5275
    %v5916 = vsub.f32 0.0, %v5276
    %v5917 = vsub.f32 0.0, %v5277
    %v5918 = vsub.f32 0.0, %v5278
    %v5919 = vsub.f32 0.0, %v5279
    %v5920 = vsub.f32 0.0, %v5280
    %v5921 = vsub.f32 0.0, %v5281
    %v5922 = vsub.f32 0.0, %v5282
    %v5923 = vsub.f32 0.0, %v5283
    %v5924 = vsub.f32 0.0, %v5284
    %v5925 = vsub.f32 0.0, %v5285
    %v5926 = vsub.f32 0.0, %v5286
    %v5927 = vsub.f32 0.0, %v5287
    %v5928 = vsub.f32 0.0, %v5288
    %v5929 = vsub.f32 0.0, %v5289
    %v5930 = vsub.f32 0.0, %v5290
    %v5931 = vsub.f32 0.0, %v5291
    %v5932 = vsub.f32 0.0, %v5292
    %v5933 = vsub.f32 0.0, %v5293
    %v5934 = vsub.f32 0.0, %v5294
    %v5935 = vsub.f32 0.0, %v5295
    %v5936 = vsub.f32 0.0, %v5296
    %v5937 = vsub.f32 0.0, %v5297
    %v5938 = vsub.f32 0.0, %v5298
    %v5939 = vsub.f32 0.0, %v5299
    %v5940 = vsub.f32 0.0, %v5300
    %v5941 = vsub.f32 0.0, %v5301
    %v5942 = vsub.f32 0.0, %v5302
    %v5943 = vsub.f32 0.0, %v5303
    %v5944 = vsub.f32 0.0, %v5304
    %v5945 = vsub.f32 0.0, %v5305
    %v5946 = vadd.f32 %v5882, 1.0
    %v5947 = vlog2.pop %v5946
    %v5948 = vmul.f32 %v5947, 0.6931472
    %v5949 = vmul.f32 -0.5, %v5882
    %v5950 = vadd.f32 %v5949, 1.0
    %v5951 = vmul.f32 %v5950, %v5882
    %v5952 = vand.u32 2147483647, %v5882
    %vm5953 = vcmp.lt.f32.partialorder %v5952, 0.0004427343
    %v5954 = vsel %vm5953, %v5951, %v5948
    %v5955 = vadd.f32 %v5883, 1.0
    %v5956 = vlog2.pop %v5955
    %v5957 = vmul.f32 %v5956, 0.6931472
    %v5958 = vmul.f32 -0.5, %v5883
    %v5959 = vadd.f32 %v5958, 1.0
    %v5960 = vmul.f32 %v5959, %v5883
    %v5961 = vand.u32 2147483647, %v5883
    %vm5962 = vcmp.lt.f32.partialorder %v5961, 0.0004427343
    %v5963 = vsel %vm5962, %v5960, %v5957
    %v5964 = vadd.f32 %v5884, 1.0
    %v5965 = vlog2.pop %v5964
    %v5966 = vmul.f32 %v5965, 0.6931472
    %v5967 = vmul.f32 -0.5, %v5884
    %v5968 = vadd.f32 %v5967, 1.0
    %v5969 = vmul.f32 %v5968, %v5884
    %v5970 = vand.u32 2147483647, %v5884
    %vm5971 = vcmp.lt.f32.partialorder %v5970, 0.0004427343
    %v5972 = vsel %vm5971, %v5969, %v5966
    %v5973 = vadd.f32 %v5885, 1.0
    %v5974 = vlog2.pop %v5973
    %v5975 = vmul.f32 %v5974, 0.6931472
    %v5976 = vmul.f32 -0.5, %v5885
    %v5977 = vadd.f32 %v5976, 1.0
    %v5978 = vmul.f32 %v5977, %v5885
    %v5979 = vand.u32 2147483647, %v5885
    %vm5980 = vcmp.lt.f32.partialorder %v5979, 0.0004427343
    %v5981 = vsel %vm5980, %v5978, %v5975
    %v5982 = vadd.f32 %v5886, 1.0
    %v5983 = vlog2.pop %v5982
    %v5984 = vmul.f32 %v5983, 0.6931472
    %v5985 = vmul.f32 -0.5, %v5886
    %v5986 = vadd.f32 %v5985, 1.0
    %v5987 = vmul.f32 %v5986, %v5886
    %v5988 = vand.u32 2147483647, %v5886
    %vm5989 = vcmp.lt.f32.partialorder %v5988, 0.0004427343
    %v5990 = vsel %vm5989, %v5987, %v5984
    %v5991 = vadd.f32 %v5887, 1.0
    %v5992 = vlog2.pop %v5991
    %v5993 = vmul.f32 %v5992, 0.6931472
    %v5994 = vmul.f32 -0.5, %v5887
    %v5995 = vadd.f32 %v5994, 1.0
    %v5996 = vmul.f32 %v5995, %v5887
    %v5997 = vand.u32 2147483647, %v5887
    %vm5998 = vcmp.lt.f32.partialorder %v5997, 0.0004427343
    %v5999 = vsel %vm5998, %v5996, %v5993
    %v6000 = vadd.f32 %v5888, 1.0
    %v6001 = vlog2.pop %v6000
    %v6002 = vmul.f32 %v6001, 0.6931472
    %v6003 = vmul.f32 -0.5, %v5888
    %v6004 = vadd.f32 %v6003, 1.0
    %v6005 = vmul.f32 %v6004, %v5888
    %v6006 = vand.u32 2147483647, %v5888
    %vm6007 = vcmp.lt.f32.partialorder %v6006, 0.0004427343
    %v6008 = vsel %vm6007, %v6005, %v6002
    %v6009 = vadd.f32 %v5889, 1.0
    %v6010 = vlog2.pop %v6009
    %v6011 = vmul.f32 %v6010, 0.6931472
    %v6012 = vmul.f32 -0.5, %v5889
    %v6013 = vadd.f32 %v6012, 1.0
    %v6014 = vmul.f32 %v6013, %v5889
    %v6015 = vand.u32 2147483647, %v5889
    %vm6016 = vcmp.lt.f32.partialorder %v6015, 0.0004427343
    %v6017 = vsel %vm6016, %v6014, %v6011
    %v6018 = vadd.f32 %v5890, 1.0
    %v6019 = vlog2.pop %v6018
    %v6020 = vmul.f32 %v6019, 0.6931472
    %v6021 = vmul.f32 -0.5, %v5890
    %v6022 = vadd.f32 %v6021, 1.0
    %v6023 = vmul.f32 %v6022, %v5890
    %v6024 = vand.u32 2147483647, %v5890
    %vm6025 = vcmp.lt.f32.partialorder %v6024, 0.0004427343
    %v6026 = vsel %vm6025, %v6023, %v6020
    %v6027 = vadd.f32 %v5891, 1.0
    %v6028 = vlog2.pop %v6027
    %v6029 = vmul.f32 %v6028, 0.6931472
    %v6030 = vmul.f32 -0.5, %v5891
    %v6031 = vadd.f32 %v6030, 1.0
    %v6032 = vmul.f32 %v6031, %v5891
    %v6033 = vand.u32 2147483647, %v5891
    %vm6034 = vcmp.lt.f32.partialorder %v6033, 0.0004427343
    %v6035 = vsel %vm6034, %v6032, %v6029
    %v6036 = vadd.f32 %v5892, 1.0
    %v6037 = vlog2.pop %v6036
    %v6038 = vmul.f32 %v6037, 0.6931472
    %v6039 = vmul.f32 -0.5, %v5892
    %v6040 = vadd.f32 %v6039, 1.0
    %v6041 = vmul.f32 %v6040, %v5892
    %v6042 = vand.u32 2147483647, %v5892
    %vm6043 = vcmp.lt.f32.partialorder %v6042, 0.0004427343
    %v6044 = vsel %vm6043, %v6041, %v6038
    %v6045 = vadd.f32 %v5893, 1.0
    %v6046 = vlog2.pop %v6045
    %v6047 = vmul.f32 %v6046, 0.6931472
    %v6048 = vmul.f32 -0.5, %v5893
    %v6049 = vadd.f32 %v6048, 1.0
    %v6050 = vmul.f32 %v6049, %v5893
    %v6051 = vand.u32 2147483647, %v5893
    %vm6052 = vcmp.lt.f32.partialorder %v6051, 0.0004427343
    %v6053 = vsel %vm6052, %v6050, %v6047
    %v6054 = vadd.f32 %v5894, 1.0
    %v6055 = vlog2.pop %v6054
    %v6056 = vmul.f32 %v6055, 0.6931472
    %v6057 = vmul.f32 -0.5, %v5894
    %v6058 = vadd.f32 %v6057, 1.0
    %v6059 = vmul.f32 %v6058, %v5894
    %v6060 = vand.u32 2147483647, %v5894
    %vm6061 = vcmp.lt.f32.partialorder %v6060, 0.0004427343
    %v6062 = vsel %vm6061, %v6059, %v6056
    %v6063 = vadd.f32 %v5895, 1.0
    %v6064 = vlog2.pop %v6063
    %v6065 = vmul.f32 %v6064, 0.6931472
    %v6066 = vmul.f32 -0.5, %v5895
    %v6067 = vadd.f32 %v6066, 1.0
    %v6068 = vmul.f32 %v6067, %v5895
    %v6069 = vand.u32 2147483647, %v5895
    %vm6070 = vcmp.lt.f32.partialorder %v6069, 0.0004427343
    %v6071 = vsel %vm6070, %v6068, %v6065
    %v6072 = vadd.f32 %v5896, 1.0
    %v6073 = vlog2.pop %v6072
    %v6074 = vmul.f32 %v6073, 0.6931472
    %v6075 = vmul.f32 -0.5, %v5896
    %v6076 = vadd.f32 %v6075, 1.0
    %v6077 = vmul.f32 %v6076, %v5896
    %v6078 = vand.u32 2147483647, %v5896
    %vm6079 = vcmp.lt.f32.partialorder %v6078, 0.0004427343
    %v6080 = vsel %vm6079, %v6077, %v6074
    %v6081 = vadd.f32 %v5897, 1.0
    %v6082 = vlog2.pop %v6081
    %v6083 = vmul.f32 %v6082, 0.6931472
    %v6084 = vmul.f32 -0.5, %v5897
    %v6085 = vadd.f32 %v6084, 1.0
    %v6086 = vmul.f32 %v6085, %v5897
    %v6087 = vand.u32 2147483647, %v5897
    %vm6088 = vcmp.lt.f32.partialorder %v6087, 0.0004427343
    %v6089 = vsel %vm6088, %v6086, %v6083
    %v6090 = vadd.f32 %v5898, 1.0
    %v6091 = vlog2.pop %v6090
    %v6092 = vmul.f32 %v6091, 0.6931472
    %v6093 = vmul.f32 -0.5, %v5898
    %v6094 = vadd.f32 %v6093, 1.0
    %v6095 = vmul.f32 %v6094, %v5898
    %v6096 = vand.u32 2147483647, %v5898
    %vm6097 = vcmp.lt.f32.partialorder %v6096, 0.0004427343
    %v6098 = vsel %vm6097, %v6095, %v6092
    %v6099 = vadd.f32 %v5899, 1.0
    %v6100 = vlog2.pop %v6099
    %v6101 = vmul.f32 %v6100, 0.6931472
    %v6102 = vmul.f32 -0.5, %v5899
    %v6103 = vadd.f32 %v6102, 1.0
    %v6104 = vmul.f32 %v6103, %v5899
    %v6105 = vand.u32 2147483647, %v5899
    %vm6106 = vcmp.lt.f32.partialorder %v6105, 0.0004427343
    %v6107 = vsel %vm6106, %v6104, %v6101
    %v6108 = vadd.f32 %v5900, 1.0
    %v6109 = vlog2.pop %v6108
    %v6110 = vmul.f32 %v6109, 0.6931472
    %v6111 = vmul.f32 -0.5, %v5900
    %v6112 = vadd.f32 %v6111, 1.0
    %v6113 = vmul.f32 %v6112, %v5900
    %v6114 = vand.u32 2147483647, %v5900
    %vm6115 = vcmp.lt.f32.partialorder %v6114, 0.0004427343
    %v6116 = vsel %vm6115, %v6113, %v6110
    %v6117 = vadd.f32 %v5901, 1.0
    %v6118 = vlog2.pop %v6117
    %v6119 = vmul.f32 %v6118, 0.6931472
    %v6120 = vmul.f32 -0.5, %v5901
    %v6121 = vadd.f32 %v6120, 1.0
    %v6122 = vmul.f32 %v6121, %v5901
    %v6123 = vand.u32 2147483647, %v5901
    %vm6124 = vcmp.lt.f32.partialorder %v6123, 0.0004427343
    %v6125 = vsel %vm6124, %v6122, %v6119
    %v6126 = vadd.f32 %v5902, 1.0
    %v6127 = vlog2.pop %v6126
    %v6128 = vmul.f32 %v6127, 0.6931472
    %v6129 = vmul.f32 -0.5, %v5902
    %v6130 = vadd.f32 %v6129, 1.0
    %v6131 = vmul.f32 %v6130, %v5902
    %v6132 = vand.u32 2147483647, %v5902
    %vm6133 = vcmp.lt.f32.partialorder %v6132, 0.0004427343
    %v6134 = vsel %vm6133, %v6131, %v6128
    %v6135 = vadd.f32 %v5903, 1.0
    %v6136 = vlog2.pop %v6135
    %v6137 = vmul.f32 %v6136, 0.6931472
    %v6138 = vmul.f32 -0.5, %v5903
    %v6139 = vadd.f32 %v6138, 1.0
    %v6140 = vmul.f32 %v6139, %v5903
    %v6141 = vand.u32 2147483647, %v5903
    %vm6142 = vcmp.lt.f32.partialorder %v6141, 0.0004427343
    %v6143 = vsel %vm6142, %v6140, %v6137
    %v6144 = vadd.f32 %v5904, 1.0
    %v6145 = vlog2.pop %v6144
    %v6146 = vmul.f32 %v6145, 0.6931472
    %v6147 = vmul.f32 -0.5, %v5904
    %v6148 = vadd.f32 %v6147, 1.0
    %v6149 = vmul.f32 %v6148, %v5904
    %v6150 = vand.u32 2147483647, %v5904
    %vm6151 = vcmp.lt.f32.partialorder %v6150, 0.0004427343
    %v6152 = vsel %vm6151, %v6149, %v6146
    %v6153 = vadd.f32 %v5905, 1.0
    %v6154 = vlog2.pop %v6153
    %v6155 = vmul.f32 %v6154, 0.6931472
    %v6156 = vmul.f32 -0.5, %v5905
    %v6157 = vadd.f32 %v6156, 1.0
    %v6158 = vmul.f32 %v6157, %v5905
    %v6159 = vand.u32 2147483647, %v5905
    %vm6160 = vcmp.lt.f32.partialorder %v6159, 0.0004427343
    %v6161 = vsel %vm6160, %v6158, %v6155
    %v6162 = vadd.f32 %v5906, 1.0
    %v6163 = vlog2.pop %v6162
    %v6164 = vmul.f32 %v6163, 0.6931472
    %v6165 = vmul.f32 -0.5, %v5906
    %v6166 = vadd.f32 %v6165, 1.0
    %v6167 = vmul.f32 %v6166, %v5906
    %v6168 = vand.u32 2147483647, %v5906
    %vm6169 = vcmp.lt.f32.partialorder %v6168, 0.0004427343
    %v6170 = vsel %vm6169, %v6167, %v6164
    %v6171 = vadd.f32 %v5907, 1.0
    %v6172 = vlog2.pop %v6171
    %v6173 = vmul.f32 %v6172, 0.6931472
    %v6174 = vmul.f32 -0.5, %v5907
    %v6175 = vadd.f32 %v6174, 1.0
    %v6176 = vmul.f32 %v6175, %v5907
    %v6177 = vand.u32 2147483647, %v5907
    %vm6178 = vcmp.lt.f32.partialorder %v6177, 0.0004427343
    %v6179 = vsel %vm6178, %v6176, %v6173
    %v6180 = vadd.f32 %v5908, 1.0
    %v6181 = vlog2.pop %v6180
    %v6182 = vmul.f32 %v6181, 0.6931472
    %v6183 = vmul.f32 -0.5, %v5908
    %v6184 = vadd.f32 %v6183, 1.0
    %v6185 = vmul.f32 %v6184, %v5908
    %v6186 = vand.u32 2147483647, %v5908
    %vm6187 = vcmp.lt.f32.partialorder %v6186, 0.0004427343
    %v6188 = vsel %vm6187, %v6185, %v6182
    %v6189 = vadd.f32 %v5909, 1.0
    %v6190 = vlog2.pop %v6189
    %v6191 = vmul.f32 %v6190, 0.6931472
    %v6192 = vmul.f32 -0.5, %v5909
    %v6193 = vadd.f32 %v6192, 1.0
    %v6194 = vmul.f32 %v6193, %v5909
    %v6195 = vand.u32 2147483647, %v5909
    %vm6196 = vcmp.lt.f32.partialorder %v6195, 0.0004427343
    %v6197 = vsel %vm6196, %v6194, %v6191
    %v6198 = vadd.f32 %v5910, 1.0
    %v6199 = vlog2.pop %v6198
    %v6200 = vmul.f32 %v6199, 0.6931472
    %v6201 = vmul.f32 -0.5, %v5910
    %v6202 = vadd.f32 %v6201, 1.0
    %v6203 = vmul.f32 %v6202, %v5910
    %v6204 = vand.u32 2147483647, %v5910
    %vm6205 = vcmp.lt.f32.partialorder %v6204, 0.0004427343
    %v6206 = vsel %vm6205, %v6203, %v6200
    %v6207 = vadd.f32 %v5911, 1.0
    %v6208 = vlog2.pop %v6207
    %v6209 = vmul.f32 %v6208, 0.6931472
    %v6210 = vmul.f32 -0.5, %v5911
    %v6211 = vadd.f32 %v6210, 1.0
    %v6212 = vmul.f32 %v6211, %v5911
    %v6213 = vand.u32 2147483647, %v5911
    %vm6214 = vcmp.lt.f32.partialorder %v6213, 0.0004427343
    %v6215 = vsel %vm6214, %v6212, %v6209
    %v6216 = vadd.f32 %v5912, 1.0
    %v6217 = vlog2.pop %v6216
    %v6218 = vmul.f32 %v6217, 0.6931472
    %v6219 = vmul.f32 -0.5, %v5912
    %v6220 = vadd.f32 %v6219, 1.0
    %v6221 = vmul.f32 %v6220, %v5912
    %v6222 = vand.u32 2147483647, %v5912
    %vm6223 = vcmp.lt.f32.partialorder %v6222, 0.0004427343
    %v6224 = vsel %vm6223, %v6221, %v6218
    %v6225 = vadd.f32 %v5913, 1.0
    %v6226 = vlog2.pop %v6225
    %v6227 = vmul.f32 %v6226, 0.6931472
    %v6228 = vmul.f32 -0.5, %v5913
    %v6229 = vadd.f32 %v6228, 1.0
    %v6230 = vmul.f32 %v6229, %v5913
    %v6231 = vand.u32 2147483647, %v5913
    %vm6232 = vcmp.lt.f32.partialorder %v6231, 0.0004427343
    %v6233 = vsel %vm6232, %v6230, %v6227
    %v6234 = vadd.f32 %v5914, 1.0
    %v6235 = vlog2.pop %v6234
    %v6236 = vmul.f32 %v6235, 0.6931472
    %v6237 = vmul.f32 -0.5, %v5914
    %v6238 = vadd.f32 %v6237, 1.0
    %v6239 = vmul.f32 %v6238, %v5914
    %v6240 = vand.u32 2147483647, %v5914
    %vm6241 = vcmp.lt.f32.partialorder %v6240, 0.0004427343
    %v6242 = vsel %vm6241, %v6239, %v6236
    %v6243 = vadd.f32 %v5915, 1.0
    %v6244 = vlog2.pop %v6243
    %v6245 = vmul.f32 %v6244, 0.6931472
    %v6246 = vmul.f32 -0.5, %v5915
    %v6247 = vadd.f32 %v6246, 1.0
    %v6248 = vmul.f32 %v6247, %v5915
    %v6249 = vand.u32 2147483647, %v5915
    %vm6250 = vcmp.lt.f32.partialorder %v6249, 0.0004427343
    %v6251 = vsel %vm6250, %v6248, %v6245
    %v6252 = vadd.f32 %v5916, 1.0
    %v6253 = vlog2.pop %v6252
    %v6254 = vmul.f32 %v6253, 0.6931472
    %v6255 = vmul.f32 -0.5, %v5916
    %v6256 = vadd.f32 %v6255, 1.0
    %v6257 = vmul.f32 %v6256, %v5916
    %v6258 = vand.u32 2147483647, %v5916
    %vm6259 = vcmp.lt.f32.partialorder %v6258, 0.0004427343
    %v6260 = vsel %vm6259, %v6257, %v6254
    %v6261 = vadd.f32 %v5917, 1.0
    %v6262 = vlog2.pop %v6261
    %v6263 = vmul.f32 %v6262, 0.6931472
    %v6264 = vmul.f32 -0.5, %v5917
    %v6265 = vadd.f32 %v6264, 1.0
    %v6266 = vmul.f32 %v6265, %v5917
    %v6267 = vand.u32 2147483647, %v5917
    %vm6268 = vcmp.lt.f32.partialorder %v6267, 0.0004427343
    %v6269 = vsel %vm6268, %v6266, %v6263
    %v6270 = vadd.f32 %v5918, 1.0
    %v6271 = vlog2.pop %v6270
    %v6272 = vmul.f32 %v6271, 0.6931472
    %v6273 = vmul.f32 -0.5, %v5918
    %v6274 = vadd.f32 %v6273, 1.0
    %v6275 = vmul.f32 %v6274, %v5918
    %v6276 = vand.u32 2147483647, %v5918
    %vm6277 = vcmp.lt.f32.partialorder %v6276, 0.0004427343
    %v6278 = vsel %vm6277, %v6275, %v6272
    %v6279 = vadd.f32 %v5919, 1.0
    %v6280 = vlog2.pop %v6279
    %v6281 = vmul.f32 %v6280, 0.6931472
    %v6282 = vmul.f32 -0.5, %v5919
    %v6283 = vadd.f32 %v6282, 1.0
    %v6284 = vmul.f32 %v6283, %v5919
    %v6285 = vand.u32 2147483647, %v5919
    %vm6286 = vcmp.lt.f32.partialorder %v6285, 0.0004427343
    %v6287 = vsel %vm6286, %v6284, %v6281
    %v6288 = vadd.f32 %v5920, 1.0
    %v6289 = vlog2.pop %v6288
    %v6290 = vmul.f32 %v6289, 0.6931472
    %v6291 = vmul.f32 -0.5, %v5920
    %v6292 = vadd.f32 %v6291, 1.0
    %v6293 = vmul.f32 %v6292, %v5920
    %v6294 = vand.u32 2147483647, %v5920
    %vm6295 = vcmp.lt.f32.partialorder %v6294, 0.0004427343
    %v6296 = vsel %vm6295, %v6293, %v6290
    %v6297 = vadd.f32 %v5921, 1.0
    %v6298 = vlog2.pop %v6297
    %v6299 = vmul.f32 %v6298, 0.6931472
    %v6300 = vmul.f32 -0.5, %v5921
    %v6301 = vadd.f32 %v6300, 1.0
    %v6302 = vmul.f32 %v6301, %v5921
    %v6303 = vand.u32 2147483647, %v5921
    %vm6304 = vcmp.lt.f32.partialorder %v6303, 0.0004427343
    %v6305 = vsel %vm6304, %v6302, %v6299
    %v6306 = vadd.f32 %v5922, 1.0
    %v6307 = vlog2.pop %v6306
    %v6308 = vmul.f32 %v6307, 0.6931472
    %v6309 = vmul.f32 -0.5, %v5922
    %v6310 = vadd.f32 %v6309, 1.0
    %v6311 = vmul.f32 %v6310, %v5922
    %v6312 = vand.u32 2147483647, %v5922
    %vm6313 = vcmp.lt.f32.partialorder %v6312, 0.0004427343
    %v6314 = vsel %vm6313, %v6311, %v6308
    %v6315 = vadd.f32 %v5923, 1.0
    %v6316 = vlog2.pop %v6315
    %v6317 = vmul.f32 %v6316, 0.6931472
    %v6318 = vmul.f32 -0.5, %v5923
    %v6319 = vadd.f32 %v6318, 1.0
    %v6320 = vmul.f32 %v6319, %v5923
    %v6321 = vand.u32 2147483647, %v5923
    %vm6322 = vcmp.lt.f32.partialorder %v6321, 0.0004427343
    %v6323 = vsel %vm6322, %v6320, %v6317
    %v6324 = vadd.f32 %v5924, 1.0
    %v6325 = vlog2.pop %v6324
    %v6326 = vmul.f32 %v6325, 0.6931472
    %v6327 = vmul.f32 -0.5, %v5924
    %v6328 = vadd.f32 %v6327, 1.0
    %v6329 = vmul.f32 %v6328, %v5924
    %v6330 = vand.u32 2147483647, %v5924
    %vm6331 = vcmp.lt.f32.partialorder %v6330, 0.0004427343
    %v6332 = vsel %vm6331, %v6329, %v6326
    %v6333 = vadd.f32 %v5925, 1.0
    %v6334 = vlog2.pop %v6333
    %v6335 = vmul.f32 %v6334, 0.6931472
    %v6336 = vmul.f32 -0.5, %v5925
    %v6337 = vadd.f32 %v6336, 1.0
    %v6338 = vmul.f32 %v6337, %v5925
    %v6339 = vand.u32 2147483647, %v5925
    %vm6340 = vcmp.lt.f32.partialorder %v6339, 0.0004427343
    %v6341 = vsel %vm6340, %v6338, %v6335
    %v6342 = vadd.f32 %v5926, 1.0
    %v6343 = vlog2.pop %v6342
    %v6344 = vmul.f32 %v6343, 0.6931472
    %v6345 = vmul.f32 -0.5, %v5926
    %v6346 = vadd.f32 %v6345, 1.0
    %v6347 = vmul.f32 %v6346, %v5926
    %v6348 = vand.u32 2147483647, %v5926
    %vm6349 = vcmp.lt.f32.partialorder %v6348, 0.0004427343
    %v6350 = vsel %vm6349, %v6347, %v6344
    %v6351 = vadd.f32 %v5927, 1.0
    %v6352 = vlog2.pop %v6351
    %v6353 = vmul.f32 %v6352, 0.6931472
    %v6354 = vmul.f32 -0.5, %v5927
    %v6355 = vadd.f32 %v6354, 1.0
    %v6356 = vmul.f32 %v6355, %v5927
    %v6357 = vand.u32 2147483647, %v5927
    %vm6358 = vcmp.lt.f32.partialorder %v6357, 0.0004427343
    %v6359 = vsel %vm6358, %v6356, %v6353
    %v6360 = vadd.f32 %v5928, 1.0
    %v6361 = vlog2.pop %v6360
    %v6362 = vmul.f32 %v6361, 0.6931472
    %v6363 = vmul.f32 -0.5, %v5928
    %v6364 = vadd.f32 %v6363, 1.0
    %v6365 = vmul.f32 %v6364, %v5928
    %v6366 = vand.u32 2147483647, %v5928
    %vm6367 = vcmp.lt.f32.partialorder %v6366, 0.0004427343
    %v6368 = vsel %vm6367, %v6365, %v6362
    %v6369 = vadd.f32 %v5929, 1.0
    %v6370 = vlog2.pop %v6369
    %v6371 = vmul.f32 %v6370, 0.6931472
    %v6372 = vmul.f32 -0.5, %v5929
    %v6373 = vadd.f32 %v6372, 1.0
    %v6374 = vmul.f32 %v6373, %v5929
    %v6375 = vand.u32 2147483647, %v5929
    %vm6376 = vcmp.lt.f32.partialorder %v6375, 0.0004427343
    %v6377 = vsel %vm6376, %v6374, %v6371
    %v6378 = vadd.f32 %v5930, 1.0
    %v6379 = vlog2.pop %v6378
    %v6380 = vmul.f32 %v6379, 0.6931472
    %v6381 = vmul.f32 -0.5, %v5930
    %v6382 = vadd.f32 %v6381, 1.0
    %v6383 = vmul.f32 %v6382, %v5930
    %v6384 = vand.u32 2147483647, %v5930
    %vm6385 = vcmp.lt.f32.partialorder %v6384, 0.0004427343
    %v6386 = vsel %vm6385, %v6383, %v6380
    %v6387 = vadd.f32 %v5931, 1.0
    %v6388 = vlog2.pop %v6387
    %v6389 = vmul.f32 %v6388, 0.6931472
    %v6390 = vmul.f32 -0.5, %v5931
    %v6391 = vadd.f32 %v6390, 1.0
    %v6392 = vmul.f32 %v6391, %v5931
    %v6393 = vand.u32 2147483647, %v5931
    %vm6394 = vcmp.lt.f32.partialorder %v6393, 0.0004427343
    %v6395 = vsel %vm6394, %v6392, %v6389
    %v6396 = vadd.f32 %v5932, 1.0
    %v6397 = vlog2.pop %v6396
    %v6398 = vmul.f32 %v6397, 0.6931472
    %v6399 = vmul.f32 -0.5, %v5932
    %v6400 = vadd.f32 %v6399, 1.0
    %v6401 = vmul.f32 %v6400, %v5932
    %v6402 = vand.u32 2147483647, %v5932
    %vm6403 = vcmp.lt.f32.partialorder %v6402, 0.0004427343
    %v6404 = vsel %vm6403, %v6401, %v6398
    %v6405 = vadd.f32 %v5933, 1.0
    %v6406 = vlog2.pop %v6405
    %v6407 = vmul.f32 %v6406, 0.6931472
    %v6408 = vmul.f32 -0.5, %v5933
    %v6409 = vadd.f32 %v6408, 1.0
    %v6410 = vmul.f32 %v6409, %v5933
    %v6411 = vand.u32 2147483647, %v5933
    %vm6412 = vcmp.lt.f32.partialorder %v6411, 0.0004427343
    %v6413 = vsel %vm6412, %v6410, %v6407
    %v6414 = vadd.f32 %v5934, 1.0
    %v6415 = vlog2.pop %v6414
    %v6416 = vmul.f32 %v6415, 0.6931472
    %v6417 = vmul.f32 -0.5, %v5934
    %v6418 = vadd.f32 %v6417, 1.0
    %v6419 = vmul.f32 %v6418, %v5934
    %v6420 = vand.u32 2147483647, %v5934
    %vm6421 = vcmp.lt.f32.partialorder %v6420, 0.0004427343
    %v6422 = vsel %vm6421, %v6419, %v6416
    %v6423 = vadd.f32 %v5935, 1.0
    %v6424 = vlog2.pop %v6423
    %v6425 = vmul.f32 %v6424, 0.6931472
    %v6426 = vmul.f32 -0.5, %v5935
    %v6427 = vadd.f32 %v6426, 1.0
    %v6428 = vmul.f32 %v6427, %v5935
    %v6429 = vand.u32 2147483647, %v5935
    %vm6430 = vcmp.lt.f32.partialorder %v6429, 0.0004427343
    %v6431 = vsel %vm6430, %v6428, %v6425
    %v6432 = vadd.f32 %v5936, 1.0
    %v6433 = vlog2.pop %v6432
    %v6434 = vmul.f32 %v6433, 0.6931472
    %v6435 = vmul.f32 -0.5, %v5936
    %v6436 = vadd.f32 %v6435, 1.0
    %v6437 = vmul.f32 %v6436, %v5936
    %v6438 = vand.u32 2147483647, %v5936
    %vm6439 = vcmp.lt.f32.partialorder %v6438, 0.0004427343
    %v6440 = vsel %vm6439, %v6437, %v6434
    %v6441 = vadd.f32 %v5937, 1.0
    %v6442 = vlog2.pop %v6441
    %v6443 = vmul.f32 %v6442, 0.6931472
    %v6444 = vmul.f32 -0.5, %v5937
    %v6445 = vadd.f32 %v6444, 1.0
    %v6446 = vmul.f32 %v6445, %v5937
    %v6447 = vand.u32 2147483647, %v5937
    %vm6448 = vcmp.lt.f32.partialorder %v6447, 0.0004427343
    %v6449 = vsel %vm6448, %v6446, %v6443
    %v6450 = vadd.f32 %v5938, 1.0
    %v6451 = vlog2.pop %v6450
    %v6452 = vmul.f32 %v6451, 0.6931472
    %v6453 = vmul.f32 -0.5, %v5938
    %v6454 = vadd.f32 %v6453, 1.0
    %v6455 = vmul.f32 %v6454, %v5938
    %v6456 = vand.u32 2147483647, %v5938
    %vm6457 = vcmp.lt.f32.partialorder %v6456, 0.0004427343
    %v6458 = vsel %vm6457, %v6455, %v6452
    %v6459 = vadd.f32 %v5939, 1.0
    %v6460 = vlog2.pop %v6459
    %v6461 = vmul.f32 %v6460, 0.6931472
    %v6462 = vmul.f32 -0.5, %v5939
    %v6463 = vadd.f32 %v6462, 1.0
    %v6464 = vmul.f32 %v6463, %v5939
    %v6465 = vand.u32 2147483647, %v5939
    %vm6466 = vcmp.lt.f32.partialorder %v6465, 0.0004427343
    %v6467 = vsel %vm6466, %v6464, %v6461
    %v6468 = vadd.f32 %v5940, 1.0
    %v6469 = vlog2.pop %v6468
    %v6470 = vmul.f32 %v6469, 0.6931472
    %v6471 = vmul.f32 -0.5, %v5940
    %v6472 = vadd.f32 %v6471, 1.0
    %v6473 = vmul.f32 %v6472, %v5940
    %v6474 = vand.u32 2147483647, %v5940
    %vm6475 = vcmp.lt.f32.partialorder %v6474, 0.0004427343
    %v6476 = vsel %vm6475, %v6473, %v6470
    %v6477 = vadd.f32 %v5941, 1.0
    %v6478 = vlog2.pop %v6477
    %v6479 = vmul.f32 %v6478, 0.6931472
    %v6480 = vmul.f32 -0.5, %v5941
    %v6481 = vadd.f32 %v6480, 1.0
    %v6482 = vmul.f32 %v6481, %v5941
    %v6483 = vand.u32 2147483647, %v5941
    %vm6484 = vcmp.lt.f32.partialorder %v6483, 0.0004427343
    %v6485 = vsel %vm6484, %v6482, %v6479
    %v6486 = vadd.f32 %v5942, 1.0
    %v6487 = vlog2.pop %v6486
    %v6488 = vmul.f32 %v6487, 0.6931472
    %v6489 = vmul.f32 -0.5, %v5942
    %v6490 = vadd.f32 %v6489, 1.0
    %v6491 = vmul.f32 %v6490, %v5942
    %v6492 = vand.u32 2147483647, %v5942
    %vm6493 = vcmp.lt.f32.partialorder %v6492, 0.0004427343
    %v6494 = vsel %vm6493, %v6491, %v6488
    %v6495 = vadd.f32 %v5943, 1.0
    %v6496 = vlog2.pop %v6495
    %v6497 = vmul.f32 %v6496, 0.6931472
    %v6498 = vmul.f32 -0.5, %v5943
    %v6499 = vadd.f32 %v6498, 1.0
    %v6500 = vmul.f32 %v6499, %v5943
    %v6501 = vand.u32 2147483647, %v5943
    %vm6502 = vcmp.lt.f32.partialorder %v6501, 0.0004427343
    %v6503 = vsel %vm6502, %v6500, %v6497
    %v6504 = vadd.f32 %v5944, 1.0
    %v6505 = vlog2.pop %v6504
    %v6506 = vmul.f32 %v6505, 0.6931472
    %v6507 = vmul.f32 -0.5, %v5944
    %v6508 = vadd.f32 %v6507, 1.0
    %v6509 = vmul.f32 %v6508, %v5944
    %v6510 = vand.u32 2147483647, %v5944
    %vm6511 = vcmp.lt.f32.partialorder %v6510, 0.0004427343
    %v6512 = vsel %vm6511, %v6509, %v6506
    %v6513 = vadd.f32 %v5945, 1.0
    %v6514 = vlog2.pop %v6513
    %v6515 = vmul.f32 %v6514, 0.6931472
    %v6516 = vmul.f32 -0.5, %v5945
    %v6517 = vadd.f32 %v6516, 1.0
    %v6518 = vmul.f32 %v6517, %v5945
    %v6519 = vand.u32 2147483647, %v5945
    %vm6520 = vcmp.lt.f32.partialorder %v6519, 0.0004427343
    %v6521 = vsel %vm6520, %v6518, %v6515
    %v6522 = vsub.f32 %v5314, %v5954
    %v6523 = vsub.f32 %v5323, %v5963
    %v6524 = vsub.f32 %v5332, %v5972
    %v6525 = vsub.f32 %v5341, %v5981
    %v6526 = vsub.f32 %v5350, %v5990
    %v6527 = vsub.f32 %v5359, %v5999
    %v6528 = vsub.f32 %v5368, %v6008
    %v6529 = vsub.f32 %v5377, %v6017
    %v6530 = vsub.f32 %v5386, %v6026
    %v6531 = vsub.f32 %v5395, %v6035
    %v6532 = vsub.f32 %v5404, %v6044
    %v6533 = vsub.f32 %v5413, %v6053
    %v6534 = vsub.f32 %v5422, %v6062
    %v6535 = vsub.f32 %v5431, %v6071
    %v6536 = vsub.f32 %v5440, %v6080
    %v6537 = vsub.f32 %v5449, %v6089
    %v6538 = vsub.f32 %v5458, %v6098
    %v6539 = vsub.f32 %v5467, %v6107
    %v6540 = vsub.f32 %v5476, %v6116
    %v6541 = vsub.f32 %v5485, %v6125
    %v6542 = vsub.f32 %v5494, %v6134
    %v6543 = vsub.f32 %v5503, %v6143
    %v6544 = vsub.f32 %v5512, %v6152
    %v6545 = vsub.f32 %v5521, %v6161
    %v6546 = vsub.f32 %v5530, %v6170
    %v6547 = vsub.f32 %v5539, %v6179
    %v6548 = vsub.f32 %v5548, %v6188
    %v6549 = vsub.f32 %v5557, %v6197
    %v6550 = vsub.f32 %v5566, %v6206
    %v6551 = vsub.f32 %v5575, %v6215
    %v6552 = vsub.f32 %v5584, %v6224
    %v6553 = vsub.f32 %v5593, %v6233
    %v6554 = vsub.f32 %v5602, %v6242
    %v6555 = vsub.f32 %v5611, %v6251
    %v6556 = vsub.f32 %v5620, %v6260
    %v6557 = vsub.f32 %v5629, %v6269
    %v6558 = vsub.f32 %v5638, %v6278
    %v6559 = vsub.f32 %v5647, %v6287
    %v6560 = vsub.f32 %v5656, %v6296
    %v6561 = vsub.f32 %v5665, %v6305
    %v6562 = vsub.f32 %v5674, %v6314
    %v6563 = vsub.f32 %v5683, %v6323
    %v6564 = vsub.f32 %v5692, %v6332
    %v6565 = vsub.f32 %v5701, %v6341
    %v6566 = vsub.f32 %v5710, %v6350
    %v6567 = vsub.f32 %v5719, %v6359
    %v6568 = vsub.f32 %v5728, %v6368
    %v6569 = vsub.f32 %v5737, %v6377
    %v6570 = vsub.f32 %v5746, %v6386
    %v6571 = vsub.f32 %v5755, %v6395
    %v6572 = vsub.f32 %v5764, %v6404
    %v6573 = vsub.f32 %v5773, %v6413
    %v6574 = vsub.f32 %v5782, %v6422
    %v6575 = vsub.f32 %v5791, %v6431
    %v6576 = vsub.f32 %v5800, %v6440
    %v6577 = vsub.f32 %v5809, %v6449
    %v6578 = vsub.f32 %v5818, %v6458
    %v6579 = vsub.f32 %v5827, %v6467
    %v6580 = vsub.f32 %v5836, %v6476
    %v6581 = vsub.f32 %v5845, %v6485
    %v6582 = vsub.f32 %v5854, %v6494
    %v6583 = vsub.f32 %v5863, %v6503
    %v6584 = vsub.f32 %v5872, %v6512
    %v6585 = vsub.f32 %v5881, %v6521
    %v6586 = vmul.f32 %v6522, 0.5
    %v6587 = vmul.f32 %v6523, 0.5
    %v6588 = vmul.f32 %v6524, 0.5
    %v6589 = vmul.f32 %v6525, 0.5
    %v6590 = vmul.f32 %v6526, 0.5
    %v6591 = vmul.f32 %v6527, 0.5
    %v6592 = vmul.f32 %v6528, 0.5
    %v6593 = vmul.f32 %v6529, 0.5
    %v6594 = vmul.f32 %v6530, 0.5
    %v6595 = vmul.f32 %v6531, 0.5
    %v6596 = vmul.f32 %v6532, 0.5
    %v6597 = vmul.f32 %v6533, 0.5
    %v6598 = vmul.f32 %v6534, 0.5
    %v6599 = vmul.f32 %v6535, 0.5
    %v6600 = vmul.f32 %v6536, 0.5
    %v6601 = vmul.f32 %v6537, 0.5
    %v6602 = vmul.f32 %v6538, 0.5
    %v6603 = vmul.f32 %v6539, 0.5
    %v6604 = vmul.f32 %v6540, 0.5
    %v6605 = vmul.f32 %v6541, 0.5
    %v6606 = vmul.f32 %v6542, 0.5
    %v6607 = vmul.f32 %v6543, 0.5
    %v6608 = vmul.f32 %v6544, 0.5
    %v6609 = vmul.f32 %v6545, 0.5
    %v6610 = vmul.f32 %v6546, 0.5
    %v6611 = vmul.f32 %v6547, 0.5
    %v6612 = vmul.f32 %v6548, 0.5
    %v6613 = vmul.f32 %v6549, 0.5
    %v6614 = vmul.f32 %v6550, 0.5
    %v6615 = vmul.f32 %v6551, 0.5
    %v6616 = vmul.f32 %v6552, 0.5
    %v6617 = vmul.f32 %v6553, 0.5
    %v6618 = vmul.f32 %v6554, 0.5
    %v6619 = vmul.f32 %v6555, 0.5
    %v6620 = vmul.f32 %v6556, 0.5
    %v6621 = vmul.f32 %v6557, 0.5
    %v6622 = vmul.f32 %v6558, 0.5
    %v6623 = vmul.f32 %v6559, 0.5
    %v6624 = vmul.f32 %v6560, 0.5
    %v6625 = vmul.f32 %v6561, 0.5
    %v6626 = vmul.f32 %v6562, 0.5
    %v6627 = vmul.f32 %v6563, 0.5
    %v6628 = vmul.f32 %v6564, 0.5
    %v6629 = vmul.f32 %v6565, 0.5
    %v6630 = vmul.f32 %v6566, 0.5
    %v6631 = vmul.f32 %v6567, 0.5
    %v6632 = vmul.f32 %v6568, 0.5
    %v6633 = vmul.f32 %v6569, 0.5
    %v6634 = vmul.f32 %v6570, 0.5
    %v6635 = vmul.f32 %v6571, 0.5
    %v6636 = vmul.f32 %v6572, 0.5
    %v6637 = vmul.f32 %v6573, 0.5
    %v6638 = vmul.f32 %v6574, 0.5
    %v6639 = vmul.f32 %v6575, 0.5
    %v6640 = vmul.f32 %v6576, 0.5
    %v6641 = vmul.f32 %v6577, 0.5
    %v6642 = vmul.f32 %v6578, 0.5
    %v6643 = vmul.f32 %v6579, 0.5
    %v6644 = vmul.f32 %v6580, 0.5
    %v6645 = vmul.f32 %v6581, 0.5
    %v6646 = vmul.f32 %v6582, 0.5
    %v6647 = vmul.f32 %v6583, 0.5
    %v6648 = vmul.f32 %v6584, 0.5
    %v6649 = vmul.f32 %v6585, 0.5
    %v6650 = vmul.f32 %v6586, %v5114
    %v6651 = vmul.f32 %v6587, %v5115
    %v6652 = vmul.f32 %v6588, %v5116
    %v6653 = vmul.f32 %v6589, %v5117
    %v6654 = vmul.f32 %v6590, %v5118
    %v6655 = vmul.f32 %v6591, %v5119
    %v6656 = vmul.f32 %v6592, %v5120
    %v6657 = vmul.f32 %v6593, %v5121
    %v6658 = vmul.f32 %v6594, %v5122
    %v6659 = vmul.f32 %v6595, %v5123
    %v6660 = vmul.f32 %v6596, %v5124
    %v6661 = vmul.f32 %v6597, %v5125
    %v6662 = vmul.f32 %v6598, %v5126
    %v6663 = vmul.f32 %v6599, %v5127
    %v6664 = vmul.f32 %v6600, %v5128
    %v6665 = vmul.f32 %v6601, %v5129
    %v6666 = vmul.f32 %v6602, %v5130
    %v6667 = vmul.f32 %v6603, %v5131
    %v6668 = vmul.f32 %v6604, %v5132
    %v6669 = vmul.f32 %v6605, %v5133
    %v6670 = vmul.f32 %v6606, %v5134
    %v6671 = vmul.f32 %v6607, %v5135
    %v6672 = vmul.f32 %v6608, %v5136
    %v6673 = vmul.f32 %v6609, %v5137
    %v6674 = vmul.f32 %v6610, %v5138
    %v6675 = vmul.f32 %v6611, %v5139
    %v6676 = vmul.f32 %v6612, %v5140
    %v6677 = vmul.f32 %v6613, %v5141
    %v6678 = vmul.f32 %v6614, %v5142
    %v6679 = vmul.f32 %v6615, %v5143
    %v6680 = vmul.f32 %v6616, %v5144
    %v6681 = vmul.f32 %v6617, %v5145
    %v6682 = vmul.f32 %v6618, %v5146
    %v6683 = vmul.f32 %v6619, %v5147
    %v6684 = vmul.f32 %v6620, %v5148
    %v6685 = vmul.f32 %v6621, %v5149
    %v6686 = vmul.f32 %v6622, %v5150
    %v6687 = vmul.f32 %v6623, %v5151
    %v6688 = vmul.f32 %v6624, %v5152
    %v6689 = vmul.f32 %v6625, %v5153
    %v6690 = vmul.f32 %v6626, %v5154
    %v6691 = vmul.f32 %v6627, %v5155
    %v6692 = vmul.f32 %v6628, %v5156
    %v6693 = vmul.f32 %v6629, %v5157
    %v6694 = vmul.f32 %v6630, %v5158
    %v6695 = vmul.f32 %v6631, %v5159
    %v6696 = vmul.f32 %v6632, %v5160
    %v6697 = vmul.f32 %v6633, %v5161
    %v6698 = vmul.f32 %v6634, %v5162
    %v6699 = vmul.f32 %v6635, %v5163
    %v6700 = vmul.f32 %v6636, %v5164
    %v6701 = vmul.f32 %v6637, %v5165
    %v6702 = vmul.f32 %v6638, %v5166
    %v6703 = vmul.f32 %v6639, %v5167
    %v6704 = vmul.f32 %v6640, %v5168
    %v6705 = vmul.f32 %v6641, %v5169
    %v6706 = vmul.f32 %v6642, %v5170
    %v6707 = vmul.f32 %v6643, %v5171
    %v6708 = vmul.f32 %v6644, %v5172
    %v6709 = vmul.f32 %v6645, %v5173
    %v6710 = vmul.f32 %v6646, %v5174
    %v6711 = vmul.f32 %v6647, %v5175
    %v6712 = vmul.f32 %v6648, %v5176
    %v6713 = vmul.f32 %v6649, %v5177
    %v6714 = vmul.f32 %v6650, %v4986
    %v6715 = vmul.f32 %v6651, %v4987
    %v6716 = vmul.f32 %v6652, %v4988
    %v6717 = vmul.f32 %v6653, %v4989
    %v6718 = vmul.f32 %v6654, %v4990
    %v6719 = vmul.f32 %v6655, %v4991
    %v6720 = vmul.f32 %v6656, %v4992
    %v6721 = vmul.f32 %v6657, %v4993
    %v6722 = vmul.f32 %v6658, %v4994
    %v6723 = vmul.f32 %v6659, %v4995
    %v6724 = vmul.f32 %v6660, %v4996
    %v6725 = vmul.f32 %v6661, %v4997
    %v6726 = vmul.f32 %v6662, %v4998
    %v6727 = vmul.f32 %v6663, %v4999
    %v6728 = vmul.f32 %v6664, %v5000
    %v6729 = vmul.f32 %v6665, %v5001
    %v6730 = vmul.f32 %v6666, %v5002
    %v6731 = vmul.f32 %v6667, %v5003
    %v6732 = vmul.f32 %v6668, %v5004
    %v6733 = vmul.f32 %v6669, %v5005
    %v6734 = vmul.f32 %v6670, %v5006
    %v6735 = vmul.f32 %v6671, %v5007
    %v6736 = vmul.f32 %v6672, %v5008
    %v6737 = vmul.f32 %v6673, %v5009
    %v6738 = vmul.f32 %v6674, %v5010
    %v6739 = vmul.f32 %v6675, %v5011
    %v6740 = vmul.f32 %v6676, %v5012
    %v6741 = vmul.f32 %v6677, %v5013
    %v6742 = vmul.f32 %v6678, %v5014
    %v6743 = vmul.f32 %v6679, %v5015
    %v6744 = vmul.f32 %v6680, %v5016
    %v6745 = vmul.f32 %v6681, %v5017
    %v6746 = vmul.f32 %v6682, %v5018
    %v6747 = vmul.f32 %v6683, %v5019
    %v6748 = vmul.f32 %v6684, %v5020
    %v6749 = vmul.f32 %v6685, %v5021
    %v6750 = vmul.f32 %v6686, %v5022
    %v6751 = vmul.f32 %v6687, %v5023
    %v6752 = vmul.f32 %v6688, %v5024
    %v6753 = vmul.f32 %v6689, %v5025
    %v6754 = vmul.f32 %v6690, %v5026
    %v6755 = vmul.f32 %v6691, %v5027
    %v6756 = vmul.f32 %v6692, %v5028
    %v6757 = vmul.f32 %v6693, %v5029
    %v6758 = vmul.f32 %v6694, %v5030
    %v6759 = vmul.f32 %v6695, %v5031
    %v6760 = vmul.f32 %v6696, %v5032
    %v6761 = vmul.f32 %v6697, %v5033
    %v6762 = vmul.f32 %v6698, %v5034
    %v6763 = vmul.f32 %v6699, %v5035
    %v6764 = vmul.f32 %v6700, %v5036
    %v6765 = vmul.f32 %v6701, %v5037
    %v6766 = vmul.f32 %v6702, %v5038
    %v6767 = vmul.f32 %v6703, %v5039
    %v6768 = vmul.f32 %v6704, %v5040
    %v6769 = vmul.f32 %v6705, %v5041
    %v6770 = vmul.f32 %v6706, %v5042
    %v6771 = vmul.f32 %v6707, %v5043
    %v6772 = vmul.f32 %v6708, %v5044
    %v6773 = vmul.f32 %v6709, %v5045
    %v6774 = vmul.f32 %v6710, %v5046
    %v6775 = vmul.f32 %v6711, %v5047
    %v6776 = vmul.f32 %v6712, %v5048
    %v6777 = vmul.f32 %v6713, %v5049
    %v6778 = vpack.c.bf16 %v6715, %v6714
    %v6779 = vpack.c.bf16 %v6717, %v6716
    %v6780 = vpack.c.bf16 %v6719, %v6718
    %v6781 = vpack.c.bf16 %v6721, %v6720
    %v6782 = vpack.c.bf16 %v6723, %v6722
    %v6783 = vpack.c.bf16 %v6725, %v6724
    %v6784 = vpack.c.bf16 %v6727, %v6726
    %v6785 = vpack.c.bf16 %v6729, %v6728
    %v6786 = vpack.c.bf16 %v6731, %v6730
    %v6787 = vpack.c.bf16 %v6733, %v6732
    %v6788 = vpack.c.bf16 %v6735, %v6734
    %v6789 = vpack.c.bf16 %v6737, %v6736
    %v6790 = vpack.c.bf16 %v6739, %v6738
    %v6791 = vpack.c.bf16 %v6741, %v6740
    %v6792 = vpack.c.bf16 %v6743, %v6742
    %v6793 = vpack.c.bf16 %v6745, %v6744
    %v6794 = vpack.c.bf16 %v6747, %v6746
    %v6795 = vpack.c.bf16 %v6749, %v6748
    %v6796 = vpack.c.bf16 %v6751, %v6750
    %v6797 = vpack.c.bf16 %v6753, %v6752
    %v6798 = vpack.c.bf16 %v6755, %v6754
    %v6799 = vpack.c.bf16 %v6757, %v6756
    %v6800 = vpack.c.bf16 %v6759, %v6758
    %v6801 = vpack.c.bf16 %v6761, %v6760
    %v6802 = vpack.c.bf16 %v6763, %v6762
    %v6803 = vpack.c.bf16 %v6765, %v6764
    %v6804 = vpack.c.bf16 %v6767, %v6766
    %v6805 = vpack.c.bf16 %v6769, %v6768
    %v6806 = vpack.c.bf16 %v6771, %v6770
    %v6807 = vpack.c.bf16 %v6773, %v6772
    %v6808 = vpack.c.bf16 %v6775, %v6774
    %v6809 = vpack.c.bf16 %v6777, %v6776
    %v6842 = vunpack.c.l.b16 %v6778
    %v6843 = vunpack.c.h.b16 %v6778
    %v6844 = vunpack.c.l.b16 %v6779
    %v6845 = vunpack.c.h.b16 %v6779
    %v6846 = vunpack.c.l.b16 %v6780
    %v6847 = vunpack.c.h.b16 %v6780
    %v6848 = vunpack.c.l.b16 %v6781
    %v6849 = vunpack.c.h.b16 %v6781
    %v6850 = vunpack.c.l.b16 %v6782
    %v6851 = vunpack.c.h.b16 %v6782
    %v6852 = vunpack.c.l.b16 %v6783
    %v6853 = vunpack.c.h.b16 %v6783
    %v6854 = vunpack.c.l.b16 %v6784
    %v6855 = vunpack.c.h.b16 %v6784
    %v6856 = vunpack.c.l.b16 %v6785
    %v6857 = vunpack.c.h.b16 %v6785
    %v6858 = vunpack.c.l.b16 %v6786
    %v6859 = vunpack.c.h.b16 %v6786
    %v6860 = vunpack.c.l.b16 %v6787
    %v6861 = vunpack.c.h.b16 %v6787
    %v6862 = vunpack.c.l.b16 %v6788
    %v6863 = vunpack.c.h.b16 %v6788
    %v6864 = vunpack.c.l.b16 %v6789
    %v6865 = vunpack.c.h.b16 %v6789
    %v6866 = vunpack.c.l.b16 %v6790
    %v6867 = vunpack.c.h.b16 %v6790
    %v6868 = vunpack.c.l.b16 %v6791
    %v6869 = vunpack.c.h.b16 %v6791
    %v6870 = vunpack.c.l.b16 %v6792
    %v6871 = vunpack.c.h.b16 %v6792
    %v6872 = vunpack.c.l.b16 %v6793
    %v6873 = vunpack.c.h.b16 %v6793
    %v6874 = vunpack.c.l.b16 %v6794
    %v6875 = vunpack.c.h.b16 %v6794
    %v6876 = vunpack.c.l.b16 %v6795
    %v6877 = vunpack.c.h.b16 %v6795
    %v6878 = vunpack.c.l.b16 %v6796
    %v6879 = vunpack.c.h.b16 %v6796
    %v6880 = vunpack.c.l.b16 %v6797
    %v6881 = vunpack.c.h.b16 %v6797
    %v6882 = vunpack.c.l.b16 %v6798
    %v6883 = vunpack.c.h.b16 %v6798
    %v6884 = vunpack.c.l.b16 %v6799
    %v6885 = vunpack.c.h.b16 %v6799
    %v6886 = vunpack.c.l.b16 %v6800
    %v6887 = vunpack.c.h.b16 %v6800
    %v6888 = vunpack.c.l.b16 %v6801
    %v6889 = vunpack.c.h.b16 %v6801
    %v6890 = vunpack.c.l.b16 %v6802
    %v6891 = vunpack.c.h.b16 %v6802
    %v6892 = vunpack.c.l.b16 %v6803
    %v6893 = vunpack.c.h.b16 %v6803
    %v6894 = vunpack.c.l.b16 %v6804
    %v6895 = vunpack.c.h.b16 %v6804
    %v6896 = vunpack.c.l.b16 %v6805
    %v6897 = vunpack.c.h.b16 %v6805
    %v6898 = vunpack.c.l.b16 %v6806
    %v6899 = vunpack.c.h.b16 %v6806
    %v6900 = vunpack.c.l.b16 %v6807
    %v6901 = vunpack.c.h.b16 %v6807
    %v6902 = vunpack.c.l.b16 %v6808
    %v6903 = vunpack.c.h.b16 %v6808
    %v6904 = vunpack.c.l.b16 %v6809
    %v6905 = vunpack.c.h.b16 %v6809
    %v6906 = vpack.c.b16 %v6842, %v6842
    %v6907 = vpack.c.b16 %v6843, %v6843
    %v6908 = vpack.c.b16 %v6844, %v6844
    %v6909 = vpack.c.b16 %v6845, %v6845
    %v6910 = vpack.c.b16 %v6846, %v6846
    %v6911 = vpack.c.b16 %v6847, %v6847
    %v6912 = vpack.c.b16 %v6848, %v6848
    %v6913 = vpack.c.b16 %v6849, %v6849
    %v6914 = vpack.c.b16 %v6850, %v6850
    %v6915 = vpack.c.b16 %v6851, %v6851
    %v6916 = vpack.c.b16 %v6852, %v6852
    %v6917 = vpack.c.b16 %v6853, %v6853
    %v6918 = vpack.c.b16 %v6854, %v6854
    %v6919 = vpack.c.b16 %v6855, %v6855
    %v6920 = vpack.c.b16 %v6856, %v6856
    %v6921 = vpack.c.b16 %v6857, %v6857
    %v6922 = vpack.c.b16 %v6858, %v6858
    %v6923 = vpack.c.b16 %v6859, %v6859
    %v6924 = vpack.c.b16 %v6860, %v6860
    %v6925 = vpack.c.b16 %v6861, %v6861
    %v6926 = vpack.c.b16 %v6862, %v6862
    %v6927 = vpack.c.b16 %v6863, %v6863
    %v6928 = vpack.c.b16 %v6864, %v6864
    %v6929 = vpack.c.b16 %v6865, %v6865
    %v6930 = vpack.c.b16 %v6866, %v6866
    %v6931 = vpack.c.b16 %v6867, %v6867
    %v6932 = vpack.c.b16 %v6868, %v6868
    %v6933 = vpack.c.b16 %v6869, %v6869
    %v6934 = vpack.c.b16 %v6870, %v6870
    %v6935 = vpack.c.b16 %v6871, %v6871
    %v6936 = vpack.c.b16 %v6872, %v6872
    %v6937 = vpack.c.b16 %v6873, %v6873
    %v6938 = vpack.c.b16 %v6874, %v6874
    %v6939 = vpack.c.b16 %v6875, %v6875
    %v6940 = vpack.c.b16 %v6876, %v6876
    %v6941 = vpack.c.b16 %v6877, %v6877
    %v6942 = vpack.c.b16 %v6878, %v6878
    %v6943 = vpack.c.b16 %v6879, %v6879
    %v6944 = vpack.c.b16 %v6880, %v6880
    %v6945 = vpack.c.b16 %v6881, %v6881
    %v6946 = vpack.c.b16 %v6882, %v6882
    %v6947 = vpack.c.b16 %v6883, %v6883
    %v6948 = vpack.c.b16 %v6884, %v6884
    %v6949 = vpack.c.b16 %v6885, %v6885
    %v6950 = vpack.c.b16 %v6886, %v6886
    %v6951 = vpack.c.b16 %v6887, %v6887
    %v6952 = vpack.c.b16 %v6888, %v6888
    %v6953 = vpack.c.b16 %v6889, %v6889
    %v6954 = vpack.c.b16 %v6890, %v6890
    %v6955 = vpack.c.b16 %v6891, %v6891
    %v6956 = vpack.c.b16 %v6892, %v6892
    %v6957 = vpack.c.b16 %v6893, %v6893
    %v6958 = vpack.c.b16 %v6894, %v6894
    %v6959 = vpack.c.b16 %v6895, %v6895
    %v6960 = vpack.c.b16 %v6896, %v6896
    %v6961 = vpack.c.b16 %v6897, %v6897
    %v6962 = vpack.c.b16 %v6898, %v6898
    %v6963 = vpack.c.b16 %v6899, %v6899
    %v6964 = vpack.c.b16 %v6900, %v6900
    %v6965 = vpack.c.b16 %v6901, %v6901
    %v6966 = vpack.c.b16 %v6902, %v6902
    %v6967 = vpack.c.b16 %v6903, %v6903
    %v6968 = vpack.c.b16 %v6904, %v6904
    %v6969 = vpack.c.b16 %v6905, %v6905
    %7034 = vst [vmem:[#allocation8] sm:$0xf] %v6906
    %7035 = vst [vmem:[#allocation8 + $0x4] sm:$0xf] %v6907
    %7036 = vst [vmem:[#allocation8 + $0x8] sm:$0xf] %v6908
    %7037 = vst [vmem:[#allocation8 + $0xc] sm:$0xf] %v6909
    %7038 = vst [vmem:[#allocation8 + $0x10] sm:$0xf] %v6910
    %7039 = vst [vmem:[#allocation8 + $0x14] sm:$0xf] %v6911
    %7040 = vst [vmem:[#allocation8 + $0x18] sm:$0xf] %v6912
    %7041 = vst [vmem:[#allocation8 + $0x1c] sm:$0xf] %v6913
    %7042 = vst [vmem:[#allocation8 + $0x20] sm:$0xf] %v6914
    %7043 = vst [vmem:[#allocation8 + $0x24] sm:$0xf] %v6915
    %7044 = vst [vmem:[#allocation8 + $0x28] sm:$0xf] %v6916
    %7045 = vst [vmem:[#allocation8 + $0x2c] sm:$0xf] %v6917
    %7046 = vst [vmem:[#allocation8 + $0x30] sm:$0xf] %v6918
    %7047 = vst [vmem:[#allocation8 + $0x34] sm:$0xf] %v6919
    %7048 = vst [vmem:[#allocation8 + $0x38] sm:$0xf] %v6920
    %7049 = vst [vmem:[#allocation8 + $0x3c] sm:$0xf] %v6921
    %7050 = vst [vmem:[#allocation8 + $0x40] sm:$0xf] %v6922
    %7051 = vst [vmem:[#allocation8 + $0x44] sm:$0xf] %v6923
    %7052 = vst [vmem:[#allocation8 + $0x48] sm:$0xf] %v6924
    %7053 = vst [vmem:[#allocation8 + $0x4c] sm:$0xf] %v6925
    %7054 = vst [vmem:[#allocation8 + $0x50] sm:$0xf] %v6926
    %7055 = vst [vmem:[#allocation8 + $0x54] sm:$0xf] %v6927
    %7056 = vst [vmem:[#allocation8 + $0x58] sm:$0xf] %v6928
    %7057 = vst [vmem:[#allocation8 + $0x5c] sm:$0xf] %v6929
    %7058 = vst [vmem:[#allocation8 + $0x60] sm:$0xf] %v6930
    %7059 = vst [vmem:[#allocation8 + $0x64] sm:$0xf] %v6931
    %7060 = vst [vmem:[#allocation8 + $0x68] sm:$0xf] %v6932
    %7061 = vst [vmem:[#allocation8 + $0x6c] sm:$0xf] %v6933
    %7062 = vst [vmem:[#allocation8 + $0x70] sm:$0xf] %v6934
    %7063 = vst [vmem:[#allocation8 + $0x74] sm:$0xf] %v6935
    %7064 = vst [vmem:[#allocation8 + $0x78] sm:$0xf] %v6936
    %7065 = vst [vmem:[#allocation8 + $0x7c] sm:$0xf] %v6937
    %7066 = vst [vmem:[#allocation8 + $0x80] sm:$0xf] %v6938
    %7067 = vst [vmem:[#allocation8 + $0x84] sm:$0xf] %v6939
    %7068 = vst [vmem:[#allocation8 + $0x88] sm:$0xf] %v6940
    %7069 = vst [vmem:[#allocation8 + $0x8c] sm:$0xf] %v6941
    %7070 = vst [vmem:[#allocation8 + $0x90] sm:$0xf] %v6942
    %7071 = vst [vmem:[#allocation8 + $0x94] sm:$0xf] %v6943
    %7072 = vst [vmem:[#allocation8 + $0x98] sm:$0xf] %v6944
    %7073 = vst [vmem:[#allocation8 + $0x9c] sm:$0xf] %v6945
    %7074 = vst [vmem:[#allocation8 + $0xa0] sm:$0xf] %v6946
    %7075 = vst [vmem:[#allocation8 + $0xa4] sm:$0xf] %v6947
    %7076 = vst [vmem:[#allocation8 + $0xa8] sm:$0xf] %v6948
    %7077 = vst [vmem:[#allocation8 + $0xac] sm:$0xf] %v6949
    %7078 = vst [vmem:[#allocation8 + $0xb0] sm:$0xf] %v6950
    %7079 = vst [vmem:[#allocation8 + $0xb4] sm:$0xf] %v6951
    %7080 = vst [vmem:[#allocation8 + $0xb8] sm:$0xf] %v6952
    %7081 = vst [vmem:[#allocation8 + $0xbc] sm:$0xf] %v6953
    %7082 = vst [vmem:[#allocation8 + $0xc0] sm:$0xf] %v6954
    %7083 = vst [vmem:[#allocation8 + $0xc4] sm:$0xf] %v6955
    %7084 = vst [vmem:[#allocation8 + $0xc8] sm:$0xf] %v6956
    %7085 = vst [vmem:[#allocation8 + $0xcc] sm:$0xf] %v6957
    %7086 = vst [vmem:[#allocation8 + $0xd0] sm:$0xf] %v6958
    %7087 = vst [vmem:[#allocation8 + $0xd4] sm:$0xf] %v6959
    %7088 = vst [vmem:[#allocation8 + $0xd8] sm:$0xf] %v6960
    %7089 = vst [vmem:[#allocation8 + $0xdc] sm:$0xf] %v6961
    %7090 = vst [vmem:[#allocation8 + $0xe0] sm:$0xf] %v6962
    %7091 = vst [vmem:[#allocation8 + $0xe4] sm:$0xf] %v6963
    %7092 = vst [vmem:[#allocation8 + $0xe8] sm:$0xf] %v6964
    %7093 = vst [vmem:[#allocation8 + $0xec] sm:$0xf] %v6965
    %7094 = vst [vmem:[#allocation8 + $0xf0] sm:$0xf] %v6966
    %7095 = vst [vmem:[#allocation8 + $0xf4] sm:$0xf] %v6967
    %7096 = vst [vmem:[#allocation8 + $0xf8] sm:$0xf] %v6968
    %7097 = vst [vmem:[#allocation8 + $0xfc] sm:$0xf] %v6969
    // Predicated region
    $region26: #{tpu_custom_call.1} parent=1 // pred_check
      _
    $region27: #{tpu_custom_call.1} parent=1 // pred_check_branch
      %7099 = sbr.rel (0) target = $region29
    $region28: #{tpu_custom_call.1} parent=1 // pred_region
      %s7101 = ssub.s32 4096, 4096
      %7102 = vsyncadd [#allocation5], %s7101
      %s7103 = sshll.u32 [#allocation8], 4
      %s7104 = int_to_ptr.vmem [resolvable:$true] %s7103
      %7109 = dma.vmem_to_hbm [thread:$0]  %s7104, 4096, %s4, [#allocation5], 64, 64, 4
    $region29: #{tpu_custom_call.1} parent=1 // pred_fallthru
      _
    // Predicated region
    $region30: #{tpu_custom_call.1} parent=1 // pred_check
      _
    $region31: #{tpu_custom_call.1} parent=1 // pred_check_branch
      %7111 = sbr.rel (0) target = $region33
    $region32: #{tpu_custom_call.1} parent=1 // pred_region
      %7112 = dma.done [#allocation5], 4096
    $region33: #{tpu_custom_call.1} parent=1 // pred_fallthru
      _
    %7113 = vsyncpa [#allocation4], 1
    %7114 = vsyncpa [#allocation7], 1
    %7115 = vsyncpa [#allocation5], 1

</llo_original>
